<compile_context>
chip_gen: v7x
topology: tpu7x:2x2x1
jax: 0.10.0
libtpu: 0.0.40
codegen_flags: <defaults>
</compile_context>

<pallas_src>
import functools

import jax
import jax.numpy as jnp
from jax.experimental import pallas as pl
from jax.experimental.pallas import tpu as pltpu


def _stn3d_kernel(*refs, n_points, tile_n, fuse_head, c3_chunk):
    if fuse_head:
        (x_ref, w1_ref, b1_ref, w2_ref, b2_ref, w3_ref, b3_ref,
         wf1_ref, bf1_ref, wf2_ref, bf2_ref, wf3_ref, bf3_ref,
         o_ref, acc_ref) = refs
    else:
        (x_ref, w1_ref, b1_ref, w2_ref, b2_ref, w3_ref, b3_ref,
         o_ref, acc_ref) = refs

    n = pl.program_id(1)
    n_last = pl.num_programs(1) - 1

    @pl.when(n == 0)
    def _init():
        # relu is folded after the max-pool, so 0.0 is the correct identity.
        acc_ref[...] = jnp.zeros(acc_ref.shape, acc_ref.dtype)

    x = x_ref[0]                                            # (3, TN) f32

    # conv1: K=3 -> three VPU broadcast multiply-adds, no MXU pass (review #6).
    w1 = w1_ref[...]                                        # (64, 3) f32
    h = (w1[:, 0:1] * x[0:1, :]
         + w1[:, 1:2] * x[1:2, :]
         + w1[:, 2:3] * x[2:3, :]
         + b1_ref[...])                                     # (64, TN) f32
    h = jnp.maximum(h, 0.0)

    # conv2 channels-first on MXU: (128,64) @ (64,TN) -> (128,TN), f32 accum.
    h = jnp.dot(w2_ref[...], h.astype(jnp.bfloat16),
                preferred_element_type=jnp.float32) + b2_ref[...]
    h = jnp.maximum(h, 0.0)

    # single channels->points transpose, in bf16 (half the XLU bytes, review #2).
    h = jnp.transpose(h.astype(jnp.bfloat16))               # (TN, 128) bf16

    # Validity mask for the ragged last tile (only generated if N % TN != 0).
    needs_mask = (n_points % tile_n) != 0
    if needs_mask:
        row = jax.lax.broadcasted_iota(jnp.int32, (tile_n, 1), 0)
        valid = jnp.broadcast_to(n * tile_n + row < n_points,
                                 (tile_n, c3_chunk))

    # conv3 in c3_chunk-wide output chunks: bias + mask + running max per chunk,
    # so the live f32 intermediate is only (TN, c3_chunk) (review #5).
    for c in range(0, 1024, c3_chunk):
        hc = jnp.dot(h, w3_ref[:, c:c + c3_chunk],
                     preferred_element_type=jnp.float32) + b3_ref[:, c:c + c3_chunk]
        if needs_mask:
            # 0.0 is safe: relu(max(...)) == max(0, max(...)), and it also
            # neutralizes any garbage in the partially-DMA'd last block.
            hc = jnp.where(valid, hc, 0.0)
        acc_ref[:, c:c + c3_chunk] = jnp.maximum(
            acc_ref[:, c:c + c3_chunk], jnp.max(hc, axis=0, keepdims=True))

    @pl.when(n == n_last)
    def _final():
        f = acc_ref[...]                                    # (1,1024) = relu(maxpool)
        if fuse_head:
            g = jnp.dot(f.astype(jnp.bfloat16), wf1_ref[...],
                        preferred_element_type=jnp.float32) + bf1_ref[...]
            g = jnp.maximum(g, 0.0)
            g = jnp.dot(g.astype(jnp.bfloat16), wf2_ref[...],
                        preferred_element_type=jnp.float32) + bf2_ref[...]
            g = jnp.maximum(g, 0.0)
            o_ref[0] = jnp.dot(g.astype(jnp.bfloat16), wf3_ref[...],
                               preferred_element_type=jnp.float32) + bf3_ref[...]
        else:
            o_ref[0] = f


def init_params(key, identity_fc3=True):
    """Synthetic parameters matching STN3d.__init__ shapes.

    conv1/conv2 weights stored (Cout, Cin) (channels-first matmuls); conv3 and
    the fc weights stored transposed (Cin, Cout).  Large weights are bf16.
    fc3 is lane-padded from 9 to 128 outputs (sliced back in the wrapper).
    identity_fc3=True reproduces PyTorch's zero-weight / identity-bias init;
    identity_fc3=False uses a random fc3 so the head is numerically exercised.
    """
    ks = jax.random.split(key, 12)

    def u(k, shape, fan_in, dtype=jnp.float32):
        bound = 1.0 / jnp.sqrt(jnp.float32(fan_in))
        return jax.random.uniform(k, shape, jnp.float32, -bound, bound).astype(dtype)

    if identity_fc3:
        wf3 = jnp.zeros((256, 128), jnp.bfloat16)
        bf3 = jnp.zeros((1, 128), jnp.float32).at[0, :9].set(
            jnp.array([1, 0, 0, 0, 1, 0, 0, 0, 1], jnp.float32))
    else:
        wf3 = jnp.zeros((256, 128), jnp.float32).at[:, :9].set(
            jax.random.uniform(ks[10], (256, 9), jnp.float32, -1.0, 1.0)
        ).astype(jnp.bfloat16)
        bf3 = jnp.zeros((1, 128), jnp.float32).at[0, :9].set(
            jax.random.uniform(ks[11], (9,), jnp.float32, -1.0, 1.0))

    return dict(
        w1=u(ks[0], (64, 3), 3),                       b1=u(ks[1], (64, 1), 3),
        w2=u(ks[2], (128, 64), 64, jnp.bfloat16),      b2=u(ks[3], (128, 1), 64),
        w3=u(ks[4], (128, 1024), 128, jnp.bfloat16),   b3=u(ks[5], (1, 1024), 128),
        wf1=u(ks[6], (1024, 512), 1024, jnp.bfloat16), bf1=u(ks[7], (1, 512), 1024),
        wf2=u(ks[8], (512, 256), 512, jnp.bfloat16),   bf2=u(ks[9], (1, 256), 512),
        wf3=wf3, bf3=bf3,
    )


def stn3d_reference(x, params):
    """Pure-JAX f32 reference of the PyTorch forward (weights upcast)."""
    f32 = jnp.float32
    with jax.default_matmul_precision("highest"):
        h = jnp.einsum("oc,bcn->bon", params["w1"], x) + params["b1"][None]
        h = jnp.maximum(h, 0.0)
        h = jnp.einsum("oc,bcn->bon", params["w2"].astype(f32), h) + params["b2"][None]
        h = jnp.maximum(h, 0.0)
        h = (jnp.einsum("co,bcn->bon", params["w3"].astype(f32), h)
             + params["b3"][0][None, :, None])
        h = jnp.maximum(h, 0.0)
        f = jnp.max(h, axis=-1)                              # (B, 1024)
        g = jnp.maximum(f @ params["wf1"].astype(f32) + params["bf1"][0], 0.0)
        g = jnp.maximum(g @ params["wf2"].astype(f32) + params["bf2"][0], 0.0)
        out = g @ params["wf3"].astype(f32) + params["bf3"][0]
    return out[:, :9].reshape(-1, 3, 3)


def _round_up(v, m):
    return ((v + m - 1) // m) * m


@functools.partial(jax.jit, static_argnames=("tile_n", "fuse_head_max_batch"))
def stn3d_forward(x, params, *, tile_n=1024, fuse_head_max_batch=8):
    """x: (B, 3, N) float32  ->  (B, 3, 3) float32"""
    B, C, N = x.shape
    assert C == 3

    # Big tiles amortize per-grid-step overhead; cap at the (128-aligned) row
    # length.  No wrapper-side padding: the ragged tail is masked in-kernel.
    tn = min(tile_n, _round_up(N, 128))
    n_tiles = pl.cdiv(N, tn)
    fuse_head = B < fuse_head_max_batch        # fused head only for tiny B

    const = lambda b, n: (0, 0)
    single = pl.Buffered(1)                    # constant-index inputs: no double-buffer

    conv_specs = [
        pl.BlockSpec((1, 3, tn), lambda b, n: (b, 0, n)),
        pl.BlockSpec((64, 3), const),
        pl.BlockSpec((64, 1), const),
        pl.BlockSpec((128, 64), const, pipeline_mode=single),
        pl.BlockSpec((128, 1), const),
        pl.BlockSpec((128, 1024), const, pipeline_mode=single),
        pl.BlockSpec((1, 1024), const),
    ]
    conv_args = (x, params["w1"], params["b1"], params["w2"], params["b2"],
                 params["w3"], params["b3"])

    if fuse_head:
        head_specs = [
            pl.BlockSpec((1024, 512), const, pipeline_mode=single),
            pl.BlockSpec((1, 512), const),
            pl.BlockSpec((512, 256), const, pipeline_mode=single),
            pl.BlockSpec((1, 256), const),
            pl.BlockSpec((256, 128), const, pipeline_mode=single),
            pl.BlockSpec((1, 128), const),
        ]
        head_args = (params["wf1"], params["bf1"], params["wf2"], params["bf2"],
                     params["wf3"], params["bf3"])
        out_shape = jax.ShapeDtypeStruct((B, 1, 128), jnp.float32)
        out_spec = pl.BlockSpec((1, 1, 128), lambda b, n: (b, 0, 0))
    else:
        head_specs, head_args = [], ()
        out_shape = jax.ShapeDtypeStruct((B, 1, 1024), jnp.float32)
        out_spec = pl.BlockSpec((1, 1, 1024), lambda b, n: (b, 0, 0))

    kernel = functools.partial(_stn3d_kernel, n_points=N, tile_n=tn,
                               fuse_head=fuse_head, c3_chunk=256)

    out = pl.pallas_call(
        kernel,
        out_shape=out_shape,
        grid=(B, n_tiles),
        in_specs=conv_specs + head_specs,
        out_specs=out_spec,
        scratch_shapes=[pltpu.VMEM((1, 1024), jnp.float32)],
        compiler_params=pltpu.CompilerParams(
            dimension_semantics=("parallel", "arbitrary"),
            vmem_limit_bytes=32 * 1024 * 1024),
    )(*conv_args, *head_args)

    if fuse_head:
        return out.reshape(B, 128)[:, :9].reshape(B, 3, 3)

    # Un-fused head: one batched M=B matmul per fc layer in plain XLA
    # (the pooled features are only 4 KB per row, so the HBM hop is negligible).
    f = out.reshape(B, 1024)
    g = jnp.dot(f.astype(jnp.bfloat16), params["wf1"],
                preferred_element_type=jnp.float32) + params["bf1"][0]
    g = jnp.maximum(g, 0.0)
    g = jnp.dot(g.astype(jnp.bfloat16), params["wf2"],
                preferred_element_type=jnp.float32) + params["bf2"][0]
    g = jnp.maximum(g, 0.0)
    out9 = jnp.dot(g.astype(jnp.bfloat16), params["wf3"],
                   preferred_element_type=jnp.float32) + params["bf3"][0]
    return out9[:, :9].reshape(B, 3, 3)


if __name__ == "__main__":
    key = jax.random.PRNGKey(0)
    k_param, k_x1, k_x2 = jax.random.split(key, 3)

    # Random fc3 so the head is numerically exercised (PyTorch's default init
    # would make the output input-independent).
    params = init_params(k_param, identity_fc3=False)

    # Path 1: small batch -> fully fused head; N=640 with tile_n=512 exercises
    # the ragged last tile + in-kernel masking.
    B1, N1 = 2, 640
    x1 = jax.random.normal(k_x1, (B1, 3, N1), dtype=jnp.float32)
    out1 = jax.block_until_ready(stn3d_forward(x1, params, tile_n=512))
    ref1 = stn3d_reference(x1, params)
    assert out1.shape == (B1, 3, 3) and out1.dtype == jnp.float32
    assert jnp.allclose(out1, ref1, atol=5e-2, rtol=5e-2)

    # Path 2: moderate batch -> kernel emits pooled features, fc head runs as
    # one batched XLA matmul (review: un-fuse the M=1 head for B >= 8).
    B2, N2 = 8, 512
    x2 = jax.random.normal(k_x2, (B2, 3, N2), dtype=jnp.float32)
    out2 = jax.block_until_ready(stn3d_forward(x2, params))
    ref2 = stn3d_reference(x2, params)
    assert out2.shape == (B2, 3, 3)
    assert jnp.allclose(out2, ref2, atol=5e-2, rtol=5e-2)

    # PyTorch-default fc3 init (zero weight, identity bias) -> exact identity.
    params_id = init_params(k_param, identity_fc3=True)
    out3 = jax.block_until_ready(stn3d_forward(x1, params_id, tile_n=512))
    assert jnp.allclose(out3, jnp.broadcast_to(jnp.eye(3), (B1, 3, 3)), atol=1e-5)

    print("KERNEL_OK")
</pallas_src>

<mosaic_0001>
module attributes {stable_mosaic.version = 11 : i64} {
  func.func @_stn3d_kernel(%arg0: i32, %arg1: i32, %arg2: memref<1x3x512xf32, #tpu.memory_space<vmem>>, %arg3: memref<64x3xf32, #tpu.memory_space<vmem>>, %arg4: memref<64x1xf32, #tpu.memory_space<vmem>>, %arg5: memref<128x64xbf16, #tpu.memory_space<vmem>>, %arg6: memref<128x1xf32, #tpu.memory_space<vmem>>, %arg7: memref<128x1024xbf16, #tpu.memory_space<vmem>>, %arg8: memref<1x1024xf32, #tpu.memory_space<vmem>>, %arg9: memref<1024x512xbf16, #tpu.memory_space<vmem>>, %arg10: memref<1x512xf32, #tpu.memory_space<vmem>>, %arg11: memref<512x256xbf16, #tpu.memory_space<vmem>>, %arg12: memref<1x256xf32, #tpu.memory_space<vmem>>, %arg13: memref<256x128xbf16, #tpu.memory_space<vmem>>, %arg14: memref<1x128xf32, #tpu.memory_space<vmem>>, %arg15: memref<1x1x128xf32, #tpu.memory_space<vmem>>, %arg16: memref<1x1024xf32, #tpu.memory_space<vmem>>) attributes {dimension_semantics = [#tpu.dimension_semantics<parallel>, #tpu.dimension_semantics<arbitrary>], iteration_bounds = array<i64: 2, 2>, scalar_prefetch = 0 : i64, scratch_operands = 1 : i64, tpu.core_type = #tpu.core_type<tc>, window_params = [{transform_indices = @transform_0, window_bounds = array<i64: 1, 3, 512>}, {pipeline_mode = #tpu.pipeline_mode<synchronous>, transform_indices = @transform_1, window_bounds = array<i64: 64, 3>}, {pipeline_mode = #tpu.pipeline_mode<synchronous>, transform_indices = @transform_2, window_bounds = array<i64: 64, 1>}, {pipeline_mode = #tpu.pipeline_mode<synchronous>, transform_indices = @transform_3, window_bounds = array<i64: 128, 64>}, {pipeline_mode = #tpu.pipeline_mode<synchronous>, transform_indices = @transform_4, window_bounds = array<i64: 128, 1>}, {pipeline_mode = #tpu.pipeline_mode<synchronous>, transform_indices = @transform_5, window_bounds = array<i64: 128, 1024>}, {pipeline_mode = #tpu.pipeline_mode<synchronous>, transform_indices = @transform_6, window_bounds = array<i64: 1, 1024>}, {pipeline_mode = #tpu.pipeline_mode<synchronous>, transform_indices = @transform_7, window_bounds = array<i64: 1024, 512>}, {pipeline_mode = #tpu.pipeline_mode<synchronous>, transform_indices = @transform_8, window_bounds = array<i64: 1, 512>}, {pipeline_mode = #tpu.pipeline_mode<synchronous>, transform_indices = @transform_9, window_bounds = array<i64: 512, 256>}, {pipeline_mode = #tpu.pipeline_mode<synchronous>, transform_indices = @transform_10, window_bounds = array<i64: 1, 256>}, {pipeline_mode = #tpu.pipeline_mode<synchronous>, transform_indices = @transform_11, window_bounds = array<i64: 256, 128>}, {pipeline_mode = #tpu.pipeline_mode<synchronous>, transform_indices = @transform_12, window_bounds = array<i64: 1, 128>}, {transform_indices = @transform_13, window_bounds = array<i64: 1, 1, 128>}]} {
    %c0_i32 = arith.constant 0 : i32
    %0 = arith.cmpi eq, %arg1, %c0_i32 : i32
    %1 = arith.extui %0 : i1 to i32
    %c0_i32_0 = arith.constant 0 : i32
    %2 = arith.cmpi ne, %1, %c0_i32_0 : i32
    scf.if %2 {
      %cst_55 = arith.constant 0.000000e+00 : f32
      %97 = vector.broadcast %cst_55 : f32 to vector<1x1024xf32>
      %c0_56 = arith.constant 0 : index
      %c0_57 = arith.constant 0 : index
      %98 = vector.load %arg16[%c0_56, %c0_57] : memref<1x1024xf32, #tpu.memory_space<vmem>>, vector<1x1024xf32>
      tpu.vector_store %arg16[%c0_56, %c0_57], %97 {strides = array<i32>} : memref<1x1024xf32, #tpu.memory_space<vmem>>, vector<1x1024xf32>,
    } else {
    }
    %c0 = arith.constant 0 : index
    %c0_1 = arith.constant 0 : index
    %c0_2 = arith.constant 0 : index
    %3 = vector.load %arg2[%c0, %c0_1, %c0_2] : memref<1x3x512xf32, #tpu.memory_space<vmem>>, vector<1x3x512xf32>
    %4 = vector.shape_cast %3 : vector<1x3x512xf32> to vector<3x512xf32>
    %c0_3 = arith.constant 0 : index
    %c0_4 = arith.constant 0 : index
    %5 = vector.load %arg3[%c0_3, %c0_4] : memref<64x3xf32, #tpu.memory_space<vmem>>, vector<64x3xf32>
    %6 = vector.extract_strided_slice %5 {offsets = [0, 0], sizes = [64, 1], strides = [1, 1]} : vector<64x3xf32> to vector<64x1xf32>
    %7 = vector.extract_strided_slice %4 {offsets = [0, 0], sizes = [1, 512], strides = [1, 1]} : vector<3x512xf32> to vector<1x512xf32>
    %8 = vector.broadcast %6 : vector<64x1xf32> to vector<64x512xf32>
    %9 = vector.broadcast %7 : vector<1x512xf32> to vector<64x512xf32>
    %10 = arith.mulf %8, %9 : vector<64x512xf32>
    %11 = vector.extract_strided_slice %5 {offsets = [0, 1], sizes = [64, 1], strides = [1, 1]} : vector<64x3xf32> to vector<64x1xf32>
    %12 = vector.extract_strided_slice %4 {offsets = [1, 0], sizes = [1, 512], strides = [1, 1]} : vector<3x512xf32> to vector<1x512xf32>
    %13 = vector.broadcast %11 : vector<64x1xf32> to vector<64x512xf32>
    %14 = vector.broadcast %12 : vector<1x512xf32> to vector<64x512xf32>
    %15 = arith.mulf %13, %14 : vector<64x512xf32>
    %16 = arith.addf %10, %15 : vector<64x512xf32>
    %17 = vector.extract_strided_slice %5 {offsets = [0, 2], sizes = [64, 1], strides = [1, 1]} : vector<64x3xf32> to vector<64x1xf32>
    %18 = vector.extract_strided_slice %4 {offsets = [2, 0], sizes = [1, 512], strides = [1, 1]} : vector<3x512xf32> to vector<1x512xf32>
    %19 = vector.broadcast %17 : vector<64x1xf32> to vector<64x512xf32>
    %20 = vector.broadcast %18 : vector<1x512xf32> to vector<64x512xf32>
    %21 = arith.mulf %19, %20 : vector<64x512xf32>
    %22 = arith.addf %16, %21 : vector<64x512xf32>
    %c0_5 = arith.constant 0 : index
    %c0_6 = arith.constant 0 : index
    %23 = vector.load %arg4[%c0_5, %c0_6] : memref<64x1xf32, #tpu.memory_space<vmem>>, vector<64x1xf32>
    %24 = vector.broadcast %23 : vector<64x1xf32> to vector<64x512xf32>
    %25 = arith.addf %22, %24 : vector<64x512xf32>
    %cst = arith.constant 0.000000e+00 : f32
    %26 = vector.broadcast %cst : f32 to vector<64x512xf32>
    %27 = arith.maximumf %25, %26 : vector<64x512xf32>
    %c0_7 = arith.constant 0 : index
    %c0_8 = arith.constant 0 : index
    %28 = vector.load %arg5[%c0_7, %c0_8] : memref<128x64xbf16, #tpu.memory_space<vmem>>, vector<128x64xbf16>
    %29 = arith.truncf %27 : vector<64x512xf32> to vector<64x512xbf16>
    %cst_9 = arith.constant dense<0.000000e+00> : vector<128x512xf32>
    %30 = tpu.matmul %28, %29, %cst_9 {dimension_numbers = #tpu.dot_dimension_numbers<[1], [0], [0], [1], [0, 0, 1, 1], [], []>} : vector<128x64xbf16>, vector<64x512xbf16>, vector<128x512xf32> -> vector<128x512xf32>
    %c0_10 = arith.constant 0 : index
    %c0_11 = arith.constant 0 : index
    %31 = vector.load %arg6[%c0_10, %c0_11] : memref<128x1xf32, #tpu.memory_space<vmem>>, vector<128x1xf32>
    %32 = vector.broadcast %31 : vector<128x1xf32> to vector<128x512xf32>
    %33 = arith.addf %30, %32 : vector<128x512xf32>
    %cst_12 = arith.constant 0.000000e+00 : f32
    %34 = vector.broadcast %cst_12 : f32 to vector<128x512xf32>
    %35 = arith.maximumf %33, %34 : vector<128x512xf32>
    %36 = arith.truncf %35 : vector<128x512xf32> to vector<128x512xbf16>
    %37 = tpu.transpose %36, [1, 0] : vector<128x512xbf16> -> vector<512x128xbf16>
    %38 = tpu.iota {dimensions = array<i32: 0>} : vector<512x1xi32>
    %c512_i32 = arith.constant 512 : i32
    %39 = arith.muli %arg1, %c512_i32 : i32
    %40 = vector.broadcast %39 : i32 to vector<512x1xi32>
    %41 = arith.addi %40, %38 : vector<512x1xi32>
    %c640_i32 = arith.constant 640 : i32
    %42 = vector.broadcast %c640_i32 : i32 to vector<512x1xi32>
    %43 = arith.cmpi slt, %41, %42 : vector<512x1xi32>
    %44 = vector.shape_cast %43 : vector<512x1xi1> to vector<512x1xi1>
    %45 = vector.broadcast %44 : vector<512x1xi1> to vector<512x256xi1>
    %c0_13 = arith.constant 0 : index
    %c0_14 = arith.constant 0 : index
    %46 = vector.load %arg7[%c0_13, %c0_14] : memref<128x1024xbf16, #tpu.memory_space<vmem>>, vector<128x256xbf16>
    %cst_15 = arith.constant dense<0.000000e+00> : vector<512x256xf32>
    %47 = tpu.matmul %37, %46, %cst_15 {dimension_numbers = #tpu.dot_dimension_numbers<[1], [0], [0], [1], [0, 0, 1, 1], [], []>} : vector<512x128xbf16>, vector<128x256xbf16>, vector<512x256xf32> -> vector<512x256xf32>
    %c0_16 = arith.constant 0 : index
    %c0_17 = arith.constant 0 : index
    %48 = vector.load %arg8[%c0_16, %c0_17] : memref<1x1024xf32, #tpu.memory_space<vmem>>, vector<1x256xf32>
    %49 = vector.broadcast %48 : vector<1x256xf32> to vector<512x256xf32>
    %50 = arith.addf %47, %49 : vector<512x256xf32>
    %cst_18 = arith.constant 0.000000e+00 : f32
    %51 = vector.broadcast %cst_18 : f32 to vector<512x256xf32>
    %52 = arith.select %45, %50, %51 : vector<512x256xi1>, vector<512x256xf32>
    %c0_19 = arith.constant 0 : index
    %c0_20 = arith.constant 0 : index
    %53 = vector.load %arg16[%c0_19, %c0_20] : memref<1x1024xf32, #tpu.memory_space<vmem>>, vector<1x256xf32>
    %cst_21 = arith.constant dense<0xFF800000> : vector<256xf32>
    %54 = vector.multi_reduction <maximumf>, %52, %cst_21 [0] : vector<512x256xf32> to vector<256xf32>
    %55 = vector.shape_cast %54 : vector<256xf32> to vector<1x256xf32>
    %56 = arith.maximumf %53, %55 : vector<1x256xf32>
    %c0_22 = arith.constant 0 : index
    %c0_23 = arith.constant 0 : index
    %57 = vector.load %arg16[%c0_22, %c0_23] : memref<1x1024xf32, #tpu.memory_space<vmem>>, vector<1x256xf32>
    tpu.vector_store %arg16[%c0_22, %c0_23], %56 {strides = array<i32>} : memref<1x1024xf32, #tpu.memory_space<vmem>>, vector<1x256xf32>,
    %c0_24 = arith.constant 0 : index
    %c256 = arith.constant 256 : index
    %58 = vector.load %arg7[%c0_24, %c256] : memref<128x1024xbf16, #tpu.memory_space<vmem>>, vector<128x256xbf16>
    %cst_25 = arith.constant dense<0.000000e+00> : vector<512x256xf32>
    %59 = tpu.matmul %37, %58, %cst_25 {dimension_numbers = #tpu.dot_dimension_numbers<[1], [0], [0], [1], [0, 0, 1, 1], [], []>} : vector<512x128xbf16>, vector<128x256xbf16>, vector<512x256xf32> -> vector<512x256xf32>
    %c0_26 = arith.constant 0 : index
    %c256_27 = arith.constant 256 : index
    %60 = vector.load %arg8[%c0_26, %c256_27] : memref<1x1024xf32, #tpu.memory_space<vmem>>, vector<1x256xf32>
    %61 = vector.broadcast %60 : vector<1x256xf32> to vector<512x256xf32>
    %62 = arith.addf %59, %61 : vector<512x256xf32>
    %cst_28 = arith.constant 0.000000e+00 : f32
    %63 = vector.broadcast %cst_28 : f32 to vector<512x256xf32>
    %64 = arith.select %45, %62, %63 : vector<512x256xi1>, vector<512x256xf32>
    %c0_29 = arith.constant 0 : index
    %c256_30 = arith.constant 256 : index
    %65 = vector.load %arg16[%c0_29, %c256_30] : memref<1x1024xf32, #tpu.memory_space<vmem>>, vector<1x256xf32>
    %cst_31 = arith.constant dense<0xFF800000> : vector<256xf32>
    %66 = vector.multi_reduction <maximumf>, %64, %cst_31 [0] : vector<512x256xf32> to vector<256xf32>
    %67 = vector.shape_cast %66 : vector<256xf32> to vector<1x256xf32>
    %68 = arith.maximumf %65, %67 : vector<1x256xf32>
    %c0_32 = arith.constant 0 : index
    %c256_33 = arith.constant 256 : index
    %69 = vector.load %arg16[%c0_32, %c256_33] : memref<1x1024xf32, #tpu.memory_space<vmem>>, vector<1x256xf32>
    tpu.vector_store %arg16[%c0_32, %c256_33], %68 {strides = array<i32>} : memref<1x1024xf32, #tpu.memory_space<vmem>>, vector<1x256xf32>,
    %c0_34 = arith.constant 0 : index
    %c512 = arith.constant 512 : index
    %70 = vector.load %arg7[%c0_34, %c512] : memref<128x1024xbf16, #tpu.memory_space<vmem>>, vector<128x256xbf16>
    %cst_35 = arith.constant dense<0.000000e+00> : vector<512x256xf32>
    %71 = tpu.matmul %37, %70, %cst_35 {dimension_numbers = #tpu.dot_dimension_numbers<[1], [0], [0], [1], [0, 0, 1, 1], [], []>} : vector<512x128xbf16>, vector<128x256xbf16>, vector<512x256xf32> -> vector<512x256xf32>
    %c0_36 = arith.constant 0 : index
    %c512_37 = arith.constant 512 : index
    %72 = vector.load %arg8[%c0_36, %c512_37] : memref<1x1024xf32, #tpu.memory_space<vmem>>, vector<1x256xf32>
    %73 = vector.broadcast %72 : vector<1x256xf32> to vector<512x256xf32>
    %74 = arith.addf %71, %73 : vector<512x256xf32>
    %cst_38 = arith.constant 0.000000e+00 : f32
    %75 = vector.broadcast %cst_38 : f32 to vector<512x256xf32>
    %76 = arith.select %45, %74, %75 : vector<512x256xi1>, vector<512x256xf32>
    %c0_39 = arith.constant 0 : index
    %c512_40 = arith.constant 512 : index
    %77 = vector.load %arg16[%c0_39, %c512_40] : memref<1x1024xf32, #tpu.memory_space<vmem>>, vector<1x256xf32>
    %cst_41 = arith.constant dense<0xFF800000> : vector<256xf32>
    %78 = vector.multi_reduction <maximumf>, %76, %cst_41 [0] : vector<512x256xf32> to vector<256xf32>
    %79 = vector.shape_cast %78 : vector<256xf32> to vector<1x256xf32>
    %80 = arith.maximumf %77, %79 : vector<1x256xf32>
    %c0_42 = arith.constant 0 : index
    %c512_43 = arith.constant 512 : index
    %81 = vector.load %arg16[%c0_42, %c512_43] : memref<1x1024xf32, #tpu.memory_space<vmem>>, vector<1x256xf32>
    tpu.vector_store %arg16[%c0_42, %c512_43], %80 {strides = array<i32>} : memref<1x1024xf32, #tpu.memory_space<vmem>>, vector<1x256xf32>,
    %c0_44 = arith.constant 0 : index
    %c768 = arith.constant 768 : index
    %82 = vector.load %arg7[%c0_44, %c768] : memref<128x1024xbf16, #tpu.memory_space<vmem>>, vector<128x256xbf16>
    %cst_45 = arith.constant dense<0.000000e+00> : vector<512x256xf32>
    %83 = tpu.matmul %37, %82, %cst_45 {dimension_numbers = #tpu.dot_dimension_numbers<[1], [0], [0], [1], [0, 0, 1, 1], [], []>} : vector<512x128xbf16>, vector<128x256xbf16>, vector<512x256xf32> -> vector<512x256xf32>
    %c0_46 = arith.constant 0 : index
    %c768_47 = arith.constant 768 : index
    %84 = vector.load %arg8[%c0_46, %c768_47] : memref<1x1024xf32, #tpu.memory_space<vmem>>, vector<1x256xf32>
    %85 = vector.broadcast %84 : vector<1x256xf32> to vector<512x256xf32>
    %86 = arith.addf %83, %85 : vector<512x256xf32>
    %cst_48 = arith.constant 0.000000e+00 : f32
    %87 = vector.broadcast %cst_48 : f32 to vector<512x256xf32>
    %88 = arith.select %45, %86, %87 : vector<512x256xi1>, vector<512x256xf32>
    %c0_49 = arith.constant 0 : index
    %c768_50 = arith.constant 768 : index
    %89 = vector.load %arg16[%c0_49, %c768_50] : memref<1x1024xf32, #tpu.memory_space<vmem>>, vector<1x256xf32>
    %cst_51 = arith.constant dense<0xFF800000> : vector<256xf32>
    %90 = vector.multi_reduction <maximumf>, %88, %cst_51 [0] : vector<512x256xf32> to vector<256xf32>
    %91 = vector.shape_cast %90 : vector<256xf32> to vector<1x256xf32>
    %92 = arith.maximumf %89, %91 : vector<1x256xf32>
    %c0_52 = arith.constant 0 : index
    %c768_53 = arith.constant 768 : index
    %93 = vector.load %arg16[%c0_52, %c768_53] : memref<1x1024xf32, #tpu.memory_space<vmem>>, vector<1x256xf32>
    tpu.vector_store %arg16[%c0_52, %c768_53], %92 {strides = array<i32>} : memref<1x1024xf32, #tpu.memory_space<vmem>>, vector<1x256xf32>,
    %c1_i32 = arith.constant 1 : i32
    %94 = arith.cmpi eq, %arg1, %c1_i32 : i32
    %95 = arith.extui %94 : i1 to i32
    %c0_i32_54 = arith.constant 0 : i32
    %96 = arith.cmpi ne, %95, %c0_i32_54 : i32
    scf.if %96 {
      %c0_55 = arith.constant 0 : index
      %c0_56 = arith.constant 0 : index
      %97 = vector.load %arg16[%c0_55, %c0_56] : memref<1x1024xf32, #tpu.memory_space<vmem>>, vector<1x1024xf32>
      %98 = arith.truncf %97 : vector<1x1024xf32> to vector<1x1024xbf16>
      %c0_57 = arith.constant 0 : index
      %c0_58 = arith.constant 0 : index
      %99 = vector.load %arg9[%c0_57, %c0_58] : memref<1024x512xbf16, #tpu.memory_space<vmem>>, vector<1024x512xbf16>
      %cst_59 = arith.constant dense<0.000000e+00> : vector<1x512xf32>
      %100 = tpu.matmul %98, %99, %cst_59 {dimension_numbers = #tpu.dot_dimension_numbers<[1], [0], [0], [1], [0, 0, 1, 1], [], []>} : vector<1x1024xbf16>, vector<1024x512xbf16>, vector<1x512xf32> -> vector<1x512xf32>
      %c0_60 = arith.constant 0 : index
      %c0_61 = arith.constant 0 : index
      %101 = vector.load %arg10[%c0_60, %c0_61] : memref<1x512xf32, #tpu.memory_space<vmem>>, vector<1x512xf32>
      %102 = arith.addf %100, %101 : vector<1x512xf32>
      %cst_62 = arith.constant 0.000000e+00 : f32
      %103 = vector.broadcast %cst_62 : f32 to vector<1x512xf32>
      %104 = arith.maximumf %102, %103 : vector<1x512xf32>
      %105 = arith.truncf %104 : vector<1x512xf32> to vector<1x512xbf16>
      %c0_63 = arith.constant 0 : index
      %c0_64 = arith.constant 0 : index
      %106 = vector.load %arg11[%c0_63, %c0_64] : memref<512x256xbf16, #tpu.memory_space<vmem>>, vector<512x256xbf16>
      %cst_65 = arith.constant dense<0.000000e+00> : vector<1x256xf32>
      %107 = tpu.matmul %105, %106, %cst_65 {dimension_numbers = #tpu.dot_dimension_numbers<[1], [0], [0], [1], [0, 0, 1, 1], [], []>} : vector<1x512xbf16>, vector<512x256xbf16>, vector<1x256xf32> -> vector<1x256xf32>
      %c0_66 = arith.constant 0 : index
      %c0_67 = arith.constant 0 : index
      %108 = vector.load %arg12[%c0_66, %c0_67] : memref<1x256xf32, #tpu.memory_space<vmem>>, vector<1x256xf32>
      %109 = arith.addf %107, %108 : vector<1x256xf32>
      %cst_68 = arith.constant 0.000000e+00 : f32
      %110 = vector.broadcast %cst_68 : f32 to vector<1x256xf32>
      %111 = arith.maximumf %109, %110 : vector<1x256xf32>
      %112 = arith.truncf %111 : vector<1x256xf32> to vector<1x256xbf16>
      %c0_69 = arith.constant 0 : index
      %c0_70 = arith.constant 0 : index
      %113 = vector.load %arg13[%c0_69, %c0_70] : memref<256x128xbf16, #tpu.memory_space<vmem>>, vector<256x128xbf16>
      %cst_71 = arith.constant dense<0.000000e+00> : vector<1x128xf32>
      %114 = tpu.matmul %112, %113, %cst_71 {dimension_numbers = #tpu.dot_dimension_numbers<[1], [0], [0], [1], [0, 0, 1, 1], [], []>} : vector<1x256xbf16>, vector<256x128xbf16>, vector<1x128xf32> -> vector<1x128xf32>
      %c0_72 = arith.constant 0 : index
      %c0_73 = arith.constant 0 : index
      %115 = vector.load %arg14[%c0_72, %c0_73] : memref<1x128xf32, #tpu.memory_space<vmem>>, vector<1x128xf32>
      %116 = arith.addf %114, %115 : vector<1x128xf32>
      %c0_74 = arith.constant 0 : index
      %c0_75 = arith.constant 0 : index
      %c0_76 = arith.constant 0 : index
      %117 = vector.load %arg15[%c0_74, %c0_75, %c0_76] : memref<1x1x128xf32, #tpu.memory_space<vmem>>, vector<1x1x128xf32>
      %118 = vector.shape_cast %117 : vector<1x1x128xf32> to vector<1x128xf32>
      %119 = vector.shape_cast %116 : vector<1x128xf32> to vector<1x1x128xf32>
      tpu.vector_store %arg15[%c0_74, %c0_75, %c0_76], %119 {strides = array<i32>} : memref<1x1x128xf32, #tpu.memory_space<vmem>>, vector<1x1x128xf32>,
    } else {
    }
    return
  }
  func.func @transform_0(%arg0: i32, %arg1: i32) -> (i32, i32, i32) {
    %c0_i32 = arith.constant 0 : i32
    %c0_i32_0 = arith.constant 0 : i32
    return %arg0, %c0_i32, %arg1 : i32, i32, i32
  }
  func.func @transform_1(%arg0: i32, %arg1: i32) -> (i32, i32) {
    %c0_i32 = arith.constant 0 : i32
    %c0_i32_0 = arith.constant 0 : i32
    %c0_i32_1 = arith.constant 0 : i32
    return %c0_i32, %c0_i32_0 : i32, i32
  }
  func.func @transform_2(%arg0: i32, %arg1: i32) -> (i32, i32) {
    %c0_i32 = arith.constant 0 : i32
    %c0_i32_0 = arith.constant 0 : i32
    %c0_i32_1 = arith.constant 0 : i32
    return %c0_i32, %c0_i32_0 : i32, i32
  }
  func.func @transform_3(%arg0: i32, %arg1: i32) -> (i32, i32) {
    %c0_i32 = arith.constant 0 : i32
    %c0_i32_0 = arith.constant 0 : i32
    %c0_i32_1 = arith.constant 0 : i32
    return %c0_i32, %c0_i32_0 : i32, i32
  }
  func.func @transform_4(%arg0: i32, %arg1: i32) -> (i32, i32) {
    %c0_i32 = arith.constant 0 : i32
    %c0_i32_0 = arith.constant 0 : i32
    %c0_i32_1 = arith.constant 0 : i32
    return %c0_i32, %c0_i32_0 : i32, i32
  }
  func.func @transform_5(%arg0: i32, %arg1: i32) -> (i32, i32) {
    %c0_i32 = arith.constant 0 : i32
    %c0_i32_0 = arith.constant 0 : i32
    %c0_i32_1 = arith.constant 0 : i32
    return %c0_i32, %c0_i32_0 : i32, i32
  }
  func.func @transform_6(%arg0: i32, %arg1: i32) -> (i32, i32) {
    %c0_i32 = arith.constant 0 : i32
    %c0_i32_0 = arith.constant 0 : i32
    %c0_i32_1 = arith.constant 0 : i32
    return %c0_i32, %c0_i32_0 : i32, i32
  }
  func.func @transform_7(%arg0: i32, %arg1: i32) -> (i32, i32) {
    %c0_i32 = arith.constant 0 : i32
    %c0_i32_0 = arith.constant 0 : i32
    %c0_i32_1 = arith.constant 0 : i32
    return %c0_i32, %c0_i32_0 : i32, i32
  }
  func.func @transform_8(%arg0: i32, %arg1: i32) -> (i32, i32) {
    %c0_i32 = arith.constant 0 : i32
    %c0_i32_0 = arith.constant 0 : i32
    %c0_i32_1 = arith.constant 0 : i32
    return %c0_i32, %c0_i32_0 : i32, i32
  }
  func.func @transform_9(%arg0: i32, %arg1: i32) -> (i32, i32) {
    %c0_i32 = arith.constant 0 : i32
    %c0_i32_0 = arith.constant 0 : i32
    %c0_i32_1 = arith.constant 0 : i32
    return %c0_i32, %c0_i32_0 : i32, i32
  }
  func.func @transform_10(%arg0: i32, %arg1: i32) -> (i32, i32) {
    %c0_i32 = arith.constant 0 : i32
    %c0_i32_0 = arith.constant 0 : i32
    %c0_i32_1 = arith.constant 0 : i32
    return %c0_i32, %c0_i32_0 : i32, i32
  }
  func.func @transform_11(%arg0: i32, %arg1: i32) -> (i32, i32) {
    %c0_i32 = arith.constant 0 : i32
    %c0_i32_0 = arith.constant 0 : i32
    %c0_i32_1 = arith.constant 0 : i32
    return %c0_i32, %c0_i32_0 : i32, i32
  }
  func.func @transform_12(%arg0: i32, %arg1: i32) -> (i32, i32) {
    %c0_i32 = arith.constant 0 : i32
    %c0_i32_0 = arith.constant 0 : i32
    %c0_i32_1 = arith.constant 0 : i32
    return %c0_i32, %c0_i32_0 : i32, i32
  }
  func.func @transform_13(%arg0: i32, %arg1: i32) -> (i32, i32, i32) {
    %c0_i32 = arith.constant 0 : i32
    %c0_i32_0 = arith.constant 0 : i32
    %c0_i32_1 = arith.constant 0 : i32
    return %arg0, %c0_i32, %c0_i32_0 : i32, i32, i32
  }
}

</mosaic_0001>

<llo_original>
// kernel: stn3d_forward.1
$region0: #{stn3d_forward.1}
  #allocation0 [shape = 'u32[]', space=smem, size = 0x4, offset = 0x4, fixed_abs, tag = 'smem constant byte address 0x4 - core index']
  #allocation1 [shape = 'u32[144,128]{1,0:T(1,128)}', space=vmem, size = 0x12000, scoped, tag = 'internal scratch']
  #allocation2 [shape = 'f32[1,1024]{1,0:T(1,128)}', space=vmem, size = 0x1000, scoped, tag = 'scratch operand']
  %s0 = inlined_call_operand.vmem [shape: f32[2,3,640], index: 0, kind: input, shape index: {}]
  %s1 = inlined_call_operand.vmem [shape: f32[64,3], index: 1, kind: input, shape index: {}]
  %s2 = inlined_call_operand.vmem [shape: f32[64,1], index: 2, kind: input, shape index: {}]
  %s3 = inlined_call_operand.vmem [shape: bf16[128,64], index: 3, kind: input, shape index: {}]
  %s4 = inlined_call_operand.vmem [shape: f32[128,1], index: 4, kind: input, shape index: {}]
  %s5 = inlined_call_operand.hbm [shape: bf16[128,1024], index: 5, kind: input, shape index: {}]
  %s6 = inlined_call_operand.vmem [shape: f32[1,1024], index: 6, kind: input, shape index: {}]
  %s7 = inlined_call_operand.hbm [shape: bf16[1024,512], index: 7, kind: input, shape index: {}]
  %s8 = inlined_call_operand.vmem [shape: f32[1,512], index: 8, kind: input, shape index: {}]
  %s9 = inlined_call_operand.hbm [shape: bf16[512,256], index: 9, kind: input, shape index: {}]
  %s10 = inlined_call_operand.vmem [shape: f32[1,256], index: 10, kind: input, shape index: {}]
  %s11 = inlined_call_operand.vmem [shape: bf16[256,128], index: 11, kind: input, shape index: {}]
  %s12 = inlined_call_operand.vmem [shape: f32[1,128], index: 12, kind: input, shape index: {}]
  %s13 = inlined_call_operand.vmem [shape: f32[2,1,128], index: 13, kind: output, shape index: {}]
  %s14 = sld [smem:[#allocation0]]
  $region105: #{stn3d_forward.1} parent=0
    _
  %s16 = ssub.s32 1, %s14
  %s17 = scalar_select 0, %s16, %s14
  $region1: #{stn3d_forward.1} parent=0
    #allocation3 [shape = 'u8[262144]{0}', space=vmem, size = 0x40000, scoped, tag = 'input window, operand 5, single buffered']
    #allocation4 [shape = 's32[2]{0}', space=sflag, size = 0x8, scoped, tag = 'scoped memory for stn3d_forward.1']
    #allocation5 [shape = 'u8[1048576]{0}', space=vmem, size = 0x100000, scoped, tag = 'input window, operand 7, single buffered']
    #allocation6 [shape = 's32[1]{0}', space=sflag, size = 0x4, scoped, tag = 'scoped memory for stn3d_forward.1']
    #allocation7 [shape = 'u8[262144]{0}', space=vmem, size = 0x40000, scoped, tag = 'input window, operand 9, single buffered']
    %18 = vsyncpa [#allocation4], 0
    %19 = vsyncpa [#allocation6], 0
    loop: start=0, step=1, limit=6
    $region2: #{stn3d_forward.1} parent=1 // loop_pre_header
      _
    $region3: #{stn3d_forward.1} parent=1 // loop_header
      %s21 = sphi 0, %s25
      %p22 = scmp.ge.s32.totalorder %s21, 6
      %s28 = sphi 0, %s40
      %s29 = sphi 0, %s36
      %s30 = sphi 0, %s28
      %s31 = sphi 0, %s29
      %s32 = sphi 0, %s30
      %s33 = sphi 0, %s31
      %s45 = sphi 0, %s47
      %s48 = sphi 0, %s45
      %s49 = sphi 0, %s48
      %s65 = sphi 0, %s49
      %s69 = sphi 0, %s69
      %s71 = sphi 0, %s69
      %s72 = sphi 0, %s71
      %s86 = sphi 0, %s72
      %s90 = sphi 0, %s90
      %s92 = sphi 0, %s90
      %s93 = sphi 0, %s92
      %s107 = sphi 0, %s93
      %s111 = sphi 0, %s111
      %s113 = sphi 0, %s111
      %s114 = sphi 0, %s113
      %s128 = sphi 0, %s114
      %s132 = sphi 0, %s132
      %s134 = sphi 0, %s132
      %s135 = sphi 0, %s134
      %s149 = sphi 0, %s135
      %s153 = sphi 0, %s153
      %s155 = sphi 0, %s153
      %s156 = sphi 0, %s155
      %s170 = sphi 0, %s156
      %s174 = sphi 0, %s174
      %s176 = sphi 0, %s174
      %s177 = sphi 0, %s176
      %s191 = sphi 0, %s177
      %s195 = sphi 0, %s195
      %s197 = sphi 0, %s195
      %s198 = sphi 0, %s197
      %s212 = sphi 0, %s198
      %s216 = sphi 0, %s216
      %s218 = sphi 0, %s216
      %s219 = sphi 0, %s218
      %s233 = sphi 0, %s219
      %s237 = sphi 0, %s237
      %s239 = sphi 0, %s237
      %s240 = sphi 0, %s239
      %s254 = sphi 0, %s240
      %s258 = sphi 0, %s258
      %s260 = sphi 0, %s258
      %s261 = sphi 0, %s260
      %s275 = sphi 0, %s261
      %s279 = sphi 0, %s279
      %s281 = sphi 0, %s279
      %s282 = sphi 0, %s281
      %s296 = sphi 0, %s282
      %s300 = sphi 0, %s300
      %s302 = sphi 0, %s300
      %s303 = sphi 0, %s302
      %s317 = sphi 0, %s303
      %s323 = sphi 0, %s325
      %s326 = sphi 0, %s323
      %s327 = sphi 0, %s326
      %s343 = sphi 0, %s327
    $region4: #{stn3d_forward.1} parent=1 // loop_header_branch
      %24 = sbr.rel (%p22) target = $region8
    $region5: #{stn3d_forward.1} parent=1 // loop_body
      %s26 = ssub.s32 %s21, 1
      %s27 = ssub.s32 %s21, 2
      %s34 = sadd.s32 1, %s29
      %p35 = scmp.ge.s32.totalorder %s34, 2
      %s36 = scalar_select %p35, 0, %s34
      %s37 = sadd.s32 1, %s28
      %s38 = scalar_select %p35, %s37, %s28
      %p39 = scmp.ge.s32.totalorder %s38, 2
      %s40 = scalar_select %p39, 0, %s38
      %s41 = ssub.s32 %s28, %s40
      %s42 = ssub.s32 %s29, %s36
      %s43 = sor.u32 %s41, %s42
      %p44 = scmp.eq.s32.totalorder %s43, 0
      %s46 = sadd.s32 %s45, 1
      %s47 = scalar_select %p44, %s45, %s46
      %p50 = pneg %p44
      %p51 = scmp.eq.s32.totalorder %s21, 3
      %p52 = por %p50, %p51
      %p53 = scmp.ne.s32.totalorder %s45, %s48
      %p54 = scmp.eq.s32.totalorder %s21, 0
      %p55 = por %p53, %p54
      %p56 = scmp.ne.s32.totalorder %s45, %s48
      %p57 = scmp.eq.s32.totalorder %s26, 3
      %p58 = por %p56, %p57
      %p59 = scmp.ne.s32.totalorder %s48, %s49
      %p60 = scmp.eq.s32.totalorder %s26, 0
      %p61 = por %p59, %p60
      %p62 = scmp.ne.s32.totalorder %s48, %s49
      %p63 = scmp.eq.s32.totalorder %s27, 3
      %p64 = por %p62, %p63
      %p66 = scmp.ne.s32.totalorder %s49, %s65
      %p67 = scmp.eq.s32.totalorder %s27, 0
      %p68 = por %p66, %p67
      %s70 = sadd.s32 %s69, 1
      %p73 = scmp.eq.s32.totalorder %s21, 3
      %p74 = scmp.ne.s32.totalorder %s69, %s71
      %p75 = scmp.eq.s32.totalorder %s21, 0
      %p76 = por %p74, %p75
      %p77 = scmp.ne.s32.totalorder %s69, %s71
      %p78 = scmp.eq.s32.totalorder %s26, 3
      %p79 = por %p77, %p78
      %p80 = scmp.ne.s32.totalorder %s71, %s72
      %p81 = scmp.eq.s32.totalorder %s26, 0
      %p82 = por %p80, %p81
      %p83 = scmp.ne.s32.totalorder %s71, %s72
      %p84 = scmp.eq.s32.totalorder %s27, 3
      %p85 = por %p83, %p84
      %p87 = scmp.ne.s32.totalorder %s72, %s86
      %p88 = scmp.eq.s32.totalorder %s27, 0
      %p89 = por %p87, %p88
      %s91 = sadd.s32 %s90, 1
      %p94 = scmp.eq.s32.totalorder %s21, 3
      %p95 = scmp.ne.s32.totalorder %s90, %s92
      %p96 = scmp.eq.s32.totalorder %s21, 0
      %p97 = por %p95, %p96
      %p98 = scmp.ne.s32.totalorder %s90, %s92
      %p99 = scmp.eq.s32.totalorder %s26, 3
      %p100 = por %p98, %p99
      %p101 = scmp.ne.s32.totalorder %s92, %s93
      %p102 = scmp.eq.s32.totalorder %s26, 0
      %p103 = por %p101, %p102
      %p104 = scmp.ne.s32.totalorder %s92, %s93
      %p105 = scmp.eq.s32.totalorder %s27, 3
      %p106 = por %p104, %p105
      %p108 = scmp.ne.s32.totalorder %s93, %s107
      %p109 = scmp.eq.s32.totalorder %s27, 0
      %p110 = por %p108, %p109
      %s112 = sadd.s32 %s111, 1
      %p115 = scmp.eq.s32.totalorder %s21, 3
      %p116 = scmp.ne.s32.totalorder %s111, %s113
      %p117 = scmp.eq.s32.totalorder %s21, 0
      %p118 = por %p116, %p117
      %p119 = scmp.ne.s32.totalorder %s111, %s113
      %p120 = scmp.eq.s32.totalorder %s26, 3
      %p121 = por %p119, %p120
      %p122 = scmp.ne.s32.totalorder %s113, %s114
      %p123 = scmp.eq.s32.totalorder %s26, 0
      %p124 = por %p122, %p123
      %p125 = scmp.ne.s32.totalorder %s113, %s114
      %p126 = scmp.eq.s32.totalorder %s27, 3
      %p127 = por %p125, %p126
      %p129 = scmp.ne.s32.totalorder %s114, %s128
      %p130 = scmp.eq.s32.totalorder %s27, 0
      %p131 = por %p129, %p130
      %s133 = sadd.s32 %s132, 1
      %p136 = scmp.eq.s32.totalorder %s21, 3
      %p137 = scmp.ne.s32.totalorder %s132, %s134
      %p138 = scmp.eq.s32.totalorder %s21, 0
      %p139 = por %p137, %p138
      %p140 = scmp.ne.s32.totalorder %s132, %s134
      %p141 = scmp.eq.s32.totalorder %s26, 3
      %p142 = por %p140, %p141
      %p143 = scmp.ne.s32.totalorder %s134, %s135
      %p144 = scmp.eq.s32.totalorder %s26, 0
      %p145 = por %p143, %p144
      %p146 = scmp.ne.s32.totalorder %s134, %s135
      %p147 = scmp.eq.s32.totalorder %s27, 3
      %p148 = por %p146, %p147
      %p150 = scmp.ne.s32.totalorder %s135, %s149
      %p151 = scmp.eq.s32.totalorder %s27, 0
      %p152 = por %p150, %p151
      %s154 = sadd.s32 %s153, 1
      %p157 = scmp.eq.s32.totalorder %s21, 3
      %p158 = scmp.ne.s32.totalorder %s153, %s155
      %p159 = scmp.eq.s32.totalorder %s21, 0
      %p160 = por %p158, %p159
      %p161 = scmp.ne.s32.totalorder %s153, %s155
      %p162 = scmp.eq.s32.totalorder %s26, 3
      %p163 = por %p161, %p162
      %p164 = scmp.ne.s32.totalorder %s155, %s156
      %p165 = scmp.eq.s32.totalorder %s26, 0
      %p166 = por %p164, %p165
      %p167 = scmp.ne.s32.totalorder %s155, %s156
      %p168 = scmp.eq.s32.totalorder %s27, 3
      %p169 = por %p167, %p168
      %p171 = scmp.ne.s32.totalorder %s156, %s170
      %p172 = scmp.eq.s32.totalorder %s27, 0
      %p173 = por %p171, %p172
      %s175 = sadd.s32 %s174, 1
      %p178 = scmp.eq.s32.totalorder %s21, 3
      %p179 = scmp.ne.s32.totalorder %s174, %s176
      %p180 = scmp.eq.s32.totalorder %s21, 0
      %p181 = por %p179, %p180
      %p182 = scmp.ne.s32.totalorder %s174, %s176
      %p183 = scmp.eq.s32.totalorder %s26, 3
      %p184 = por %p182, %p183
      %p185 = scmp.ne.s32.totalorder %s176, %s177
      %p186 = scmp.eq.s32.totalorder %s26, 0
      %p187 = por %p185, %p186
      %p188 = scmp.ne.s32.totalorder %s176, %s177
      %p189 = scmp.eq.s32.totalorder %s27, 3
      %p190 = por %p188, %p189
      %p192 = scmp.ne.s32.totalorder %s177, %s191
      %p193 = scmp.eq.s32.totalorder %s27, 0
      %p194 = por %p192, %p193
      %s196 = sadd.s32 %s195, 1
      %p199 = scmp.eq.s32.totalorder %s21, 3
      %p200 = scmp.ne.s32.totalorder %s195, %s197
      %p201 = scmp.eq.s32.totalorder %s21, 0
      %p202 = por %p200, %p201
      %p203 = scmp.ne.s32.totalorder %s195, %s197
      %p204 = scmp.eq.s32.totalorder %s26, 3
      %p205 = por %p203, %p204
      %p206 = scmp.ne.s32.totalorder %s197, %s198
      %p207 = scmp.eq.s32.totalorder %s26, 0
      %p208 = por %p206, %p207
      %p209 = scmp.ne.s32.totalorder %s197, %s198
      %p210 = scmp.eq.s32.totalorder %s27, 3
      %p211 = por %p209, %p210
      %p213 = scmp.ne.s32.totalorder %s198, %s212
      %p214 = scmp.eq.s32.totalorder %s27, 0
      %p215 = por %p213, %p214
      %s217 = sadd.s32 %s216, 1
      %p220 = scmp.eq.s32.totalorder %s21, 3
      %p221 = scmp.ne.s32.totalorder %s216, %s218
      %p222 = scmp.eq.s32.totalorder %s21, 0
      %p223 = por %p221, %p222
      %p224 = scmp.ne.s32.totalorder %s216, %s218
      %p225 = scmp.eq.s32.totalorder %s26, 3
      %p226 = por %p224, %p225
      %p227 = scmp.ne.s32.totalorder %s218, %s219
      %p228 = scmp.eq.s32.totalorder %s26, 0
      %p229 = por %p227, %p228
      %p230 = scmp.ne.s32.totalorder %s218, %s219
      %p231 = scmp.eq.s32.totalorder %s27, 3
      %p232 = por %p230, %p231
      %p234 = scmp.ne.s32.totalorder %s219, %s233
      %p235 = scmp.eq.s32.totalorder %s27, 0
      %p236 = por %p234, %p235
      %s238 = sadd.s32 %s237, 1
      %p241 = scmp.eq.s32.totalorder %s21, 3
      %p242 = scmp.ne.s32.totalorder %s237, %s239
      %p243 = scmp.eq.s32.totalorder %s21, 0
      %p244 = por %p242, %p243
      %p245 = scmp.ne.s32.totalorder %s237, %s239
      %p246 = scmp.eq.s32.totalorder %s26, 3
      %p247 = por %p245, %p246
      %p248 = scmp.ne.s32.totalorder %s239, %s240
      %p249 = scmp.eq.s32.totalorder %s26, 0
      %p250 = por %p248, %p249
      %p251 = scmp.ne.s32.totalorder %s239, %s240
      %p252 = scmp.eq.s32.totalorder %s27, 3
      %p253 = por %p251, %p252
      %p255 = scmp.ne.s32.totalorder %s240, %s254
      %p256 = scmp.eq.s32.totalorder %s27, 0
      %p257 = por %p255, %p256
      %s259 = sadd.s32 %s258, 1
      %p262 = scmp.eq.s32.totalorder %s21, 3
      %p263 = scmp.ne.s32.totalorder %s258, %s260
      %p264 = scmp.eq.s32.totalorder %s21, 0
      %p265 = por %p263, %p264
      %p266 = scmp.ne.s32.totalorder %s258, %s260
      %p267 = scmp.eq.s32.totalorder %s26, 3
      %p268 = por %p266, %p267
      %p269 = scmp.ne.s32.totalorder %s260, %s261
      %p270 = scmp.eq.s32.totalorder %s26, 0
      %p271 = por %p269, %p270
      %p272 = scmp.ne.s32.totalorder %s260, %s261
      %p273 = scmp.eq.s32.totalorder %s27, 3
      %p274 = por %p272, %p273
      %p276 = scmp.ne.s32.totalorder %s261, %s275
      %p277 = scmp.eq.s32.totalorder %s27, 0
      %p278 = por %p276, %p277
      %s280 = sadd.s32 %s279, 1
      %p283 = scmp.eq.s32.totalorder %s21, 3
      %p284 = scmp.ne.s32.totalorder %s279, %s281
      %p285 = scmp.eq.s32.totalorder %s21, 0
      %p286 = por %p284, %p285
      %p287 = scmp.ne.s32.totalorder %s279, %s281
      %p288 = scmp.eq.s32.totalorder %s26, 3
      %p289 = por %p287, %p288
      %p290 = scmp.ne.s32.totalorder %s281, %s282
      %p291 = scmp.eq.s32.totalorder %s26, 0
      %p292 = por %p290, %p291
      %p293 = scmp.ne.s32.totalorder %s281, %s282
      %p294 = scmp.eq.s32.totalorder %s27, 3
      %p295 = por %p293, %p294
      %p297 = scmp.ne.s32.totalorder %s282, %s296
      %p298 = scmp.eq.s32.totalorder %s27, 0
      %p299 = por %p297, %p298
      %s301 = sadd.s32 %s300, 1
      %p304 = scmp.eq.s32.totalorder %s21, 3
      %p305 = scmp.ne.s32.totalorder %s300, %s302
      %p306 = scmp.eq.s32.totalorder %s21, 0
      %p307 = por %p305, %p306
      %p308 = scmp.ne.s32.totalorder %s300, %s302
      %p309 = scmp.eq.s32.totalorder %s26, 3
      %p310 = por %p308, %p309
      %p311 = scmp.ne.s32.totalorder %s302, %s303
      %p312 = scmp.eq.s32.totalorder %s26, 0
      %p313 = por %p311, %p312
      %p314 = scmp.ne.s32.totalorder %s302, %s303
      %p315 = scmp.eq.s32.totalorder %s27, 3
      %p316 = por %p314, %p315
      %p318 = scmp.ne.s32.totalorder %s303, %s317
      %p319 = scmp.eq.s32.totalorder %s27, 0
      %p320 = por %p318, %p319
      %s321 = ssub.s32 %s28, %s40
      %p322 = scmp.eq.s32.totalorder %s321, 0
      %s324 = sadd.s32 %s323, 1
      %s325 = scalar_select %p322, %s323, %s324
      %p328 = pneg %p322
      %p329 = scmp.eq.s32.totalorder %s21, 3
      %p330 = por %p328, %p329
      %p331 = scmp.ne.s32.totalorder %s323, %s326
      %p332 = scmp.eq.s32.totalorder %s21, 0
      %p333 = por %p331, %p332
      %p334 = scmp.ne.s32.totalorder %s323, %s326
      %p335 = scmp.eq.s32.totalorder %s26, 3
      %p336 = por %p334, %p335
      %p337 = scmp.ne.s32.totalorder %s326, %s327
      %p338 = scmp.eq.s32.totalorder %s26, 0
      %p339 = por %p337, %p338
      %p340 = scmp.ne.s32.totalorder %s326, %s327
      %p341 = scmp.eq.s32.totalorder %s27, 3
      %p342 = por %p340, %p341
      %p344 = scmp.ne.s32.totalorder %s327, %s343
      %p345 = scmp.eq.s32.totalorder %s27, 0
      %p346 = por %p344, %p345
      %p347 = scmp.le.s32.totalorder 1, %s21
      %p348 = scmp.lt.s32.totalorder %s21, 5
      %p349 = pnand %p347, %p348
      %p350 = pneg %p349
      // Predicated region
      $region9: #{stn3d_forward.1} parent=5 // pred_check
        _
      $region10: #{stn3d_forward.1} parent=5 // pred_check_branch
        %352 = sbr.rel (%p349) target = $region12
      $region11: #{stn3d_forward.1} parent=5 // pred_region
        %s353 = ssub.s32 %s21, 1
        // Predicated region
        $region13: #{stn3d_forward.1} parent=11 // pred_check
          %p354 = pneg %p82
        $region14: #{stn3d_forward.1} parent=11 // pred_check_branch
          %356 = sbr.rel (%p354) target = $region16
        $region15: #{stn3d_forward.1} parent=11 // pred_region
          _
        $region16: #{stn3d_forward.1} parent=11 // pred_fallthru
          _
        // Predicated region
        $region17: #{stn3d_forward.1} parent=11 // pred_check
          %p357 = pneg %p103
        $region18: #{stn3d_forward.1} parent=11 // pred_check_branch
          %359 = sbr.rel (%p357) target = $region20
        $region19: #{stn3d_forward.1} parent=11 // pred_region
          _
        $region20: #{stn3d_forward.1} parent=11 // pred_fallthru
          _
        // Predicated region
        $region21: #{stn3d_forward.1} parent=11 // pred_check
          %p360 = pneg %p124
        $region22: #{stn3d_forward.1} parent=11 // pred_check_branch
          %362 = sbr.rel (%p360) target = $region24
        $region23: #{stn3d_forward.1} parent=11 // pred_region
          _
        $region24: #{stn3d_forward.1} parent=11 // pred_fallthru
          _
        // Predicated region
        $region25: #{stn3d_forward.1} parent=11 // pred_check
          %p363 = pneg %p145
        $region26: #{stn3d_forward.1} parent=11 // pred_check_branch
          %365 = sbr.rel (%p363) target = $region28
        $region27: #{stn3d_forward.1} parent=11 // pred_region
          _
        $region28: #{stn3d_forward.1} parent=11 // pred_fallthru
          _
        // Predicated region
        $region29: #{stn3d_forward.1} parent=11 // pred_check
          %p366 = pneg %p166
        $region30: #{stn3d_forward.1} parent=11 // pred_check_branch
          %368 = sbr.rel (%p366) target = $region32
        $region31: #{stn3d_forward.1} parent=11 // pred_region
          %s370 = ssub.s32 8192, 8192
          %371 = vsyncadd [#allocation4], %s370
          %s372 = sshll.u32 [#allocation3], 4
          %s373 = int_to_ptr.vmem [resolvable:$true] %s372
          %378 = dma.hbm_to_vmem [thread:$0]  %s5, 8192, %s373, [#allocation4], 512, 512, 32
        $region32: #{stn3d_forward.1} parent=11 // pred_fallthru
          _
        // Predicated region
        $region33: #{stn3d_forward.1} parent=11 // pred_check
          %p379 = pneg %p187
        $region34: #{stn3d_forward.1} parent=11 // pred_check_branch
          %381 = sbr.rel (%p379) target = $region36
        $region35: #{stn3d_forward.1} parent=11 // pred_region
          _
        $region36: #{stn3d_forward.1} parent=11 // pred_fallthru
          _
        // Predicated region
        $region37: #{stn3d_forward.1} parent=11 // pred_check
          %p382 = pneg %p208
        $region38: #{stn3d_forward.1} parent=11 // pred_check_branch
          %384 = sbr.rel (%p382) target = $region40
        $region39: #{stn3d_forward.1} parent=11 // pred_region
          %s386 = ssub.s32 32768, 32768
          %387 = vsyncadd [#allocation6], %s386
          %s388 = sshll.u32 [#allocation5], 4
          %s389 = int_to_ptr.vmem [resolvable:$true] %s388
          %394 = dma.hbm_to_vmem [thread:$0]  %s7, 32768, %s389, [#allocation6], 256, 256, 16
        $region40: #{stn3d_forward.1} parent=11 // pred_fallthru
          _
        // Predicated region
        $region41: #{stn3d_forward.1} parent=11 // pred_check
          %p395 = pneg %p229
        $region42: #{stn3d_forward.1} parent=11 // pred_check_branch
          %397 = sbr.rel (%p395) target = $region44
        $region43: #{stn3d_forward.1} parent=11 // pred_region
          _
        $region44: #{stn3d_forward.1} parent=11 // pred_fallthru
          _
        // Predicated region
        $region45: #{stn3d_forward.1} parent=11 // pred_check
          %p398 = pneg %p250
        $region46: #{stn3d_forward.1} parent=11 // pred_check_branch
          %400 = sbr.rel (%p398) target = $region48
        $region47: #{stn3d_forward.1} parent=11 // pred_region
          %s402 = ssub.s32 8192, 8192
          %403 = vsyncadd [#allocation6], %s402
          %s404 = sshll.u32 [#allocation7], 4
          %s405 = int_to_ptr.vmem [resolvable:$true] %s404
          %410 = dma.hbm_to_vmem [thread:$0]  %s9, 8192, %s405, [#allocation6], 128, 128, 8
        $region48: #{stn3d_forward.1} parent=11 // pred_fallthru
          _
        // Predicated region
        $region49: #{stn3d_forward.1} parent=11 // pred_check
          %p411 = pneg %p271
        $region50: #{stn3d_forward.1} parent=11 // pred_check_branch
          %413 = sbr.rel (%p411) target = $region52
        $region51: #{stn3d_forward.1} parent=11 // pred_region
          _
        $region52: #{stn3d_forward.1} parent=11 // pred_fallthru
          _
        // Predicated region
        $region53: #{stn3d_forward.1} parent=11 // pred_check
          %p414 = pneg %p292
        $region54: #{stn3d_forward.1} parent=11 // pred_check_branch
          %416 = sbr.rel (%p414) target = $region56
        $region55: #{stn3d_forward.1} parent=11 // pred_region
          _
        $region56: #{stn3d_forward.1} parent=11 // pred_fallthru
          _
        // Predicated region
        $region57: #{stn3d_forward.1} parent=11 // pred_check
          %p417 = pneg %p313
        $region58: #{stn3d_forward.1} parent=11 // pred_check_branch
          %419 = sbr.rel (%p417) target = $region60
        $region59: #{stn3d_forward.1} parent=11 // pred_region
          _
        $region60: #{stn3d_forward.1} parent=11 // pred_fallthru
          _
      $region12: #{stn3d_forward.1} parent=5 // pred_fallthru
        _
      %p420 = scmp.lt.s32.totalorder %s21, 4
      // Predicated region
      $region61: #{stn3d_forward.1} parent=5 // pred_check
        %p421 = pneg %p420
      $region62: #{stn3d_forward.1} parent=5 // pred_check_branch
        %423 = sbr.rel (%p421) target = $region64
      $region63: #{stn3d_forward.1} parent=5 // pred_region
        // Predicated region
        $region65: #{stn3d_forward.1} parent=63 // pred_check
          %p424 = pneg %p55
        $region66: #{stn3d_forward.1} parent=63 // pred_check_branch
          %426 = sbr.rel (%p424) target = $region68
        $region67: #{stn3d_forward.1} parent=63 // pred_region
          %s427 = smul.u32 4, %s29
          %s428 = ssub.s32 5, %s427
          %p429 = scmp.lt.s32.totalorder %s428, 4
          %s430 = scalar_select %p429, %s428, 4
          %s431 = smul.u32 64, %s430
          %p432 = scmp.lt.s32.totalorder %s28, 1
          %s433 = scalar_select %p432, %s28, 1
          %p434 = scmp.lt.s32.totalorder %s427, 4
          %s435 = scalar_select %p434, %s427, 4
          %s436 = smul.addr %s433, 5
          %s437 = sadd.s32 %s435, %s436
          %s438 = smul.addr %s437, 4
          %s439 = scalar_lea.vmem %s0, %s438
          %s440 = smul.u32 4, %s29
          %s441 = ssub.s32 5, %s440
          %p442 = scmp.lt.s32.totalorder %s441, 4
          %s443 = scalar_select %p442, %s441, 4
          %s444 = smul.u32 64, %s443
        $region68: #{stn3d_forward.1} parent=63 // pred_fallthru
          _
      $region64: #{stn3d_forward.1} parent=5 // pred_fallthru
        _
      %p445 = scmp.le.s32.totalorder 1, %s21
      %p446 = scmp.lt.s32.totalorder %s21, 5
      %p447 = pnand %p445, %p446
      %p448 = pneg %p447
      // Predicated region
      $region69: #{stn3d_forward.1} parent=5 // pred_check
        _
      $region70: #{stn3d_forward.1} parent=5 // pred_check_branch
        %450 = sbr.rel (%p447) target = $region72
      $region71: #{stn3d_forward.1} parent=5 // pred_region
        %s451 = ssub.s32 %s21, 1
        // Predicated region
        $region73: #{stn3d_forward.1} parent=71 // pred_check
          %p452 = pneg %p166
        $region74: #{stn3d_forward.1} parent=71 // pred_check_branch
          %454 = sbr.rel (%p452) target = $region76
        $region75: #{stn3d_forward.1} parent=71 // pred_region
          %455 = dma.done [#allocation4], 8192
        $region76: #{stn3d_forward.1} parent=71 // pred_fallthru
          _
        // Predicated region
        $region77: #{stn3d_forward.1} parent=71 // pred_check
          %p456 = pneg %p208
        $region78: #{stn3d_forward.1} parent=71 // pred_check_branch
          %458 = sbr.rel (%p456) target = $region80
        $region79: #{stn3d_forward.1} parent=71 // pred_region
          %459 = dma.done [#allocation6], 32768
        $region80: #{stn3d_forward.1} parent=71 // pred_fallthru
          _
        // Predicated region
        $region81: #{stn3d_forward.1} parent=71 // pred_check
          %p460 = pneg %p250
        $region82: #{stn3d_forward.1} parent=71 // pred_check_branch
          %462 = sbr.rel (%p460) target = $region84
        $region83: #{stn3d_forward.1} parent=71 // pred_region
          %463 = dma.done [#allocation6], 8192
        $region84: #{stn3d_forward.1} parent=71 // pred_fallthru
          _
        %s464 = smul.u32 4, %s31
        %s465 = ssub.s32 5, %s464
        %p466 = scmp.lt.s32.totalorder %s465, 4
        %s467 = scalar_select %p466, %s465, 4
        %s468 = smul.u32 64, %s467
        %p469 = scmp.lt.s32.totalorder %s30, 1
        %s470 = scalar_select %p469, %s30, 1
        %p471 = scmp.lt.s32.totalorder %s464, 4
        %s472 = scalar_select %p471, %s464, 4
        %s473 = smul.addr %s470, 5
        %s474 = sadd.s32 %s472, %s473
        %s475 = smul.addr %s474, 4
        %s476 = scalar_lea.vmem %s0, %s475
        %p477 = pneg %p61
        %p478 = pneg %p58
        %p479 = pneg %p82
        %p480 = pneg %p79
        %p481 = pneg %p103
        %p482 = pneg %p100
        %p483 = pneg %p124
        %p484 = pneg %p121
        %p485 = pneg %p145
        %p486 = pneg %p142
        %p487 = pneg %p166
        %p488 = pneg %p163
        %p489 = pneg %p187
        %p490 = pneg %p184
        %p491 = pneg %p208
        %p492 = pneg %p205
        %p493 = pneg %p229
        %p494 = pneg %p226
        %p495 = pneg %p250
        %p496 = pneg %p247
        %p497 = pneg %p271
        %p498 = pneg %p268
        %p499 = pneg %p292
        %p500 = pneg %p289
        %p501 = pneg %p313
        %p502 = pneg %p310
        %p503 = pneg %p339
        %p504 = pneg %p336
        %p505 = scmp.lt.s32.totalorder %s30, 1
        %s506 = scalar_select %p505, %s30, 1
        %s507 = scalar_lea.vmem %s13, %s506
        %s508 = smul.u32 4, %s31
        %s509 = ssub.s32 5, %s508
        %p510 = scmp.lt.s32.totalorder %s509, 4
        %s511 = scalar_select %p510, %s509, 4
        %s512 = smul.u32 64, %s511
        %p513 = scmp.lt.s32.totalorder %s30, 1
        %s514 = scalar_select %p513, %s30, 1
        %p515 = scmp.lt.s32.totalorder %s508, 4
        %s516 = scalar_select %p515, %s508, 4
        %s517 = smul.addr %s514, 5
        %s518 = sadd.s32 %s516, %s517
        %s519 = smul.addr %s518, 4
        %s520 = scalar_lea.vmem %s0, %s519
        %s521 = smul.u32 4, %s31
        %s522 = ssub.s32 5, %s521
        %p523 = scmp.lt.s32.totalorder %s522, 4
        %s524 = scalar_select %p523, %s522, 4
        %s525 = smul.u32 64, %s524
        %p526 = scmp.lt.s32.totalorder %s30, 1
        %s527 = scalar_select %p526, %s30, 1
        %s528 = scalar_lea.vmem %s13, %s527
        %p530 = scmp.eq.s32.totalorder %s31, 0
        // Predicated region
        $region85: #{stn3d_forward.1} parent=71 // pred_check
          %p531 = pneg %p530
        $region86: #{stn3d_forward.1} parent=71 // pred_check_branch
          %533 = sbr.rel (%p531) target = $region88
        $region87: #{stn3d_forward.1} parent=71 // pred_region
          %534 = vst [vmem:[#allocation2] sm:$0xff] 0.0
        $region88: #{stn3d_forward.1} parent=71 // pred_fallthru
          _
        %v535 = vld [vmem:[%s520] sm:$0x77]
        %v536 = vld [vmem:[%s520 + $0x8] sm:$0x77]
        %v537 = vld [vmem:[%s1] sm:$0xff]
        %v538 = vld [vmem:[%s1 + $0x8] sm:$0xff]
        %v539 = vld [vmem:[%s1 + $0x10] sm:$0xff]
        %v540 = vld [vmem:[%s1 + $0x18] sm:$0xff]
        %v541 = vld [vmem:[%s1 + $0x20] sm:$0xff]
        %v542 = vld [vmem:[%s1 + $0x28] sm:$0xff]
        %v543 = vld [vmem:[%s1 + $0x30] sm:$0xff]
        %v544 = vld [vmem:[%s1 + $0x38] sm:$0xff]
        %546 = vset.pattern.permute.xlu0 0
        %547 = vperm.xlu0 %546, %v537
        %v548 = vpop.permute.xlu0 %547
        %551 = vset.pattern.permute.xlu0 0
        %552 = vperm.xlu0 %551, %v538
        %v553 = vpop.permute.xlu0 %552
        %556 = vset.pattern.permute.xlu0 0
        %557 = vperm.xlu0 %556, %v539
        %v558 = vpop.permute.xlu0 %557
        %561 = vset.pattern.permute.xlu0 0
        %562 = vperm.xlu0 %561, %v540
        %v563 = vpop.permute.xlu0 %562
        %566 = vset.pattern.permute.xlu0 0
        %567 = vperm.xlu0 %566, %v541
        %v568 = vpop.permute.xlu0 %567
        %571 = vset.pattern.permute.xlu0 0
        %572 = vperm.xlu0 %571, %v542
        %v573 = vpop.permute.xlu0 %572
        %576 = vset.pattern.permute.xlu0 0
        %577 = vperm.xlu0 %576, %v543
        %v578 = vpop.permute.xlu0 %577
        %581 = vset.pattern.permute.xlu0 0
        %582 = vperm.xlu0 %581, %v544
        %v583 = vpop.permute.xlu0 %582
        %v587 = vlaneseq
        %v588 = vshrl.u32 %v587, 7
        %v589 = vsub.s32 0, %v588
        %v590 = vrot.slane %v535, %v589
        %v591 = vlaneseq
        %v592 = vshrl.u32 %v591, 7
        %v593 = vsub.s32 4, %v592
        %v594 = vrot.slane %v535, %v593
        %v595 = vlaneseq
        %v596 = vshrl.u32 %v595, 7
        %v597 = vsub.s32 0, %v596
        %v598 = vrot.slane %v536, %v597
        %v599 = vlaneseq
        %v600 = vshrl.u32 %v599, 7
        %v601 = vsub.s32 4, %v600
        %v602 = vrot.slane %v536, %v601
        %v607 = vlaneseq
        %v608 = vshrl.u32 %v607, 7
        %v609 = vsub.s32 0, %v608
        %v610 = vrot.slane %v590, %v609
        %v611 = vlaneseq
        %v612 = vshrl.u32 %v611, 7
        %v613 = vsub.s32 0, %v612
        %v614 = vrot.slane %v594, %v613
        %v615 = vlaneseq
        %v616 = vshrl.u32 %v615, 7
        %v617 = vsub.s32 0, %v616
        %v618 = vrot.slane %v598, %v617
        %v619 = vlaneseq
        %v620 = vshrl.u32 %v619, 7
        %v621 = vsub.s32 0, %v620
        %v622 = vrot.slane %v602, %v621
        %v623 = vmul.f32 %v548, %v610
        %v624 = vmul.f32 %v548, %v614
        %v625 = vmul.f32 %v548, %v618
        %v626 = vmul.f32 %v548, %v622
        %v627 = vmul.f32 %v553, %v610
        %v628 = vmul.f32 %v553, %v614
        %v629 = vmul.f32 %v553, %v618
        %v630 = vmul.f32 %v553, %v622
        %v631 = vmul.f32 %v558, %v610
        %v632 = vmul.f32 %v558, %v614
        %v633 = vmul.f32 %v558, %v618
        %v634 = vmul.f32 %v558, %v622
        %v635 = vmul.f32 %v563, %v610
        %v636 = vmul.f32 %v563, %v614
        %v637 = vmul.f32 %v563, %v618
        %v638 = vmul.f32 %v563, %v622
        %v639 = vmul.f32 %v568, %v610
        %v640 = vmul.f32 %v568, %v614
        %v641 = vmul.f32 %v568, %v618
        %v642 = vmul.f32 %v568, %v622
        %v643 = vmul.f32 %v573, %v610
        %v644 = vmul.f32 %v573, %v614
        %v645 = vmul.f32 %v573, %v618
        %v646 = vmul.f32 %v573, %v622
        %v647 = vmul.f32 %v578, %v610
        %v648 = vmul.f32 %v578, %v614
        %v649 = vmul.f32 %v578, %v618
        %v650 = vmul.f32 %v578, %v622
        %v651 = vmul.f32 %v583, %v610
        %v652 = vmul.f32 %v583, %v614
        %v653 = vmul.f32 %v583, %v618
        %v654 = vmul.f32 %v583, %v622
        %655 = vset.pattern.permute.xlu0 1
        %656 = vperm.xlu0 %655, %v537
        %v657 = vpop.permute.xlu0 %656
        %659 = vset.pattern.permute.xlu0 1
        %660 = vperm.xlu0 %659, %v538
        %v661 = vpop.permute.xlu0 %660
        %663 = vset.pattern.permute.xlu0 1
        %664 = vperm.xlu0 %663, %v539
        %v665 = vpop.permute.xlu0 %664
        %667 = vset.pattern.permute.xlu0 1
        %668 = vperm.xlu0 %667, %v540
        %v669 = vpop.permute.xlu0 %668
        %671 = vset.pattern.permute.xlu0 1
        %672 = vperm.xlu0 %671, %v541
        %v673 = vpop.permute.xlu0 %672
        %675 = vset.pattern.permute.xlu0 1
        %676 = vperm.xlu0 %675, %v542
        %v677 = vpop.permute.xlu0 %676
        %679 = vset.pattern.permute.xlu0 1
        %680 = vperm.xlu0 %679, %v543
        %v681 = vpop.permute.xlu0 %680
        %683 = vset.pattern.permute.xlu0 1
        %684 = vperm.xlu0 %683, %v544
        %v685 = vpop.permute.xlu0 %684
        %v687 = vlaneseq
        %v688 = vshrl.u32 %v687, 7
        %v689 = vsub.s32 1, %v688
        %v690 = vrot.slane %v535, %v689
        %v691 = vlaneseq
        %v692 = vshrl.u32 %v691, 7
        %v693 = vsub.s32 5, %v692
        %v694 = vrot.slane %v535, %v693
        %v695 = vlaneseq
        %v696 = vshrl.u32 %v695, 7
        %v697 = vsub.s32 1, %v696
        %v698 = vrot.slane %v536, %v697
        %v699 = vlaneseq
        %v700 = vshrl.u32 %v699, 7
        %v701 = vsub.s32 5, %v700
        %v702 = vrot.slane %v536, %v701
        %v707 = vlaneseq
        %v708 = vshrl.u32 %v707, 7
        %v709 = vsub.s32 1, %v708
        %v710 = vrot.slane %v690, %v709
        %v711 = vlaneseq
        %v712 = vshrl.u32 %v711, 7
        %v713 = vsub.s32 1, %v712
        %v714 = vrot.slane %v694, %v713
        %v715 = vlaneseq
        %v716 = vshrl.u32 %v715, 7
        %v717 = vsub.s32 1, %v716
        %v718 = vrot.slane %v698, %v717
        %v719 = vlaneseq
        %v720 = vshrl.u32 %v719, 7
        %v721 = vsub.s32 1, %v720
        %v722 = vrot.slane %v702, %v721
        %v723 = vmul.f32 %v657, %v710
        %v724 = vmul.f32 %v657, %v714
        %v725 = vmul.f32 %v657, %v718
        %v726 = vmul.f32 %v657, %v722
        %v727 = vmul.f32 %v661, %v710
        %v728 = vmul.f32 %v661, %v714
        %v729 = vmul.f32 %v661, %v718
        %v730 = vmul.f32 %v661, %v722
        %v731 = vmul.f32 %v665, %v710
        %v732 = vmul.f32 %v665, %v714
        %v733 = vmul.f32 %v665, %v718
        %v734 = vmul.f32 %v665, %v722
        %v735 = vmul.f32 %v669, %v710
        %v736 = vmul.f32 %v669, %v714
        %v737 = vmul.f32 %v669, %v718
        %v738 = vmul.f32 %v669, %v722
        %v739 = vmul.f32 %v673, %v710
        %v740 = vmul.f32 %v673, %v714
        %v741 = vmul.f32 %v673, %v718
        %v742 = vmul.f32 %v673, %v722
        %v743 = vmul.f32 %v677, %v710
        %v744 = vmul.f32 %v677, %v714
        %v745 = vmul.f32 %v677, %v718
        %v746 = vmul.f32 %v677, %v722
        %v747 = vmul.f32 %v681, %v710
        %v748 = vmul.f32 %v681, %v714
        %v749 = vmul.f32 %v681, %v718
        %v750 = vmul.f32 %v681, %v722
        %v751 = vmul.f32 %v685, %v710
        %v752 = vmul.f32 %v685, %v714
        %v753 = vmul.f32 %v685, %v718
        %v754 = vmul.f32 %v685, %v722
        %v755 = vadd.f32 %v623, %v723
        %v756 = vadd.f32 %v624, %v724
        %v757 = vadd.f32 %v625, %v725
        %v758 = vadd.f32 %v626, %v726
        %v759 = vadd.f32 %v627, %v727
        %v760 = vadd.f32 %v628, %v728
        %v761 = vadd.f32 %v629, %v729
        %v762 = vadd.f32 %v630, %v730
        %v763 = vadd.f32 %v631, %v731
        %v764 = vadd.f32 %v632, %v732
        %v765 = vadd.f32 %v633, %v733
        %v766 = vadd.f32 %v634, %v734
        %v767 = vadd.f32 %v635, %v735
        %v768 = vadd.f32 %v636, %v736
        %v769 = vadd.f32 %v637, %v737
        %v770 = vadd.f32 %v638, %v738
        %v771 = vadd.f32 %v639, %v739
        %v772 = vadd.f32 %v640, %v740
        %v773 = vadd.f32 %v641, %v741
        %v774 = vadd.f32 %v642, %v742
        %v775 = vadd.f32 %v643, %v743
        %v776 = vadd.f32 %v644, %v744
        %v777 = vadd.f32 %v645, %v745
        %v778 = vadd.f32 %v646, %v746
        %v779 = vadd.f32 %v647, %v747
        %v780 = vadd.f32 %v648, %v748
        %v781 = vadd.f32 %v649, %v749
        %v782 = vadd.f32 %v650, %v750
        %v783 = vadd.f32 %v651, %v751
        %v784 = vadd.f32 %v652, %v752
        %v785 = vadd.f32 %v653, %v753
        %v786 = vadd.f32 %v654, %v754
        %787 = vset.pattern.permute.xlu0 2
        %788 = vperm.xlu0 %787, %v537
        %v789 = vpop.permute.xlu0 %788
        %791 = vset.pattern.permute.xlu0 2
        %792 = vperm.xlu0 %791, %v538
        %v793 = vpop.permute.xlu0 %792
        %795 = vset.pattern.permute.xlu0 2
        %796 = vperm.xlu0 %795, %v539
        %v797 = vpop.permute.xlu0 %796
        %799 = vset.pattern.permute.xlu0 2
        %800 = vperm.xlu0 %799, %v540
        %v801 = vpop.permute.xlu0 %800
        %803 = vset.pattern.permute.xlu0 2
        %804 = vperm.xlu0 %803, %v541
        %v805 = vpop.permute.xlu0 %804
        %807 = vset.pattern.permute.xlu0 2
        %808 = vperm.xlu0 %807, %v542
        %v809 = vpop.permute.xlu0 %808
        %811 = vset.pattern.permute.xlu0 2
        %812 = vperm.xlu0 %811, %v543
        %v813 = vpop.permute.xlu0 %812
        %815 = vset.pattern.permute.xlu0 2
        %816 = vperm.xlu0 %815, %v544
        %v817 = vpop.permute.xlu0 %816
        %v819 = vlaneseq
        %v820 = vshrl.u32 %v819, 7
        %v821 = vsub.s32 2, %v820
        %v822 = vrot.slane %v535, %v821
        %v823 = vlaneseq
        %v824 = vshrl.u32 %v823, 7
        %v825 = vsub.s32 6, %v824
        %v826 = vrot.slane %v535, %v825
        %v827 = vlaneseq
        %v828 = vshrl.u32 %v827, 7
        %v829 = vsub.s32 2, %v828
        %v830 = vrot.slane %v536, %v829
        %v831 = vlaneseq
        %v832 = vshrl.u32 %v831, 7
        %v833 = vsub.s32 6, %v832
        %v834 = vrot.slane %v536, %v833
        %v839 = vlaneseq
        %v840 = vshrl.u32 %v839, 7
        %v841 = vsub.s32 2, %v840
        %v842 = vrot.slane %v822, %v841
        %v843 = vlaneseq
        %v844 = vshrl.u32 %v843, 7
        %v845 = vsub.s32 2, %v844
        %v846 = vrot.slane %v826, %v845
        %v847 = vlaneseq
        %v848 = vshrl.u32 %v847, 7
        %v849 = vsub.s32 2, %v848
        %v850 = vrot.slane %v830, %v849
        %v851 = vlaneseq
        %v852 = vshrl.u32 %v851, 7
        %v853 = vsub.s32 2, %v852
        %v854 = vrot.slane %v834, %v853
        %v855 = vmul.f32 %v789, %v842
        %v856 = vmul.f32 %v789, %v846
        %v857 = vmul.f32 %v789, %v850
        %v858 = vmul.f32 %v789, %v854
        %v859 = vmul.f32 %v793, %v842
        %v860 = vmul.f32 %v793, %v846
        %v861 = vmul.f32 %v793, %v850
        %v862 = vmul.f32 %v793, %v854
        %v863 = vmul.f32 %v797, %v842
        %v864 = vmul.f32 %v797, %v846
        %v865 = vmul.f32 %v797, %v850
        %v866 = vmul.f32 %v797, %v854
        %v867 = vmul.f32 %v801, %v842
        %v868 = vmul.f32 %v801, %v846
        %v869 = vmul.f32 %v801, %v850
        %v870 = vmul.f32 %v801, %v854
        %v871 = vmul.f32 %v805, %v842
        %v872 = vmul.f32 %v805, %v846
        %v873 = vmul.f32 %v805, %v850
        %v874 = vmul.f32 %v805, %v854
        %v875 = vmul.f32 %v809, %v842
        %v876 = vmul.f32 %v809, %v846
        %v877 = vmul.f32 %v809, %v850
        %v878 = vmul.f32 %v809, %v854
        %v879 = vmul.f32 %v813, %v842
        %v880 = vmul.f32 %v813, %v846
        %v881 = vmul.f32 %v813, %v850
        %v882 = vmul.f32 %v813, %v854
        %v883 = vmul.f32 %v817, %v842
        %v884 = vmul.f32 %v817, %v846
        %v885 = vmul.f32 %v817, %v850
        %v886 = vmul.f32 %v817, %v854
        %v887 = vadd.f32 %v755, %v855
        %v888 = vadd.f32 %v756, %v856
        %v889 = vadd.f32 %v757, %v857
        %v890 = vadd.f32 %v758, %v858
        %v891 = vadd.f32 %v759, %v859
        %v892 = vadd.f32 %v760, %v860
        %v893 = vadd.f32 %v761, %v861
        %v894 = vadd.f32 %v762, %v862
        %v895 = vadd.f32 %v763, %v863
        %v896 = vadd.f32 %v764, %v864
        %v897 = vadd.f32 %v765, %v865
        %v898 = vadd.f32 %v766, %v866
        %v899 = vadd.f32 %v767, %v867
        %v900 = vadd.f32 %v768, %v868
        %v901 = vadd.f32 %v769, %v869
        %v902 = vadd.f32 %v770, %v870
        %v903 = vadd.f32 %v771, %v871
        %v904 = vadd.f32 %v772, %v872
        %v905 = vadd.f32 %v773, %v873
        %v906 = vadd.f32 %v774, %v874
        %v907 = vadd.f32 %v775, %v875
        %v908 = vadd.f32 %v776, %v876
        %v909 = vadd.f32 %v777, %v877
        %v910 = vadd.f32 %v778, %v878
        %v911 = vadd.f32 %v779, %v879
        %v912 = vadd.f32 %v780, %v880
        %v913 = vadd.f32 %v781, %v881
        %v914 = vadd.f32 %v782, %v882
        %v915 = vadd.f32 %v783, %v883
        %v916 = vadd.f32 %v784, %v884
        %v917 = vadd.f32 %v785, %v885
        %v918 = vadd.f32 %v786, %v886
        %v919 = vld [vmem:[%s2] sm:$0xff]
        %v920 = vld [vmem:[%s2 + $0x8] sm:$0xff]
        %v921 = vld [vmem:[%s2 + $0x10] sm:$0xff]
        %v922 = vld [vmem:[%s2 + $0x18] sm:$0xff]
        %v923 = vld [vmem:[%s2 + $0x20] sm:$0xff]
        %v924 = vld [vmem:[%s2 + $0x28] sm:$0xff]
        %v925 = vld [vmem:[%s2 + $0x30] sm:$0xff]
        %v926 = vld [vmem:[%s2 + $0x38] sm:$0xff]
        %928 = vset.pattern.permute.xlu0 0
        %929 = vperm.xlu0 %928, %v919
        %v930 = vpop.permute.xlu0 %929
        %933 = vset.pattern.permute.xlu0 0
        %934 = vperm.xlu0 %933, %v920
        %v935 = vpop.permute.xlu0 %934
        %938 = vset.pattern.permute.xlu0 0
        %939 = vperm.xlu0 %938, %v921
        %v940 = vpop.permute.xlu0 %939
        %943 = vset.pattern.permute.xlu0 0
        %944 = vperm.xlu0 %943, %v922
        %v945 = vpop.permute.xlu0 %944
        %948 = vset.pattern.permute.xlu0 0
        %949 = vperm.xlu0 %948, %v923
        %v950 = vpop.permute.xlu0 %949
        %953 = vset.pattern.permute.xlu0 0
        %954 = vperm.xlu0 %953, %v924
        %v955 = vpop.permute.xlu0 %954
        %958 = vset.pattern.permute.xlu0 0
        %959 = vperm.xlu0 %958, %v925
        %v960 = vpop.permute.xlu0 %959
        %963 = vset.pattern.permute.xlu0 0
        %964 = vperm.xlu0 %963, %v926
        %v965 = vpop.permute.xlu0 %964
        %v967 = vadd.f32 %v887, %v930
        %v968 = vadd.f32 %v888, %v930
        %v969 = vadd.f32 %v889, %v930
        %v970 = vadd.f32 %v890, %v930
        %v971 = vadd.f32 %v891, %v935
        %v972 = vadd.f32 %v892, %v935
        %v973 = vadd.f32 %v893, %v935
        %v974 = vadd.f32 %v894, %v935
        %v975 = vadd.f32 %v895, %v940
        %v976 = vadd.f32 %v896, %v940
        %v977 = vadd.f32 %v897, %v940
        %v978 = vadd.f32 %v898, %v940
        %v979 = vadd.f32 %v899, %v945
        %v980 = vadd.f32 %v900, %v945
        %v981 = vadd.f32 %v901, %v945
        %v982 = vadd.f32 %v902, %v945
        %v983 = vadd.f32 %v903, %v950
        %v984 = vadd.f32 %v904, %v950
        %v985 = vadd.f32 %v905, %v950
        %v986 = vadd.f32 %v906, %v950
        %v987 = vadd.f32 %v907, %v955
        %v988 = vadd.f32 %v908, %v955
        %v989 = vadd.f32 %v909, %v955
        %v990 = vadd.f32 %v910, %v955
        %v991 = vadd.f32 %v911, %v960
        %v992 = vadd.f32 %v912, %v960
        %v993 = vadd.f32 %v913, %v960
        %v994 = vadd.f32 %v914, %v960
        %v995 = vadd.f32 %v915, %v965
        %v996 = vadd.f32 %v916, %v965
        %v997 = vadd.f32 %v917, %v965
        %v998 = vadd.f32 %v918, %v965
        %v999 = vmax.f32 %v967, 0.0
        %v1000 = vmax.f32 %v968, 0.0
        %v1001 = vmax.f32 %v969, 0.0
        %v1002 = vmax.f32 %v970, 0.0
        %v1003 = vmax.f32 %v971, 0.0
        %v1004 = vmax.f32 %v972, 0.0
        %v1005 = vmax.f32 %v973, 0.0
        %v1006 = vmax.f32 %v974, 0.0
        %v1007 = vmax.f32 %v975, 0.0
        %v1008 = vmax.f32 %v976, 0.0
        %v1009 = vmax.f32 %v977, 0.0
        %v1010 = vmax.f32 %v978, 0.0
        %v1011 = vmax.f32 %v979, 0.0
        %v1012 = vmax.f32 %v980, 0.0
        %v1013 = vmax.f32 %v981, 0.0
        %v1014 = vmax.f32 %v982, 0.0
        %v1015 = vmax.f32 %v983, 0.0
        %v1016 = vmax.f32 %v984, 0.0
        %v1017 = vmax.f32 %v985, 0.0
        %v1018 = vmax.f32 %v986, 0.0
        %v1019 = vmax.f32 %v987, 0.0
        %v1020 = vmax.f32 %v988, 0.0
        %v1021 = vmax.f32 %v989, 0.0
        %v1022 = vmax.f32 %v990, 0.0
        %v1023 = vmax.f32 %v991, 0.0
        %v1024 = vmax.f32 %v992, 0.0
        %v1025 = vmax.f32 %v993, 0.0
        %v1026 = vmax.f32 %v994, 0.0
        %v1027 = vmax.f32 %v995, 0.0
        %v1028 = vmax.f32 %v996, 0.0
        %v1029 = vmax.f32 %v997, 0.0
        %v1030 = vmax.f32 %v998, 0.0
        %v1031 = vld [vmem:[%s3] sm:$0xf]
        %v1032 = vld [vmem:[%s3 + $0x4] sm:$0xf]
        %v1033 = vld [vmem:[%s3 + $0x8] sm:$0xf]
        %v1034 = vld [vmem:[%s3 + $0xc] sm:$0xf]
        %v1035 = vld [vmem:[%s3 + $0x10] sm:$0xf]
        %v1036 = vld [vmem:[%s3 + $0x14] sm:$0xf]
        %v1037 = vld [vmem:[%s3 + $0x18] sm:$0xf]
        %v1038 = vld [vmem:[%s3 + $0x1c] sm:$0xf]
        %v1039 = vld [vmem:[%s3 + $0x20] sm:$0xf]
        %v1040 = vld [vmem:[%s3 + $0x24] sm:$0xf]
        %v1041 = vld [vmem:[%s3 + $0x28] sm:$0xf]
        %v1042 = vld [vmem:[%s3 + $0x2c] sm:$0xf]
        %v1043 = vld [vmem:[%s3 + $0x30] sm:$0xf]
        %v1044 = vld [vmem:[%s3 + $0x34] sm:$0xf]
        %v1045 = vld [vmem:[%s3 + $0x38] sm:$0xf]
        %v1046 = vld [vmem:[%s3 + $0x3c] sm:$0xf]
        %v1047 = vpack.c.bf16 %v1003, %v999
        %v1048 = vpack.c.bf16 %v1004, %v1000
        %v1049 = vpack.c.bf16 %v1005, %v1001
        %v1050 = vpack.c.bf16 %v1006, %v1002
        %v1051 = vpack.c.bf16 %v1011, %v1007
        %v1052 = vpack.c.bf16 %v1012, %v1008
        %v1053 = vpack.c.bf16 %v1013, %v1009
        %v1054 = vpack.c.bf16 %v1014, %v1010
        %v1055 = vpack.c.bf16 %v1019, %v1015
        %v1056 = vpack.c.bf16 %v1020, %v1016
        %v1057 = vpack.c.bf16 %v1021, %v1017
        %v1058 = vpack.c.bf16 %v1022, %v1018
        %v1059 = vpack.c.bf16 %v1027, %v1023
        %v1060 = vpack.c.bf16 %v1028, %v1024
        %v1061 = vpack.c.bf16 %v1029, %v1025
        %v1062 = vpack.c.bf16 %v1030, %v1026
        %v1063 = vld [vmem:[%s4] sm:$0xff]
        %v1064 = vld [vmem:[%s4 + $0x8] sm:$0xff]
        %v1065 = vld [vmem:[%s4 + $0x10] sm:$0xff]
        %v1066 = vld [vmem:[%s4 + $0x18] sm:$0xff]
        %v1067 = vld [vmem:[%s4 + $0x20] sm:$0xff]
        %v1068 = vld [vmem:[%s4 + $0x28] sm:$0xff]
        %v1069 = vld [vmem:[%s4 + $0x30] sm:$0xff]
        %v1070 = vld [vmem:[%s4 + $0x38] sm:$0xff]
        %v1071 = vld [vmem:[%s4 + $0x40] sm:$0xff]
        %v1072 = vld [vmem:[%s4 + $0x48] sm:$0xff]
        %v1073 = vld [vmem:[%s4 + $0x50] sm:$0xff]
        %v1074 = vld [vmem:[%s4 + $0x58] sm:$0xff]
        %v1075 = vld [vmem:[%s4 + $0x60] sm:$0xff]
        %v1076 = vld [vmem:[%s4 + $0x68] sm:$0xff]
        %v1077 = vld [vmem:[%s4 + $0x70] sm:$0xff]
        %v1078 = vld [vmem:[%s4 + $0x78] sm:$0xff]
        %1080 = vset.pattern.permute.xlu0 0
        %1081 = vperm.xlu0 %1080, %v1063
        %v1082 = vpop.permute.xlu0 %1081
        %1085 = vset.pattern.permute.xlu0 0
        %1086 = vperm.xlu0 %1085, %v1064
        %v1087 = vpop.permute.xlu0 %1086
        %1090 = vset.pattern.permute.xlu0 0
        %1091 = vperm.xlu0 %1090, %v1065
        %v1092 = vpop.permute.xlu0 %1091
        %1095 = vset.pattern.permute.xlu0 0
        %1096 = vperm.xlu0 %1095, %v1066
        %v1097 = vpop.permute.xlu0 %1096
        %1100 = vset.pattern.permute.xlu0 0
        %1101 = vperm.xlu0 %1100, %v1067
        %v1102 = vpop.permute.xlu0 %1101
        %1105 = vset.pattern.permute.xlu0 0
        %1106 = vperm.xlu0 %1105, %v1068
        %v1107 = vpop.permute.xlu0 %1106
        %1110 = vset.pattern.permute.xlu0 0
        %1111 = vperm.xlu0 %1110, %v1069
        %v1112 = vpop.permute.xlu0 %1111
        %1115 = vset.pattern.permute.xlu0 0
        %1116 = vperm.xlu0 %1115, %v1070
        %v1117 = vpop.permute.xlu0 %1116
        %1120 = vset.pattern.permute.xlu0 0
        %1121 = vperm.xlu0 %1120, %v1071
        %v1122 = vpop.permute.xlu0 %1121
        %1125 = vset.pattern.permute.xlu0 0
        %1126 = vperm.xlu0 %1125, %v1072
        %v1127 = vpop.permute.xlu0 %1126
        %1130 = vset.pattern.permute.xlu0 0
        %1131 = vperm.xlu0 %1130, %v1073
        %v1132 = vpop.permute.xlu0 %1131
        %1135 = vset.pattern.permute.xlu0 0
        %1136 = vperm.xlu0 %1135, %v1074
        %v1137 = vpop.permute.xlu0 %1136
        %1140 = vset.pattern.permute.xlu0 0
        %1141 = vperm.xlu0 %1140, %v1075
        %v1142 = vpop.permute.xlu0 %1141
        %1145 = vset.pattern.permute.xlu0 0
        %1146 = vperm.xlu0 %1145, %v1076
        %v1147 = vpop.permute.xlu0 %1146
        %1150 = vset.pattern.permute.xlu0 0
        %1151 = vperm.xlu0 %1150, %v1077
        %v1152 = vpop.permute.xlu0 %1151
        %1155 = vset.pattern.permute.xlu0 0
        %1156 = vperm.xlu0 %1155, %v1078
        %v1157 = vpop.permute.xlu0 %1156
        %v1175 = vunpack.c.l.b16 %v1031
        %v1176 = vunpack.c.l.b16 %v1032
        %v1177 = vunpack.c.l.b16 %v1033
        %v1178 = vunpack.c.l.b16 %v1034
        %v1179 = vunpack.c.l.b16 %v1035
        %v1180 = vunpack.c.l.b16 %v1036
        %v1181 = vunpack.c.l.b16 %v1037
        %v1182 = vunpack.c.l.b16 %v1038
        %v1183 = vunpack.c.l.b16 %v1039
        %v1184 = vunpack.c.l.b16 %v1040
        %v1185 = vunpack.c.l.b16 %v1041
        %v1186 = vunpack.c.l.b16 %v1042
        %v1187 = vunpack.c.l.b16 %v1043
        %v1188 = vunpack.c.l.b16 %v1044
        %v1189 = vunpack.c.l.b16 %v1045
        %v1190 = vunpack.c.l.b16 %v1046
        %v1191 = vpack.c.b16 %v1176, %v1175
        %v1192 = vpack.c.b16 %v1178, %v1177
        %v1193 = vpack.c.b16 %v1180, %v1179
        %v1194 = vpack.c.b16 %v1182, %v1181
        %v1195 = vpack.c.b16 %v1184, %v1183
        %v1196 = vpack.c.b16 %v1186, %v1185
        %v1197 = vpack.c.b16 %v1188, %v1187
        %v1198 = vpack.c.b16 %v1190, %v1189
        %vm1199 = vcmask 523264
        %v1201 = vsel %vm1199, %v1191, 0
        %v1204 = vsel %vm1199, %v1192, 0
        %v1207 = vsel %vm1199, %v1193, 0
        %v1210 = vsel %vm1199, %v1194, 0
        %v1213 = vsel %vm1199, %v1195, 0
        %v1216 = vsel %vm1199, %v1196, 0
        %v1219 = vsel %vm1199, %v1197, 0
        %v1222 = vsel %vm1199, %v1198, 0
        %1224 = vmatprep.subr.bf16.mxu0 %v1048
        %1225 = vmatpush1.bf16.msra.mxu0 %v1047
        %1226 = vmatprep.subr.bf16.mxu0 %v1052
        %1227 = vmatpush1.bf16.msra.mxu0 %v1051
        %1228 = vmatprep.subr.bf16.mxu0 %v1056
        %1229 = vmatpush1.bf16.msra.mxu0 %v1055
        %1230 = vmatprep.subr.bf16.mxu0 %v1060
        %1231 = vmatpush1.bf16.msra.mxu0 %v1059
        %1232 = vmatprep.subr.bf16.mxu0 0
        %1233 = vmatpush1.bf16.msra.mxu0 0
        %1234 = vmatprep.subr.bf16.mxu0 0
        %1235 = vmatpush1.bf16.msra.mxu0 0
        %1236 = vmatprep.subr.bf16.mxu0 0
        %1237 = vmatpush1.bf16.msra.mxu0 0
        %1238 = vmatprep.subr.bf16.mxu0 0
        %1239 = vmatpush1.bf16.msra.mxu0 0
        %1240 = vmatprep.subr.bf16.mxu0 0
        %1241 = vmatpush1.bf16.msra.mxu0 0
        %1242 = vmatprep.subr.bf16.mxu0 0
        %1243 = vmatpush1.bf16.msra.mxu0 0
        %1244 = vmatprep.subr.bf16.mxu0 0
        %1245 = vmatpush1.bf16.msra.mxu0 0
        %1246 = vmatprep.subr.bf16.mxu0 0
        %1247 = vmatpush1.bf16.msra.mxu0 0
        %1248 = vmatprep.subr.bf16.mxu0 0
        %1249 = vmatpush1.bf16.msra.mxu0 0
        %1250 = vmatprep.subr.bf16.mxu0 0
        %1251 = vmatpush1.bf16.msra.mxu0 0
        %1252 = vmatprep.subr.bf16.mxu0 0
        %1253 = vmatpush1.bf16.msra.mxu0 0
        %1254 = vmatprep.subr.bf16.mxu0 0
        %1255 = vmatpush1.bf16.msra.mxu0 0
        %1256 = vmatprep.mubr.bf16.mxu0 0
        %1257 = vmatmul.mubr.bf16.gmra.mrb[0].mxu0 %v1201
        %v1258 = vpop.f32.mrb[0].mxu0
        %v1259 = vadd.f32 %v1082, %v1258
        %v1260 = vpop.f32.mrb[0].mxu0
        %v1261 = vadd.f32 %v1082, %v1260
        %v1262 = vpop.f32.mrb[0].mxu0
        %v1263 = vadd.f32 %v1087, %v1262
        %v1264 = vpop.f32.mrb[0].mxu0
        %v1265 = vadd.f32 %v1087, %v1264
        %1266 = vmatprep.mubr.bf16.mxu0 0
        %1267 = vmatmul.mubr.bf16.gmra.mrb[0].mxu0 %v1204
        %v1268 = vpop.f32.mrb[0].mxu0
        %v1269 = vadd.f32 %v1092, %v1268
        %v1270 = vpop.f32.mrb[0].mxu0
        %v1271 = vadd.f32 %v1092, %v1270
        %v1272 = vpop.f32.mrb[0].mxu0
        %v1273 = vadd.f32 %v1097, %v1272
        %v1274 = vpop.f32.mrb[0].mxu0
        %v1275 = vadd.f32 %v1097, %v1274
        %1276 = vmatprep.mubr.bf16.mxu0 0
        %1277 = vmatmul.mubr.bf16.gmra.mrb[0].mxu0 %v1207
        %v1278 = vpop.f32.mrb[0].mxu0
        %v1279 = vadd.f32 %v1102, %v1278
        %v1280 = vpop.f32.mrb[0].mxu0
        %v1281 = vadd.f32 %v1102, %v1280
        %v1282 = vpop.f32.mrb[0].mxu0
        %v1283 = vadd.f32 %v1107, %v1282
        %v1284 = vpop.f32.mrb[0].mxu0
        %v1285 = vadd.f32 %v1107, %v1284
        %1286 = vmatprep.mubr.bf16.mxu0 0
        %1287 = vmatmul.mubr.bf16.gmra.mrb[0].mxu0 %v1210
        %v1288 = vpop.f32.mrb[0].mxu0
        %v1289 = vadd.f32 %v1112, %v1288
        %v1290 = vpop.f32.mrb[0].mxu0
        %v1291 = vadd.f32 %v1112, %v1290
        %v1292 = vpop.f32.mrb[0].mxu0
        %v1293 = vadd.f32 %v1117, %v1292
        %v1294 = vpop.f32.mrb[0].mxu0
        %v1295 = vadd.f32 %v1117, %v1294
        %1296 = vmatprep.mubr.bf16.mxu0 0
        %1297 = vmatmul.mubr.bf16.gmra.mrb[0].mxu0 %v1213
        %v1298 = vpop.f32.mrb[0].mxu0
        %v1299 = vadd.f32 %v1122, %v1298
        %v1300 = vpop.f32.mrb[0].mxu0
        %v1301 = vadd.f32 %v1122, %v1300
        %v1302 = vpop.f32.mrb[0].mxu0
        %v1303 = vadd.f32 %v1127, %v1302
        %v1304 = vpop.f32.mrb[0].mxu0
        %v1305 = vadd.f32 %v1127, %v1304
        %1306 = vmatprep.mubr.bf16.mxu0 0
        %1307 = vmatmul.mubr.bf16.gmra.mrb[0].mxu0 %v1216
        %v1308 = vpop.f32.mrb[0].mxu0
        %v1309 = vadd.f32 %v1132, %v1308
        %v1310 = vpop.f32.mrb[0].mxu0
        %v1311 = vadd.f32 %v1132, %v1310
        %v1312 = vpop.f32.mrb[0].mxu0
        %v1313 = vadd.f32 %v1137, %v1312
        %v1314 = vpop.f32.mrb[0].mxu0
        %v1315 = vadd.f32 %v1137, %v1314
        %1316 = vmatprep.mubr.bf16.mxu0 0
        %1317 = vmatmul.mubr.bf16.gmra.mrb[0].mxu0 %v1219
        %v1318 = vpop.f32.mrb[0].mxu0
        %v1319 = vadd.f32 %v1142, %v1318
        %v1320 = vpop.f32.mrb[0].mxu0
        %v1321 = vadd.f32 %v1142, %v1320
        %v1322 = vpop.f32.mrb[0].mxu0
        %v1323 = vadd.f32 %v1147, %v1322
        %v1324 = vpop.f32.mrb[0].mxu0
        %v1325 = vadd.f32 %v1147, %v1324
        %1326 = vmatprep.mubr.bf16.mxu0 0
        %1327 = vmatmul.mubr.bf16.gmra.mrb[0].mxu0 %v1222
        %v1328 = vpop.f32.mrb[0].mxu0
        %v1329 = vadd.f32 %v1152, %v1328
        %v1330 = vpop.f32.mrb[0].mxu0
        %v1331 = vadd.f32 %v1152, %v1330
        %v1332 = vpop.f32.mrb[0].mxu0
        %v1333 = vadd.f32 %v1157, %v1332
        %v1334 = vpop.f32.mrb[0].mxu0
        %v1335 = vadd.f32 %v1157, %v1334
        %1336 = vdwg.mxu0
        %1337 = vmatprep.subr.bf16.mxu0 %v1050
        %1338 = vmatpush1.bf16.msra.mxu0 %v1049
        %1339 = vmatprep.subr.bf16.mxu0 %v1054
        %1340 = vmatpush1.bf16.msra.mxu0 %v1053
        %1341 = vmatprep.subr.bf16.mxu0 %v1058
        %1342 = vmatpush1.bf16.msra.mxu0 %v1057
        %1343 = vmatprep.subr.bf16.mxu0 %v1062
        %1344 = vmatpush1.bf16.msra.mxu0 %v1061
        %1345 = vmatprep.subr.bf16.mxu0 0
        %1346 = vmatpush1.bf16.msra.mxu0 0
        %1347 = vmatprep.subr.bf16.mxu0 0
        %1348 = vmatpush1.bf16.msra.mxu0 0
        %1349 = vmatprep.subr.bf16.mxu0 0
        %1350 = vmatpush1.bf16.msra.mxu0 0
        %1351 = vmatprep.subr.bf16.mxu0 0
        %1352 = vmatpush1.bf16.msra.mxu0 0
        %1353 = vmatprep.subr.bf16.mxu0 0
        %1354 = vmatpush1.bf16.msra.mxu0 0
        %1355 = vmatprep.subr.bf16.mxu0 0
        %1356 = vmatpush1.bf16.msra.mxu0 0
        %1357 = vmatprep.subr.bf16.mxu0 0
        %1358 = vmatpush1.bf16.msra.mxu0 0
        %1359 = vmatprep.subr.bf16.mxu0 0
        %1360 = vmatpush1.bf16.msra.mxu0 0
        %1361 = vmatprep.subr.bf16.mxu0 0
        %1362 = vmatpush1.bf16.msra.mxu0 0
        %1363 = vmatprep.subr.bf16.mxu0 0
        %1364 = vmatpush1.bf16.msra.mxu0 0
        %1365 = vmatprep.subr.bf16.mxu0 0
        %1366 = vmatpush1.bf16.msra.mxu0 0
        %1367 = vmatprep.subr.bf16.mxu0 0
        %1368 = vmatpush1.bf16.msra.mxu0 0
        %1369 = vmatprep.mubr.bf16.mxu0 0
        %1370 = vmatmul.mubr.bf16.gmra.mrb[0].mxu0 %v1201
        %v1371 = vpop.f32.mrb[0].mxu0
        %v1372 = vadd.f32 %v1082, %v1371
        %v1373 = vpop.f32.mrb[0].mxu0
        %v1374 = vadd.f32 %v1082, %v1373
        %v1375 = vpop.f32.mrb[0].mxu0
        %v1376 = vadd.f32 %v1087, %v1375
        %v1377 = vpop.f32.mrb[0].mxu0
        %v1378 = vadd.f32 %v1087, %v1377
        %1379 = vmatprep.mubr.bf16.mxu0 0
        %1380 = vmatmul.mubr.bf16.gmra.mrb[0].mxu0 %v1204
        %v1381 = vpop.f32.mrb[0].mxu0
        %v1382 = vadd.f32 %v1092, %v1381
        %v1383 = vpop.f32.mrb[0].mxu0
        %v1384 = vadd.f32 %v1092, %v1383
        %v1385 = vpop.f32.mrb[0].mxu0
        %v1386 = vadd.f32 %v1097, %v1385
        %v1387 = vpop.f32.mrb[0].mxu0
        %v1388 = vadd.f32 %v1097, %v1387
        %1389 = vmatprep.mubr.bf16.mxu0 0
        %1390 = vmatmul.mubr.bf16.gmra.mrb[0].mxu0 %v1207
        %v1391 = vpop.f32.mrb[0].mxu0
        %v1392 = vadd.f32 %v1102, %v1391
        %v1393 = vpop.f32.mrb[0].mxu0
        %v1394 = vadd.f32 %v1102, %v1393
        %v1395 = vpop.f32.mrb[0].mxu0
        %v1396 = vadd.f32 %v1107, %v1395
        %v1397 = vpop.f32.mrb[0].mxu0
        %v1398 = vadd.f32 %v1107, %v1397
        %1399 = vmatprep.mubr.bf16.mxu0 0
        %1400 = vmatmul.mubr.bf16.gmra.mrb[0].mxu0 %v1210
        %v1401 = vpop.f32.mrb[0].mxu0
        %v1402 = vadd.f32 %v1112, %v1401
        %v1403 = vpop.f32.mrb[0].mxu0
        %v1404 = vadd.f32 %v1112, %v1403
        %v1405 = vpop.f32.mrb[0].mxu0
        %v1406 = vadd.f32 %v1117, %v1405
        %v1407 = vpop.f32.mrb[0].mxu0
        %v1408 = vadd.f32 %v1117, %v1407
        %1409 = vmatprep.mubr.bf16.mxu0 0
        %1410 = vmatmul.mubr.bf16.gmra.mrb[0].mxu0 %v1213
        %v1411 = vpop.f32.mrb[0].mxu0
        %v1412 = vadd.f32 %v1122, %v1411
        %v1413 = vpop.f32.mrb[0].mxu0
        %v1414 = vadd.f32 %v1122, %v1413
        %v1415 = vpop.f32.mrb[0].mxu0
        %v1416 = vadd.f32 %v1127, %v1415
        %v1417 = vpop.f32.mrb[0].mxu0
        %v1418 = vadd.f32 %v1127, %v1417
        %1419 = vmatprep.mubr.bf16.mxu0 0
        %1420 = vmatmul.mubr.bf16.gmra.mrb[0].mxu0 %v1216
        %v1421 = vpop.f32.mrb[0].mxu0
        %v1422 = vadd.f32 %v1132, %v1421
        %v1423 = vpop.f32.mrb[0].mxu0
        %v1424 = vadd.f32 %v1132, %v1423
        %v1425 = vpop.f32.mrb[0].mxu0
        %v1426 = vadd.f32 %v1137, %v1425
        %v1427 = vpop.f32.mrb[0].mxu0
        %v1428 = vadd.f32 %v1137, %v1427
        %1429 = vmatprep.mubr.bf16.mxu0 0
        %1430 = vmatmul.mubr.bf16.gmra.mrb[0].mxu0 %v1219
        %v1431 = vpop.f32.mrb[0].mxu0
        %v1432 = vadd.f32 %v1142, %v1431
        %v1433 = vpop.f32.mrb[0].mxu0
        %v1434 = vadd.f32 %v1142, %v1433
        %v1435 = vpop.f32.mrb[0].mxu0
        %v1436 = vadd.f32 %v1147, %v1435
        %v1437 = vpop.f32.mrb[0].mxu0
        %v1438 = vadd.f32 %v1147, %v1437
        %1439 = vmatprep.mubr.bf16.mxu0 0
        %1440 = vmatmul.mubr.bf16.gmra.mrb[0].mxu0 %v1222
        %v1441 = vpop.f32.mrb[0].mxu0
        %v1442 = vadd.f32 %v1152, %v1441
        %v1443 = vpop.f32.mrb[0].mxu0
        %v1444 = vadd.f32 %v1152, %v1443
        %v1445 = vpop.f32.mrb[0].mxu0
        %v1446 = vadd.f32 %v1157, %v1445
        %v1447 = vpop.f32.mrb[0].mxu0
        %v1448 = vadd.f32 %v1157, %v1447
        %1449 = vdwg.mxu0
        %v1450 = vmax.f32 %v1259, 0.0
        %v1451 = vmax.f32 %v1261, 0.0
        %v1452 = vmax.f32 %v1372, 0.0
        %v1453 = vmax.f32 %v1374, 0.0
        %v1454 = vmax.f32 %v1263, 0.0
        %v1455 = vmax.f32 %v1265, 0.0
        %v1456 = vmax.f32 %v1376, 0.0
        %v1457 = vmax.f32 %v1378, 0.0
        %v1458 = vmax.f32 %v1269, 0.0
        %v1459 = vmax.f32 %v1271, 0.0
        %v1460 = vmax.f32 %v1382, 0.0
        %v1461 = vmax.f32 %v1384, 0.0
        %v1462 = vmax.f32 %v1273, 0.0
        %v1463 = vmax.f32 %v1275, 0.0
        %v1464 = vmax.f32 %v1386, 0.0
        %v1465 = vmax.f32 %v1388, 0.0
        %v1466 = vmax.f32 %v1279, 0.0
        %v1467 = vmax.f32 %v1281, 0.0
        %v1468 = vmax.f32 %v1392, 0.0
        %v1469 = vmax.f32 %v1394, 0.0
        %v1470 = vmax.f32 %v1283, 0.0
        %v1471 = vmax.f32 %v1285, 0.0
        %v1472 = vmax.f32 %v1396, 0.0
        %v1473 = vmax.f32 %v1398, 0.0
        %v1474 = vmax.f32 %v1289, 0.0
        %v1475 = vmax.f32 %v1291, 0.0
        %v1476 = vmax.f32 %v1402, 0.0
        %v1477 = vmax.f32 %v1404, 0.0
        %v1478 = vmax.f32 %v1293, 0.0
        %v1479 = vmax.f32 %v1295, 0.0
        %v1480 = vmax.f32 %v1406, 0.0
        %v1481 = vmax.f32 %v1408, 0.0
        %v1482 = vmax.f32 %v1299, 0.0
        %v1483 = vmax.f32 %v1301, 0.0
        %v1484 = vmax.f32 %v1412, 0.0
        %v1485 = vmax.f32 %v1414, 0.0
        %v1486 = vmax.f32 %v1303, 0.0
        %v1487 = vmax.f32 %v1305, 0.0
        %v1488 = vmax.f32 %v1416, 0.0
        %v1489 = vmax.f32 %v1418, 0.0
        %v1490 = vmax.f32 %v1309, 0.0
        %v1491 = vmax.f32 %v1311, 0.0
        %v1492 = vmax.f32 %v1422, 0.0
        %v1493 = vmax.f32 %v1424, 0.0
        %v1494 = vmax.f32 %v1313, 0.0
        %v1495 = vmax.f32 %v1315, 0.0
        %v1496 = vmax.f32 %v1426, 0.0
        %v1497 = vmax.f32 %v1428, 0.0
        %v1498 = vmax.f32 %v1319, 0.0
        %v1499 = vmax.f32 %v1321, 0.0
        %v1500 = vmax.f32 %v1432, 0.0
        %v1501 = vmax.f32 %v1434, 0.0
        %v1502 = vmax.f32 %v1323, 0.0
        %v1503 = vmax.f32 %v1325, 0.0
        %v1504 = vmax.f32 %v1436, 0.0
        %v1505 = vmax.f32 %v1438, 0.0
        %v1506 = vmax.f32 %v1329, 0.0
        %v1507 = vmax.f32 %v1331, 0.0
        %v1508 = vmax.f32 %v1442, 0.0
        %v1509 = vmax.f32 %v1444, 0.0
        %v1510 = vmax.f32 %v1333, 0.0
        %v1511 = vmax.f32 %v1335, 0.0
        %v1512 = vmax.f32 %v1446, 0.0
        %v1513 = vmax.f32 %v1448, 0.0
        %v1514 = vpack.c.bf16 %v1454, %v1450
        %v1515 = vpack.c.bf16 %v1455, %v1451
        %v1516 = vpack.c.bf16 %v1456, %v1452
        %v1517 = vpack.c.bf16 %v1457, %v1453
        %v1518 = vpack.c.bf16 %v1462, %v1458
        %v1519 = vpack.c.bf16 %v1463, %v1459
        %v1520 = vpack.c.bf16 %v1464, %v1460
        %v1521 = vpack.c.bf16 %v1465, %v1461
        %v1522 = vpack.c.bf16 %v1470, %v1466
        %v1523 = vpack.c.bf16 %v1471, %v1467
        %v1524 = vpack.c.bf16 %v1472, %v1468
        %v1525 = vpack.c.bf16 %v1473, %v1469
        %v1526 = vpack.c.bf16 %v1478, %v1474
        %v1527 = vpack.c.bf16 %v1479, %v1475
        %v1528 = vpack.c.bf16 %v1480, %v1476
        %v1529 = vpack.c.bf16 %v1481, %v1477
        %v1530 = vpack.c.bf16 %v1486, %v1482
        %v1531 = vpack.c.bf16 %v1487, %v1483
        %v1532 = vpack.c.bf16 %v1488, %v1484
        %v1533 = vpack.c.bf16 %v1489, %v1485
        %v1534 = vpack.c.bf16 %v1494, %v1490
        %v1535 = vpack.c.bf16 %v1495, %v1491
        %v1536 = vpack.c.bf16 %v1496, %v1492
        %v1537 = vpack.c.bf16 %v1497, %v1493
        %v1538 = vpack.c.bf16 %v1502, %v1498
        %v1539 = vpack.c.bf16 %v1503, %v1499
        %v1540 = vpack.c.bf16 %v1504, %v1500
        %v1541 = vpack.c.bf16 %v1505, %v1501
        %v1542 = vpack.c.bf16 %v1510, %v1506
        %v1543 = vpack.c.bf16 %v1511, %v1507
        %v1544 = vpack.c.bf16 %v1512, %v1508
        %v1545 = vpack.c.bf16 %v1513, %v1509
        %1546 = vxpose.xlu0.c.b16.start [1/8] %v1514, 128
        %1547 = vxpose.xlu0.c.b16.cont [2/8] %v1518, 128
        %1548 = vxpose.xlu0.c.b16.cont [3/8] %v1522, 128
        %1549 = vxpose.xlu0.c.b16.cont [4/8] %v1526, 128
        %1550 = vxpose.xlu0.c.b16.cont [5/8] %v1530, 128
        %1551 = vxpose.xlu0.c.b16.cont [6/8] %v1534, 128
        %1552 = vxpose.xlu0.c.b16.cont [7/8] %v1538, 128
        %1553 = vxpose.xlu0.c.b16.end [8/8] %v1542, 128
        %v1554 = vpop.trf.xlu0
        %v1555 = vpop.trf.xlu0
        %v1556 = vpop.trf.xlu0
        %v1557 = vpop.trf.xlu0
        %v1558 = vpop.trf.xlu0
        %v1559 = vpop.trf.xlu0
        %v1560 = vpop.trf.xlu0
        %v1561 = vpop.trf.xlu0
        %1562 = vxpose.xlu0.c.b16.start [1/8] %v1515, 128
        %1563 = vxpose.xlu0.c.b16.cont [2/8] %v1519, 128
        %1564 = vxpose.xlu0.c.b16.cont [3/8] %v1523, 128
        %1565 = vxpose.xlu0.c.b16.cont [4/8] %v1527, 128
        %1566 = vxpose.xlu0.c.b16.cont [5/8] %v1531, 128
        %1567 = vxpose.xlu0.c.b16.cont [6/8] %v1535, 128
        %1568 = vxpose.xlu0.c.b16.cont [7/8] %v1539, 128
        %1569 = vxpose.xlu0.c.b16.end [8/8] %v1543, 128
        %v1570 = vpop.trf.xlu0
        %v1571 = vpop.trf.xlu0
        %v1572 = vpop.trf.xlu0
        %v1573 = vpop.trf.xlu0
        %v1574 = vpop.trf.xlu0
        %v1575 = vpop.trf.xlu0
        %v1576 = vpop.trf.xlu0
        %v1577 = vpop.trf.xlu0
        %1578 = vxpose.xlu0.c.b16.start [1/8] %v1516, 128
        %1579 = vxpose.xlu0.c.b16.cont [2/8] %v1520, 128
        %1580 = vxpose.xlu0.c.b16.cont [3/8] %v1524, 128
        %1581 = vxpose.xlu0.c.b16.cont [4/8] %v1528, 128
        %1582 = vxpose.xlu0.c.b16.cont [5/8] %v1532, 128
        %1583 = vxpose.xlu0.c.b16.cont [6/8] %v1536, 128
        %1584 = vxpose.xlu0.c.b16.cont [7/8] %v1540, 128
        %1585 = vxpose.xlu0.c.b16.end [8/8] %v1544, 128
        %v1586 = vpop.trf.xlu0
        %v1587 = vpop.trf.xlu0
        %v1588 = vpop.trf.xlu0
        %v1589 = vpop.trf.xlu0
        %v1590 = vpop.trf.xlu0
        %v1591 = vpop.trf.xlu0
        %v1592 = vpop.trf.xlu0
        %v1593 = vpop.trf.xlu0
        %1594 = vxpose.xlu0.c.b16.start [1/8] %v1517, 128
        %1595 = vxpose.xlu0.c.b16.cont [2/8] %v1521, 128
        %1596 = vxpose.xlu0.c.b16.cont [3/8] %v1525, 128
        %1597 = vxpose.xlu0.c.b16.cont [4/8] %v1529, 128
        %1598 = vxpose.xlu0.c.b16.cont [5/8] %v1533, 128
        %1599 = vxpose.xlu0.c.b16.cont [6/8] %v1537, 128
        %1600 = vxpose.xlu0.c.b16.cont [7/8] %v1541, 128
        %1601 = vxpose.xlu0.c.b16.end [8/8] %v1545, 128
        %v1602 = vpop.trf.xlu0
        %v1603 = vpop.trf.xlu0
        %v1604 = vpop.trf.xlu0
        %v1605 = vpop.trf.xlu0
        %v1606 = vpop.trf.xlu0
        %v1607 = vpop.trf.xlu0
        %v1608 = vpop.trf.xlu0
        %v1609 = vpop.trf.xlu0
        %v1610 = vlaneseq
        %v1611 = vshrl.u32 %v1610, 7
        %v1612 = vadd.s32 %v1611, 8
        %v1613 = vadd.s32 %v1611, 16
        %v1614 = vadd.s32 %v1611, 24
        %v1615 = vadd.s32 %v1611, 32
        %v1616 = vadd.s32 %v1611, 40
        %v1617 = vadd.s32 %v1611, 48
        %v1618 = vadd.s32 %v1611, 56
        %v1619 = vadd.s32 %v1611, 64
        %v1620 = vadd.s32 %v1611, 72
        %v1621 = vadd.s32 %v1611, 80
        %v1622 = vadd.s32 %v1611, 88
        %v1623 = vadd.s32 %v1611, 96
        %v1624 = vadd.s32 %v1611, 104
        %v1625 = vadd.s32 %v1611, 112
        %v1626 = vadd.s32 %v1611, 120
        %v1627 = vadd.s32 %v1611, 128
        %v1628 = vadd.s32 %v1611, 136
        %v1629 = vadd.s32 %v1611, 144
        %v1630 = vadd.s32 %v1611, 152
        %v1631 = vadd.s32 %v1611, 160
        %v1632 = vadd.s32 %v1611, 168
        %v1633 = vadd.s32 %v1611, 176
        %v1634 = vadd.s32 %v1611, 184
        %v1635 = vadd.s32 %v1611, 192
        %v1636 = vadd.s32 %v1611, 200
        %v1637 = vadd.s32 %v1611, 208
        %v1638 = vadd.s32 %v1611, 216
        %v1639 = vadd.s32 %v1611, 224
        %v1640 = vadd.s32 %v1611, 232
        %v1641 = vadd.s32 %v1611, 240
        %v1642 = vadd.s32 %v1611, 248
        %v1643 = vadd.s32 %v1611, 256
        %v1644 = vadd.s32 %v1611, 264
        %v1645 = vadd.s32 %v1611, 272
        %v1646 = vadd.s32 %v1611, 280
        %v1647 = vadd.s32 %v1611, 288
        %v1648 = vadd.s32 %v1611, 296
        %v1649 = vadd.s32 %v1611, 304
        %v1650 = vadd.s32 %v1611, 312
        %v1651 = vadd.s32 %v1611, 320
        %v1652 = vadd.s32 %v1611, 328
        %v1653 = vadd.s32 %v1611, 336
        %v1654 = vadd.s32 %v1611, 344
        %v1655 = vadd.s32 %v1611, 352
        %v1656 = vadd.s32 %v1611, 360
        %v1657 = vadd.s32 %v1611, 368
        %v1658 = vadd.s32 %v1611, 376
        %v1659 = vadd.s32 %v1611, 384
        %v1660 = vadd.s32 %v1611, 392
        %v1661 = vadd.s32 %v1611, 400
        %v1662 = vadd.s32 %v1611, 408
        %v1663 = vadd.s32 %v1611, 416
        %v1664 = vadd.s32 %v1611, 424
        %v1665 = vadd.s32 %v1611, 432
        %v1666 = vadd.s32 %v1611, 440
        %v1667 = vadd.s32 %v1611, 448
        %v1668 = vadd.s32 %v1611, 456
        %v1669 = vadd.s32 %v1611, 464
        %v1670 = vadd.s32 %v1611, 472
        %v1671 = vadd.s32 %v1611, 480
        %v1672 = vadd.s32 %v1611, 488
        %v1673 = vadd.s32 %v1611, 496
        %v1674 = vadd.s32 %v1611, 504
        %s1675 = smul.u32 %s31, 512
        %v1676 = vstv %s1675
        %v1677 = vadd.s32 %v1676, %v1611
        %v1678 = vadd.s32 %v1676, %v1612
        %v1679 = vadd.s32 %v1676, %v1613
        %v1680 = vadd.s32 %v1676, %v1614
        %v1681 = vadd.s32 %v1676, %v1615
        %v1682 = vadd.s32 %v1676, %v1616
        %v1683 = vadd.s32 %v1676, %v1617
        %v1684 = vadd.s32 %v1676, %v1618
        %v1685 = vadd.s32 %v1676, %v1619
        %v1686 = vadd.s32 %v1676, %v1620
        %v1687 = vadd.s32 %v1676, %v1621
        %v1688 = vadd.s32 %v1676, %v1622
        %v1689 = vadd.s32 %v1676, %v1623
        %v1690 = vadd.s32 %v1676, %v1624
        %v1691 = vadd.s32 %v1676, %v1625
        %v1692 = vadd.s32 %v1676, %v1626
        %v1693 = vadd.s32 %v1676, %v1627
        %v1694 = vadd.s32 %v1676, %v1628
        %v1695 = vadd.s32 %v1676, %v1629
        %v1696 = vadd.s32 %v1676, %v1630
        %v1697 = vadd.s32 %v1676, %v1631
        %v1698 = vadd.s32 %v1676, %v1632
        %v1699 = vadd.s32 %v1676, %v1633
        %v1700 = vadd.s32 %v1676, %v1634
        %v1701 = vadd.s32 %v1676, %v1635
        %v1702 = vadd.s32 %v1676, %v1636
        %v1703 = vadd.s32 %v1676, %v1637
        %v1704 = vadd.s32 %v1676, %v1638
        %v1705 = vadd.s32 %v1676, %v1639
        %v1706 = vadd.s32 %v1676, %v1640
        %v1707 = vadd.s32 %v1676, %v1641
        %v1708 = vadd.s32 %v1676, %v1642
        %v1709 = vadd.s32 %v1676, %v1643
        %v1710 = vadd.s32 %v1676, %v1644
        %v1711 = vadd.s32 %v1676, %v1645
        %v1712 = vadd.s32 %v1676, %v1646
        %v1713 = vadd.s32 %v1676, %v1647
        %v1714 = vadd.s32 %v1676, %v1648
        %v1715 = vadd.s32 %v1676, %v1649
        %v1716 = vadd.s32 %v1676, %v1650
        %v1717 = vadd.s32 %v1676, %v1651
        %v1718 = vadd.s32 %v1676, %v1652
        %v1719 = vadd.s32 %v1676, %v1653
        %v1720 = vadd.s32 %v1676, %v1654
        %v1721 = vadd.s32 %v1676, %v1655
        %v1722 = vadd.s32 %v1676, %v1656
        %v1723 = vadd.s32 %v1676, %v1657
        %v1724 = vadd.s32 %v1676, %v1658
        %v1725 = vadd.s32 %v1676, %v1659
        %v1726 = vadd.s32 %v1676, %v1660
        %v1727 = vadd.s32 %v1676, %v1661
        %v1728 = vadd.s32 %v1676, %v1662
        %v1729 = vadd.s32 %v1676, %v1663
        %v1730 = vadd.s32 %v1676, %v1664
        %v1731 = vadd.s32 %v1676, %v1665
        %v1732 = vadd.s32 %v1676, %v1666
        %v1733 = vadd.s32 %v1676, %v1667
        %v1734 = vadd.s32 %v1676, %v1668
        %v1735 = vadd.s32 %v1676, %v1669
        %v1736 = vadd.s32 %v1676, %v1670
        %v1737 = vadd.s32 %v1676, %v1671
        %v1738 = vadd.s32 %v1676, %v1672
        %v1739 = vadd.s32 %v1676, %v1673
        %v1740 = vadd.s32 %v1676, %v1674
        %vm1741 = vcmp.lt.s32.totalorder %v1677, 640
        %vm1742 = vcmp.lt.s32.totalorder %v1678, 640
        %vm1743 = vcmp.lt.s32.totalorder %v1679, 640
        %vm1744 = vcmp.lt.s32.totalorder %v1680, 640
        %vm1745 = vcmp.lt.s32.totalorder %v1681, 640
        %vm1746 = vcmp.lt.s32.totalorder %v1682, 640
        %vm1747 = vcmp.lt.s32.totalorder %v1683, 640
        %vm1748 = vcmp.lt.s32.totalorder %v1684, 640
        %vm1749 = vcmp.lt.s32.totalorder %v1685, 640
        %vm1750 = vcmp.lt.s32.totalorder %v1686, 640
        %vm1751 = vcmp.lt.s32.totalorder %v1687, 640
        %vm1752 = vcmp.lt.s32.totalorder %v1688, 640
        %vm1753 = vcmp.lt.s32.totalorder %v1689, 640
        %vm1754 = vcmp.lt.s32.totalorder %v1690, 640
        %vm1755 = vcmp.lt.s32.totalorder %v1691, 640
        %vm1756 = vcmp.lt.s32.totalorder %v1692, 640
        %vm1757 = vcmp.lt.s32.totalorder %v1693, 640
        %vm1758 = vcmp.lt.s32.totalorder %v1694, 640
        %vm1759 = vcmp.lt.s32.totalorder %v1695, 640
        %vm1760 = vcmp.lt.s32.totalorder %v1696, 640
        %vm1761 = vcmp.lt.s32.totalorder %v1697, 640
        %vm1762 = vcmp.lt.s32.totalorder %v1698, 640
        %vm1763 = vcmp.lt.s32.totalorder %v1699, 640
        %vm1764 = vcmp.lt.s32.totalorder %v1700, 640
        %vm1765 = vcmp.lt.s32.totalorder %v1701, 640
        %vm1766 = vcmp.lt.s32.totalorder %v1702, 640
        %vm1767 = vcmp.lt.s32.totalorder %v1703, 640
        %vm1768 = vcmp.lt.s32.totalorder %v1704, 640
        %vm1769 = vcmp.lt.s32.totalorder %v1705, 640
        %vm1770 = vcmp.lt.s32.totalorder %v1706, 640
        %vm1771 = vcmp.lt.s32.totalorder %v1707, 640
        %vm1772 = vcmp.lt.s32.totalorder %v1708, 640
        %vm1773 = vcmp.lt.s32.totalorder %v1709, 640
        %vm1774 = vcmp.lt.s32.totalorder %v1710, 640
        %vm1775 = vcmp.lt.s32.totalorder %v1711, 640
        %vm1776 = vcmp.lt.s32.totalorder %v1712, 640
        %vm1777 = vcmp.lt.s32.totalorder %v1713, 640
        %vm1778 = vcmp.lt.s32.totalorder %v1714, 640
        %vm1779 = vcmp.lt.s32.totalorder %v1715, 640
        %vm1780 = vcmp.lt.s32.totalorder %v1716, 640
        %vm1781 = vcmp.lt.s32.totalorder %v1717, 640
        %vm1782 = vcmp.lt.s32.totalorder %v1718, 640
        %vm1783 = vcmp.lt.s32.totalorder %v1719, 640
        %vm1784 = vcmp.lt.s32.totalorder %v1720, 640
        %vm1785 = vcmp.lt.s32.totalorder %v1721, 640
        %vm1786 = vcmp.lt.s32.totalorder %v1722, 640
        %vm1787 = vcmp.lt.s32.totalorder %v1723, 640
        %vm1788 = vcmp.lt.s32.totalorder %v1724, 640
        %vm1789 = vcmp.lt.s32.totalorder %v1725, 640
        %vm1790 = vcmp.lt.s32.totalorder %v1726, 640
        %vm1791 = vcmp.lt.s32.totalorder %v1727, 640
        %vm1792 = vcmp.lt.s32.totalorder %v1728, 640
        %vm1793 = vcmp.lt.s32.totalorder %v1729, 640
        %vm1794 = vcmp.lt.s32.totalorder %v1730, 640
        %vm1795 = vcmp.lt.s32.totalorder %v1731, 640
        %vm1796 = vcmp.lt.s32.totalorder %v1732, 640
        %vm1797 = vcmp.lt.s32.totalorder %v1733, 640
        %vm1798 = vcmp.lt.s32.totalorder %v1734, 640
        %vm1799 = vcmp.lt.s32.totalorder %v1735, 640
        %vm1800 = vcmp.lt.s32.totalorder %v1736, 640
        %vm1801 = vcmp.lt.s32.totalorder %v1737, 640
        %vm1802 = vcmp.lt.s32.totalorder %v1738, 640
        %vm1803 = vcmp.lt.s32.totalorder %v1739, 640
        %vm1804 = vcmp.lt.s32.totalorder %v1740, 640
        %v1805 = vsel %vm1741, 1, 0
        %v1806 = vsel %vm1742, 1, 0
        %v1807 = vsel %vm1743, 1, 0
        %v1808 = vsel %vm1744, 1, 0
        %v1809 = vsel %vm1745, 1, 0
        %v1810 = vsel %vm1746, 1, 0
        %v1811 = vsel %vm1747, 1, 0
        %v1812 = vsel %vm1748, 1, 0
        %v1813 = vsel %vm1749, 1, 0
        %v1814 = vsel %vm1750, 1, 0
        %v1815 = vsel %vm1751, 1, 0
        %v1816 = vsel %vm1752, 1, 0
        %v1817 = vsel %vm1753, 1, 0
        %v1818 = vsel %vm1754, 1, 0
        %v1819 = vsel %vm1755, 1, 0
        %v1820 = vsel %vm1756, 1, 0
        %v1821 = vsel %vm1757, 1, 0
        %v1822 = vsel %vm1758, 1, 0
        %v1823 = vsel %vm1759, 1, 0
        %v1824 = vsel %vm1760, 1, 0
        %v1825 = vsel %vm1761, 1, 0
        %v1826 = vsel %vm1762, 1, 0
        %v1827 = vsel %vm1763, 1, 0
        %v1828 = vsel %vm1764, 1, 0
        %v1829 = vsel %vm1765, 1, 0
        %v1830 = vsel %vm1766, 1, 0
        %v1831 = vsel %vm1767, 1, 0
        %v1832 = vsel %vm1768, 1, 0
        %v1833 = vsel %vm1769, 1, 0
        %v1834 = vsel %vm1770, 1, 0
        %v1835 = vsel %vm1771, 1, 0
        %v1836 = vsel %vm1772, 1, 0
        %v1837 = vsel %vm1773, 1, 0
        %v1838 = vsel %vm1774, 1, 0
        %v1839 = vsel %vm1775, 1, 0
        %v1840 = vsel %vm1776, 1, 0
        %v1841 = vsel %vm1777, 1, 0
        %v1842 = vsel %vm1778, 1, 0
        %v1843 = vsel %vm1779, 1, 0
        %v1844 = vsel %vm1780, 1, 0
        %v1845 = vsel %vm1781, 1, 0
        %v1846 = vsel %vm1782, 1, 0
        %v1847 = vsel %vm1783, 1, 0
        %v1848 = vsel %vm1784, 1, 0
        %v1849 = vsel %vm1785, 1, 0
        %v1850 = vsel %vm1786, 1, 0
        %v1851 = vsel %vm1787, 1, 0
        %v1852 = vsel %vm1788, 1, 0
        %v1853 = vsel %vm1789, 1, 0
        %v1854 = vsel %vm1790, 1, 0
        %v1855 = vsel %vm1791, 1, 0
        %v1856 = vsel %vm1792, 1, 0
        %v1857 = vsel %vm1793, 1, 0
        %v1858 = vsel %vm1794, 1, 0
        %v1859 = vsel %vm1795, 1, 0
        %v1860 = vsel %vm1796, 1, 0
        %v1861 = vsel %vm1797, 1, 0
        %v1862 = vsel %vm1798, 1, 0
        %v1863 = vsel %vm1799, 1, 0
        %v1864 = vsel %vm1800, 1, 0
        %v1865 = vsel %vm1801, 1, 0
        %v1866 = vsel %vm1802, 1, 0
        %v1867 = vsel %vm1803, 1, 0
        %v1868 = vsel %vm1804, 1, 0
        %vm1869 = vcmp.eq.s32.totalorder %v1805, 1
        %vm1870 = vcmp.eq.s32.totalorder %v1806, 1
        %vm1871 = vcmp.eq.s32.totalorder %v1807, 1
        %vm1872 = vcmp.eq.s32.totalorder %v1808, 1
        %vm1873 = vcmp.eq.s32.totalorder %v1809, 1
        %vm1874 = vcmp.eq.s32.totalorder %v1810, 1
        %vm1875 = vcmp.eq.s32.totalorder %v1811, 1
        %vm1876 = vcmp.eq.s32.totalorder %v1812, 1
        %vm1877 = vcmp.eq.s32.totalorder %v1813, 1
        %vm1878 = vcmp.eq.s32.totalorder %v1814, 1
        %vm1879 = vcmp.eq.s32.totalorder %v1815, 1
        %vm1880 = vcmp.eq.s32.totalorder %v1816, 1
        %vm1881 = vcmp.eq.s32.totalorder %v1817, 1
        %vm1882 = vcmp.eq.s32.totalorder %v1818, 1
        %vm1883 = vcmp.eq.s32.totalorder %v1819, 1
        %vm1884 = vcmp.eq.s32.totalorder %v1820, 1
        %vm1885 = vcmp.eq.s32.totalorder %v1821, 1
        %vm1886 = vcmp.eq.s32.totalorder %v1822, 1
        %vm1887 = vcmp.eq.s32.totalorder %v1823, 1
        %vm1888 = vcmp.eq.s32.totalorder %v1824, 1
        %vm1889 = vcmp.eq.s32.totalorder %v1825, 1
        %vm1890 = vcmp.eq.s32.totalorder %v1826, 1
        %vm1891 = vcmp.eq.s32.totalorder %v1827, 1
        %vm1892 = vcmp.eq.s32.totalorder %v1828, 1
        %vm1893 = vcmp.eq.s32.totalorder %v1829, 1
        %vm1894 = vcmp.eq.s32.totalorder %v1830, 1
        %vm1895 = vcmp.eq.s32.totalorder %v1831, 1
        %vm1896 = vcmp.eq.s32.totalorder %v1832, 1
        %vm1897 = vcmp.eq.s32.totalorder %v1833, 1
        %vm1898 = vcmp.eq.s32.totalorder %v1834, 1
        %vm1899 = vcmp.eq.s32.totalorder %v1835, 1
        %vm1900 = vcmp.eq.s32.totalorder %v1836, 1
        %vm1901 = vcmp.eq.s32.totalorder %v1837, 1
        %vm1902 = vcmp.eq.s32.totalorder %v1838, 1
        %vm1903 = vcmp.eq.s32.totalorder %v1839, 1
        %vm1904 = vcmp.eq.s32.totalorder %v1840, 1
        %vm1905 = vcmp.eq.s32.totalorder %v1841, 1
        %vm1906 = vcmp.eq.s32.totalorder %v1842, 1
        %vm1907 = vcmp.eq.s32.totalorder %v1843, 1
        %vm1908 = vcmp.eq.s32.totalorder %v1844, 1
        %vm1909 = vcmp.eq.s32.totalorder %v1845, 1
        %vm1910 = vcmp.eq.s32.totalorder %v1846, 1
        %vm1911 = vcmp.eq.s32.totalorder %v1847, 1
        %vm1912 = vcmp.eq.s32.totalorder %v1848, 1
        %vm1913 = vcmp.eq.s32.totalorder %v1849, 1
        %vm1914 = vcmp.eq.s32.totalorder %v1850, 1
        %vm1915 = vcmp.eq.s32.totalorder %v1851, 1
        %vm1916 = vcmp.eq.s32.totalorder %v1852, 1
        %vm1917 = vcmp.eq.s32.totalorder %v1853, 1
        %vm1918 = vcmp.eq.s32.totalorder %v1854, 1
        %vm1919 = vcmp.eq.s32.totalorder %v1855, 1
        %vm1920 = vcmp.eq.s32.totalorder %v1856, 1
        %vm1921 = vcmp.eq.s32.totalorder %v1857, 1
        %vm1922 = vcmp.eq.s32.totalorder %v1858, 1
        %vm1923 = vcmp.eq.s32.totalorder %v1859, 1
        %vm1924 = vcmp.eq.s32.totalorder %v1860, 1
        %vm1925 = vcmp.eq.s32.totalorder %v1861, 1
        %vm1926 = vcmp.eq.s32.totalorder %v1862, 1
        %vm1927 = vcmp.eq.s32.totalorder %v1863, 1
        %vm1928 = vcmp.eq.s32.totalorder %v1864, 1
        %vm1929 = vcmp.eq.s32.totalorder %v1865, 1
        %vm1930 = vcmp.eq.s32.totalorder %v1866, 1
        %vm1931 = vcmp.eq.s32.totalorder %v1867, 1
        %vm1932 = vcmp.eq.s32.totalorder %v1868, 1
        %v1933 = vld [vmem:[#allocation3] sm:$0xff]
        %v1934 = vld [vmem:[#allocation3 + $0x20] sm:$0xff]
        %v1935 = vld [vmem:[#allocation3 + $0x40] sm:$0xff]
        %v1936 = vld [vmem:[#allocation3 + $0x60] sm:$0xff]
        %v1937 = vld [vmem:[#allocation3 + $0x80] sm:$0xff]
        %v1938 = vld [vmem:[#allocation3 + $0xa0] sm:$0xff]
        %v1939 = vld [vmem:[#allocation3 + $0xc0] sm:$0xff]
        %v1940 = vld [vmem:[#allocation3 + $0xe0] sm:$0xff]
        %v1941 = vld [vmem:[#allocation3 + $0x100] sm:$0xff]
        %v1942 = vld [vmem:[#allocation3 + $0x120] sm:$0xff]
        %v1943 = vld [vmem:[#allocation3 + $0x140] sm:$0xff]
        %v1944 = vld [vmem:[#allocation3 + $0x160] sm:$0xff]
        %v1945 = vld [vmem:[#allocation3 + $0x180] sm:$0xff]
        %v1946 = vld [vmem:[#allocation3 + $0x1a0] sm:$0xff]
        %v1947 = vld [vmem:[#allocation3 + $0x1c0] sm:$0xff]
        %v1948 = vld [vmem:[#allocation3 + $0x1e0] sm:$0xff]
        %v1949 = vld [vmem:[%s6] sm:$0x3]
        %v1951 = vlaneseq
        %v1952 = vshrl.u32 %v1951, 7
        %v1953 = vsub.s32 0, %v1952
        %v1954 = vrot.slane %v1949, %v1953
        %v1955 = vlaneseq
        %v1956 = vshrl.u32 %v1955, 7
        %v1957 = vsub.s32 1, %v1956
        %v1958 = vrot.slane %v1949, %v1957
        %v1977 = vunpack.c.l.b16 %v1933
        %v1978 = vunpack.c.h.b16 %v1933
        %v1979 = vunpack.c.l.b16 %v1934
        %v1980 = vunpack.c.h.b16 %v1934
        %v1981 = vunpack.c.l.b16 %v1935
        %v1982 = vunpack.c.h.b16 %v1935
        %v1983 = vunpack.c.l.b16 %v1936
        %v1984 = vunpack.c.h.b16 %v1936
        %v1985 = vunpack.c.l.b16 %v1937
        %v1986 = vunpack.c.h.b16 %v1937
        %v1987 = vunpack.c.l.b16 %v1938
        %v1988 = vunpack.c.h.b16 %v1938
        %v1989 = vunpack.c.l.b16 %v1939
        %v1990 = vunpack.c.h.b16 %v1939
        %v1991 = vunpack.c.l.b16 %v1940
        %v1992 = vunpack.c.h.b16 %v1940
        %v1993 = vunpack.c.l.b16 %v1941
        %v1994 = vunpack.c.h.b16 %v1941
        %v1995 = vunpack.c.l.b16 %v1942
        %v1996 = vunpack.c.h.b16 %v1942
        %v1997 = vunpack.c.l.b16 %v1943
        %v1998 = vunpack.c.h.b16 %v1943
        %v1999 = vunpack.c.l.b16 %v1944
        %v2000 = vunpack.c.h.b16 %v1944
        %v2001 = vunpack.c.l.b16 %v1945
        %v2002 = vunpack.c.h.b16 %v1945
        %v2003 = vunpack.c.l.b16 %v1946
        %v2004 = vunpack.c.h.b16 %v1946
        %v2005 = vunpack.c.l.b16 %v1947
        %v2006 = vunpack.c.h.b16 %v1947
        %v2007 = vunpack.c.l.b16 %v1948
        %v2008 = vunpack.c.h.b16 %v1948
        %v2009 = vpack.c.b16 %v1979, %v1977
        %v2010 = vpack.c.b16 %v1980, %v1978
        %v2011 = vpack.c.b16 %v1983, %v1981
        %v2012 = vpack.c.b16 %v1984, %v1982
        %v2013 = vpack.c.b16 %v1987, %v1985
        %v2014 = vpack.c.b16 %v1988, %v1986
        %v2015 = vpack.c.b16 %v1991, %v1989
        %v2016 = vpack.c.b16 %v1992, %v1990
        %v2017 = vpack.c.b16 %v1995, %v1993
        %v2018 = vpack.c.b16 %v1996, %v1994
        %v2019 = vpack.c.b16 %v1999, %v1997
        %v2020 = vpack.c.b16 %v2000, %v1998
        %v2021 = vpack.c.b16 %v2003, %v2001
        %v2022 = vpack.c.b16 %v2004, %v2002
        %v2023 = vpack.c.b16 %v2007, %v2005
        %v2024 = vpack.c.b16 %v2008, %v2006
        %2041 = vmatprep.subr.bf16.mxu0 %v2010
        %2042 = vmatpush1.bf16.msra.mxu0 %v2009
        %2043 = vmatprep.subr.bf16.mxu0 %v2012
        %2044 = vmatpush1.bf16.msra.mxu0 %v2011
        %2045 = vmatprep.subr.bf16.mxu0 %v2014
        %2046 = vmatpush1.bf16.msra.mxu0 %v2013
        %2047 = vmatprep.subr.bf16.mxu0 %v2016
        %2048 = vmatpush1.bf16.msra.mxu0 %v2015
        %2049 = vmatprep.subr.bf16.mxu0 %v2018
        %2050 = vmatpush1.bf16.msra.mxu0 %v2017
        %2051 = vmatprep.subr.bf16.mxu0 %v2020
        %2052 = vmatpush1.bf16.msra.mxu0 %v2019
        %2053 = vmatprep.subr.bf16.mxu0 %v2022
        %2054 = vmatpush1.bf16.msra.mxu0 %v2021
        %2055 = vmatprep.subr.bf16.mxu0 %v2024
        %2056 = vmatpush1.bf16.msra.mxu0 %v2023
        %2057 = vmatprep.subr.bf16.mxu0 0
        %2058 = vmatpush1.bf16.msra.mxu0 0
        %2059 = vmatprep.subr.bf16.mxu0 0
        %2060 = vmatpush1.bf16.msra.mxu0 0
        %2061 = vmatprep.subr.bf16.mxu0 0
        %2062 = vmatpush1.bf16.msra.mxu0 0
        %2063 = vmatprep.subr.bf16.mxu0 0
        %2064 = vmatpush1.bf16.msra.mxu0 0
        %2065 = vmatprep.subr.bf16.mxu0 0
        %2066 = vmatpush1.bf16.msra.mxu0 0
        %2067 = vmatprep.subr.bf16.mxu0 0
        %2068 = vmatpush1.bf16.msra.mxu0 0
        %2069 = vmatprep.subr.bf16.mxu0 0
        %2070 = vmatpush1.bf16.msra.mxu0 0
        %2071 = vmatprep.subr.bf16.mxu0 0
        %2072 = vmatpush1.bf16.msra.mxu0 0
        %2073 = vmatprep.mubr.bf16.mxu0 0
        %2074 = vmatmul.mubr.bf16.gmra.mrb[0].mxu0 %v1554
        %v2075 = vpop.f32.mrb[0].mxu0
        %v2076 = vadd.f32 %v1954, %v2075
        %v2077 = vpop.f32.mrb[0].mxu0
        %v2078 = vadd.f32 %v1958, %v2077
        %v2079 = vpop.f32.mrb[0].mxu0
        %v2080 = vadd.f32 %v1954, %v2079
        %v2081 = vpop.f32.mrb[0].mxu0
        %v2082 = vadd.f32 %v1958, %v2081
        %2083 = vmatprep.mubr.bf16.mxu0 0
        %2084 = vmatmul.mubr.bf16.gmra.mrb[0].mxu0 %v1555
        %v2085 = vpop.f32.mrb[0].mxu0
        %v2086 = vadd.f32 %v1954, %v2085
        %v2087 = vpop.f32.mrb[0].mxu0
        %v2088 = vadd.f32 %v1958, %v2087
        %v2089 = vpop.f32.mrb[0].mxu0
        %v2090 = vadd.f32 %v1954, %v2089
        %v2091 = vpop.f32.mrb[0].mxu0
        %v2092 = vadd.f32 %v1958, %v2091
        %2093 = vmatprep.mubr.bf16.mxu0 0
        %2094 = vmatmul.mubr.bf16.gmra.mrb[0].mxu0 %v1556
        %v2095 = vpop.f32.mrb[0].mxu0
        %v2096 = vadd.f32 %v1954, %v2095
        %v2097 = vpop.f32.mrb[0].mxu0
        %v2098 = vadd.f32 %v1958, %v2097
        %v2099 = vpop.f32.mrb[0].mxu0
        %v2100 = vadd.f32 %v1954, %v2099
        %v2101 = vpop.f32.mrb[0].mxu0
        %v2102 = vadd.f32 %v1958, %v2101
        %2103 = vmatprep.mubr.bf16.mxu0 0
        %2104 = vmatmul.mubr.bf16.gmra.mrb[0].mxu0 %v1557
        %v2105 = vpop.f32.mrb[0].mxu0
        %v2106 = vadd.f32 %v1954, %v2105
        %v2107 = vpop.f32.mrb[0].mxu0
        %v2108 = vadd.f32 %v1958, %v2107
        %v2109 = vpop.f32.mrb[0].mxu0
        %v2110 = vadd.f32 %v1954, %v2109
        %v2111 = vpop.f32.mrb[0].mxu0
        %v2112 = vadd.f32 %v1958, %v2111
        %2113 = vmatprep.mubr.bf16.mxu0 0
        %2114 = vmatmul.mubr.bf16.gmra.mrb[0].mxu0 %v1558
        %v2115 = vpop.f32.mrb[0].mxu0
        %v2116 = vadd.f32 %v1954, %v2115
        %v2117 = vpop.f32.mrb[0].mxu0
        %v2118 = vadd.f32 %v1958, %v2117
        %v2119 = vpop.f32.mrb[0].mxu0
        %v2120 = vadd.f32 %v1954, %v2119
        %v2121 = vpop.f32.mrb[0].mxu0
        %v2122 = vadd.f32 %v1958, %v2121
        %2123 = vmatprep.mubr.bf16.mxu0 0
        %2124 = vmatmul.mubr.bf16.gmra.mrb[0].mxu0 %v1559
        %v2125 = vpop.f32.mrb[0].mxu0
        %v2126 = vadd.f32 %v1954, %v2125
        %v2127 = vpop.f32.mrb[0].mxu0
        %v2128 = vadd.f32 %v1958, %v2127
        %v2129 = vpop.f32.mrb[0].mxu0
        %v2130 = vadd.f32 %v1954, %v2129
        %v2131 = vpop.f32.mrb[0].mxu0
        %v2132 = vadd.f32 %v1958, %v2131
        %2133 = vmatprep.mubr.bf16.mxu0 0
        %2134 = vmatmul.mubr.bf16.gmra.mrb[0].mxu0 %v1560
        %v2135 = vpop.f32.mrb[0].mxu0
        %v2136 = vadd.f32 %v1954, %v2135
        %v2137 = vpop.f32.mrb[0].mxu0
        %v2138 = vadd.f32 %v1958, %v2137
        %v2139 = vpop.f32.mrb[0].mxu0
        %v2140 = vadd.f32 %v1954, %v2139
        %v2141 = vpop.f32.mrb[0].mxu0
        %v2142 = vadd.f32 %v1958, %v2141
        %2143 = vmatprep.mubr.bf16.mxu0 0
        %2144 = vmatmul.mubr.bf16.gmra.mrb[0].mxu0 %v1561
        %v2145 = vpop.f32.mrb[0].mxu0
        %v2146 = vadd.f32 %v1954, %v2145
        %v2147 = vpop.f32.mrb[0].mxu0
        %v2148 = vadd.f32 %v1958, %v2147
        %v2149 = vpop.f32.mrb[0].mxu0
        %v2150 = vadd.f32 %v1954, %v2149
        %v2151 = vpop.f32.mrb[0].mxu0
        %v2152 = vadd.f32 %v1958, %v2151
        %2153 = vmatprep.mubr.bf16.mxu0 0
        %2154 = vmatmul.mubr.bf16.gmra.mrb[0].mxu0 %v1570
        %v2155 = vpop.f32.mrb[0].mxu0
        %v2156 = vadd.f32 %v1954, %v2155
        %v2157 = vpop.f32.mrb[0].mxu0
        %v2158 = vadd.f32 %v1958, %v2157
        %v2159 = vpop.f32.mrb[0].mxu0
        %v2160 = vadd.f32 %v1954, %v2159
        %v2161 = vpop.f32.mrb[0].mxu0
        %v2162 = vadd.f32 %v1958, %v2161
        %2163 = vmatprep.mubr.bf16.mxu0 0
        %2164 = vmatmul.mubr.bf16.gmra.mrb[0].mxu0 %v1571
        %v2165 = vpop.f32.mrb[0].mxu0
        %v2166 = vadd.f32 %v1954, %v2165
        %v2167 = vpop.f32.mrb[0].mxu0
        %v2168 = vadd.f32 %v1958, %v2167
        %v2169 = vpop.f32.mrb[0].mxu0
        %v2170 = vadd.f32 %v1954, %v2169
        %v2171 = vpop.f32.mrb[0].mxu0
        %v2172 = vadd.f32 %v1958, %v2171
        %2173 = vmatprep.mubr.bf16.mxu0 0
        %2174 = vmatmul.mubr.bf16.gmra.mrb[0].mxu0 %v1572
        %v2175 = vpop.f32.mrb[0].mxu0
        %v2176 = vadd.f32 %v1954, %v2175
        %v2177 = vpop.f32.mrb[0].mxu0
        %v2178 = vadd.f32 %v1958, %v2177
        %v2179 = vpop.f32.mrb[0].mxu0
        %v2180 = vadd.f32 %v1954, %v2179
        %v2181 = vpop.f32.mrb[0].mxu0
        %v2182 = vadd.f32 %v1958, %v2181
        %2183 = vmatprep.mubr.bf16.mxu0 0
        %2184 = vmatmul.mubr.bf16.gmra.mrb[0].mxu0 %v1573
        %v2185 = vpop.f32.mrb[0].mxu0
        %v2186 = vadd.f32 %v1954, %v2185
        %v2187 = vpop.f32.mrb[0].mxu0
        %v2188 = vadd.f32 %v1958, %v2187
        %v2189 = vpop.f32.mrb[0].mxu0
        %v2190 = vadd.f32 %v1954, %v2189
        %v2191 = vpop.f32.mrb[0].mxu0
        %v2192 = vadd.f32 %v1958, %v2191
        %2193 = vmatprep.mubr.bf16.mxu0 0
        %2194 = vmatmul.mubr.bf16.gmra.mrb[0].mxu0 %v1574
        %v2195 = vpop.f32.mrb[0].mxu0
        %v2196 = vadd.f32 %v1954, %v2195
        %v2197 = vpop.f32.mrb[0].mxu0
        %v2198 = vadd.f32 %v1958, %v2197
        %v2199 = vpop.f32.mrb[0].mxu0
        %v2200 = vadd.f32 %v1954, %v2199
        %v2201 = vpop.f32.mrb[0].mxu0
        %v2202 = vadd.f32 %v1958, %v2201
        %2203 = vmatprep.mubr.bf16.mxu0 0
        %2204 = vmatmul.mubr.bf16.gmra.mrb[0].mxu0 %v1575
        %v2205 = vpop.f32.mrb[0].mxu0
        %v2206 = vadd.f32 %v1954, %v2205
        %v2207 = vpop.f32.mrb[0].mxu0
        %v2208 = vadd.f32 %v1958, %v2207
        %v2209 = vpop.f32.mrb[0].mxu0
        %v2210 = vadd.f32 %v1954, %v2209
        %v2211 = vpop.f32.mrb[0].mxu0
        %v2212 = vadd.f32 %v1958, %v2211
        %2213 = vmatprep.mubr.bf16.mxu0 0
        %2214 = vmatmul.mubr.bf16.gmra.mrb[0].mxu0 %v1576
        %v2215 = vpop.f32.mrb[0].mxu0
        %v2216 = vadd.f32 %v1954, %v2215
        %v2217 = vpop.f32.mrb[0].mxu0
        %v2218 = vadd.f32 %v1958, %v2217
        %v2219 = vpop.f32.mrb[0].mxu0
        %v2220 = vadd.f32 %v1954, %v2219
        %v2221 = vpop.f32.mrb[0].mxu0
        %v2222 = vadd.f32 %v1958, %v2221
        %2223 = vmatprep.mubr.bf16.mxu0 0
        %2224 = vmatmul.mubr.bf16.gmra.mrb[0].mxu0 %v1577
        %v2225 = vpop.f32.mrb[0].mxu0
        %v2226 = vadd.f32 %v1954, %v2225
        %v2227 = vpop.f32.mrb[0].mxu0
        %v2228 = vadd.f32 %v1958, %v2227
        %v2229 = vpop.f32.mrb[0].mxu0
        %v2230 = vadd.f32 %v1954, %v2229
        %v2231 = vpop.f32.mrb[0].mxu0
        %v2232 = vadd.f32 %v1958, %v2231
        %2233 = vmatprep.mubr.bf16.mxu0 0
        %2234 = vmatmul.mubr.bf16.gmra.mrb[0].mxu0 %v1586
        %v2235 = vpop.f32.mrb[0].mxu0
        %v2236 = vadd.f32 %v1954, %v2235
        %v2237 = vpop.f32.mrb[0].mxu0
        %v2238 = vadd.f32 %v1958, %v2237
        %v2239 = vpop.f32.mrb[0].mxu0
        %v2240 = vadd.f32 %v1954, %v2239
        %v2241 = vpop.f32.mrb[0].mxu0
        %v2242 = vadd.f32 %v1958, %v2241
        %2243 = vmatprep.mubr.bf16.mxu0 0
        %2244 = vmatmul.mubr.bf16.gmra.mrb[0].mxu0 %v1587
        %v2245 = vpop.f32.mrb[0].mxu0
        %v2246 = vadd.f32 %v1954, %v2245
        %v2247 = vpop.f32.mrb[0].mxu0
        %v2248 = vadd.f32 %v1958, %v2247
        %v2249 = vpop.f32.mrb[0].mxu0
        %v2250 = vadd.f32 %v1954, %v2249
        %v2251 = vpop.f32.mrb[0].mxu0
        %v2252 = vadd.f32 %v1958, %v2251
        %2253 = vmatprep.mubr.bf16.mxu0 0
        %2254 = vmatmul.mubr.bf16.gmra.mrb[0].mxu0 %v1588
        %v2255 = vpop.f32.mrb[0].mxu0
        %v2256 = vadd.f32 %v1954, %v2255
        %v2257 = vpop.f32.mrb[0].mxu0
        %v2258 = vadd.f32 %v1958, %v2257
        %v2259 = vpop.f32.mrb[0].mxu0
        %v2260 = vadd.f32 %v1954, %v2259
        %v2261 = vpop.f32.mrb[0].mxu0
        %v2262 = vadd.f32 %v1958, %v2261
        %2263 = vmatprep.mubr.bf16.mxu0 0
        %2264 = vmatmul.mubr.bf16.gmra.mrb[0].mxu0 %v1589
        %v2265 = vpop.f32.mrb[0].mxu0
        %v2266 = vadd.f32 %v1954, %v2265
        %v2267 = vpop.f32.mrb[0].mxu0
        %v2268 = vadd.f32 %v1958, %v2267
        %v2269 = vpop.f32.mrb[0].mxu0
        %v2270 = vadd.f32 %v1954, %v2269
        %v2271 = vpop.f32.mrb[0].mxu0
        %v2272 = vadd.f32 %v1958, %v2271
        %2273 = vmatprep.mubr.bf16.mxu0 0
        %2274 = vmatmul.mubr.bf16.gmra.mrb[0].mxu0 %v1590
        %v2275 = vpop.f32.mrb[0].mxu0
        %v2276 = vadd.f32 %v1954, %v2275
        %v2277 = vpop.f32.mrb[0].mxu0
        %v2278 = vadd.f32 %v1958, %v2277
        %v2279 = vpop.f32.mrb[0].mxu0
        %v2280 = vadd.f32 %v1954, %v2279
        %v2281 = vpop.f32.mrb[0].mxu0
        %v2282 = vadd.f32 %v1958, %v2281
        %2283 = vmatprep.mubr.bf16.mxu0 0
        %2284 = vmatmul.mubr.bf16.gmra.mrb[0].mxu0 %v1591
        %v2285 = vpop.f32.mrb[0].mxu0
        %v2286 = vadd.f32 %v1954, %v2285
        %v2287 = vpop.f32.mrb[0].mxu0
        %v2288 = vadd.f32 %v1958, %v2287
        %v2289 = vpop.f32.mrb[0].mxu0
        %v2290 = vadd.f32 %v1954, %v2289
        %v2291 = vpop.f32.mrb[0].mxu0
        %v2292 = vadd.f32 %v1958, %v2291
        %2293 = vmatprep.mubr.bf16.mxu0 0
        %2294 = vmatmul.mubr.bf16.gmra.mrb[0].mxu0 %v1592
        %v2295 = vpop.f32.mrb[0].mxu0
        %v2296 = vadd.f32 %v1954, %v2295
        %v2297 = vpop.f32.mrb[0].mxu0
        %v2298 = vadd.f32 %v1958, %v2297
        %v2299 = vpop.f32.mrb[0].mxu0
        %v2300 = vadd.f32 %v1954, %v2299
        %v2301 = vpop.f32.mrb[0].mxu0
        %v2302 = vadd.f32 %v1958, %v2301
        %2303 = vmatprep.mubr.bf16.mxu0 0
        %2304 = vmatmul.mubr.bf16.gmra.mrb[0].mxu0 %v1593
        %v2305 = vpop.f32.mrb[0].mxu0
        %v2306 = vadd.f32 %v1954, %v2305
        %v2307 = vpop.f32.mrb[0].mxu0
        %v2308 = vadd.f32 %v1958, %v2307
        %v2309 = vpop.f32.mrb[0].mxu0
        %v2310 = vadd.f32 %v1954, %v2309
        %v2311 = vpop.f32.mrb[0].mxu0
        %v2312 = vadd.f32 %v1958, %v2311
        %2313 = vmatprep.mubr.bf16.mxu0 0
        %2314 = vmatmul.mubr.bf16.gmra.mrb[0].mxu0 %v1602
        %v2315 = vpop.f32.mrb[0].mxu0
        %v2316 = vadd.f32 %v1954, %v2315
        %v2317 = vpop.f32.mrb[0].mxu0
        %v2318 = vadd.f32 %v1958, %v2317
        %v2319 = vpop.f32.mrb[0].mxu0
        %v2320 = vadd.f32 %v1954, %v2319
        %v2321 = vpop.f32.mrb[0].mxu0
        %v2322 = vadd.f32 %v1958, %v2321
        %2323 = vmatprep.mubr.bf16.mxu0 0
        %2324 = vmatmul.mubr.bf16.gmra.mrb[0].mxu0 %v1603
        %v2325 = vpop.f32.mrb[0].mxu0
        %v2326 = vadd.f32 %v1954, %v2325
        %v2327 = vpop.f32.mrb[0].mxu0
        %v2328 = vadd.f32 %v1958, %v2327
        %v2329 = vpop.f32.mrb[0].mxu0
        %v2330 = vadd.f32 %v1954, %v2329
        %v2331 = vpop.f32.mrb[0].mxu0
        %v2332 = vadd.f32 %v1958, %v2331
        %2333 = vmatprep.mubr.bf16.mxu0 0
        %2334 = vmatmul.mubr.bf16.gmra.mrb[0].mxu0 %v1604
        %v2335 = vpop.f32.mrb[0].mxu0
        %v2336 = vadd.f32 %v1954, %v2335
        %v2337 = vpop.f32.mrb[0].mxu0
        %v2338 = vadd.f32 %v1958, %v2337
        %v2339 = vpop.f32.mrb[0].mxu0
        %v2340 = vadd.f32 %v1954, %v2339
        %v2341 = vpop.f32.mrb[0].mxu0
        %v2342 = vadd.f32 %v1958, %v2341
        %2343 = vmatprep.mubr.bf16.mxu0 0
        %2344 = vmatmul.mubr.bf16.gmra.mrb[0].mxu0 %v1605
        %v2345 = vpop.f32.mrb[0].mxu0
        %v2346 = vadd.f32 %v1954, %v2345
        %v2347 = vpop.f32.mrb[0].mxu0
        %v2348 = vadd.f32 %v1958, %v2347
        %v2349 = vpop.f32.mrb[0].mxu0
        %v2350 = vadd.f32 %v1954, %v2349
        %v2351 = vpop.f32.mrb[0].mxu0
        %v2352 = vadd.f32 %v1958, %v2351
        %2353 = vmatprep.mubr.bf16.mxu0 0
        %2354 = vmatmul.mubr.bf16.gmra.mrb[0].mxu0 %v1606
        %v2355 = vpop.f32.mrb[0].mxu0
        %v2356 = vadd.f32 %v1954, %v2355
        %v2357 = vpop.f32.mrb[0].mxu0
        %v2358 = vadd.f32 %v1958, %v2357
        %v2359 = vpop.f32.mrb[0].mxu0
        %v2360 = vadd.f32 %v1954, %v2359
        %v2361 = vpop.f32.mrb[0].mxu0
        %v2362 = vadd.f32 %v1958, %v2361
        %2363 = vmatprep.mubr.bf16.mxu0 0
        %2364 = vmatmul.mubr.bf16.gmra.mrb[0].mxu0 %v1607
        %v2365 = vpop.f32.mrb[0].mxu0
        %v2366 = vadd.f32 %v1954, %v2365
        %v2367 = vpop.f32.mrb[0].mxu0
        %v2368 = vadd.f32 %v1958, %v2367
        %v2369 = vpop.f32.mrb[0].mxu0
        %v2370 = vadd.f32 %v1954, %v2369
        %v2371 = vpop.f32.mrb[0].mxu0
        %v2372 = vadd.f32 %v1958, %v2371
        %2373 = vmatprep.mubr.bf16.mxu0 0
        %2374 = vmatmul.mubr.bf16.gmra.mrb[0].mxu0 %v1608
        %v2375 = vpop.f32.mrb[0].mxu0
        %v2376 = vadd.f32 %v1954, %v2375
        %v2377 = vpop.f32.mrb[0].mxu0
        %v2378 = vadd.f32 %v1958, %v2377
        %v2379 = vpop.f32.mrb[0].mxu0
        %v2380 = vadd.f32 %v1954, %v2379
        %v2381 = vpop.f32.mrb[0].mxu0
        %v2382 = vadd.f32 %v1958, %v2381
        %2383 = vmatprep.mubr.bf16.mxu0 0
        %2384 = vmatmul.mubr.bf16.gmra.mrb[0].mxu0 %v1609
        %v2385 = vpop.f32.mrb[0].mxu0
        %v2386 = vadd.f32 %v1954, %v2385
        %v2387 = vpop.f32.mrb[0].mxu0
        %v2388 = vadd.f32 %v1958, %v2387
        %v2389 = vpop.f32.mrb[0].mxu0
        %v2390 = vadd.f32 %v1954, %v2389
        %v2391 = vpop.f32.mrb[0].mxu0
        %v2392 = vadd.f32 %v1958, %v2391
        %2393 = vdwg.mxu0
        %v2394 = vsel %vm1869, %v2076, 0.0
        %v2395 = vsel %vm1869, %v2078, 0.0
        %v2396 = vsel %vm1870, %v2080, 0.0
        %v2397 = vsel %vm1870, %v2082, 0.0
        %v2398 = vsel %vm1871, %v2086, 0.0
        %v2399 = vsel %vm1871, %v2088, 0.0
        %v2400 = vsel %vm1872, %v2090, 0.0
        %v2401 = vsel %vm1872, %v2092, 0.0
        %v2402 = vsel %vm1873, %v2096, 0.0
        %v2403 = vsel %vm1873, %v2098, 0.0
        %v2404 = vsel %vm1874, %v2100, 0.0
        %v2405 = vsel %vm1874, %v2102, 0.0
        %v2406 = vsel %vm1875, %v2106, 0.0
        %v2407 = vsel %vm1875, %v2108, 0.0
        %v2408 = vsel %vm1876, %v2110, 0.0
        %v2409 = vsel %vm1876, %v2112, 0.0
        %v2410 = vsel %vm1877, %v2116, 0.0
        %v2411 = vsel %vm1877, %v2118, 0.0
        %v2412 = vsel %vm1878, %v2120, 0.0
        %v2413 = vsel %vm1878, %v2122, 0.0
        %v2414 = vsel %vm1879, %v2126, 0.0
        %v2415 = vsel %vm1879, %v2128, 0.0
        %v2416 = vsel %vm1880, %v2130, 0.0
        %v2417 = vsel %vm1880, %v2132, 0.0
        %v2418 = vsel %vm1881, %v2136, 0.0
        %v2419 = vsel %vm1881, %v2138, 0.0
        %v2420 = vsel %vm1882, %v2140, 0.0
        %v2421 = vsel %vm1882, %v2142, 0.0
        %v2422 = vsel %vm1883, %v2146, 0.0
        %v2423 = vsel %vm1883, %v2148, 0.0
        %v2424 = vsel %vm1884, %v2150, 0.0
        %v2425 = vsel %vm1884, %v2152, 0.0
        %v2426 = vsel %vm1885, %v2156, 0.0
        %v2427 = vsel %vm1885, %v2158, 0.0
        %v2428 = vsel %vm1886, %v2160, 0.0
        %v2429 = vsel %vm1886, %v2162, 0.0
        %v2430 = vsel %vm1887, %v2166, 0.0
        %v2431 = vsel %vm1887, %v2168, 0.0
        %v2432 = vsel %vm1888, %v2170, 0.0
        %v2433 = vsel %vm1888, %v2172, 0.0
        %v2434 = vsel %vm1889, %v2176, 0.0
        %v2435 = vsel %vm1889, %v2178, 0.0
        %v2436 = vsel %vm1890, %v2180, 0.0
        %v2437 = vsel %vm1890, %v2182, 0.0
        %v2438 = vsel %vm1891, %v2186, 0.0
        %v2439 = vsel %vm1891, %v2188, 0.0
        %v2440 = vsel %vm1892, %v2190, 0.0
        %v2441 = vsel %vm1892, %v2192, 0.0
        %v2442 = vsel %vm1893, %v2196, 0.0
        %v2443 = vsel %vm1893, %v2198, 0.0
        %v2444 = vsel %vm1894, %v2200, 0.0
        %v2445 = vsel %vm1894, %v2202, 0.0
        %v2446 = vsel %vm1895, %v2206, 0.0
        %v2447 = vsel %vm1895, %v2208, 0.0
        %v2448 = vsel %vm1896, %v2210, 0.0
        %v2449 = vsel %vm1896, %v2212, 0.0
        %v2450 = vsel %vm1897, %v2216, 0.0
        %v2451 = vsel %vm1897, %v2218, 0.0
        %v2452 = vsel %vm1898, %v2220, 0.0
        %v2453 = vsel %vm1898, %v2222, 0.0
        %v2454 = vsel %vm1899, %v2226, 0.0
        %v2455 = vsel %vm1899, %v2228, 0.0
        %v2456 = vsel %vm1900, %v2230, 0.0
        %v2457 = vsel %vm1900, %v2232, 0.0
        %v2458 = vsel %vm1901, %v2236, 0.0
        %v2459 = vsel %vm1901, %v2238, 0.0
        %v2460 = vsel %vm1902, %v2240, 0.0
        %v2461 = vsel %vm1902, %v2242, 0.0
        %v2462 = vsel %vm1903, %v2246, 0.0
        %v2463 = vsel %vm1903, %v2248, 0.0
        %v2464 = vsel %vm1904, %v2250, 0.0
        %v2465 = vsel %vm1904, %v2252, 0.0
        %v2466 = vsel %vm1905, %v2256, 0.0
        %v2467 = vsel %vm1905, %v2258, 0.0
        %v2468 = vsel %vm1906, %v2260, 0.0
        %v2469 = vsel %vm1906, %v2262, 0.0
        %v2470 = vsel %vm1907, %v2266, 0.0
        %v2471 = vsel %vm1907, %v2268, 0.0
        %v2472 = vsel %vm1908, %v2270, 0.0
        %v2473 = vsel %vm1908, %v2272, 0.0
        %v2474 = vsel %vm1909, %v2276, 0.0
        %v2475 = vsel %vm1909, %v2278, 0.0
        %v2476 = vsel %vm1910, %v2280, 0.0
        %v2477 = vsel %vm1910, %v2282, 0.0
        %v2478 = vsel %vm1911, %v2286, 0.0
        %v2479 = vsel %vm1911, %v2288, 0.0
        %v2480 = vsel %vm1912, %v2290, 0.0
        %v2481 = vsel %vm1912, %v2292, 0.0
        %v2482 = vsel %vm1913, %v2296, 0.0
        %v2483 = vsel %vm1913, %v2298, 0.0
        %v2484 = vsel %vm1914, %v2300, 0.0
        %v2485 = vsel %vm1914, %v2302, 0.0
        %v2486 = vsel %vm1915, %v2306, 0.0
        %v2487 = vsel %vm1915, %v2308, 0.0
        %v2488 = vsel %vm1916, %v2310, 0.0
        %v2489 = vsel %vm1916, %v2312, 0.0
        %v2490 = vsel %vm1917, %v2316, 0.0
        %v2491 = vsel %vm1917, %v2318, 0.0
        %v2492 = vsel %vm1918, %v2320, 0.0
        %v2493 = vsel %vm1918, %v2322, 0.0
        %v2494 = vsel %vm1919, %v2326, 0.0
        %v2495 = vsel %vm1919, %v2328, 0.0
        %v2496 = vsel %vm1920, %v2330, 0.0
        %v2497 = vsel %vm1920, %v2332, 0.0
        %v2498 = vsel %vm1921, %v2336, 0.0
        %v2499 = vsel %vm1921, %v2338, 0.0
        %v2500 = vsel %vm1922, %v2340, 0.0
        %v2501 = vsel %vm1922, %v2342, 0.0
        %v2502 = vsel %vm1923, %v2346, 0.0
        %v2503 = vsel %vm1923, %v2348, 0.0
        %v2504 = vsel %vm1924, %v2350, 0.0
        %v2505 = vsel %vm1924, %v2352, 0.0
        %v2506 = vsel %vm1925, %v2356, 0.0
        %v2507 = vsel %vm1925, %v2358, 0.0
        %v2508 = vsel %vm1926, %v2360, 0.0
        %v2509 = vsel %vm1926, %v2362, 0.0
        %v2510 = vsel %vm1927, %v2366, 0.0
        %v2511 = vsel %vm1927, %v2368, 0.0
        %v2512 = vsel %vm1928, %v2370, 0.0
        %v2513 = vsel %vm1928, %v2372, 0.0
        %v2514 = vsel %vm1929, %v2376, 0.0
        %v2515 = vsel %vm1929, %v2378, 0.0
        %v2516 = vsel %vm1930, %v2380, 0.0
        %v2517 = vsel %vm1930, %v2382, 0.0
        %v2518 = vsel %vm1931, %v2386, 0.0
        %v2519 = vsel %vm1931, %v2388, 0.0
        %v2520 = vsel %vm1932, %v2390, 0.0
        %v2521 = vsel %vm1932, %v2392, 0.0
        %v2522 = vld [vmem:[#allocation2] sm:$0x3]
        %v2523 = vmax.f32 %v2394, %v2398
        %v2524 = vmax.f32 %v2396, %v2400
        %v2525 = vmax.f32 %v2523, %v2402
        %v2526 = vmax.f32 %v2524, %v2404
        %v2527 = vmax.f32 %v2525, %v2406
        %v2528 = vmax.f32 %v2526, %v2408
        %v2529 = vmax.f32 %v2527, %v2410
        %v2530 = vmax.f32 %v2528, %v2412
        %v2531 = vmax.f32 %v2529, %v2414
        %v2532 = vmax.f32 %v2530, %v2416
        %v2533 = vmax.f32 %v2531, %v2418
        %v2534 = vmax.f32 %v2532, %v2420
        %v2535 = vmax.f32 %v2533, %v2422
        %v2536 = vmax.f32 %v2534, %v2424
        %v2537 = vmax.f32 %v2535, %v2426
        %v2538 = vmax.f32 %v2536, %v2428
        %v2539 = vmax.f32 %v2537, %v2430
        %v2540 = vmax.f32 %v2538, %v2432
        %v2541 = vmax.f32 %v2539, %v2434
        %v2542 = vmax.f32 %v2540, %v2436
        %v2543 = vmax.f32 %v2541, %v2438
        %v2544 = vmax.f32 %v2542, %v2440
        %v2545 = vmax.f32 %v2543, %v2442
        %v2546 = vmax.f32 %v2544, %v2444
        %v2547 = vmax.f32 %v2545, %v2446
        %v2548 = vmax.f32 %v2546, %v2448
        %v2549 = vmax.f32 %v2547, %v2450
        %v2550 = vmax.f32 %v2548, %v2452
        %v2551 = vmax.f32 %v2549, %v2454
        %v2552 = vmax.f32 %v2550, %v2456
        %v2553 = vmax.f32 %v2551, %v2458
        %v2554 = vmax.f32 %v2552, %v2460
        %v2555 = vmax.f32 %v2553, %v2462
        %v2556 = vmax.f32 %v2554, %v2464
        %v2557 = vmax.f32 %v2555, %v2466
        %v2558 = vmax.f32 %v2556, %v2468
        %v2559 = vmax.f32 %v2557, %v2470
        %v2560 = vmax.f32 %v2558, %v2472
        %v2561 = vmax.f32 %v2559, %v2474
        %v2562 = vmax.f32 %v2560, %v2476
        %v2563 = vmax.f32 %v2561, %v2478
        %v2564 = vmax.f32 %v2562, %v2480
        %v2565 = vmax.f32 %v2563, %v2482
        %v2566 = vmax.f32 %v2564, %v2484
        %v2567 = vmax.f32 %v2565, %v2486
        %v2568 = vmax.f32 %v2566, %v2488
        %v2569 = vmax.f32 %v2567, %v2490
        %v2570 = vmax.f32 %v2568, %v2492
        %v2571 = vmax.f32 %v2569, %v2494
        %v2572 = vmax.f32 %v2570, %v2496
        %v2573 = vmax.f32 %v2571, %v2498
        %v2574 = vmax.f32 %v2572, %v2500
        %v2575 = vmax.f32 %v2573, %v2502
        %v2576 = vmax.f32 %v2574, %v2504
        %v2577 = vmax.f32 %v2575, %v2506
        %v2578 = vmax.f32 %v2576, %v2508
        %v2579 = vmax.f32 %v2577, %v2510
        %v2580 = vmax.f32 %v2578, %v2512
        %v2581 = vmax.f32 %v2579, %v2514
        %v2582 = vmax.f32 %v2580, %v2516
        %v2583 = vmax.f32 %v2581, %v2518
        %v2584 = vmax.f32 %v2582, %v2520
        %v2585 = vmax.f32 %v2583, %v2584
        %v2586 = vrot.slane %v2585, 4
        %v2587 = vmax.f32 %v2585, %v2586
        %v2588 = vrot.slane %v2587, 2
        %v2589 = vmax.f32 %v2587, %v2588
        %v2590 = vrot.slane %v2589, 1
        %v2591 = vmax.f32 %v2589, %v2590
        %v2592 = vmax.f32 %v2395, %v2399
        %v2593 = vmax.f32 %v2397, %v2401
        %v2594 = vmax.f32 %v2592, %v2403
        %v2595 = vmax.f32 %v2593, %v2405
        %v2596 = vmax.f32 %v2594, %v2407
        %v2597 = vmax.f32 %v2595, %v2409
        %v2598 = vmax.f32 %v2596, %v2411
        %v2599 = vmax.f32 %v2597, %v2413
        %v2600 = vmax.f32 %v2598, %v2415
        %v2601 = vmax.f32 %v2599, %v2417
        %v2602 = vmax.f32 %v2600, %v2419
        %v2603 = vmax.f32 %v2601, %v2421
        %v2604 = vmax.f32 %v2602, %v2423
        %v2605 = vmax.f32 %v2603, %v2425
        %v2606 = vmax.f32 %v2604, %v2427
        %v2607 = vmax.f32 %v2605, %v2429
        %v2608 = vmax.f32 %v2606, %v2431
        %v2609 = vmax.f32 %v2607, %v2433
        %v2610 = vmax.f32 %v2608, %v2435
        %v2611 = vmax.f32 %v2609, %v2437
        %v2612 = vmax.f32 %v2610, %v2439
        %v2613 = vmax.f32 %v2611, %v2441
        %v2614 = vmax.f32 %v2612, %v2443
        %v2615 = vmax.f32 %v2613, %v2445
        %v2616 = vmax.f32 %v2614, %v2447
        %v2617 = vmax.f32 %v2615, %v2449
        %v2618 = vmax.f32 %v2616, %v2451
        %v2619 = vmax.f32 %v2617, %v2453
        %v2620 = vmax.f32 %v2618, %v2455
        %v2621 = vmax.f32 %v2619, %v2457
        %v2622 = vmax.f32 %v2620, %v2459
        %v2623 = vmax.f32 %v2621, %v2461
        %v2624 = vmax.f32 %v2622, %v2463
        %v2625 = vmax.f32 %v2623, %v2465
        %v2626 = vmax.f32 %v2624, %v2467
        %v2627 = vmax.f32 %v2625, %v2469
        %v2628 = vmax.f32 %v2626, %v2471
        %v2629 = vmax.f32 %v2627, %v2473
        %v2630 = vmax.f32 %v2628, %v2475
        %v2631 = vmax.f32 %v2629, %v2477
        %v2632 = vmax.f32 %v2630, %v2479
        %v2633 = vmax.f32 %v2631, %v2481
        %v2634 = vmax.f32 %v2632, %v2483
        %v2635 = vmax.f32 %v2633, %v2485
        %v2636 = vmax.f32 %v2634, %v2487
        %v2637 = vmax.f32 %v2635, %v2489
        %v2638 = vmax.f32 %v2636, %v2491
        %v2639 = vmax.f32 %v2637, %v2493
        %v2640 = vmax.f32 %v2638, %v2495
        %v2641 = vmax.f32 %v2639, %v2497
        %v2642 = vmax.f32 %v2640, %v2499
        %v2643 = vmax.f32 %v2641, %v2501
        %v2644 = vmax.f32 %v2642, %v2503
        %v2645 = vmax.f32 %v2643, %v2505
        %v2646 = vmax.f32 %v2644, %v2507
        %v2647 = vmax.f32 %v2645, %v2509
        %v2648 = vmax.f32 %v2646, %v2511
        %v2649 = vmax.f32 %v2647, %v2513
        %v2650 = vmax.f32 %v2648, %v2515
        %v2651 = vmax.f32 %v2649, %v2517
        %v2652 = vmax.f32 %v2650, %v2519
        %v2653 = vmax.f32 %v2651, %v2521
        %v2654 = vmax.f32 %v2652, %v2653
        %v2655 = vrot.slane %v2654, 4
        %v2656 = vmax.f32 %v2654, %v2655
        %v2657 = vrot.slane %v2656, 2
        %v2658 = vmax.f32 %v2656, %v2657
        %v2659 = vrot.slane %v2658, 1
        %v2660 = vmax.f32 %v2658, %v2659
        %v2663 = vcombine.low %v2591, %v2660
        %v2665 = vunpack.c.l.s4 1966171168
        %v2666 = vunpack.c.0.s8 %v2665
        %v2667 = vlaneseq
        %v2668 = vshrl.u32 %v2667, 7
        %v2669 = vsub.s32 %v2666, %v2668
        %v2670 = vrot.slane %v2663, %v2669
        %v2672 = vunpack.c.l.s4 1966171168
        %v2673 = vunpack.c.0.s8 %v2672
        %v2674 = vlaneseq
        %v2675 = vshrl.u32 %v2674, 7
        %v2676 = vsub.s32 %v2673, %v2675
        %v2677 = vrot.slane %v2670, %v2676
        %v2679 = vmax.f32 %v2522, %v2677
        %v2680 = vlaneseq
        %vm2681 = vcmp.ge.s32.totalorder %v2680, 0
        %vm2682 = vcmp.lt.s32.totalorder %v2680, 256
        %vm2683 = vmand %vm2681, %vm2682
        %2684 = vst.msk [vmem:[#allocation2] sm:$0x3] %vm2683, %v2679
        %v2685 = vld [vmem:[#allocation3 + $0x8] sm:$0xff]
        %v2686 = vld [vmem:[#allocation3 + $0x28] sm:$0xff]
        %v2687 = vld [vmem:[#allocation3 + $0x48] sm:$0xff]
        %v2688 = vld [vmem:[#allocation3 + $0x68] sm:$0xff]
        %v2689 = vld [vmem:[#allocation3 + $0x88] sm:$0xff]
        %v2690 = vld [vmem:[#allocation3 + $0xa8] sm:$0xff]
        %v2691 = vld [vmem:[#allocation3 + $0xc8] sm:$0xff]
        %v2692 = vld [vmem:[#allocation3 + $0xe8] sm:$0xff]
        %v2693 = vld [vmem:[#allocation3 + $0x108] sm:$0xff]
        %v2694 = vld [vmem:[#allocation3 + $0x128] sm:$0xff]
        %v2695 = vld [vmem:[#allocation3 + $0x148] sm:$0xff]
        %v2696 = vld [vmem:[#allocation3 + $0x168] sm:$0xff]
        %v2697 = vld [vmem:[#allocation3 + $0x188] sm:$0xff]
        %v2698 = vld [vmem:[#allocation3 + $0x1a8] sm:$0xff]
        %v2699 = vld [vmem:[#allocation3 + $0x1c8] sm:$0xff]
        %v2700 = vld [vmem:[#allocation3 + $0x1e8] sm:$0xff]
        %v2701 = vld [vmem:[%s6 + $0x2] sm:$0x3]
        %v2703 = vlaneseq
        %v2704 = vshrl.u32 %v2703, 7
        %v2705 = vsub.s32 0, %v2704
        %v2706 = vrot.slane %v2701, %v2705
        %v2707 = vlaneseq
        %v2708 = vshrl.u32 %v2707, 7
        %v2709 = vsub.s32 1, %v2708
        %v2710 = vrot.slane %v2701, %v2709
        %v2729 = vunpack.c.l.b16 %v2685
        %v2730 = vunpack.c.h.b16 %v2685
        %v2731 = vunpack.c.l.b16 %v2686
        %v2732 = vunpack.c.h.b16 %v2686
        %v2733 = vunpack.c.l.b16 %v2687
        %v2734 = vunpack.c.h.b16 %v2687
        %v2735 = vunpack.c.l.b16 %v2688
        %v2736 = vunpack.c.h.b16 %v2688
        %v2737 = vunpack.c.l.b16 %v2689
        %v2738 = vunpack.c.h.b16 %v2689
        %v2739 = vunpack.c.l.b16 %v2690
        %v2740 = vunpack.c.h.b16 %v2690
        %v2741 = vunpack.c.l.b16 %v2691
        %v2742 = vunpack.c.h.b16 %v2691
        %v2743 = vunpack.c.l.b16 %v2692
        %v2744 = vunpack.c.h.b16 %v2692
        %v2745 = vunpack.c.l.b16 %v2693
        %v2746 = vunpack.c.h.b16 %v2693
        %v2747 = vunpack.c.l.b16 %v2694
        %v2748 = vunpack.c.h.b16 %v2694
        %v2749 = vunpack.c.l.b16 %v2695
        %v2750 = vunpack.c.h.b16 %v2695
        %v2751 = vunpack.c.l.b16 %v2696
        %v2752 = vunpack.c.h.b16 %v2696
        %v2753 = vunpack.c.l.b16 %v2697
        %v2754 = vunpack.c.h.b16 %v2697
        %v2755 = vunpack.c.l.b16 %v2698
        %v2756 = vunpack.c.h.b16 %v2698
        %v2757 = vunpack.c.l.b16 %v2699
        %v2758 = vunpack.c.h.b16 %v2699
        %v2759 = vunpack.c.l.b16 %v2700
        %v2760 = vunpack.c.h.b16 %v2700
        %v2761 = vpack.c.b16 %v2731, %v2729
        %v2762 = vpack.c.b16 %v2732, %v2730
        %v2763 = vpack.c.b16 %v2735, %v2733
        %v2764 = vpack.c.b16 %v2736, %v2734
        %v2765 = vpack.c.b16 %v2739, %v2737
        %v2766 = vpack.c.b16 %v2740, %v2738
        %v2767 = vpack.c.b16 %v2743, %v2741
        %v2768 = vpack.c.b16 %v2744, %v2742
        %v2769 = vpack.c.b16 %v2747, %v2745
        %v2770 = vpack.c.b16 %v2748, %v2746
        %v2771 = vpack.c.b16 %v2751, %v2749
        %v2772 = vpack.c.b16 %v2752, %v2750
        %v2773 = vpack.c.b16 %v2755, %v2753
        %v2774 = vpack.c.b16 %v2756, %v2754
        %v2775 = vpack.c.b16 %v2759, %v2757
        %v2776 = vpack.c.b16 %v2760, %v2758
        %2793 = vmatprep.subr.bf16.mxu0 %v2762
        %2794 = vmatpush1.bf16.msra.mxu0 %v2761
        %2795 = vmatprep.subr.bf16.mxu0 %v2764
        %2796 = vmatpush1.bf16.msra.mxu0 %v2763
        %2797 = vmatprep.subr.bf16.mxu0 %v2766
        %2798 = vmatpush1.bf16.msra.mxu0 %v2765
        %2799 = vmatprep.subr.bf16.mxu0 %v2768
        %2800 = vmatpush1.bf16.msra.mxu0 %v2767
        %2801 = vmatprep.subr.bf16.mxu0 %v2770
        %2802 = vmatpush1.bf16.msra.mxu0 %v2769
        %2803 = vmatprep.subr.bf16.mxu0 %v2772
        %2804 = vmatpush1.bf16.msra.mxu0 %v2771
        %2805 = vmatprep.subr.bf16.mxu0 %v2774
        %2806 = vmatpush1.bf16.msra.mxu0 %v2773
        %2807 = vmatprep.subr.bf16.mxu0 %v2776
        %2808 = vmatpush1.bf16.msra.mxu0 %v2775
        %2809 = vmatprep.subr.bf16.mxu0 0
        %2810 = vmatpush1.bf16.msra.mxu0 0
        %2811 = vmatprep.subr.bf16.mxu0 0
        %2812 = vmatpush1.bf16.msra.mxu0 0
        %2813 = vmatprep.subr.bf16.mxu0 0
        %2814 = vmatpush1.bf16.msra.mxu0 0
        %2815 = vmatprep.subr.bf16.mxu0 0
        %2816 = vmatpush1.bf16.msra.mxu0 0
        %2817 = vmatprep.subr.bf16.mxu0 0
        %2818 = vmatpush1.bf16.msra.mxu0 0
        %2819 = vmatprep.subr.bf16.mxu0 0
        %2820 = vmatpush1.bf16.msra.mxu0 0
        %2821 = vmatprep.subr.bf16.mxu0 0
        %2822 = vmatpush1.bf16.msra.mxu0 0
        %2823 = vmatprep.subr.bf16.mxu0 0
        %2824 = vmatpush1.bf16.msra.mxu0 0
        %2825 = vmatprep.mubr.bf16.mxu0 0
        %2826 = vmatmul.mubr.bf16.gmra.mrb[0].mxu0 %v1554
        %v2827 = vpop.f32.mrb[0].mxu0
        %v2828 = vadd.f32 %v2706, %v2827
        %v2829 = vpop.f32.mrb[0].mxu0
        %v2830 = vadd.f32 %v2710, %v2829
        %v2831 = vpop.f32.mrb[0].mxu0
        %v2832 = vadd.f32 %v2706, %v2831
        %v2833 = vpop.f32.mrb[0].mxu0
        %v2834 = vadd.f32 %v2710, %v2833
        %2835 = vmatprep.mubr.bf16.mxu0 0
        %2836 = vmatmul.mubr.bf16.gmra.mrb[0].mxu0 %v1555
        %v2837 = vpop.f32.mrb[0].mxu0
        %v2838 = vadd.f32 %v2706, %v2837
        %v2839 = vpop.f32.mrb[0].mxu0
        %v2840 = vadd.f32 %v2710, %v2839
        %v2841 = vpop.f32.mrb[0].mxu0
        %v2842 = vadd.f32 %v2706, %v2841
        %v2843 = vpop.f32.mrb[0].mxu0
        %v2844 = vadd.f32 %v2710, %v2843
        %2845 = vmatprep.mubr.bf16.mxu0 0
        %2846 = vmatmul.mubr.bf16.gmra.mrb[0].mxu0 %v1556
        %v2847 = vpop.f32.mrb[0].mxu0
        %v2848 = vadd.f32 %v2706, %v2847
        %v2849 = vpop.f32.mrb[0].mxu0
        %v2850 = vadd.f32 %v2710, %v2849
        %v2851 = vpop.f32.mrb[0].mxu0
        %v2852 = vadd.f32 %v2706, %v2851
        %v2853 = vpop.f32.mrb[0].mxu0
        %v2854 = vadd.f32 %v2710, %v2853
        %2855 = vmatprep.mubr.bf16.mxu0 0
        %2856 = vmatmul.mubr.bf16.gmra.mrb[0].mxu0 %v1557
        %v2857 = vpop.f32.mrb[0].mxu0
        %v2858 = vadd.f32 %v2706, %v2857
        %v2859 = vpop.f32.mrb[0].mxu0
        %v2860 = vadd.f32 %v2710, %v2859
        %v2861 = vpop.f32.mrb[0].mxu0
        %v2862 = vadd.f32 %v2706, %v2861
        %v2863 = vpop.f32.mrb[0].mxu0
        %v2864 = vadd.f32 %v2710, %v2863
        %2865 = vmatprep.mubr.bf16.mxu0 0
        %2866 = vmatmul.mubr.bf16.gmra.mrb[0].mxu0 %v1558
        %v2867 = vpop.f32.mrb[0].mxu0
        %v2868 = vadd.f32 %v2706, %v2867
        %v2869 = vpop.f32.mrb[0].mxu0
        %v2870 = vadd.f32 %v2710, %v2869
        %v2871 = vpop.f32.mrb[0].mxu0
        %v2872 = vadd.f32 %v2706, %v2871
        %v2873 = vpop.f32.mrb[0].mxu0
        %v2874 = vadd.f32 %v2710, %v2873
        %2875 = vmatprep.mubr.bf16.mxu0 0
        %2876 = vmatmul.mubr.bf16.gmra.mrb[0].mxu0 %v1559
        %v2877 = vpop.f32.mrb[0].mxu0
        %v2878 = vadd.f32 %v2706, %v2877
        %v2879 = vpop.f32.mrb[0].mxu0
        %v2880 = vadd.f32 %v2710, %v2879
        %v2881 = vpop.f32.mrb[0].mxu0
        %v2882 = vadd.f32 %v2706, %v2881
        %v2883 = vpop.f32.mrb[0].mxu0
        %v2884 = vadd.f32 %v2710, %v2883
        %2885 = vmatprep.mubr.bf16.mxu0 0
        %2886 = vmatmul.mubr.bf16.gmra.mrb[0].mxu0 %v1560
        %v2887 = vpop.f32.mrb[0].mxu0
        %v2888 = vadd.f32 %v2706, %v2887
        %v2889 = vpop.f32.mrb[0].mxu0
        %v2890 = vadd.f32 %v2710, %v2889
        %v2891 = vpop.f32.mrb[0].mxu0
        %v2892 = vadd.f32 %v2706, %v2891
        %v2893 = vpop.f32.mrb[0].mxu0
        %v2894 = vadd.f32 %v2710, %v2893
        %2895 = vmatprep.mubr.bf16.mxu0 0
        %2896 = vmatmul.mubr.bf16.gmra.mrb[0].mxu0 %v1561
        %v2897 = vpop.f32.mrb[0].mxu0
        %v2898 = vadd.f32 %v2706, %v2897
        %v2899 = vpop.f32.mrb[0].mxu0
        %v2900 = vadd.f32 %v2710, %v2899
        %v2901 = vpop.f32.mrb[0].mxu0
        %v2902 = vadd.f32 %v2706, %v2901
        %v2903 = vpop.f32.mrb[0].mxu0
        %v2904 = vadd.f32 %v2710, %v2903
        %2905 = vmatprep.mubr.bf16.mxu0 0
        %2906 = vmatmul.mubr.bf16.gmra.mrb[0].mxu0 %v1570
        %v2907 = vpop.f32.mrb[0].mxu0
        %v2908 = vadd.f32 %v2706, %v2907
        %v2909 = vpop.f32.mrb[0].mxu0
        %v2910 = vadd.f32 %v2710, %v2909
        %v2911 = vpop.f32.mrb[0].mxu0
        %v2912 = vadd.f32 %v2706, %v2911
        %v2913 = vpop.f32.mrb[0].mxu0
        %v2914 = vadd.f32 %v2710, %v2913
        %2915 = vmatprep.mubr.bf16.mxu0 0
        %2916 = vmatmul.mubr.bf16.gmra.mrb[0].mxu0 %v1571
        %v2917 = vpop.f32.mrb[0].mxu0
        %v2918 = vadd.f32 %v2706, %v2917
        %v2919 = vpop.f32.mrb[0].mxu0
        %v2920 = vadd.f32 %v2710, %v2919
        %v2921 = vpop.f32.mrb[0].mxu0
        %v2922 = vadd.f32 %v2706, %v2921
        %v2923 = vpop.f32.mrb[0].mxu0
        %v2924 = vadd.f32 %v2710, %v2923
        %2925 = vmatprep.mubr.bf16.mxu0 0
        %2926 = vmatmul.mubr.bf16.gmra.mrb[0].mxu0 %v1572
        %v2927 = vpop.f32.mrb[0].mxu0
        %v2928 = vadd.f32 %v2706, %v2927
        %v2929 = vpop.f32.mrb[0].mxu0
        %v2930 = vadd.f32 %v2710, %v2929
        %v2931 = vpop.f32.mrb[0].mxu0
        %v2932 = vadd.f32 %v2706, %v2931
        %v2933 = vpop.f32.mrb[0].mxu0
        %v2934 = vadd.f32 %v2710, %v2933
        %2935 = vmatprep.mubr.bf16.mxu0 0
        %2936 = vmatmul.mubr.bf16.gmra.mrb[0].mxu0 %v1573
        %v2937 = vpop.f32.mrb[0].mxu0
        %v2938 = vadd.f32 %v2706, %v2937
        %v2939 = vpop.f32.mrb[0].mxu0
        %v2940 = vadd.f32 %v2710, %v2939
        %v2941 = vpop.f32.mrb[0].mxu0
        %v2942 = vadd.f32 %v2706, %v2941
        %v2943 = vpop.f32.mrb[0].mxu0
        %v2944 = vadd.f32 %v2710, %v2943
        %2945 = vmatprep.mubr.bf16.mxu0 0
        %2946 = vmatmul.mubr.bf16.gmra.mrb[0].mxu0 %v1574
        %v2947 = vpop.f32.mrb[0].mxu0
        %v2948 = vadd.f32 %v2706, %v2947
        %v2949 = vpop.f32.mrb[0].mxu0
        %v2950 = vadd.f32 %v2710, %v2949
        %v2951 = vpop.f32.mrb[0].mxu0
        %v2952 = vadd.f32 %v2706, %v2951
        %v2953 = vpop.f32.mrb[0].mxu0
        %v2954 = vadd.f32 %v2710, %v2953
        %2955 = vmatprep.mubr.bf16.mxu0 0
        %2956 = vmatmul.mubr.bf16.gmra.mrb[0].mxu0 %v1575
        %v2957 = vpop.f32.mrb[0].mxu0
        %v2958 = vadd.f32 %v2706, %v2957
        %v2959 = vpop.f32.mrb[0].mxu0
        %v2960 = vadd.f32 %v2710, %v2959
        %v2961 = vpop.f32.mrb[0].mxu0
        %v2962 = vadd.f32 %v2706, %v2961
        %v2963 = vpop.f32.mrb[0].mxu0
        %v2964 = vadd.f32 %v2710, %v2963
        %2965 = vmatprep.mubr.bf16.mxu0 0
        %2966 = vmatmul.mubr.bf16.gmra.mrb[0].mxu0 %v1576
        %v2967 = vpop.f32.mrb[0].mxu0
        %v2968 = vadd.f32 %v2706, %v2967
        %v2969 = vpop.f32.mrb[0].mxu0
        %v2970 = vadd.f32 %v2710, %v2969
        %v2971 = vpop.f32.mrb[0].mxu0
        %v2972 = vadd.f32 %v2706, %v2971
        %v2973 = vpop.f32.mrb[0].mxu0
        %v2974 = vadd.f32 %v2710, %v2973
        %2975 = vmatprep.mubr.bf16.mxu0 0
        %2976 = vmatmul.mubr.bf16.gmra.mrb[0].mxu0 %v1577
        %v2977 = vpop.f32.mrb[0].mxu0
        %v2978 = vadd.f32 %v2706, %v2977
        %v2979 = vpop.f32.mrb[0].mxu0
        %v2980 = vadd.f32 %v2710, %v2979
        %v2981 = vpop.f32.mrb[0].mxu0
        %v2982 = vadd.f32 %v2706, %v2981
        %v2983 = vpop.f32.mrb[0].mxu0
        %v2984 = vadd.f32 %v2710, %v2983
        %2985 = vmatprep.mubr.bf16.mxu0 0
        %2986 = vmatmul.mubr.bf16.gmra.mrb[0].mxu0 %v1586
        %v2987 = vpop.f32.mrb[0].mxu0
        %v2988 = vadd.f32 %v2706, %v2987
        %v2989 = vpop.f32.mrb[0].mxu0
        %v2990 = vadd.f32 %v2710, %v2989
        %v2991 = vpop.f32.mrb[0].mxu0
        %v2992 = vadd.f32 %v2706, %v2991
        %v2993 = vpop.f32.mrb[0].mxu0
        %v2994 = vadd.f32 %v2710, %v2993
        %2995 = vmatprep.mubr.bf16.mxu0 0
        %2996 = vmatmul.mubr.bf16.gmra.mrb[0].mxu0 %v1587
        %v2997 = vpop.f32.mrb[0].mxu0
        %v2998 = vadd.f32 %v2706, %v2997
        %v2999 = vpop.f32.mrb[0].mxu0
        %v3000 = vadd.f32 %v2710, %v2999
        %v3001 = vpop.f32.mrb[0].mxu0
        %v3002 = vadd.f32 %v2706, %v3001
        %v3003 = vpop.f32.mrb[0].mxu0
        %v3004 = vadd.f32 %v2710, %v3003
        %3005 = vmatprep.mubr.bf16.mxu0 0
        %3006 = vmatmul.mubr.bf16.gmra.mrb[0].mxu0 %v1588
        %v3007 = vpop.f32.mrb[0].mxu0
        %v3008 = vadd.f32 %v2706, %v3007
        %v3009 = vpop.f32.mrb[0].mxu0
        %v3010 = vadd.f32 %v2710, %v3009
        %v3011 = vpop.f32.mrb[0].mxu0
        %v3012 = vadd.f32 %v2706, %v3011
        %v3013 = vpop.f32.mrb[0].mxu0
        %v3014 = vadd.f32 %v2710, %v3013
        %3015 = vmatprep.mubr.bf16.mxu0 0
        %3016 = vmatmul.mubr.bf16.gmra.mrb[0].mxu0 %v1589
        %v3017 = vpop.f32.mrb[0].mxu0
        %v3018 = vadd.f32 %v2706, %v3017
        %v3019 = vpop.f32.mrb[0].mxu0
        %v3020 = vadd.f32 %v2710, %v3019
        %v3021 = vpop.f32.mrb[0].mxu0
        %v3022 = vadd.f32 %v2706, %v3021
        %v3023 = vpop.f32.mrb[0].mxu0
        %v3024 = vadd.f32 %v2710, %v3023
        %3025 = vmatprep.mubr.bf16.mxu0 0
        %3026 = vmatmul.mubr.bf16.gmra.mrb[0].mxu0 %v1590
        %v3027 = vpop.f32.mrb[0].mxu0
        %v3028 = vadd.f32 %v2706, %v3027
        %v3029 = vpop.f32.mrb[0].mxu0
        %v3030 = vadd.f32 %v2710, %v3029
        %v3031 = vpop.f32.mrb[0].mxu0
        %v3032 = vadd.f32 %v2706, %v3031
        %v3033 = vpop.f32.mrb[0].mxu0
        %v3034 = vadd.f32 %v2710, %v3033
        %3035 = vmatprep.mubr.bf16.mxu0 0
        %3036 = vmatmul.mubr.bf16.gmra.mrb[0].mxu0 %v1591
        %v3037 = vpop.f32.mrb[0].mxu0
        %v3038 = vadd.f32 %v2706, %v3037
        %v3039 = vpop.f32.mrb[0].mxu0
        %v3040 = vadd.f32 %v2710, %v3039
        %v3041 = vpop.f32.mrb[0].mxu0
        %v3042 = vadd.f32 %v2706, %v3041
        %v3043 = vpop.f32.mrb[0].mxu0
        %v3044 = vadd.f32 %v2710, %v3043
        %3045 = vmatprep.mubr.bf16.mxu0 0
        %3046 = vmatmul.mubr.bf16.gmra.mrb[0].mxu0 %v1592
        %v3047 = vpop.f32.mrb[0].mxu0
        %v3048 = vadd.f32 %v2706, %v3047
        %v3049 = vpop.f32.mrb[0].mxu0
        %v3050 = vadd.f32 %v2710, %v3049
        %v3051 = vpop.f32.mrb[0].mxu0
        %v3052 = vadd.f32 %v2706, %v3051
        %v3053 = vpop.f32.mrb[0].mxu0
        %v3054 = vadd.f32 %v2710, %v3053
        %3055 = vmatprep.mubr.bf16.mxu0 0
        %3056 = vmatmul.mubr.bf16.gmra.mrb[0].mxu0 %v1593
        %v3057 = vpop.f32.mrb[0].mxu0
        %v3058 = vadd.f32 %v2706, %v3057
        %v3059 = vpop.f32.mrb[0].mxu0
        %v3060 = vadd.f32 %v2710, %v3059
        %v3061 = vpop.f32.mrb[0].mxu0
        %v3062 = vadd.f32 %v2706, %v3061
        %v3063 = vpop.f32.mrb[0].mxu0
        %v3064 = vadd.f32 %v2710, %v3063
        %3065 = vmatprep.mubr.bf16.mxu0 0
        %3066 = vmatmul.mubr.bf16.gmra.mrb[0].mxu0 %v1602
        %v3067 = vpop.f32.mrb[0].mxu0
        %v3068 = vadd.f32 %v2706, %v3067
        %v3069 = vpop.f32.mrb[0].mxu0
        %v3070 = vadd.f32 %v2710, %v3069
        %v3071 = vpop.f32.mrb[0].mxu0
        %v3072 = vadd.f32 %v2706, %v3071
        %v3073 = vpop.f32.mrb[0].mxu0
        %v3074 = vadd.f32 %v2710, %v3073
        %3075 = vmatprep.mubr.bf16.mxu0 0
        %3076 = vmatmul.mubr.bf16.gmra.mrb[0].mxu0 %v1603
        %v3077 = vpop.f32.mrb[0].mxu0
        %v3078 = vadd.f32 %v2706, %v3077
        %v3079 = vpop.f32.mrb[0].mxu0
        %v3080 = vadd.f32 %v2710, %v3079
        %v3081 = vpop.f32.mrb[0].mxu0
        %v3082 = vadd.f32 %v2706, %v3081
        %v3083 = vpop.f32.mrb[0].mxu0
        %v3084 = vadd.f32 %v2710, %v3083
        %3085 = vmatprep.mubr.bf16.mxu0 0
        %3086 = vmatmul.mubr.bf16.gmra.mrb[0].mxu0 %v1604
        %v3087 = vpop.f32.mrb[0].mxu0
        %v3088 = vadd.f32 %v2706, %v3087
        %v3089 = vpop.f32.mrb[0].mxu0
        %v3090 = vadd.f32 %v2710, %v3089
        %v3091 = vpop.f32.mrb[0].mxu0
        %v3092 = vadd.f32 %v2706, %v3091
        %v3093 = vpop.f32.mrb[0].mxu0
        %v3094 = vadd.f32 %v2710, %v3093
        %3095 = vmatprep.mubr.bf16.mxu0 0
        %3096 = vmatmul.mubr.bf16.gmra.mrb[0].mxu0 %v1605
        %v3097 = vpop.f32.mrb[0].mxu0
        %v3098 = vadd.f32 %v2706, %v3097
        %v3099 = vpop.f32.mrb[0].mxu0
        %v3100 = vadd.f32 %v2710, %v3099
        %v3101 = vpop.f32.mrb[0].mxu0
        %v3102 = vadd.f32 %v2706, %v3101
        %v3103 = vpop.f32.mrb[0].mxu0
        %v3104 = vadd.f32 %v2710, %v3103
        %3105 = vmatprep.mubr.bf16.mxu0 0
        %3106 = vmatmul.mubr.bf16.gmra.mrb[0].mxu0 %v1606
        %v3107 = vpop.f32.mrb[0].mxu0
        %v3108 = vadd.f32 %v2706, %v3107
        %v3109 = vpop.f32.mrb[0].mxu0
        %v3110 = vadd.f32 %v2710, %v3109
        %v3111 = vpop.f32.mrb[0].mxu0
        %v3112 = vadd.f32 %v2706, %v3111
        %v3113 = vpop.f32.mrb[0].mxu0
        %v3114 = vadd.f32 %v2710, %v3113
        %3115 = vmatprep.mubr.bf16.mxu0 0
        %3116 = vmatmul.mubr.bf16.gmra.mrb[0].mxu0 %v1607
        %v3117 = vpop.f32.mrb[0].mxu0
        %v3118 = vadd.f32 %v2706, %v3117
        %v3119 = vpop.f32.mrb[0].mxu0
        %v3120 = vadd.f32 %v2710, %v3119
        %v3121 = vpop.f32.mrb[0].mxu0
        %v3122 = vadd.f32 %v2706, %v3121
        %v3123 = vpop.f32.mrb[0].mxu0
        %v3124 = vadd.f32 %v2710, %v3123
        %3125 = vmatprep.mubr.bf16.mxu0 0
        %3126 = vmatmul.mubr.bf16.gmra.mrb[0].mxu0 %v1608
        %v3127 = vpop.f32.mrb[0].mxu0
        %v3128 = vadd.f32 %v2706, %v3127
        %v3129 = vpop.f32.mrb[0].mxu0
        %v3130 = vadd.f32 %v2710, %v3129
        %v3131 = vpop.f32.mrb[0].mxu0
        %v3132 = vadd.f32 %v2706, %v3131
        %v3133 = vpop.f32.mrb[0].mxu0
        %v3134 = vadd.f32 %v2710, %v3133
        %3135 = vmatprep.mubr.bf16.mxu0 0
        %3136 = vmatmul.mubr.bf16.gmra.mrb[0].mxu0 %v1609
        %v3137 = vpop.f32.mrb[0].mxu0
        %v3138 = vadd.f32 %v2706, %v3137
        %v3139 = vpop.f32.mrb[0].mxu0
        %v3140 = vadd.f32 %v2710, %v3139
        %v3141 = vpop.f32.mrb[0].mxu0
        %v3142 = vadd.f32 %v2706, %v3141
        %v3143 = vpop.f32.mrb[0].mxu0
        %v3144 = vadd.f32 %v2710, %v3143
        %3145 = vdwg.mxu0
        %v3146 = vsel %vm1869, %v2828, 0.0
        %v3147 = vsel %vm1869, %v2830, 0.0
        %v3148 = vsel %vm1870, %v2832, 0.0
        %v3149 = vsel %vm1870, %v2834, 0.0
        %v3150 = vsel %vm1871, %v2838, 0.0
        %v3151 = vsel %vm1871, %v2840, 0.0
        %v3152 = vsel %vm1872, %v2842, 0.0
        %v3153 = vsel %vm1872, %v2844, 0.0
        %v3154 = vsel %vm1873, %v2848, 0.0
        %v3155 = vsel %vm1873, %v2850, 0.0
        %v3156 = vsel %vm1874, %v2852, 0.0
        %v3157 = vsel %vm1874, %v2854, 0.0
        %v3158 = vsel %vm1875, %v2858, 0.0
        %v3159 = vsel %vm1875, %v2860, 0.0
        %v3160 = vsel %vm1876, %v2862, 0.0
        %v3161 = vsel %vm1876, %v2864, 0.0
        %v3162 = vsel %vm1877, %v2868, 0.0
        %v3163 = vsel %vm1877, %v2870, 0.0
        %v3164 = vsel %vm1878, %v2872, 0.0
        %v3165 = vsel %vm1878, %v2874, 0.0
        %v3166 = vsel %vm1879, %v2878, 0.0
        %v3167 = vsel %vm1879, %v2880, 0.0
        %v3168 = vsel %vm1880, %v2882, 0.0
        %v3169 = vsel %vm1880, %v2884, 0.0
        %v3170 = vsel %vm1881, %v2888, 0.0
        %v3171 = vsel %vm1881, %v2890, 0.0
        %v3172 = vsel %vm1882, %v2892, 0.0
        %v3173 = vsel %vm1882, %v2894, 0.0
        %v3174 = vsel %vm1883, %v2898, 0.0
        %v3175 = vsel %vm1883, %v2900, 0.0
        %v3176 = vsel %vm1884, %v2902, 0.0
        %v3177 = vsel %vm1884, %v2904, 0.0
        %v3178 = vsel %vm1885, %v2908, 0.0
        %v3179 = vsel %vm1885, %v2910, 0.0
        %v3180 = vsel %vm1886, %v2912, 0.0
        %v3181 = vsel %vm1886, %v2914, 0.0
        %v3182 = vsel %vm1887, %v2918, 0.0
        %v3183 = vsel %vm1887, %v2920, 0.0
        %v3184 = vsel %vm1888, %v2922, 0.0
        %v3185 = vsel %vm1888, %v2924, 0.0
        %v3186 = vsel %vm1889, %v2928, 0.0
        %v3187 = vsel %vm1889, %v2930, 0.0
        %v3188 = vsel %vm1890, %v2932, 0.0
        %v3189 = vsel %vm1890, %v2934, 0.0
        %v3190 = vsel %vm1891, %v2938, 0.0
        %v3191 = vsel %vm1891, %v2940, 0.0
        %v3192 = vsel %vm1892, %v2942, 0.0
        %v3193 = vsel %vm1892, %v2944, 0.0
        %v3194 = vsel %vm1893, %v2948, 0.0
        %v3195 = vsel %vm1893, %v2950, 0.0
        %v3196 = vsel %vm1894, %v2952, 0.0
        %v3197 = vsel %vm1894, %v2954, 0.0
        %v3198 = vsel %vm1895, %v2958, 0.0
        %v3199 = vsel %vm1895, %v2960, 0.0
        %v3200 = vsel %vm1896, %v2962, 0.0
        %v3201 = vsel %vm1896, %v2964, 0.0
        %v3202 = vsel %vm1897, %v2968, 0.0
        %v3203 = vsel %vm1897, %v2970, 0.0
        %v3204 = vsel %vm1898, %v2972, 0.0
        %v3205 = vsel %vm1898, %v2974, 0.0
        %v3206 = vsel %vm1899, %v2978, 0.0
        %v3207 = vsel %vm1899, %v2980, 0.0
        %v3208 = vsel %vm1900, %v2982, 0.0
        %v3209 = vsel %vm1900, %v2984, 0.0
        %v3210 = vsel %vm1901, %v2988, 0.0
        %v3211 = vsel %vm1901, %v2990, 0.0
        %v3212 = vsel %vm1902, %v2992, 0.0
        %v3213 = vsel %vm1902, %v2994, 0.0
        %v3214 = vsel %vm1903, %v2998, 0.0
        %v3215 = vsel %vm1903, %v3000, 0.0
        %v3216 = vsel %vm1904, %v3002, 0.0
        %v3217 = vsel %vm1904, %v3004, 0.0
        %v3218 = vsel %vm1905, %v3008, 0.0
        %v3219 = vsel %vm1905, %v3010, 0.0
        %v3220 = vsel %vm1906, %v3012, 0.0
        %v3221 = vsel %vm1906, %v3014, 0.0
        %v3222 = vsel %vm1907, %v3018, 0.0
        %v3223 = vsel %vm1907, %v3020, 0.0
        %v3224 = vsel %vm1908, %v3022, 0.0
        %v3225 = vsel %vm1908, %v3024, 0.0
        %v3226 = vsel %vm1909, %v3028, 0.0
        %v3227 = vsel %vm1909, %v3030, 0.0
        %v3228 = vsel %vm1910, %v3032, 0.0
        %v3229 = vsel %vm1910, %v3034, 0.0
        %v3230 = vsel %vm1911, %v3038, 0.0
        %v3231 = vsel %vm1911, %v3040, 0.0
        %v3232 = vsel %vm1912, %v3042, 0.0
        %v3233 = vsel %vm1912, %v3044, 0.0
        %v3234 = vsel %vm1913, %v3048, 0.0
        %v3235 = vsel %vm1913, %v3050, 0.0
        %v3236 = vsel %vm1914, %v3052, 0.0
        %v3237 = vsel %vm1914, %v3054, 0.0
        %v3238 = vsel %vm1915, %v3058, 0.0
        %v3239 = vsel %vm1915, %v3060, 0.0
        %v3240 = vsel %vm1916, %v3062, 0.0
        %v3241 = vsel %vm1916, %v3064, 0.0
        %v3242 = vsel %vm1917, %v3068, 0.0
        %v3243 = vsel %vm1917, %v3070, 0.0
        %v3244 = vsel %vm1918, %v3072, 0.0
        %v3245 = vsel %vm1918, %v3074, 0.0
        %v3246 = vsel %vm1919, %v3078, 0.0
        %v3247 = vsel %vm1919, %v3080, 0.0
        %v3248 = vsel %vm1920, %v3082, 0.0
        %v3249 = vsel %vm1920, %v3084, 0.0
        %v3250 = vsel %vm1921, %v3088, 0.0
        %v3251 = vsel %vm1921, %v3090, 0.0
        %v3252 = vsel %vm1922, %v3092, 0.0
        %v3253 = vsel %vm1922, %v3094, 0.0
        %v3254 = vsel %vm1923, %v3098, 0.0
        %v3255 = vsel %vm1923, %v3100, 0.0
        %v3256 = vsel %vm1924, %v3102, 0.0
        %v3257 = vsel %vm1924, %v3104, 0.0
        %v3258 = vsel %vm1925, %v3108, 0.0
        %v3259 = vsel %vm1925, %v3110, 0.0
        %v3260 = vsel %vm1926, %v3112, 0.0
        %v3261 = vsel %vm1926, %v3114, 0.0
        %v3262 = vsel %vm1927, %v3118, 0.0
        %v3263 = vsel %vm1927, %v3120, 0.0
        %v3264 = vsel %vm1928, %v3122, 0.0
        %v3265 = vsel %vm1928, %v3124, 0.0
        %v3266 = vsel %vm1929, %v3128, 0.0
        %v3267 = vsel %vm1929, %v3130, 0.0
        %v3268 = vsel %vm1930, %v3132, 0.0
        %v3269 = vsel %vm1930, %v3134, 0.0
        %v3270 = vsel %vm1931, %v3138, 0.0
        %v3271 = vsel %vm1931, %v3140, 0.0
        %v3272 = vsel %vm1932, %v3142, 0.0
        %v3273 = vsel %vm1932, %v3144, 0.0
        %v3274 = vld [vmem:[#allocation2 + $0x2] sm:$0x3]
        %v3275 = vmax.f32 %v3146, %v3150
        %v3276 = vmax.f32 %v3148, %v3152
        %v3277 = vmax.f32 %v3275, %v3154
        %v3278 = vmax.f32 %v3276, %v3156
        %v3279 = vmax.f32 %v3277, %v3158
        %v3280 = vmax.f32 %v3278, %v3160
        %v3281 = vmax.f32 %v3279, %v3162
        %v3282 = vmax.f32 %v3280, %v3164
        %v3283 = vmax.f32 %v3281, %v3166
        %v3284 = vmax.f32 %v3282, %v3168
        %v3285 = vmax.f32 %v3283, %v3170
        %v3286 = vmax.f32 %v3284, %v3172
        %v3287 = vmax.f32 %v3285, %v3174
        %v3288 = vmax.f32 %v3286, %v3176
        %v3289 = vmax.f32 %v3287, %v3178
        %v3290 = vmax.f32 %v3288, %v3180
        %v3291 = vmax.f32 %v3289, %v3182
        %v3292 = vmax.f32 %v3290, %v3184
        %v3293 = vmax.f32 %v3291, %v3186
        %v3294 = vmax.f32 %v3292, %v3188
        %v3295 = vmax.f32 %v3293, %v3190
        %v3296 = vmax.f32 %v3294, %v3192
        %v3297 = vmax.f32 %v3295, %v3194
        %v3298 = vmax.f32 %v3296, %v3196
        %v3299 = vmax.f32 %v3297, %v3198
        %v3300 = vmax.f32 %v3298, %v3200
        %v3301 = vmax.f32 %v3299, %v3202
        %v3302 = vmax.f32 %v3300, %v3204
        %v3303 = vmax.f32 %v3301, %v3206
        %v3304 = vmax.f32 %v3302, %v3208
        %v3305 = vmax.f32 %v3303, %v3210
        %v3306 = vmax.f32 %v3304, %v3212
        %v3307 = vmax.f32 %v3305, %v3214
        %v3308 = vmax.f32 %v3306, %v3216
        %v3309 = vmax.f32 %v3307, %v3218
        %v3310 = vmax.f32 %v3308, %v3220
        %v3311 = vmax.f32 %v3309, %v3222
        %v3312 = vmax.f32 %v3310, %v3224
        %v3313 = vmax.f32 %v3311, %v3226
        %v3314 = vmax.f32 %v3312, %v3228
        %v3315 = vmax.f32 %v3313, %v3230
        %v3316 = vmax.f32 %v3314, %v3232
        %v3317 = vmax.f32 %v3315, %v3234
        %v3318 = vmax.f32 %v3316, %v3236
        %v3319 = vmax.f32 %v3317, %v3238
        %v3320 = vmax.f32 %v3318, %v3240
        %v3321 = vmax.f32 %v3319, %v3242
        %v3322 = vmax.f32 %v3320, %v3244
        %v3323 = vmax.f32 %v3321, %v3246
        %v3324 = vmax.f32 %v3322, %v3248
        %v3325 = vmax.f32 %v3323, %v3250
        %v3326 = vmax.f32 %v3324, %v3252
        %v3327 = vmax.f32 %v3325, %v3254
        %v3328 = vmax.f32 %v3326, %v3256
        %v3329 = vmax.f32 %v3327, %v3258
        %v3330 = vmax.f32 %v3328, %v3260
        %v3331 = vmax.f32 %v3329, %v3262
        %v3332 = vmax.f32 %v3330, %v3264
        %v3333 = vmax.f32 %v3331, %v3266
        %v3334 = vmax.f32 %v3332, %v3268
        %v3335 = vmax.f32 %v3333, %v3270
        %v3336 = vmax.f32 %v3334, %v3272
        %v3337 = vmax.f32 %v3335, %v3336
        %v3338 = vrot.slane %v3337, 4
        %v3339 = vmax.f32 %v3337, %v3338
        %v3340 = vrot.slane %v3339, 2
        %v3341 = vmax.f32 %v3339, %v3340
        %v3342 = vrot.slane %v3341, 1
        %v3343 = vmax.f32 %v3341, %v3342
        %v3344 = vmax.f32 %v3147, %v3151
        %v3345 = vmax.f32 %v3149, %v3153
        %v3346 = vmax.f32 %v3344, %v3155
        %v3347 = vmax.f32 %v3345, %v3157
        %v3348 = vmax.f32 %v3346, %v3159
        %v3349 = vmax.f32 %v3347, %v3161
        %v3350 = vmax.f32 %v3348, %v3163
        %v3351 = vmax.f32 %v3349, %v3165
        %v3352 = vmax.f32 %v3350, %v3167
        %v3353 = vmax.f32 %v3351, %v3169
        %v3354 = vmax.f32 %v3352, %v3171
        %v3355 = vmax.f32 %v3353, %v3173
        %v3356 = vmax.f32 %v3354, %v3175
        %v3357 = vmax.f32 %v3355, %v3177
        %v3358 = vmax.f32 %v3356, %v3179
        %v3359 = vmax.f32 %v3357, %v3181
        %v3360 = vmax.f32 %v3358, %v3183
        %v3361 = vmax.f32 %v3359, %v3185
        %v3362 = vmax.f32 %v3360, %v3187
        %v3363 = vmax.f32 %v3361, %v3189
        %v3364 = vmax.f32 %v3362, %v3191
        %v3365 = vmax.f32 %v3363, %v3193
        %v3366 = vmax.f32 %v3364, %v3195
        %v3367 = vmax.f32 %v3365, %v3197
        %v3368 = vmax.f32 %v3366, %v3199
        %v3369 = vmax.f32 %v3367, %v3201
        %v3370 = vmax.f32 %v3368, %v3203
        %v3371 = vmax.f32 %v3369, %v3205
        %v3372 = vmax.f32 %v3370, %v3207
        %v3373 = vmax.f32 %v3371, %v3209
        %v3374 = vmax.f32 %v3372, %v3211
        %v3375 = vmax.f32 %v3373, %v3213
        %v3376 = vmax.f32 %v3374, %v3215
        %v3377 = vmax.f32 %v3375, %v3217
        %v3378 = vmax.f32 %v3376, %v3219
        %v3379 = vmax.f32 %v3377, %v3221
        %v3380 = vmax.f32 %v3378, %v3223
        %v3381 = vmax.f32 %v3379, %v3225
        %v3382 = vmax.f32 %v3380, %v3227
        %v3383 = vmax.f32 %v3381, %v3229
        %v3384 = vmax.f32 %v3382, %v3231
        %v3385 = vmax.f32 %v3383, %v3233
        %v3386 = vmax.f32 %v3384, %v3235
        %v3387 = vmax.f32 %v3385, %v3237
        %v3388 = vmax.f32 %v3386, %v3239
        %v3389 = vmax.f32 %v3387, %v3241
        %v3390 = vmax.f32 %v3388, %v3243
        %v3391 = vmax.f32 %v3389, %v3245
        %v3392 = vmax.f32 %v3390, %v3247
        %v3393 = vmax.f32 %v3391, %v3249
        %v3394 = vmax.f32 %v3392, %v3251
        %v3395 = vmax.f32 %v3393, %v3253
        %v3396 = vmax.f32 %v3394, %v3255
        %v3397 = vmax.f32 %v3395, %v3257
        %v3398 = vmax.f32 %v3396, %v3259
        %v3399 = vmax.f32 %v3397, %v3261
        %v3400 = vmax.f32 %v3398, %v3263
        %v3401 = vmax.f32 %v3399, %v3265
        %v3402 = vmax.f32 %v3400, %v3267
        %v3403 = vmax.f32 %v3401, %v3269
        %v3404 = vmax.f32 %v3402, %v3271
        %v3405 = vmax.f32 %v3403, %v3273
        %v3406 = vmax.f32 %v3404, %v3405
        %v3407 = vrot.slane %v3406, 4
        %v3408 = vmax.f32 %v3406, %v3407
        %v3409 = vrot.slane %v3408, 2
        %v3410 = vmax.f32 %v3408, %v3409
        %v3411 = vrot.slane %v3410, 1
        %v3412 = vmax.f32 %v3410, %v3411
        %v3415 = vcombine.low %v3343, %v3412
        %v3417 = vunpack.c.l.s4 1966171168
        %v3418 = vunpack.c.0.s8 %v3417
        %v3419 = vlaneseq
        %v3420 = vshrl.u32 %v3419, 7
        %v3421 = vsub.s32 %v3418, %v3420
        %v3422 = vrot.slane %v3415, %v3421
        %v3424 = vunpack.c.l.s4 1966171168
        %v3425 = vunpack.c.0.s8 %v3424
        %v3426 = vlaneseq
        %v3427 = vshrl.u32 %v3426, 7
        %v3428 = vsub.s32 %v3425, %v3427
        %v3429 = vrot.slane %v3422, %v3428
        %v3431 = vmax.f32 %v3274, %v3429
        %3432 = vst.msk [vmem:[#allocation2 + $0x2] sm:$0x3] %vm2683, %v3431
        %v3433 = vld [vmem:[#allocation3 + $0x10] sm:$0xff]
        %v3434 = vld [vmem:[#allocation3 + $0x30] sm:$0xff]
        %v3435 = vld [vmem:[#allocation3 + $0x50] sm:$0xff]
        %v3436 = vld [vmem:[#allocation3 + $0x70] sm:$0xff]
        %v3437 = vld [vmem:[#allocation3 + $0x90] sm:$0xff]
        %v3438 = vld [vmem:[#allocation3 + $0xb0] sm:$0xff]
        %v3439 = vld [vmem:[#allocation3 + $0xd0] sm:$0xff]
        %v3440 = vld [vmem:[#allocation3 + $0xf0] sm:$0xff]
        %v3441 = vld [vmem:[#allocation3 + $0x110] sm:$0xff]
        %v3442 = vld [vmem:[#allocation3 + $0x130] sm:$0xff]
        %v3443 = vld [vmem:[#allocation3 + $0x150] sm:$0xff]
        %v3444 = vld [vmem:[#allocation3 + $0x170] sm:$0xff]
        %v3445 = vld [vmem:[#allocation3 + $0x190] sm:$0xff]
        %v3446 = vld [vmem:[#allocation3 + $0x1b0] sm:$0xff]
        %v3447 = vld [vmem:[#allocation3 + $0x1d0] sm:$0xff]
        %v3448 = vld [vmem:[#allocation3 + $0x1f0] sm:$0xff]
        %v3449 = vld [vmem:[%s6 + $0x4] sm:$0x3]
        %v3451 = vlaneseq
        %v3452 = vshrl.u32 %v3451, 7
        %v3453 = vsub.s32 0, %v3452
        %v3454 = vrot.slane %v3449, %v3453
        %v3455 = vlaneseq
        %v3456 = vshrl.u32 %v3455, 7
        %v3457 = vsub.s32 1, %v3456
        %v3458 = vrot.slane %v3449, %v3457
        %v3477 = vunpack.c.l.b16 %v3433
        %v3478 = vunpack.c.h.b16 %v3433
        %v3479 = vunpack.c.l.b16 %v3434
        %v3480 = vunpack.c.h.b16 %v3434
        %v3481 = vunpack.c.l.b16 %v3435
        %v3482 = vunpack.c.h.b16 %v3435
        %v3483 = vunpack.c.l.b16 %v3436
        %v3484 = vunpack.c.h.b16 %v3436
        %v3485 = vunpack.c.l.b16 %v3437
        %v3486 = vunpack.c.h.b16 %v3437
        %v3487 = vunpack.c.l.b16 %v3438
        %v3488 = vunpack.c.h.b16 %v3438
        %v3489 = vunpack.c.l.b16 %v3439
        %v3490 = vunpack.c.h.b16 %v3439
        %v3491 = vunpack.c.l.b16 %v3440
        %v3492 = vunpack.c.h.b16 %v3440
        %v3493 = vunpack.c.l.b16 %v3441
        %v3494 = vunpack.c.h.b16 %v3441
        %v3495 = vunpack.c.l.b16 %v3442
        %v3496 = vunpack.c.h.b16 %v3442
        %v3497 = vunpack.c.l.b16 %v3443
        %v3498 = vunpack.c.h.b16 %v3443
        %v3499 = vunpack.c.l.b16 %v3444
        %v3500 = vunpack.c.h.b16 %v3444
        %v3501 = vunpack.c.l.b16 %v3445
        %v3502 = vunpack.c.h.b16 %v3445
        %v3503 = vunpack.c.l.b16 %v3446
        %v3504 = vunpack.c.h.b16 %v3446
        %v3505 = vunpack.c.l.b16 %v3447
        %v3506 = vunpack.c.h.b16 %v3447
        %v3507 = vunpack.c.l.b16 %v3448
        %v3508 = vunpack.c.h.b16 %v3448
        %v3509 = vpack.c.b16 %v3479, %v3477
        %v3510 = vpack.c.b16 %v3480, %v3478
        %v3511 = vpack.c.b16 %v3483, %v3481
        %v3512 = vpack.c.b16 %v3484, %v3482
        %v3513 = vpack.c.b16 %v3487, %v3485
        %v3514 = vpack.c.b16 %v3488, %v3486
        %v3515 = vpack.c.b16 %v3491, %v3489
        %v3516 = vpack.c.b16 %v3492, %v3490
        %v3517 = vpack.c.b16 %v3495, %v3493
        %v3518 = vpack.c.b16 %v3496, %v3494
        %v3519 = vpack.c.b16 %v3499, %v3497
        %v3520 = vpack.c.b16 %v3500, %v3498
        %v3521 = vpack.c.b16 %v3503, %v3501
        %v3522 = vpack.c.b16 %v3504, %v3502
        %v3523 = vpack.c.b16 %v3507, %v3505
        %v3524 = vpack.c.b16 %v3508, %v3506
        %3541 = vmatprep.subr.bf16.mxu0 %v3510
        %3542 = vmatpush1.bf16.msra.mxu0 %v3509
        %3543 = vmatprep.subr.bf16.mxu0 %v3512
        %3544 = vmatpush1.bf16.msra.mxu0 %v3511
        %3545 = vmatprep.subr.bf16.mxu0 %v3514
        %3546 = vmatpush1.bf16.msra.mxu0 %v3513
        %3547 = vmatprep.subr.bf16.mxu0 %v3516
        %3548 = vmatpush1.bf16.msra.mxu0 %v3515
        %3549 = vmatprep.subr.bf16.mxu0 %v3518
        %3550 = vmatpush1.bf16.msra.mxu0 %v3517
        %3551 = vmatprep.subr.bf16.mxu0 %v3520
        %3552 = vmatpush1.bf16.msra.mxu0 %v3519
        %3553 = vmatprep.subr.bf16.mxu0 %v3522
        %3554 = vmatpush1.bf16.msra.mxu0 %v3521
        %3555 = vmatprep.subr.bf16.mxu0 %v3524
        %3556 = vmatpush1.bf16.msra.mxu0 %v3523
        %3557 = vmatprep.subr.bf16.mxu0 0
        %3558 = vmatpush1.bf16.msra.mxu0 0
        %3559 = vmatprep.subr.bf16.mxu0 0
        %3560 = vmatpush1.bf16.msra.mxu0 0
        %3561 = vmatprep.subr.bf16.mxu0 0
        %3562 = vmatpush1.bf16.msra.mxu0 0
        %3563 = vmatprep.subr.bf16.mxu0 0
        %3564 = vmatpush1.bf16.msra.mxu0 0
        %3565 = vmatprep.subr.bf16.mxu0 0
        %3566 = vmatpush1.bf16.msra.mxu0 0
        %3567 = vmatprep.subr.bf16.mxu0 0
        %3568 = vmatpush1.bf16.msra.mxu0 0
        %3569 = vmatprep.subr.bf16.mxu0 0
        %3570 = vmatpush1.bf16.msra.mxu0 0
        %3571 = vmatprep.subr.bf16.mxu0 0
        %3572 = vmatpush1.bf16.msra.mxu0 0
        %3573 = vmatprep.mubr.bf16.mxu0 0
        %3574 = vmatmul.mubr.bf16.gmra.mrb[0].mxu0 %v1554
        %v3575 = vpop.f32.mrb[0].mxu0
        %v3576 = vadd.f32 %v3454, %v3575
        %v3577 = vpop.f32.mrb[0].mxu0
        %v3578 = vadd.f32 %v3458, %v3577
        %v3579 = vpop.f32.mrb[0].mxu0
        %v3580 = vadd.f32 %v3454, %v3579
        %v3581 = vpop.f32.mrb[0].mxu0
        %v3582 = vadd.f32 %v3458, %v3581
        %3583 = vmatprep.mubr.bf16.mxu0 0
        %3584 = vmatmul.mubr.bf16.gmra.mrb[0].mxu0 %v1555
        %v3585 = vpop.f32.mrb[0].mxu0
        %v3586 = vadd.f32 %v3454, %v3585
        %v3587 = vpop.f32.mrb[0].mxu0
        %v3588 = vadd.f32 %v3458, %v3587
        %v3589 = vpop.f32.mrb[0].mxu0
        %v3590 = vadd.f32 %v3454, %v3589
        %v3591 = vpop.f32.mrb[0].mxu0
        %v3592 = vadd.f32 %v3458, %v3591
        %3593 = vmatprep.mubr.bf16.mxu0 0
        %3594 = vmatmul.mubr.bf16.gmra.mrb[0].mxu0 %v1556
        %v3595 = vpop.f32.mrb[0].mxu0
        %v3596 = vadd.f32 %v3454, %v3595
        %v3597 = vpop.f32.mrb[0].mxu0
        %v3598 = vadd.f32 %v3458, %v3597
        %v3599 = vpop.f32.mrb[0].mxu0
        %v3600 = vadd.f32 %v3454, %v3599
        %v3601 = vpop.f32.mrb[0].mxu0
        %v3602 = vadd.f32 %v3458, %v3601
        %3603 = vmatprep.mubr.bf16.mxu0 0
        %3604 = vmatmul.mubr.bf16.gmra.mrb[0].mxu0 %v1557
        %v3605 = vpop.f32.mrb[0].mxu0
        %v3606 = vadd.f32 %v3454, %v3605
        %v3607 = vpop.f32.mrb[0].mxu0
        %v3608 = vadd.f32 %v3458, %v3607
        %v3609 = vpop.f32.mrb[0].mxu0
        %v3610 = vadd.f32 %v3454, %v3609
        %v3611 = vpop.f32.mrb[0].mxu0
        %v3612 = vadd.f32 %v3458, %v3611
        %3613 = vmatprep.mubr.bf16.mxu0 0
        %3614 = vmatmul.mubr.bf16.gmra.mrb[0].mxu0 %v1558
        %v3615 = vpop.f32.mrb[0].mxu0
        %v3616 = vadd.f32 %v3454, %v3615
        %v3617 = vpop.f32.mrb[0].mxu0
        %v3618 = vadd.f32 %v3458, %v3617
        %v3619 = vpop.f32.mrb[0].mxu0
        %v3620 = vadd.f32 %v3454, %v3619
        %v3621 = vpop.f32.mrb[0].mxu0
        %v3622 = vadd.f32 %v3458, %v3621
        %3623 = vmatprep.mubr.bf16.mxu0 0
        %3624 = vmatmul.mubr.bf16.gmra.mrb[0].mxu0 %v1559
        %v3625 = vpop.f32.mrb[0].mxu0
        %v3626 = vadd.f32 %v3454, %v3625
        %v3627 = vpop.f32.mrb[0].mxu0
        %v3628 = vadd.f32 %v3458, %v3627
        %v3629 = vpop.f32.mrb[0].mxu0
        %v3630 = vadd.f32 %v3454, %v3629
        %v3631 = vpop.f32.mrb[0].mxu0
        %v3632 = vadd.f32 %v3458, %v3631
        %3633 = vmatprep.mubr.bf16.mxu0 0
        %3634 = vmatmul.mubr.bf16.gmra.mrb[0].mxu0 %v1560
        %v3635 = vpop.f32.mrb[0].mxu0
        %v3636 = vadd.f32 %v3454, %v3635
        %v3637 = vpop.f32.mrb[0].mxu0
        %v3638 = vadd.f32 %v3458, %v3637
        %v3639 = vpop.f32.mrb[0].mxu0
        %v3640 = vadd.f32 %v3454, %v3639
        %v3641 = vpop.f32.mrb[0].mxu0
        %v3642 = vadd.f32 %v3458, %v3641
        %3643 = vmatprep.mubr.bf16.mxu0 0
        %3644 = vmatmul.mubr.bf16.gmra.mrb[0].mxu0 %v1561
        %v3645 = vpop.f32.mrb[0].mxu0
        %v3646 = vadd.f32 %v3454, %v3645
        %v3647 = vpop.f32.mrb[0].mxu0
        %v3648 = vadd.f32 %v3458, %v3647
        %v3649 = vpop.f32.mrb[0].mxu0
        %v3650 = vadd.f32 %v3454, %v3649
        %v3651 = vpop.f32.mrb[0].mxu0
        %v3652 = vadd.f32 %v3458, %v3651
        %3653 = vmatprep.mubr.bf16.mxu0 0
        %3654 = vmatmul.mubr.bf16.gmra.mrb[0].mxu0 %v1570
        %v3655 = vpop.f32.mrb[0].mxu0
        %v3656 = vadd.f32 %v3454, %v3655
        %v3657 = vpop.f32.mrb[0].mxu0
        %v3658 = vadd.f32 %v3458, %v3657
        %v3659 = vpop.f32.mrb[0].mxu0
        %v3660 = vadd.f32 %v3454, %v3659
        %v3661 = vpop.f32.mrb[0].mxu0
        %v3662 = vadd.f32 %v3458, %v3661
        %3663 = vmatprep.mubr.bf16.mxu0 0
        %3664 = vmatmul.mubr.bf16.gmra.mrb[0].mxu0 %v1571
        %v3665 = vpop.f32.mrb[0].mxu0
        %v3666 = vadd.f32 %v3454, %v3665
        %v3667 = vpop.f32.mrb[0].mxu0
        %v3668 = vadd.f32 %v3458, %v3667
        %v3669 = vpop.f32.mrb[0].mxu0
        %v3670 = vadd.f32 %v3454, %v3669
        %v3671 = vpop.f32.mrb[0].mxu0
        %v3672 = vadd.f32 %v3458, %v3671
        %3673 = vmatprep.mubr.bf16.mxu0 0
        %3674 = vmatmul.mubr.bf16.gmra.mrb[0].mxu0 %v1572
        %v3675 = vpop.f32.mrb[0].mxu0
        %v3676 = vadd.f32 %v3454, %v3675
        %v3677 = vpop.f32.mrb[0].mxu0
        %v3678 = vadd.f32 %v3458, %v3677
        %v3679 = vpop.f32.mrb[0].mxu0
        %v3680 = vadd.f32 %v3454, %v3679
        %v3681 = vpop.f32.mrb[0].mxu0
        %v3682 = vadd.f32 %v3458, %v3681
        %3683 = vmatprep.mubr.bf16.mxu0 0
        %3684 = vmatmul.mubr.bf16.gmra.mrb[0].mxu0 %v1573
        %v3685 = vpop.f32.mrb[0].mxu0
        %v3686 = vadd.f32 %v3454, %v3685
        %v3687 = vpop.f32.mrb[0].mxu0
        %v3688 = vadd.f32 %v3458, %v3687
        %v3689 = vpop.f32.mrb[0].mxu0
        %v3690 = vadd.f32 %v3454, %v3689
        %v3691 = vpop.f32.mrb[0].mxu0
        %v3692 = vadd.f32 %v3458, %v3691
        %3693 = vmatprep.mubr.bf16.mxu0 0
        %3694 = vmatmul.mubr.bf16.gmra.mrb[0].mxu0 %v1574
        %v3695 = vpop.f32.mrb[0].mxu0
        %v3696 = vadd.f32 %v3454, %v3695
        %v3697 = vpop.f32.mrb[0].mxu0
        %v3698 = vadd.f32 %v3458, %v3697
        %v3699 = vpop.f32.mrb[0].mxu0
        %v3700 = vadd.f32 %v3454, %v3699
        %v3701 = vpop.f32.mrb[0].mxu0
        %v3702 = vadd.f32 %v3458, %v3701
        %3703 = vmatprep.mubr.bf16.mxu0 0
        %3704 = vmatmul.mubr.bf16.gmra.mrb[0].mxu0 %v1575
        %v3705 = vpop.f32.mrb[0].mxu0
        %v3706 = vadd.f32 %v3454, %v3705
        %v3707 = vpop.f32.mrb[0].mxu0
        %v3708 = vadd.f32 %v3458, %v3707
        %v3709 = vpop.f32.mrb[0].mxu0
        %v3710 = vadd.f32 %v3454, %v3709
        %v3711 = vpop.f32.mrb[0].mxu0
        %v3712 = vadd.f32 %v3458, %v3711
        %3713 = vmatprep.mubr.bf16.mxu0 0
        %3714 = vmatmul.mubr.bf16.gmra.mrb[0].mxu0 %v1576
        %v3715 = vpop.f32.mrb[0].mxu0
        %v3716 = vadd.f32 %v3454, %v3715
        %v3717 = vpop.f32.mrb[0].mxu0
        %v3718 = vadd.f32 %v3458, %v3717
        %v3719 = vpop.f32.mrb[0].mxu0
        %v3720 = vadd.f32 %v3454, %v3719
        %v3721 = vpop.f32.mrb[0].mxu0
        %v3722 = vadd.f32 %v3458, %v3721
        %3723 = vmatprep.mubr.bf16.mxu0 0
        %3724 = vmatmul.mubr.bf16.gmra.mrb[0].mxu0 %v1577
        %v3725 = vpop.f32.mrb[0].mxu0
        %v3726 = vadd.f32 %v3454, %v3725
        %v3727 = vpop.f32.mrb[0].mxu0
        %v3728 = vadd.f32 %v3458, %v3727
        %v3729 = vpop.f32.mrb[0].mxu0
        %v3730 = vadd.f32 %v3454, %v3729
        %v3731 = vpop.f32.mrb[0].mxu0
        %v3732 = vadd.f32 %v3458, %v3731
        %3733 = vmatprep.mubr.bf16.mxu0 0
        %3734 = vmatmul.mubr.bf16.gmra.mrb[0].mxu0 %v1586
        %v3735 = vpop.f32.mrb[0].mxu0
        %v3736 = vadd.f32 %v3454, %v3735
        %v3737 = vpop.f32.mrb[0].mxu0
        %v3738 = vadd.f32 %v3458, %v3737
        %v3739 = vpop.f32.mrb[0].mxu0
        %v3740 = vadd.f32 %v3454, %v3739
        %v3741 = vpop.f32.mrb[0].mxu0
        %v3742 = vadd.f32 %v3458, %v3741
        %3743 = vmatprep.mubr.bf16.mxu0 0
        %3744 = vmatmul.mubr.bf16.gmra.mrb[0].mxu0 %v1587
        %v3745 = vpop.f32.mrb[0].mxu0
        %v3746 = vadd.f32 %v3454, %v3745
        %v3747 = vpop.f32.mrb[0].mxu0
        %v3748 = vadd.f32 %v3458, %v3747
        %v3749 = vpop.f32.mrb[0].mxu0
        %v3750 = vadd.f32 %v3454, %v3749
        %v3751 = vpop.f32.mrb[0].mxu0
        %v3752 = vadd.f32 %v3458, %v3751
        %3753 = vmatprep.mubr.bf16.mxu0 0
        %3754 = vmatmul.mubr.bf16.gmra.mrb[0].mxu0 %v1588
        %v3755 = vpop.f32.mrb[0].mxu0
        %v3756 = vadd.f32 %v3454, %v3755
        %v3757 = vpop.f32.mrb[0].mxu0
        %v3758 = vadd.f32 %v3458, %v3757
        %v3759 = vpop.f32.mrb[0].mxu0
        %v3760 = vadd.f32 %v3454, %v3759
        %v3761 = vpop.f32.mrb[0].mxu0
        %v3762 = vadd.f32 %v3458, %v3761
        %3763 = vmatprep.mubr.bf16.mxu0 0
        %3764 = vmatmul.mubr.bf16.gmra.mrb[0].mxu0 %v1589
        %v3765 = vpop.f32.mrb[0].mxu0
        %v3766 = vadd.f32 %v3454, %v3765
        %v3767 = vpop.f32.mrb[0].mxu0
        %v3768 = vadd.f32 %v3458, %v3767
        %v3769 = vpop.f32.mrb[0].mxu0
        %v3770 = vadd.f32 %v3454, %v3769
        %v3771 = vpop.f32.mrb[0].mxu0
        %v3772 = vadd.f32 %v3458, %v3771
        %3773 = vmatprep.mubr.bf16.mxu0 0
        %3774 = vmatmul.mubr.bf16.gmra.mrb[0].mxu0 %v1590
        %v3775 = vpop.f32.mrb[0].mxu0
        %v3776 = vadd.f32 %v3454, %v3775
        %v3777 = vpop.f32.mrb[0].mxu0
        %v3778 = vadd.f32 %v3458, %v3777
        %v3779 = vpop.f32.mrb[0].mxu0
        %v3780 = vadd.f32 %v3454, %v3779
        %v3781 = vpop.f32.mrb[0].mxu0
        %v3782 = vadd.f32 %v3458, %v3781
        %3783 = vmatprep.mubr.bf16.mxu0 0
        %3784 = vmatmul.mubr.bf16.gmra.mrb[0].mxu0 %v1591
        %v3785 = vpop.f32.mrb[0].mxu0
        %v3786 = vadd.f32 %v3454, %v3785
        %v3787 = vpop.f32.mrb[0].mxu0
        %v3788 = vadd.f32 %v3458, %v3787
        %v3789 = vpop.f32.mrb[0].mxu0
        %v3790 = vadd.f32 %v3454, %v3789
        %v3791 = vpop.f32.mrb[0].mxu0
        %v3792 = vadd.f32 %v3458, %v3791
        %3793 = vmatprep.mubr.bf16.mxu0 0
        %3794 = vmatmul.mubr.bf16.gmra.mrb[0].mxu0 %v1592
        %v3795 = vpop.f32.mrb[0].mxu0
        %v3796 = vadd.f32 %v3454, %v3795
        %v3797 = vpop.f32.mrb[0].mxu0
        %v3798 = vadd.f32 %v3458, %v3797
        %v3799 = vpop.f32.mrb[0].mxu0
        %v3800 = vadd.f32 %v3454, %v3799
        %v3801 = vpop.f32.mrb[0].mxu0
        %v3802 = vadd.f32 %v3458, %v3801
        %3803 = vmatprep.mubr.bf16.mxu0 0
        %3804 = vmatmul.mubr.bf16.gmra.mrb[0].mxu0 %v1593
        %v3805 = vpop.f32.mrb[0].mxu0
        %v3806 = vadd.f32 %v3454, %v3805
        %v3807 = vpop.f32.mrb[0].mxu0
        %v3808 = vadd.f32 %v3458, %v3807
        %v3809 = vpop.f32.mrb[0].mxu0
        %v3810 = vadd.f32 %v3454, %v3809
        %v3811 = vpop.f32.mrb[0].mxu0
        %v3812 = vadd.f32 %v3458, %v3811
        %3813 = vmatprep.mubr.bf16.mxu0 0
        %3814 = vmatmul.mubr.bf16.gmra.mrb[0].mxu0 %v1602
        %v3815 = vpop.f32.mrb[0].mxu0
        %v3816 = vadd.f32 %v3454, %v3815
        %v3817 = vpop.f32.mrb[0].mxu0
        %v3818 = vadd.f32 %v3458, %v3817
        %v3819 = vpop.f32.mrb[0].mxu0
        %v3820 = vadd.f32 %v3454, %v3819
        %v3821 = vpop.f32.mrb[0].mxu0
        %v3822 = vadd.f32 %v3458, %v3821
        %3823 = vmatprep.mubr.bf16.mxu0 0
        %3824 = vmatmul.mubr.bf16.gmra.mrb[0].mxu0 %v1603
        %v3825 = vpop.f32.mrb[0].mxu0
        %v3826 = vadd.f32 %v3454, %v3825
        %v3827 = vpop.f32.mrb[0].mxu0
        %v3828 = vadd.f32 %v3458, %v3827
        %v3829 = vpop.f32.mrb[0].mxu0
        %v3830 = vadd.f32 %v3454, %v3829
        %v3831 = vpop.f32.mrb[0].mxu0
        %v3832 = vadd.f32 %v3458, %v3831
        %3833 = vmatprep.mubr.bf16.mxu0 0
        %3834 = vmatmul.mubr.bf16.gmra.mrb[0].mxu0 %v1604
        %v3835 = vpop.f32.mrb[0].mxu0
        %v3836 = vadd.f32 %v3454, %v3835
        %v3837 = vpop.f32.mrb[0].mxu0
        %v3838 = vadd.f32 %v3458, %v3837
        %v3839 = vpop.f32.mrb[0].mxu0
        %v3840 = vadd.f32 %v3454, %v3839
        %v3841 = vpop.f32.mrb[0].mxu0
        %v3842 = vadd.f32 %v3458, %v3841
        %3843 = vmatprep.mubr.bf16.mxu0 0
        %3844 = vmatmul.mubr.bf16.gmra.mrb[0].mxu0 %v1605
        %v3845 = vpop.f32.mrb[0].mxu0
        %v3846 = vadd.f32 %v3454, %v3845
        %v3847 = vpop.f32.mrb[0].mxu0
        %v3848 = vadd.f32 %v3458, %v3847
        %v3849 = vpop.f32.mrb[0].mxu0
        %v3850 = vadd.f32 %v3454, %v3849
        %v3851 = vpop.f32.mrb[0].mxu0
        %v3852 = vadd.f32 %v3458, %v3851
        %3853 = vmatprep.mubr.bf16.mxu0 0
        %3854 = vmatmul.mubr.bf16.gmra.mrb[0].mxu0 %v1606
        %v3855 = vpop.f32.mrb[0].mxu0
        %v3856 = vadd.f32 %v3454, %v3855
        %v3857 = vpop.f32.mrb[0].mxu0
        %v3858 = vadd.f32 %v3458, %v3857
        %v3859 = vpop.f32.mrb[0].mxu0
        %v3860 = vadd.f32 %v3454, %v3859
        %v3861 = vpop.f32.mrb[0].mxu0
        %v3862 = vadd.f32 %v3458, %v3861
        %3863 = vmatprep.mubr.bf16.mxu0 0
        %3864 = vmatmul.mubr.bf16.gmra.mrb[0].mxu0 %v1607
        %v3865 = vpop.f32.mrb[0].mxu0
        %v3866 = vadd.f32 %v3454, %v3865
        %v3867 = vpop.f32.mrb[0].mxu0
        %v3868 = vadd.f32 %v3458, %v3867
        %v3869 = vpop.f32.mrb[0].mxu0
        %v3870 = vadd.f32 %v3454, %v3869
        %v3871 = vpop.f32.mrb[0].mxu0
        %v3872 = vadd.f32 %v3458, %v3871
        %3873 = vmatprep.mubr.bf16.mxu0 0
        %3874 = vmatmul.mubr.bf16.gmra.mrb[0].mxu0 %v1608
        %v3875 = vpop.f32.mrb[0].mxu0
        %v3876 = vadd.f32 %v3454, %v3875
        %v3877 = vpop.f32.mrb[0].mxu0
        %v3878 = vadd.f32 %v3458, %v3877
        %v3879 = vpop.f32.mrb[0].mxu0
        %v3880 = vadd.f32 %v3454, %v3879
        %v3881 = vpop.f32.mrb[0].mxu0
        %v3882 = vadd.f32 %v3458, %v3881
        %3883 = vmatprep.mubr.bf16.mxu0 0
        %3884 = vmatmul.mubr.bf16.gmra.mrb[0].mxu0 %v1609
        %v3885 = vpop.f32.mrb[0].mxu0
        %v3886 = vadd.f32 %v3454, %v3885
        %v3887 = vpop.f32.mrb[0].mxu0
        %v3888 = vadd.f32 %v3458, %v3887
        %v3889 = vpop.f32.mrb[0].mxu0
        %v3890 = vadd.f32 %v3454, %v3889
        %v3891 = vpop.f32.mrb[0].mxu0
        %v3892 = vadd.f32 %v3458, %v3891
        %3893 = vdwg.mxu0
        %v3894 = vsel %vm1869, %v3576, 0.0
        %v3895 = vsel %vm1869, %v3578, 0.0
        %v3896 = vsel %vm1870, %v3580, 0.0
        %v3897 = vsel %vm1870, %v3582, 0.0
        %v3898 = vsel %vm1871, %v3586, 0.0
        %v3899 = vsel %vm1871, %v3588, 0.0
        %v3900 = vsel %vm1872, %v3590, 0.0
        %v3901 = vsel %vm1872, %v3592, 0.0
        %v3902 = vsel %vm1873, %v3596, 0.0
        %v3903 = vsel %vm1873, %v3598, 0.0
        %v3904 = vsel %vm1874, %v3600, 0.0
        %v3905 = vsel %vm1874, %v3602, 0.0
        %v3906 = vsel %vm1875, %v3606, 0.0
        %v3907 = vsel %vm1875, %v3608, 0.0
        %v3908 = vsel %vm1876, %v3610, 0.0
        %v3909 = vsel %vm1876, %v3612, 0.0
        %v3910 = vsel %vm1877, %v3616, 0.0
        %v3911 = vsel %vm1877, %v3618, 0.0
        %v3912 = vsel %vm1878, %v3620, 0.0
        %v3913 = vsel %vm1878, %v3622, 0.0
        %v3914 = vsel %vm1879, %v3626, 0.0
        %v3915 = vsel %vm1879, %v3628, 0.0
        %v3916 = vsel %vm1880, %v3630, 0.0
        %v3917 = vsel %vm1880, %v3632, 0.0
        %v3918 = vsel %vm1881, %v3636, 0.0
        %v3919 = vsel %vm1881, %v3638, 0.0
        %v3920 = vsel %vm1882, %v3640, 0.0
        %v3921 = vsel %vm1882, %v3642, 0.0
        %v3922 = vsel %vm1883, %v3646, 0.0
        %v3923 = vsel %vm1883, %v3648, 0.0
        %v3924 = vsel %vm1884, %v3650, 0.0
        %v3925 = vsel %vm1884, %v3652, 0.0
        %v3926 = vsel %vm1885, %v3656, 0.0
        %v3927 = vsel %vm1885, %v3658, 0.0
        %v3928 = vsel %vm1886, %v3660, 0.0
        %v3929 = vsel %vm1886, %v3662, 0.0
        %v3930 = vsel %vm1887, %v3666, 0.0
        %v3931 = vsel %vm1887, %v3668, 0.0
        %v3932 = vsel %vm1888, %v3670, 0.0
        %v3933 = vsel %vm1888, %v3672, 0.0
        %v3934 = vsel %vm1889, %v3676, 0.0
        %v3935 = vsel %vm1889, %v3678, 0.0
        %v3936 = vsel %vm1890, %v3680, 0.0
        %v3937 = vsel %vm1890, %v3682, 0.0
        %v3938 = vsel %vm1891, %v3686, 0.0
        %v3939 = vsel %vm1891, %v3688, 0.0
        %v3940 = vsel %vm1892, %v3690, 0.0
        %v3941 = vsel %vm1892, %v3692, 0.0
        %v3942 = vsel %vm1893, %v3696, 0.0
        %v3943 = vsel %vm1893, %v3698, 0.0
        %v3944 = vsel %vm1894, %v3700, 0.0
        %v3945 = vsel %vm1894, %v3702, 0.0
        %v3946 = vsel %vm1895, %v3706, 0.0
        %v3947 = vsel %vm1895, %v3708, 0.0
        %v3948 = vsel %vm1896, %v3710, 0.0
        %v3949 = vsel %vm1896, %v3712, 0.0
        %v3950 = vsel %vm1897, %v3716, 0.0
        %v3951 = vsel %vm1897, %v3718, 0.0
        %v3952 = vsel %vm1898, %v3720, 0.0
        %v3953 = vsel %vm1898, %v3722, 0.0
        %v3954 = vsel %vm1899, %v3726, 0.0
        %v3955 = vsel %vm1899, %v3728, 0.0
        %v3956 = vsel %vm1900, %v3730, 0.0
        %v3957 = vsel %vm1900, %v3732, 0.0
        %v3958 = vsel %vm1901, %v3736, 0.0
        %v3959 = vsel %vm1901, %v3738, 0.0
        %v3960 = vsel %vm1902, %v3740, 0.0
        %v3961 = vsel %vm1902, %v3742, 0.0
        %v3962 = vsel %vm1903, %v3746, 0.0
        %v3963 = vsel %vm1903, %v3748, 0.0
        %v3964 = vsel %vm1904, %v3750, 0.0
        %v3965 = vsel %vm1904, %v3752, 0.0
        %v3966 = vsel %vm1905, %v3756, 0.0
        %v3967 = vsel %vm1905, %v3758, 0.0
        %v3968 = vsel %vm1906, %v3760, 0.0
        %v3969 = vsel %vm1906, %v3762, 0.0
        %v3970 = vsel %vm1907, %v3766, 0.0
        %v3971 = vsel %vm1907, %v3768, 0.0
        %v3972 = vsel %vm1908, %v3770, 0.0
        %v3973 = vsel %vm1908, %v3772, 0.0
        %v3974 = vsel %vm1909, %v3776, 0.0
        %v3975 = vsel %vm1909, %v3778, 0.0
        %v3976 = vsel %vm1910, %v3780, 0.0
        %v3977 = vsel %vm1910, %v3782, 0.0
        %v3978 = vsel %vm1911, %v3786, 0.0
        %v3979 = vsel %vm1911, %v3788, 0.0
        %v3980 = vsel %vm1912, %v3790, 0.0
        %v3981 = vsel %vm1912, %v3792, 0.0
        %v3982 = vsel %vm1913, %v3796, 0.0
        %v3983 = vsel %vm1913, %v3798, 0.0
        %v3984 = vsel %vm1914, %v3800, 0.0
        %v3985 = vsel %vm1914, %v3802, 0.0
        %v3986 = vsel %vm1915, %v3806, 0.0
        %v3987 = vsel %vm1915, %v3808, 0.0
        %v3988 = vsel %vm1916, %v3810, 0.0
        %v3989 = vsel %vm1916, %v3812, 0.0
        %v3990 = vsel %vm1917, %v3816, 0.0
        %v3991 = vsel %vm1917, %v3818, 0.0
        %v3992 = vsel %vm1918, %v3820, 0.0
        %v3993 = vsel %vm1918, %v3822, 0.0
        %v3994 = vsel %vm1919, %v3826, 0.0
        %v3995 = vsel %vm1919, %v3828, 0.0
        %v3996 = vsel %vm1920, %v3830, 0.0
        %v3997 = vsel %vm1920, %v3832, 0.0
        %v3998 = vsel %vm1921, %v3836, 0.0
        %v3999 = vsel %vm1921, %v3838, 0.0
        %v4000 = vsel %vm1922, %v3840, 0.0
        %v4001 = vsel %vm1922, %v3842, 0.0
        %v4002 = vsel %vm1923, %v3846, 0.0
        %v4003 = vsel %vm1923, %v3848, 0.0
        %v4004 = vsel %vm1924, %v3850, 0.0
        %v4005 = vsel %vm1924, %v3852, 0.0
        %v4006 = vsel %vm1925, %v3856, 0.0
        %v4007 = vsel %vm1925, %v3858, 0.0
        %v4008 = vsel %vm1926, %v3860, 0.0
        %v4009 = vsel %vm1926, %v3862, 0.0
        %v4010 = vsel %vm1927, %v3866, 0.0
        %v4011 = vsel %vm1927, %v3868, 0.0
        %v4012 = vsel %vm1928, %v3870, 0.0
        %v4013 = vsel %vm1928, %v3872, 0.0
        %v4014 = vsel %vm1929, %v3876, 0.0
        %v4015 = vsel %vm1929, %v3878, 0.0
        %v4016 = vsel %vm1930, %v3880, 0.0
        %v4017 = vsel %vm1930, %v3882, 0.0
        %v4018 = vsel %vm1931, %v3886, 0.0
        %v4019 = vsel %vm1931, %v3888, 0.0
        %v4020 = vsel %vm1932, %v3890, 0.0
        %v4021 = vsel %vm1932, %v3892, 0.0
        %v4022 = vld [vmem:[#allocation2 + $0x4] sm:$0x3]
        %v4023 = vmax.f32 %v3894, %v3898
        %v4024 = vmax.f32 %v3896, %v3900
        %v4025 = vmax.f32 %v4023, %v3902
        %v4026 = vmax.f32 %v4024, %v3904
        %v4027 = vmax.f32 %v4025, %v3906
        %v4028 = vmax.f32 %v4026, %v3908
        %v4029 = vmax.f32 %v4027, %v3910
        %v4030 = vmax.f32 %v4028, %v3912
        %v4031 = vmax.f32 %v4029, %v3914
        %v4032 = vmax.f32 %v4030, %v3916
        %v4033 = vmax.f32 %v4031, %v3918
        %v4034 = vmax.f32 %v4032, %v3920
        %v4035 = vmax.f32 %v4033, %v3922
        %v4036 = vmax.f32 %v4034, %v3924
        %v4037 = vmax.f32 %v4035, %v3926
        %v4038 = vmax.f32 %v4036, %v3928
        %v4039 = vmax.f32 %v4037, %v3930
        %v4040 = vmax.f32 %v4038, %v3932
        %v4041 = vmax.f32 %v4039, %v3934
        %v4042 = vmax.f32 %v4040, %v3936
        %v4043 = vmax.f32 %v4041, %v3938
        %v4044 = vmax.f32 %v4042, %v3940
        %v4045 = vmax.f32 %v4043, %v3942
        %v4046 = vmax.f32 %v4044, %v3944
        %v4047 = vmax.f32 %v4045, %v3946
        %v4048 = vmax.f32 %v4046, %v3948
        %v4049 = vmax.f32 %v4047, %v3950
        %v4050 = vmax.f32 %v4048, %v3952
        %v4051 = vmax.f32 %v4049, %v3954
        %v4052 = vmax.f32 %v4050, %v3956
        %v4053 = vmax.f32 %v4051, %v3958
        %v4054 = vmax.f32 %v4052, %v3960
        %v4055 = vmax.f32 %v4053, %v3962
        %v4056 = vmax.f32 %v4054, %v3964
        %v4057 = vmax.f32 %v4055, %v3966
        %v4058 = vmax.f32 %v4056, %v3968
        %v4059 = vmax.f32 %v4057, %v3970
        %v4060 = vmax.f32 %v4058, %v3972
        %v4061 = vmax.f32 %v4059, %v3974
        %v4062 = vmax.f32 %v4060, %v3976
        %v4063 = vmax.f32 %v4061, %v3978
        %v4064 = vmax.f32 %v4062, %v3980
        %v4065 = vmax.f32 %v4063, %v3982
        %v4066 = vmax.f32 %v4064, %v3984
        %v4067 = vmax.f32 %v4065, %v3986
        %v4068 = vmax.f32 %v4066, %v3988
        %v4069 = vmax.f32 %v4067, %v3990
        %v4070 = vmax.f32 %v4068, %v3992
        %v4071 = vmax.f32 %v4069, %v3994
        %v4072 = vmax.f32 %v4070, %v3996
        %v4073 = vmax.f32 %v4071, %v3998
        %v4074 = vmax.f32 %v4072, %v4000
        %v4075 = vmax.f32 %v4073, %v4002
        %v4076 = vmax.f32 %v4074, %v4004
        %v4077 = vmax.f32 %v4075, %v4006
        %v4078 = vmax.f32 %v4076, %v4008
        %v4079 = vmax.f32 %v4077, %v4010
        %v4080 = vmax.f32 %v4078, %v4012
        %v4081 = vmax.f32 %v4079, %v4014
        %v4082 = vmax.f32 %v4080, %v4016
        %v4083 = vmax.f32 %v4081, %v4018
        %v4084 = vmax.f32 %v4082, %v4020
        %v4085 = vmax.f32 %v4083, %v4084
        %v4086 = vrot.slane %v4085, 4
        %v4087 = vmax.f32 %v4085, %v4086
        %v4088 = vrot.slane %v4087, 2
        %v4089 = vmax.f32 %v4087, %v4088
        %v4090 = vrot.slane %v4089, 1
        %v4091 = vmax.f32 %v4089, %v4090
        %v4092 = vmax.f32 %v3895, %v3899
        %v4093 = vmax.f32 %v3897, %v3901
        %v4094 = vmax.f32 %v4092, %v3903
        %v4095 = vmax.f32 %v4093, %v3905
        %v4096 = vmax.f32 %v4094, %v3907
        %v4097 = vmax.f32 %v4095, %v3909
        %v4098 = vmax.f32 %v4096, %v3911
        %v4099 = vmax.f32 %v4097, %v3913
        %v4100 = vmax.f32 %v4098, %v3915
        %v4101 = vmax.f32 %v4099, %v3917
        %v4102 = vmax.f32 %v4100, %v3919
        %v4103 = vmax.f32 %v4101, %v3921
        %v4104 = vmax.f32 %v4102, %v3923
        %v4105 = vmax.f32 %v4103, %v3925
        %v4106 = vmax.f32 %v4104, %v3927
        %v4107 = vmax.f32 %v4105, %v3929
        %v4108 = vmax.f32 %v4106, %v3931
        %v4109 = vmax.f32 %v4107, %v3933
        %v4110 = vmax.f32 %v4108, %v3935
        %v4111 = vmax.f32 %v4109, %v3937
        %v4112 = vmax.f32 %v4110, %v3939
        %v4113 = vmax.f32 %v4111, %v3941
        %v4114 = vmax.f32 %v4112, %v3943
        %v4115 = vmax.f32 %v4113, %v3945
        %v4116 = vmax.f32 %v4114, %v3947
        %v4117 = vmax.f32 %v4115, %v3949
        %v4118 = vmax.f32 %v4116, %v3951
        %v4119 = vmax.f32 %v4117, %v3953
        %v4120 = vmax.f32 %v4118, %v3955
        %v4121 = vmax.f32 %v4119, %v3957
        %v4122 = vmax.f32 %v4120, %v3959
        %v4123 = vmax.f32 %v4121, %v3961
        %v4124 = vmax.f32 %v4122, %v3963
        %v4125 = vmax.f32 %v4123, %v3965
        %v4126 = vmax.f32 %v4124, %v3967
        %v4127 = vmax.f32 %v4125, %v3969
        %v4128 = vmax.f32 %v4126, %v3971
        %v4129 = vmax.f32 %v4127, %v3973
        %v4130 = vmax.f32 %v4128, %v3975
        %v4131 = vmax.f32 %v4129, %v3977
        %v4132 = vmax.f32 %v4130, %v3979
        %v4133 = vmax.f32 %v4131, %v3981
        %v4134 = vmax.f32 %v4132, %v3983
        %v4135 = vmax.f32 %v4133, %v3985
        %v4136 = vmax.f32 %v4134, %v3987
        %v4137 = vmax.f32 %v4135, %v3989
        %v4138 = vmax.f32 %v4136, %v3991
        %v4139 = vmax.f32 %v4137, %v3993
        %v4140 = vmax.f32 %v4138, %v3995
        %v4141 = vmax.f32 %v4139, %v3997
        %v4142 = vmax.f32 %v4140, %v3999
        %v4143 = vmax.f32 %v4141, %v4001
        %v4144 = vmax.f32 %v4142, %v4003
        %v4145 = vmax.f32 %v4143, %v4005
        %v4146 = vmax.f32 %v4144, %v4007
        %v4147 = vmax.f32 %v4145, %v4009
        %v4148 = vmax.f32 %v4146, %v4011
        %v4149 = vmax.f32 %v4147, %v4013
        %v4150 = vmax.f32 %v4148, %v4015
        %v4151 = vmax.f32 %v4149, %v4017
        %v4152 = vmax.f32 %v4150, %v4019
        %v4153 = vmax.f32 %v4151, %v4021
        %v4154 = vmax.f32 %v4152, %v4153
        %v4155 = vrot.slane %v4154, 4
        %v4156 = vmax.f32 %v4154, %v4155
        %v4157 = vrot.slane %v4156, 2
        %v4158 = vmax.f32 %v4156, %v4157
        %v4159 = vrot.slane %v4158, 1
        %v4160 = vmax.f32 %v4158, %v4159
        %v4163 = vcombine.low %v4091, %v4160
        %v4165 = vunpack.c.l.s4 1966171168
        %v4166 = vunpack.c.0.s8 %v4165
        %v4167 = vlaneseq
        %v4168 = vshrl.u32 %v4167, 7
        %v4169 = vsub.s32 %v4166, %v4168
        %v4170 = vrot.slane %v4163, %v4169
        %v4172 = vunpack.c.l.s4 1966171168
        %v4173 = vunpack.c.0.s8 %v4172
        %v4174 = vlaneseq
        %v4175 = vshrl.u32 %v4174, 7
        %v4176 = vsub.s32 %v4173, %v4175
        %v4177 = vrot.slane %v4170, %v4176
        %v4179 = vmax.f32 %v4022, %v4177
        %4180 = vst.msk [vmem:[#allocation2 + $0x4] sm:$0x3] %vm2683, %v4179
        %v4181 = vld [vmem:[#allocation3 + $0x18] sm:$0xff]
        %v4182 = vld [vmem:[#allocation3 + $0x38] sm:$0xff]
        %v4183 = vld [vmem:[#allocation3 + $0x58] sm:$0xff]
        %v4184 = vld [vmem:[#allocation3 + $0x78] sm:$0xff]
        %v4185 = vld [vmem:[#allocation3 + $0x98] sm:$0xff]
        %v4186 = vld [vmem:[#allocation3 + $0xb8] sm:$0xff]
        %v4187 = vld [vmem:[#allocation3 + $0xd8] sm:$0xff]
        %v4188 = vld [vmem:[#allocation3 + $0xf8] sm:$0xff]
        %v4189 = vld [vmem:[#allocation3 + $0x118] sm:$0xff]
        %v4190 = vld [vmem:[#allocation3 + $0x138] sm:$0xff]
        %v4191 = vld [vmem:[#allocation3 + $0x158] sm:$0xff]
        %v4192 = vld [vmem:[#allocation3 + $0x178] sm:$0xff]
        %v4193 = vld [vmem:[#allocation3 + $0x198] sm:$0xff]
        %v4194 = vld [vmem:[#allocation3 + $0x1b8] sm:$0xff]
        %v4195 = vld [vmem:[#allocation3 + $0x1d8] sm:$0xff]
        %v4196 = vld [vmem:[#allocation3 + $0x1f8] sm:$0xff]
        %v4197 = vld [vmem:[%s6 + $0x6] sm:$0x3]
        %v4199 = vlaneseq
        %v4200 = vshrl.u32 %v4199, 7
        %v4201 = vsub.s32 0, %v4200
        %v4202 = vrot.slane %v4197, %v4201
        %v4203 = vlaneseq
        %v4204 = vshrl.u32 %v4203, 7
        %v4205 = vsub.s32 1, %v4204
        %v4206 = vrot.slane %v4197, %v4205
        %v4225 = vunpack.c.l.b16 %v4181
        %v4226 = vunpack.c.h.b16 %v4181
        %v4227 = vunpack.c.l.b16 %v4182
        %v4228 = vunpack.c.h.b16 %v4182
        %v4229 = vunpack.c.l.b16 %v4183
        %v4230 = vunpack.c.h.b16 %v4183
        %v4231 = vunpack.c.l.b16 %v4184
        %v4232 = vunpack.c.h.b16 %v4184
        %v4233 = vunpack.c.l.b16 %v4185
        %v4234 = vunpack.c.h.b16 %v4185
        %v4235 = vunpack.c.l.b16 %v4186
        %v4236 = vunpack.c.h.b16 %v4186
        %v4237 = vunpack.c.l.b16 %v4187
        %v4238 = vunpack.c.h.b16 %v4187
        %v4239 = vunpack.c.l.b16 %v4188
        %v4240 = vunpack.c.h.b16 %v4188
        %v4241 = vunpack.c.l.b16 %v4189
        %v4242 = vunpack.c.h.b16 %v4189
        %v4243 = vunpack.c.l.b16 %v4190
        %v4244 = vunpack.c.h.b16 %v4190
        %v4245 = vunpack.c.l.b16 %v4191
        %v4246 = vunpack.c.h.b16 %v4191
        %v4247 = vunpack.c.l.b16 %v4192
        %v4248 = vunpack.c.h.b16 %v4192
        %v4249 = vunpack.c.l.b16 %v4193
        %v4250 = vunpack.c.h.b16 %v4193
        %v4251 = vunpack.c.l.b16 %v4194
        %v4252 = vunpack.c.h.b16 %v4194
        %v4253 = vunpack.c.l.b16 %v4195
        %v4254 = vunpack.c.h.b16 %v4195
        %v4255 = vunpack.c.l.b16 %v4196
        %v4256 = vunpack.c.h.b16 %v4196
        %v4257 = vpack.c.b16 %v4227, %v4225
        %v4258 = vpack.c.b16 %v4228, %v4226
        %v4259 = vpack.c.b16 %v4231, %v4229
        %v4260 = vpack.c.b16 %v4232, %v4230
        %v4261 = vpack.c.b16 %v4235, %v4233
        %v4262 = vpack.c.b16 %v4236, %v4234
        %v4263 = vpack.c.b16 %v4239, %v4237
        %v4264 = vpack.c.b16 %v4240, %v4238
        %v4265 = vpack.c.b16 %v4243, %v4241
        %v4266 = vpack.c.b16 %v4244, %v4242
        %v4267 = vpack.c.b16 %v4247, %v4245
        %v4268 = vpack.c.b16 %v4248, %v4246
        %v4269 = vpack.c.b16 %v4251, %v4249
        %v4270 = vpack.c.b16 %v4252, %v4250
        %v4271 = vpack.c.b16 %v4255, %v4253
        %v4272 = vpack.c.b16 %v4256, %v4254
        %4289 = vmatprep.subr.bf16.mxu0 %v4258
        %4290 = vmatpush1.bf16.msra.mxu0 %v4257
        %4291 = vmatprep.subr.bf16.mxu0 %v4260
        %4292 = vmatpush1.bf16.msra.mxu0 %v4259
        %4293 = vmatprep.subr.bf16.mxu0 %v4262
        %4294 = vmatpush1.bf16.msra.mxu0 %v4261
        %4295 = vmatprep.subr.bf16.mxu0 %v4264
        %4296 = vmatpush1.bf16.msra.mxu0 %v4263
        %4297 = vmatprep.subr.bf16.mxu0 %v4266
        %4298 = vmatpush1.bf16.msra.mxu0 %v4265
        %4299 = vmatprep.subr.bf16.mxu0 %v4268
        %4300 = vmatpush1.bf16.msra.mxu0 %v4267
        %4301 = vmatprep.subr.bf16.mxu0 %v4270
        %4302 = vmatpush1.bf16.msra.mxu0 %v4269
        %4303 = vmatprep.subr.bf16.mxu0 %v4272
        %4304 = vmatpush1.bf16.msra.mxu0 %v4271
        %4305 = vmatprep.subr.bf16.mxu0 0
        %4306 = vmatpush1.bf16.msra.mxu0 0
        %4307 = vmatprep.subr.bf16.mxu0 0
        %4308 = vmatpush1.bf16.msra.mxu0 0
        %4309 = vmatprep.subr.bf16.mxu0 0
        %4310 = vmatpush1.bf16.msra.mxu0 0
        %4311 = vmatprep.subr.bf16.mxu0 0
        %4312 = vmatpush1.bf16.msra.mxu0 0
        %4313 = vmatprep.subr.bf16.mxu0 0
        %4314 = vmatpush1.bf16.msra.mxu0 0
        %4315 = vmatprep.subr.bf16.mxu0 0
        %4316 = vmatpush1.bf16.msra.mxu0 0
        %4317 = vmatprep.subr.bf16.mxu0 0
        %4318 = vmatpush1.bf16.msra.mxu0 0
        %4319 = vmatprep.subr.bf16.mxu0 0
        %4320 = vmatpush1.bf16.msra.mxu0 0
        %4321 = vmatprep.mubr.bf16.mxu0 0
        %4322 = vmatmul.mubr.bf16.gmra.mrb[0].mxu0 %v1554
        %v4323 = vpop.f32.mrb[0].mxu0
        %v4324 = vadd.f32 %v4202, %v4323
        %v4325 = vpop.f32.mrb[0].mxu0
        %v4326 = vadd.f32 %v4206, %v4325
        %v4327 = vpop.f32.mrb[0].mxu0
        %v4328 = vadd.f32 %v4202, %v4327
        %v4329 = vpop.f32.mrb[0].mxu0
        %v4330 = vadd.f32 %v4206, %v4329
        %4331 = vmatprep.mubr.bf16.mxu0 0
        %4332 = vmatmul.mubr.bf16.gmra.mrb[0].mxu0 %v1555
        %v4333 = vpop.f32.mrb[0].mxu0
        %v4334 = vadd.f32 %v4202, %v4333
        %v4335 = vpop.f32.mrb[0].mxu0
        %v4336 = vadd.f32 %v4206, %v4335
        %v4337 = vpop.f32.mrb[0].mxu0
        %v4338 = vadd.f32 %v4202, %v4337
        %v4339 = vpop.f32.mrb[0].mxu0
        %v4340 = vadd.f32 %v4206, %v4339
        %4341 = vmatprep.mubr.bf16.mxu0 0
        %4342 = vmatmul.mubr.bf16.gmra.mrb[0].mxu0 %v1556
        %v4343 = vpop.f32.mrb[0].mxu0
        %v4344 = vadd.f32 %v4202, %v4343
        %v4345 = vpop.f32.mrb[0].mxu0
        %v4346 = vadd.f32 %v4206, %v4345
        %v4347 = vpop.f32.mrb[0].mxu0
        %v4348 = vadd.f32 %v4202, %v4347
        %v4349 = vpop.f32.mrb[0].mxu0
        %v4350 = vadd.f32 %v4206, %v4349
        %4351 = vmatprep.mubr.bf16.mxu0 0
        %4352 = vmatmul.mubr.bf16.gmra.mrb[0].mxu0 %v1557
        %v4353 = vpop.f32.mrb[0].mxu0
        %v4354 = vadd.f32 %v4202, %v4353
        %v4355 = vpop.f32.mrb[0].mxu0
        %v4356 = vadd.f32 %v4206, %v4355
        %v4357 = vpop.f32.mrb[0].mxu0
        %v4358 = vadd.f32 %v4202, %v4357
        %v4359 = vpop.f32.mrb[0].mxu0
        %v4360 = vadd.f32 %v4206, %v4359
        %4361 = vmatprep.mubr.bf16.mxu0 0
        %4362 = vmatmul.mubr.bf16.gmra.mrb[0].mxu0 %v1558
        %v4363 = vpop.f32.mrb[0].mxu0
        %v4364 = vadd.f32 %v4202, %v4363
        %v4365 = vpop.f32.mrb[0].mxu0
        %v4366 = vadd.f32 %v4206, %v4365
        %v4367 = vpop.f32.mrb[0].mxu0
        %v4368 = vadd.f32 %v4202, %v4367
        %v4369 = vpop.f32.mrb[0].mxu0
        %v4370 = vadd.f32 %v4206, %v4369
        %4371 = vmatprep.mubr.bf16.mxu0 0
        %4372 = vmatmul.mubr.bf16.gmra.mrb[0].mxu0 %v1559
        %v4373 = vpop.f32.mrb[0].mxu0
        %v4374 = vadd.f32 %v4202, %v4373
        %v4375 = vpop.f32.mrb[0].mxu0
        %v4376 = vadd.f32 %v4206, %v4375
        %v4377 = vpop.f32.mrb[0].mxu0
        %v4378 = vadd.f32 %v4202, %v4377
        %v4379 = vpop.f32.mrb[0].mxu0
        %v4380 = vadd.f32 %v4206, %v4379
        %4381 = vmatprep.mubr.bf16.mxu0 0
        %4382 = vmatmul.mubr.bf16.gmra.mrb[0].mxu0 %v1560
        %v4383 = vpop.f32.mrb[0].mxu0
        %v4384 = vadd.f32 %v4202, %v4383
        %v4385 = vpop.f32.mrb[0].mxu0
        %v4386 = vadd.f32 %v4206, %v4385
        %v4387 = vpop.f32.mrb[0].mxu0
        %v4388 = vadd.f32 %v4202, %v4387
        %v4389 = vpop.f32.mrb[0].mxu0
        %v4390 = vadd.f32 %v4206, %v4389
        %4391 = vmatprep.mubr.bf16.mxu0 0
        %4392 = vmatmul.mubr.bf16.gmra.mrb[0].mxu0 %v1561
        %v4393 = vpop.f32.mrb[0].mxu0
        %v4394 = vadd.f32 %v4202, %v4393
        %v4395 = vpop.f32.mrb[0].mxu0
        %v4396 = vadd.f32 %v4206, %v4395
        %v4397 = vpop.f32.mrb[0].mxu0
        %v4398 = vadd.f32 %v4202, %v4397
        %v4399 = vpop.f32.mrb[0].mxu0
        %v4400 = vadd.f32 %v4206, %v4399
        %4401 = vmatprep.mubr.bf16.mxu0 0
        %4402 = vmatmul.mubr.bf16.gmra.mrb[0].mxu0 %v1570
        %v4403 = vpop.f32.mrb[0].mxu0
        %v4404 = vadd.f32 %v4202, %v4403
        %v4405 = vpop.f32.mrb[0].mxu0
        %v4406 = vadd.f32 %v4206, %v4405
        %v4407 = vpop.f32.mrb[0].mxu0
        %v4408 = vadd.f32 %v4202, %v4407
        %v4409 = vpop.f32.mrb[0].mxu0
        %v4410 = vadd.f32 %v4206, %v4409
        %4411 = vmatprep.mubr.bf16.mxu0 0
        %4412 = vmatmul.mubr.bf16.gmra.mrb[0].mxu0 %v1571
        %v4413 = vpop.f32.mrb[0].mxu0
        %v4414 = vadd.f32 %v4202, %v4413
        %v4415 = vpop.f32.mrb[0].mxu0
        %v4416 = vadd.f32 %v4206, %v4415
        %v4417 = vpop.f32.mrb[0].mxu0
        %v4418 = vadd.f32 %v4202, %v4417
        %v4419 = vpop.f32.mrb[0].mxu0
        %v4420 = vadd.f32 %v4206, %v4419
        %4421 = vmatprep.mubr.bf16.mxu0 0
        %4422 = vmatmul.mubr.bf16.gmra.mrb[0].mxu0 %v1572
        %v4423 = vpop.f32.mrb[0].mxu0
        %v4424 = vadd.f32 %v4202, %v4423
        %v4425 = vpop.f32.mrb[0].mxu0
        %v4426 = vadd.f32 %v4206, %v4425
        %v4427 = vpop.f32.mrb[0].mxu0
        %v4428 = vadd.f32 %v4202, %v4427
        %v4429 = vpop.f32.mrb[0].mxu0
        %v4430 = vadd.f32 %v4206, %v4429
        %4431 = vmatprep.mubr.bf16.mxu0 0
        %4432 = vmatmul.mubr.bf16.gmra.mrb[0].mxu0 %v1573
        %v4433 = vpop.f32.mrb[0].mxu0
        %v4434 = vadd.f32 %v4202, %v4433
        %v4435 = vpop.f32.mrb[0].mxu0
        %v4436 = vadd.f32 %v4206, %v4435
        %v4437 = vpop.f32.mrb[0].mxu0
        %v4438 = vadd.f32 %v4202, %v4437
        %v4439 = vpop.f32.mrb[0].mxu0
        %v4440 = vadd.f32 %v4206, %v4439
        %4441 = vmatprep.mubr.bf16.mxu0 0
        %4442 = vmatmul.mubr.bf16.gmra.mrb[0].mxu0 %v1574
        %v4443 = vpop.f32.mrb[0].mxu0
        %v4444 = vadd.f32 %v4202, %v4443
        %v4445 = vpop.f32.mrb[0].mxu0
        %v4446 = vadd.f32 %v4206, %v4445
        %v4447 = vpop.f32.mrb[0].mxu0
        %v4448 = vadd.f32 %v4202, %v4447
        %v4449 = vpop.f32.mrb[0].mxu0
        %v4450 = vadd.f32 %v4206, %v4449
        %4451 = vmatprep.mubr.bf16.mxu0 0
        %4452 = vmatmul.mubr.bf16.gmra.mrb[0].mxu0 %v1575
        %v4453 = vpop.f32.mrb[0].mxu0
        %v4454 = vadd.f32 %v4202, %v4453
        %v4455 = vpop.f32.mrb[0].mxu0
        %v4456 = vadd.f32 %v4206, %v4455
        %v4457 = vpop.f32.mrb[0].mxu0
        %v4458 = vadd.f32 %v4202, %v4457
        %v4459 = vpop.f32.mrb[0].mxu0
        %v4460 = vadd.f32 %v4206, %v4459
        %4461 = vmatprep.mubr.bf16.mxu0 0
        %4462 = vmatmul.mubr.bf16.gmra.mrb[0].mxu0 %v1576
        %v4463 = vpop.f32.mrb[0].mxu0
        %v4464 = vadd.f32 %v4202, %v4463
        %v4465 = vpop.f32.mrb[0].mxu0
        %v4466 = vadd.f32 %v4206, %v4465
        %v4467 = vpop.f32.mrb[0].mxu0
        %v4468 = vadd.f32 %v4202, %v4467
        %v4469 = vpop.f32.mrb[0].mxu0
        %v4470 = vadd.f32 %v4206, %v4469
        %4471 = vmatprep.mubr.bf16.mxu0 0
        %4472 = vmatmul.mubr.bf16.gmra.mrb[0].mxu0 %v1577
        %v4473 = vpop.f32.mrb[0].mxu0
        %v4474 = vadd.f32 %v4202, %v4473
        %v4475 = vpop.f32.mrb[0].mxu0
        %v4476 = vadd.f32 %v4206, %v4475
        %v4477 = vpop.f32.mrb[0].mxu0
        %v4478 = vadd.f32 %v4202, %v4477
        %v4479 = vpop.f32.mrb[0].mxu0
        %v4480 = vadd.f32 %v4206, %v4479
        %4481 = vmatprep.mubr.bf16.mxu0 0
        %4482 = vmatmul.mubr.bf16.gmra.mrb[0].mxu0 %v1586
        %v4483 = vpop.f32.mrb[0].mxu0
        %v4484 = vadd.f32 %v4202, %v4483
        %v4485 = vpop.f32.mrb[0].mxu0
        %v4486 = vadd.f32 %v4206, %v4485
        %v4487 = vpop.f32.mrb[0].mxu0
        %v4488 = vadd.f32 %v4202, %v4487
        %v4489 = vpop.f32.mrb[0].mxu0
        %v4490 = vadd.f32 %v4206, %v4489
        %4491 = vmatprep.mubr.bf16.mxu0 0
        %4492 = vmatmul.mubr.bf16.gmra.mrb[0].mxu0 %v1587
        %v4493 = vpop.f32.mrb[0].mxu0
        %v4494 = vadd.f32 %v4202, %v4493
        %v4495 = vpop.f32.mrb[0].mxu0
        %v4496 = vadd.f32 %v4206, %v4495
        %v4497 = vpop.f32.mrb[0].mxu0
        %v4498 = vadd.f32 %v4202, %v4497
        %v4499 = vpop.f32.mrb[0].mxu0
        %v4500 = vadd.f32 %v4206, %v4499
        %4501 = vmatprep.mubr.bf16.mxu0 0
        %4502 = vmatmul.mubr.bf16.gmra.mrb[0].mxu0 %v1588
        %v4503 = vpop.f32.mrb[0].mxu0
        %v4504 = vadd.f32 %v4202, %v4503
        %v4505 = vpop.f32.mrb[0].mxu0
        %v4506 = vadd.f32 %v4206, %v4505
        %v4507 = vpop.f32.mrb[0].mxu0
        %v4508 = vadd.f32 %v4202, %v4507
        %v4509 = vpop.f32.mrb[0].mxu0
        %v4510 = vadd.f32 %v4206, %v4509
        %4511 = vmatprep.mubr.bf16.mxu0 0
        %4512 = vmatmul.mubr.bf16.gmra.mrb[0].mxu0 %v1589
        %v4513 = vpop.f32.mrb[0].mxu0
        %v4514 = vadd.f32 %v4202, %v4513
        %v4515 = vpop.f32.mrb[0].mxu0
        %v4516 = vadd.f32 %v4206, %v4515
        %v4517 = vpop.f32.mrb[0].mxu0
        %v4518 = vadd.f32 %v4202, %v4517
        %v4519 = vpop.f32.mrb[0].mxu0
        %v4520 = vadd.f32 %v4206, %v4519
        %4521 = vmatprep.mubr.bf16.mxu0 0
        %4522 = vmatmul.mubr.bf16.gmra.mrb[0].mxu0 %v1590
        %v4523 = vpop.f32.mrb[0].mxu0
        %v4524 = vadd.f32 %v4202, %v4523
        %v4525 = vpop.f32.mrb[0].mxu0
        %v4526 = vadd.f32 %v4206, %v4525
        %v4527 = vpop.f32.mrb[0].mxu0
        %v4528 = vadd.f32 %v4202, %v4527
        %v4529 = vpop.f32.mrb[0].mxu0
        %v4530 = vadd.f32 %v4206, %v4529
        %4531 = vmatprep.mubr.bf16.mxu0 0
        %4532 = vmatmul.mubr.bf16.gmra.mrb[0].mxu0 %v1591
        %v4533 = vpop.f32.mrb[0].mxu0
        %v4534 = vadd.f32 %v4202, %v4533
        %v4535 = vpop.f32.mrb[0].mxu0
        %v4536 = vadd.f32 %v4206, %v4535
        %v4537 = vpop.f32.mrb[0].mxu0
        %v4538 = vadd.f32 %v4202, %v4537
        %v4539 = vpop.f32.mrb[0].mxu0
        %v4540 = vadd.f32 %v4206, %v4539
        %4541 = vmatprep.mubr.bf16.mxu0 0
        %4542 = vmatmul.mubr.bf16.gmra.mrb[0].mxu0 %v1592
        %v4543 = vpop.f32.mrb[0].mxu0
        %v4544 = vadd.f32 %v4202, %v4543
        %v4545 = vpop.f32.mrb[0].mxu0
        %v4546 = vadd.f32 %v4206, %v4545
        %v4547 = vpop.f32.mrb[0].mxu0
        %v4548 = vadd.f32 %v4202, %v4547
        %v4549 = vpop.f32.mrb[0].mxu0
        %v4550 = vadd.f32 %v4206, %v4549
        %4551 = vmatprep.mubr.bf16.mxu0 0
        %4552 = vmatmul.mubr.bf16.gmra.mrb[0].mxu0 %v1593
        %v4553 = vpop.f32.mrb[0].mxu0
        %v4554 = vadd.f32 %v4202, %v4553
        %v4555 = vpop.f32.mrb[0].mxu0
        %v4556 = vadd.f32 %v4206, %v4555
        %v4557 = vpop.f32.mrb[0].mxu0
        %v4558 = vadd.f32 %v4202, %v4557
        %v4559 = vpop.f32.mrb[0].mxu0
        %v4560 = vadd.f32 %v4206, %v4559
        %4561 = vmatprep.mubr.bf16.mxu0 0
        %4562 = vmatmul.mubr.bf16.gmra.mrb[0].mxu0 %v1602
        %v4563 = vpop.f32.mrb[0].mxu0
        %v4564 = vadd.f32 %v4202, %v4563
        %v4565 = vpop.f32.mrb[0].mxu0
        %v4566 = vadd.f32 %v4206, %v4565
        %v4567 = vpop.f32.mrb[0].mxu0
        %v4568 = vadd.f32 %v4202, %v4567
        %v4569 = vpop.f32.mrb[0].mxu0
        %v4570 = vadd.f32 %v4206, %v4569
        %4571 = vmatprep.mubr.bf16.mxu0 0
        %4572 = vmatmul.mubr.bf16.gmra.mrb[0].mxu0 %v1603
        %v4573 = vpop.f32.mrb[0].mxu0
        %v4574 = vadd.f32 %v4202, %v4573
        %v4575 = vpop.f32.mrb[0].mxu0
        %v4576 = vadd.f32 %v4206, %v4575
        %v4577 = vpop.f32.mrb[0].mxu0
        %v4578 = vadd.f32 %v4202, %v4577
        %v4579 = vpop.f32.mrb[0].mxu0
        %v4580 = vadd.f32 %v4206, %v4579
        %4581 = vmatprep.mubr.bf16.mxu0 0
        %4582 = vmatmul.mubr.bf16.gmra.mrb[0].mxu0 %v1604
        %v4583 = vpop.f32.mrb[0].mxu0
        %v4584 = vadd.f32 %v4202, %v4583
        %v4585 = vpop.f32.mrb[0].mxu0
        %v4586 = vadd.f32 %v4206, %v4585
        %v4587 = vpop.f32.mrb[0].mxu0
        %v4588 = vadd.f32 %v4202, %v4587
        %v4589 = vpop.f32.mrb[0].mxu0
        %v4590 = vadd.f32 %v4206, %v4589
        %4591 = vmatprep.mubr.bf16.mxu0 0
        %4592 = vmatmul.mubr.bf16.gmra.mrb[0].mxu0 %v1605
        %v4593 = vpop.f32.mrb[0].mxu0
        %v4594 = vadd.f32 %v4202, %v4593
        %v4595 = vpop.f32.mrb[0].mxu0
        %v4596 = vadd.f32 %v4206, %v4595
        %v4597 = vpop.f32.mrb[0].mxu0
        %v4598 = vadd.f32 %v4202, %v4597
        %v4599 = vpop.f32.mrb[0].mxu0
        %v4600 = vadd.f32 %v4206, %v4599
        %4601 = vmatprep.mubr.bf16.mxu0 0
        %4602 = vmatmul.mubr.bf16.gmra.mrb[0].mxu0 %v1606
        %v4603 = vpop.f32.mrb[0].mxu0
        %v4604 = vadd.f32 %v4202, %v4603
        %v4605 = vpop.f32.mrb[0].mxu0
        %v4606 = vadd.f32 %v4206, %v4605
        %v4607 = vpop.f32.mrb[0].mxu0
        %v4608 = vadd.f32 %v4202, %v4607
        %v4609 = vpop.f32.mrb[0].mxu0
        %v4610 = vadd.f32 %v4206, %v4609
        %4611 = vmatprep.mubr.bf16.mxu0 0
        %4612 = vmatmul.mubr.bf16.gmra.mrb[0].mxu0 %v1607
        %v4613 = vpop.f32.mrb[0].mxu0
        %v4614 = vadd.f32 %v4202, %v4613
        %v4615 = vpop.f32.mrb[0].mxu0
        %v4616 = vadd.f32 %v4206, %v4615
        %v4617 = vpop.f32.mrb[0].mxu0
        %v4618 = vadd.f32 %v4202, %v4617
        %v4619 = vpop.f32.mrb[0].mxu0
        %v4620 = vadd.f32 %v4206, %v4619
        %4621 = vmatprep.mubr.bf16.mxu0 0
        %4622 = vmatmul.mubr.bf16.gmra.mrb[0].mxu0 %v1608
        %v4623 = vpop.f32.mrb[0].mxu0
        %v4624 = vadd.f32 %v4202, %v4623
        %v4625 = vpop.f32.mrb[0].mxu0
        %v4626 = vadd.f32 %v4206, %v4625
        %v4627 = vpop.f32.mrb[0].mxu0
        %v4628 = vadd.f32 %v4202, %v4627
        %v4629 = vpop.f32.mrb[0].mxu0
        %v4630 = vadd.f32 %v4206, %v4629
        %4631 = vmatprep.mubr.bf16.mxu0 0
        %4632 = vmatmul.mubr.bf16.gmra.mrb[0].mxu0 %v1609
        %v4633 = vpop.f32.mrb[0].mxu0
        %v4634 = vadd.f32 %v4202, %v4633
        %v4635 = vpop.f32.mrb[0].mxu0
        %v4636 = vadd.f32 %v4206, %v4635
        %v4637 = vpop.f32.mrb[0].mxu0
        %v4638 = vadd.f32 %v4202, %v4637
        %v4639 = vpop.f32.mrb[0].mxu0
        %v4640 = vadd.f32 %v4206, %v4639
        %4641 = vdwg.mxu0
        %v4642 = vsel %vm1869, %v4324, 0.0
        %v4643 = vsel %vm1869, %v4326, 0.0
        %v4644 = vsel %vm1870, %v4328, 0.0
        %v4645 = vsel %vm1870, %v4330, 0.0
        %v4646 = vsel %vm1871, %v4334, 0.0
        %v4647 = vsel %vm1871, %v4336, 0.0
        %v4648 = vsel %vm1872, %v4338, 0.0
        %v4649 = vsel %vm1872, %v4340, 0.0
        %v4650 = vsel %vm1873, %v4344, 0.0
        %v4651 = vsel %vm1873, %v4346, 0.0
        %v4652 = vsel %vm1874, %v4348, 0.0
        %v4653 = vsel %vm1874, %v4350, 0.0
        %v4654 = vsel %vm1875, %v4354, 0.0
        %v4655 = vsel %vm1875, %v4356, 0.0
        %v4656 = vsel %vm1876, %v4358, 0.0
        %v4657 = vsel %vm1876, %v4360, 0.0
        %v4658 = vsel %vm1877, %v4364, 0.0
        %v4659 = vsel %vm1877, %v4366, 0.0
        %v4660 = vsel %vm1878, %v4368, 0.0
        %v4661 = vsel %vm1878, %v4370, 0.0
        %v4662 = vsel %vm1879, %v4374, 0.0
        %v4663 = vsel %vm1879, %v4376, 0.0
        %v4664 = vsel %vm1880, %v4378, 0.0
        %v4665 = vsel %vm1880, %v4380, 0.0
        %v4666 = vsel %vm1881, %v4384, 0.0
        %v4667 = vsel %vm1881, %v4386, 0.0
        %v4668 = vsel %vm1882, %v4388, 0.0
        %v4669 = vsel %vm1882, %v4390, 0.0
        %v4670 = vsel %vm1883, %v4394, 0.0
        %v4671 = vsel %vm1883, %v4396, 0.0
        %v4672 = vsel %vm1884, %v4398, 0.0
        %v4673 = vsel %vm1884, %v4400, 0.0
        %v4674 = vsel %vm1885, %v4404, 0.0
        %v4675 = vsel %vm1885, %v4406, 0.0
        %v4676 = vsel %vm1886, %v4408, 0.0
        %v4677 = vsel %vm1886, %v4410, 0.0
        %v4678 = vsel %vm1887, %v4414, 0.0
        %v4679 = vsel %vm1887, %v4416, 0.0
        %v4680 = vsel %vm1888, %v4418, 0.0
        %v4681 = vsel %vm1888, %v4420, 0.0
        %v4682 = vsel %vm1889, %v4424, 0.0
        %v4683 = vsel %vm1889, %v4426, 0.0
        %v4684 = vsel %vm1890, %v4428, 0.0
        %v4685 = vsel %vm1890, %v4430, 0.0
        %v4686 = vsel %vm1891, %v4434, 0.0
        %v4687 = vsel %vm1891, %v4436, 0.0
        %v4688 = vsel %vm1892, %v4438, 0.0
        %v4689 = vsel %vm1892, %v4440, 0.0
        %v4690 = vsel %vm1893, %v4444, 0.0
        %v4691 = vsel %vm1893, %v4446, 0.0
        %v4692 = vsel %vm1894, %v4448, 0.0
        %v4693 = vsel %vm1894, %v4450, 0.0
        %v4694 = vsel %vm1895, %v4454, 0.0
        %v4695 = vsel %vm1895, %v4456, 0.0
        %v4696 = vsel %vm1896, %v4458, 0.0
        %v4697 = vsel %vm1896, %v4460, 0.0
        %v4698 = vsel %vm1897, %v4464, 0.0
        %v4699 = vsel %vm1897, %v4466, 0.0
        %v4700 = vsel %vm1898, %v4468, 0.0
        %v4701 = vsel %vm1898, %v4470, 0.0
        %v4702 = vsel %vm1899, %v4474, 0.0
        %v4703 = vsel %vm1899, %v4476, 0.0
        %v4704 = vsel %vm1900, %v4478, 0.0
        %v4705 = vsel %vm1900, %v4480, 0.0
        %v4706 = vsel %vm1901, %v4484, 0.0
        %v4707 = vsel %vm1901, %v4486, 0.0
        %v4708 = vsel %vm1902, %v4488, 0.0
        %v4709 = vsel %vm1902, %v4490, 0.0
        %v4710 = vsel %vm1903, %v4494, 0.0
        %v4711 = vsel %vm1903, %v4496, 0.0
        %v4712 = vsel %vm1904, %v4498, 0.0
        %v4713 = vsel %vm1904, %v4500, 0.0
        %v4714 = vsel %vm1905, %v4504, 0.0
        %v4715 = vsel %vm1905, %v4506, 0.0
        %v4716 = vsel %vm1906, %v4508, 0.0
        %v4717 = vsel %vm1906, %v4510, 0.0
        %v4718 = vsel %vm1907, %v4514, 0.0
        %v4719 = vsel %vm1907, %v4516, 0.0
        %v4720 = vsel %vm1908, %v4518, 0.0
        %v4721 = vsel %vm1908, %v4520, 0.0
        %v4722 = vsel %vm1909, %v4524, 0.0
        %v4723 = vsel %vm1909, %v4526, 0.0
        %v4724 = vsel %vm1910, %v4528, 0.0
        %v4725 = vsel %vm1910, %v4530, 0.0
        %v4726 = vsel %vm1911, %v4534, 0.0
        %v4727 = vsel %vm1911, %v4536, 0.0
        %v4728 = vsel %vm1912, %v4538, 0.0
        %v4729 = vsel %vm1912, %v4540, 0.0
        %v4730 = vsel %vm1913, %v4544, 0.0
        %v4731 = vsel %vm1913, %v4546, 0.0
        %v4732 = vsel %vm1914, %v4548, 0.0
        %v4733 = vsel %vm1914, %v4550, 0.0
        %v4734 = vsel %vm1915, %v4554, 0.0
        %v4735 = vsel %vm1915, %v4556, 0.0
        %v4736 = vsel %vm1916, %v4558, 0.0
        %v4737 = vsel %vm1916, %v4560, 0.0
        %v4738 = vsel %vm1917, %v4564, 0.0
        %v4739 = vsel %vm1917, %v4566, 0.0
        %v4740 = vsel %vm1918, %v4568, 0.0
        %v4741 = vsel %vm1918, %v4570, 0.0
        %v4742 = vsel %vm1919, %v4574, 0.0
        %v4743 = vsel %vm1919, %v4576, 0.0
        %v4744 = vsel %vm1920, %v4578, 0.0
        %v4745 = vsel %vm1920, %v4580, 0.0
        %v4746 = vsel %vm1921, %v4584, 0.0
        %v4747 = vsel %vm1921, %v4586, 0.0
        %v4748 = vsel %vm1922, %v4588, 0.0
        %v4749 = vsel %vm1922, %v4590, 0.0
        %v4750 = vsel %vm1923, %v4594, 0.0
        %v4751 = vsel %vm1923, %v4596, 0.0
        %v4752 = vsel %vm1924, %v4598, 0.0
        %v4753 = vsel %vm1924, %v4600, 0.0
        %v4754 = vsel %vm1925, %v4604, 0.0
        %v4755 = vsel %vm1925, %v4606, 0.0
        %v4756 = vsel %vm1926, %v4608, 0.0
        %v4757 = vsel %vm1926, %v4610, 0.0
        %v4758 = vsel %vm1927, %v4614, 0.0
        %v4759 = vsel %vm1927, %v4616, 0.0
        %v4760 = vsel %vm1928, %v4618, 0.0
        %v4761 = vsel %vm1928, %v4620, 0.0
        %v4762 = vsel %vm1929, %v4624, 0.0
        %v4763 = vsel %vm1929, %v4626, 0.0
        %v4764 = vsel %vm1930, %v4628, 0.0
        %v4765 = vsel %vm1930, %v4630, 0.0
        %v4766 = vsel %vm1931, %v4634, 0.0
        %v4767 = vsel %vm1931, %v4636, 0.0
        %v4768 = vsel %vm1932, %v4638, 0.0
        %v4769 = vsel %vm1932, %v4640, 0.0
        %v4770 = vld [vmem:[#allocation2 + $0x6] sm:$0x3]
        %v4771 = vmax.f32 %v4642, %v4646
        %v4772 = vmax.f32 %v4644, %v4648
        %v4773 = vmax.f32 %v4771, %v4650
        %v4774 = vmax.f32 %v4772, %v4652
        %v4775 = vmax.f32 %v4773, %v4654
        %v4776 = vmax.f32 %v4774, %v4656
        %v4777 = vmax.f32 %v4775, %v4658
        %v4778 = vmax.f32 %v4776, %v4660
        %v4779 = vmax.f32 %v4777, %v4662
        %v4780 = vmax.f32 %v4778, %v4664
        %v4781 = vmax.f32 %v4779, %v4666
        %v4782 = vmax.f32 %v4780, %v4668
        %v4783 = vmax.f32 %v4781, %v4670
        %v4784 = vmax.f32 %v4782, %v4672
        %v4785 = vmax.f32 %v4783, %v4674
        %v4786 = vmax.f32 %v4784, %v4676
        %v4787 = vmax.f32 %v4785, %v4678
        %v4788 = vmax.f32 %v4786, %v4680
        %v4789 = vmax.f32 %v4787, %v4682
        %v4790 = vmax.f32 %v4788, %v4684
        %v4791 = vmax.f32 %v4789, %v4686
        %v4792 = vmax.f32 %v4790, %v4688
        %v4793 = vmax.f32 %v4791, %v4690
        %v4794 = vmax.f32 %v4792, %v4692
        %v4795 = vmax.f32 %v4793, %v4694
        %v4796 = vmax.f32 %v4794, %v4696
        %v4797 = vmax.f32 %v4795, %v4698
        %v4798 = vmax.f32 %v4796, %v4700
        %v4799 = vmax.f32 %v4797, %v4702
        %v4800 = vmax.f32 %v4798, %v4704
        %v4801 = vmax.f32 %v4799, %v4706
        %v4802 = vmax.f32 %v4800, %v4708
        %v4803 = vmax.f32 %v4801, %v4710
        %v4804 = vmax.f32 %v4802, %v4712
        %v4805 = vmax.f32 %v4803, %v4714
        %v4806 = vmax.f32 %v4804, %v4716
        %v4807 = vmax.f32 %v4805, %v4718
        %v4808 = vmax.f32 %v4806, %v4720
        %v4809 = vmax.f32 %v4807, %v4722
        %v4810 = vmax.f32 %v4808, %v4724
        %v4811 = vmax.f32 %v4809, %v4726
        %v4812 = vmax.f32 %v4810, %v4728
        %v4813 = vmax.f32 %v4811, %v4730
        %v4814 = vmax.f32 %v4812, %v4732
        %v4815 = vmax.f32 %v4813, %v4734
        %v4816 = vmax.f32 %v4814, %v4736
        %v4817 = vmax.f32 %v4815, %v4738
        %v4818 = vmax.f32 %v4816, %v4740
        %v4819 = vmax.f32 %v4817, %v4742
        %v4820 = vmax.f32 %v4818, %v4744
        %v4821 = vmax.f32 %v4819, %v4746
        %v4822 = vmax.f32 %v4820, %v4748
        %v4823 = vmax.f32 %v4821, %v4750
        %v4824 = vmax.f32 %v4822, %v4752
        %v4825 = vmax.f32 %v4823, %v4754
        %v4826 = vmax.f32 %v4824, %v4756
        %v4827 = vmax.f32 %v4825, %v4758
        %v4828 = vmax.f32 %v4826, %v4760
        %v4829 = vmax.f32 %v4827, %v4762
        %v4830 = vmax.f32 %v4828, %v4764
        %v4831 = vmax.f32 %v4829, %v4766
        %v4832 = vmax.f32 %v4830, %v4768
        %v4833 = vmax.f32 %v4831, %v4832
        %v4834 = vrot.slane %v4833, 4
        %v4835 = vmax.f32 %v4833, %v4834
        %v4836 = vrot.slane %v4835, 2
        %v4837 = vmax.f32 %v4835, %v4836
        %v4838 = vrot.slane %v4837, 1
        %v4839 = vmax.f32 %v4837, %v4838
        %v4840 = vmax.f32 %v4643, %v4647
        %v4841 = vmax.f32 %v4645, %v4649
        %v4842 = vmax.f32 %v4840, %v4651
        %v4843 = vmax.f32 %v4841, %v4653
        %v4844 = vmax.f32 %v4842, %v4655
        %v4845 = vmax.f32 %v4843, %v4657
        %v4846 = vmax.f32 %v4844, %v4659
        %v4847 = vmax.f32 %v4845, %v4661
        %v4848 = vmax.f32 %v4846, %v4663
        %v4849 = vmax.f32 %v4847, %v4665
        %v4850 = vmax.f32 %v4848, %v4667
        %v4851 = vmax.f32 %v4849, %v4669
        %v4852 = vmax.f32 %v4850, %v4671
        %v4853 = vmax.f32 %v4851, %v4673
        %v4854 = vmax.f32 %v4852, %v4675
        %v4855 = vmax.f32 %v4853, %v4677
        %v4856 = vmax.f32 %v4854, %v4679
        %v4857 = vmax.f32 %v4855, %v4681
        %v4858 = vmax.f32 %v4856, %v4683
        %v4859 = vmax.f32 %v4857, %v4685
        %v4860 = vmax.f32 %v4858, %v4687
        %v4861 = vmax.f32 %v4859, %v4689
        %v4862 = vmax.f32 %v4860, %v4691
        %v4863 = vmax.f32 %v4861, %v4693
        %v4864 = vmax.f32 %v4862, %v4695
        %v4865 = vmax.f32 %v4863, %v4697
        %v4866 = vmax.f32 %v4864, %v4699
        %v4867 = vmax.f32 %v4865, %v4701
        %v4868 = vmax.f32 %v4866, %v4703
        %v4869 = vmax.f32 %v4867, %v4705
        %v4870 = vmax.f32 %v4868, %v4707
        %v4871 = vmax.f32 %v4869, %v4709
        %v4872 = vmax.f32 %v4870, %v4711
        %v4873 = vmax.f32 %v4871, %v4713
        %v4874 = vmax.f32 %v4872, %v4715
        %v4875 = vmax.f32 %v4873, %v4717
        %v4876 = vmax.f32 %v4874, %v4719
        %v4877 = vmax.f32 %v4875, %v4721
        %v4878 = vmax.f32 %v4876, %v4723
        %v4879 = vmax.f32 %v4877, %v4725
        %v4880 = vmax.f32 %v4878, %v4727
        %v4881 = vmax.f32 %v4879, %v4729
        %v4882 = vmax.f32 %v4880, %v4731
        %v4883 = vmax.f32 %v4881, %v4733
        %v4884 = vmax.f32 %v4882, %v4735
        %v4885 = vmax.f32 %v4883, %v4737
        %v4886 = vmax.f32 %v4884, %v4739
        %v4887 = vmax.f32 %v4885, %v4741
        %v4888 = vmax.f32 %v4886, %v4743
        %v4889 = vmax.f32 %v4887, %v4745
        %v4890 = vmax.f32 %v4888, %v4747
        %v4891 = vmax.f32 %v4889, %v4749
        %v4892 = vmax.f32 %v4890, %v4751
        %v4893 = vmax.f32 %v4891, %v4753
        %v4894 = vmax.f32 %v4892, %v4755
        %v4895 = vmax.f32 %v4893, %v4757
        %v4896 = vmax.f32 %v4894, %v4759
        %v4897 = vmax.f32 %v4895, %v4761
        %v4898 = vmax.f32 %v4896, %v4763
        %v4899 = vmax.f32 %v4897, %v4765
        %v4900 = vmax.f32 %v4898, %v4767
        %v4901 = vmax.f32 %v4899, %v4769
        %v4902 = vmax.f32 %v4900, %v4901
        %v4903 = vrot.slane %v4902, 4
        %v4904 = vmax.f32 %v4902, %v4903
        %v4905 = vrot.slane %v4904, 2
        %v4906 = vmax.f32 %v4904, %v4905
        %v4907 = vrot.slane %v4906, 1
        %v4908 = vmax.f32 %v4906, %v4907
        %v4911 = vcombine.low %v4839, %v4908
        %v4913 = vunpack.c.l.s4 1966171168
        %v4914 = vunpack.c.0.s8 %v4913
        %v4915 = vlaneseq
        %v4916 = vshrl.u32 %v4915, 7
        %v4917 = vsub.s32 %v4914, %v4916
        %v4918 = vrot.slane %v4911, %v4917
        %v4920 = vunpack.c.l.s4 1966171168
        %v4921 = vunpack.c.0.s8 %v4920
        %v4922 = vlaneseq
        %v4923 = vshrl.u32 %v4922, 7
        %v4924 = vsub.s32 %v4921, %v4923
        %v4925 = vrot.slane %v4918, %v4924
        %v4927 = vmax.f32 %v4770, %v4925
        %4928 = vst.msk [vmem:[#allocation2 + $0x6] sm:$0x3] %vm2683, %v4927
        %p4929 = scmp.eq.s32.totalorder %s31, 1
        // Predicated region
        $region89: #{stn3d_forward.1} parent=71 // pred_check
          %p4930 = pneg %p4929
        $region90: #{stn3d_forward.1} parent=71 // pred_check_branch
          %4932 = sbr.rel (%p4930) target = $region92
        $region91: #{stn3d_forward.1} parent=71 // pred_region
          %v4933 = vld [vmem:[#allocation2] sm:$0xff]
          %v4935 = vlaneseq
          %v4936 = vshrl.u32 %v4935, 7
          %v4937 = vsub.s32 0, %v4936
          %v4938 = vrot.slane %v4933, %v4937
          %v4939 = vlaneseq
          %v4940 = vshrl.u32 %v4939, 7
          %v4941 = vsub.s32 1, %v4940
          %v4942 = vrot.slane %v4933, %v4941
          %v4943 = vlaneseq
          %v4944 = vshrl.u32 %v4943, 7
          %v4945 = vsub.s32 2, %v4944
          %v4946 = vrot.slane %v4933, %v4945
          %v4947 = vlaneseq
          %v4948 = vshrl.u32 %v4947, 7
          %v4949 = vsub.s32 3, %v4948
          %v4950 = vrot.slane %v4933, %v4949
          %v4951 = vlaneseq
          %v4952 = vshrl.u32 %v4951, 7
          %v4953 = vsub.s32 4, %v4952
          %v4954 = vrot.slane %v4933, %v4953
          %v4955 = vlaneseq
          %v4956 = vshrl.u32 %v4955, 7
          %v4957 = vsub.s32 5, %v4956
          %v4958 = vrot.slane %v4933, %v4957
          %v4959 = vlaneseq
          %v4960 = vshrl.u32 %v4959, 7
          %v4961 = vsub.s32 6, %v4960
          %v4962 = vrot.slane %v4933, %v4961
          %v4963 = vlaneseq
          %v4964 = vshrl.u32 %v4963, 7
          %v4965 = vsub.s32 7, %v4964
          %v4966 = vrot.slane %v4933, %v4965
          %v4975 = vpack.c.bf16 %v4938, %v4938
          %v4976 = vpack.c.bf16 %v4942, %v4942
          %v4977 = vpack.c.bf16 %v4946, %v4946
          %v4978 = vpack.c.bf16 %v4950, %v4950
          %v4979 = vpack.c.bf16 %v4954, %v4954
          %v4980 = vpack.c.bf16 %v4958, %v4958
          %v4981 = vpack.c.bf16 %v4962, %v4962
          %v4982 = vpack.c.bf16 %v4966, %v4966
          %v4983 = vld [vmem:[#allocation5] sm:$0xff]
          %v4984 = vld [vmem:[#allocation5 + $0x8] sm:$0xff]
          %v4985 = vld [vmem:[#allocation5 + $0x10] sm:$0xff]
          %v4986 = vld [vmem:[#allocation5 + $0x18] sm:$0xff]
          %v4987 = vld [vmem:[#allocation5 + $0x20] sm:$0xff]
          %v4988 = vld [vmem:[#allocation5 + $0x28] sm:$0xff]
          %v4989 = vld [vmem:[#allocation5 + $0x30] sm:$0xff]
          %v4990 = vld [vmem:[#allocation5 + $0x38] sm:$0xff]
          %v4991 = vld [vmem:[#allocation5 + $0x40] sm:$0xff]
          %v4992 = vld [vmem:[#allocation5 + $0x48] sm:$0xff]
          %v4993 = vld [vmem:[#allocation5 + $0x50] sm:$0xff]
          %v4994 = vld [vmem:[#allocation5 + $0x58] sm:$0xff]
          %v4995 = vld [vmem:[#allocation5 + $0x60] sm:$0xff]
          %v4996 = vld [vmem:[#allocation5 + $0x68] sm:$0xff]
          %v4997 = vld [vmem:[#allocation5 + $0x70] sm:$0xff]
          %v4998 = vld [vmem:[#allocation5 + $0x78] sm:$0xff]
          %v4999 = vld [vmem:[#allocation5 + $0x80] sm:$0xff]
          %v5000 = vld [vmem:[#allocation5 + $0x88] sm:$0xff]
          %v5001 = vld [vmem:[#allocation5 + $0x90] sm:$0xff]
          %v5002 = vld [vmem:[#allocation5 + $0x98] sm:$0xff]
          %v5003 = vld [vmem:[#allocation5 + $0xa0] sm:$0xff]
          %v5004 = vld [vmem:[#allocation5 + $0xa8] sm:$0xff]
          %v5005 = vld [vmem:[#allocation5 + $0xb0] sm:$0xff]
          %v5006 = vld [vmem:[#allocation5 + $0xb8] sm:$0xff]
          %v5007 = vld [vmem:[#allocation5 + $0xc0] sm:$0xff]
          %v5008 = vld [vmem:[#allocation5 + $0xc8] sm:$0xff]
          %v5009 = vld [vmem:[#allocation5 + $0xd0] sm:$0xff]
          %v5010 = vld [vmem:[#allocation5 + $0xd8] sm:$0xff]
          %v5011 = vld [vmem:[#allocation5 + $0xe0] sm:$0xff]
          %v5012 = vld [vmem:[#allocation5 + $0xe8] sm:$0xff]
          %v5013 = vld [vmem:[#allocation5 + $0xf0] sm:$0xff]
          %v5014 = vld [vmem:[#allocation5 + $0xf8] sm:$0xff]
          %v5015 = vld [vmem:[#allocation5 + $0x100] sm:$0xff]
          %v5016 = vld [vmem:[#allocation5 + $0x108] sm:$0xff]
          %v5017 = vld [vmem:[#allocation5 + $0x110] sm:$0xff]
          %v5018 = vld [vmem:[#allocation5 + $0x118] sm:$0xff]
          %v5019 = vld [vmem:[#allocation5 + $0x120] sm:$0xff]
          %v5020 = vld [vmem:[#allocation5 + $0x128] sm:$0xff]
          %v5021 = vld [vmem:[#allocation5 + $0x130] sm:$0xff]
          %v5022 = vld [vmem:[#allocation5 + $0x138] sm:$0xff]
          %v5023 = vld [vmem:[#allocation5 + $0x140] sm:$0xff]
          %v5024 = vld [vmem:[#allocation5 + $0x148] sm:$0xff]
          %v5025 = vld [vmem:[#allocation5 + $0x150] sm:$0xff]
          %v5026 = vld [vmem:[#allocation5 + $0x158] sm:$0xff]
          %v5027 = vld [vmem:[#allocation5 + $0x160] sm:$0xff]
          %v5028 = vld [vmem:[#allocation5 + $0x168] sm:$0xff]
          %v5029 = vld [vmem:[#allocation5 + $0x170] sm:$0xff]
          %v5030 = vld [vmem:[#allocation5 + $0x178] sm:$0xff]
          %v5031 = vld [vmem:[#allocation5 + $0x180] sm:$0xff]
          %v5032 = vld [vmem:[#allocation5 + $0x188] sm:$0xff]
          %v5033 = vld [vmem:[#allocation5 + $0x190] sm:$0xff]
          %v5034 = vld [vmem:[#allocation5 + $0x198] sm:$0xff]
          %v5035 = vld [vmem:[#allocation5 + $0x1a0] sm:$0xff]
          %v5036 = vld [vmem:[#allocation5 + $0x1a8] sm:$0xff]
          %v5037 = vld [vmem:[#allocation5 + $0x1b0] sm:$0xff]
          %v5038 = vld [vmem:[#allocation5 + $0x1b8] sm:$0xff]
          %v5039 = vld [vmem:[#allocation5 + $0x1c0] sm:$0xff]
          %v5040 = vld [vmem:[#allocation5 + $0x1c8] sm:$0xff]
          %v5041 = vld [vmem:[#allocation5 + $0x1d0] sm:$0xff]
          %v5042 = vld [vmem:[#allocation5 + $0x1d8] sm:$0xff]
          %v5043 = vld [vmem:[#allocation5 + $0x1e0] sm:$0xff]
          %v5044 = vld [vmem:[#allocation5 + $0x1e8] sm:$0xff]
          %v5045 = vld [vmem:[#allocation5 + $0x1f0] sm:$0xff]
          %v5046 = vld [vmem:[#allocation5 + $0x1f8] sm:$0xff]
          %v5047 = vld [vmem:[#allocation5 + $0x200] sm:$0xff]
          %v5048 = vld [vmem:[#allocation5 + $0x208] sm:$0xff]
          %v5049 = vld [vmem:[#allocation5 + $0x210] sm:$0xff]
          %v5050 = vld [vmem:[#allocation5 + $0x218] sm:$0xff]
          %v5051 = vld [vmem:[#allocation5 + $0x220] sm:$0xff]
          %v5052 = vld [vmem:[#allocation5 + $0x228] sm:$0xff]
          %v5053 = vld [vmem:[#allocation5 + $0x230] sm:$0xff]
          %v5054 = vld [vmem:[#allocation5 + $0x238] sm:$0xff]
          %v5055 = vld [vmem:[#allocation5 + $0x240] sm:$0xff]
          %v5056 = vld [vmem:[#allocation5 + $0x248] sm:$0xff]
          %v5057 = vld [vmem:[#allocation5 + $0x250] sm:$0xff]
          %v5058 = vld [vmem:[#allocation5 + $0x258] sm:$0xff]
          %v5059 = vld [vmem:[#allocation5 + $0x260] sm:$0xff]
          %v5060 = vld [vmem:[#allocation5 + $0x268] sm:$0xff]
          %v5061 = vld [vmem:[#allocation5 + $0x270] sm:$0xff]
          %v5062 = vld [vmem:[#allocation5 + $0x278] sm:$0xff]
          %v5063 = vld [vmem:[#allocation5 + $0x280] sm:$0xff]
          %v5064 = vld [vmem:[#allocation5 + $0x288] sm:$0xff]
          %v5065 = vld [vmem:[#allocation5 + $0x290] sm:$0xff]
          %v5066 = vld [vmem:[#allocation5 + $0x298] sm:$0xff]
          %v5067 = vld [vmem:[#allocation5 + $0x2a0] sm:$0xff]
          %v5068 = vld [vmem:[#allocation5 + $0x2a8] sm:$0xff]
          %v5069 = vld [vmem:[#allocation5 + $0x2b0] sm:$0xff]
          %v5070 = vld [vmem:[#allocation5 + $0x2b8] sm:$0xff]
          %v5071 = vld [vmem:[#allocation5 + $0x2c0] sm:$0xff]
          %v5072 = vld [vmem:[#allocation5 + $0x2c8] sm:$0xff]
          %v5073 = vld [vmem:[#allocation5 + $0x2d0] sm:$0xff]
          %v5074 = vld [vmem:[#allocation5 + $0x2d8] sm:$0xff]
          %v5075 = vld [vmem:[#allocation5 + $0x2e0] sm:$0xff]
          %v5076 = vld [vmem:[#allocation5 + $0x2e8] sm:$0xff]
          %v5077 = vld [vmem:[#allocation5 + $0x2f0] sm:$0xff]
          %v5078 = vld [vmem:[#allocation5 + $0x2f8] sm:$0xff]
          %v5079 = vld [vmem:[#allocation5 + $0x300] sm:$0xff]
          %v5080 = vld [vmem:[#allocation5 + $0x308] sm:$0xff]
          %v5081 = vld [vmem:[#allocation5 + $0x310] sm:$0xff]
          %v5082 = vld [vmem:[#allocation5 + $0x318] sm:$0xff]
          %v5083 = vld [vmem:[#allocation5 + $0x320] sm:$0xff]
          %v5084 = vld [vmem:[#allocation5 + $0x328] sm:$0xff]
          %v5085 = vld [vmem:[#allocation5 + $0x330] sm:$0xff]
          %v5086 = vld [vmem:[#allocation5 + $0x338] sm:$0xff]
          %v5087 = vld [vmem:[#allocation5 + $0x340] sm:$0xff]
          %v5088 = vld [vmem:[#allocation5 + $0x348] sm:$0xff]
          %v5089 = vld [vmem:[#allocation5 + $0x350] sm:$0xff]
          %v5090 = vld [vmem:[#allocation5 + $0x358] sm:$0xff]
          %v5091 = vld [vmem:[#allocation5 + $0x360] sm:$0xff]
          %v5092 = vld [vmem:[#allocation5 + $0x368] sm:$0xff]
          %v5093 = vld [vmem:[#allocation5 + $0x370] sm:$0xff]
          %v5094 = vld [vmem:[#allocation5 + $0x378] sm:$0xff]
          %v5095 = vld [vmem:[#allocation5 + $0x380] sm:$0xff]
          %v5096 = vld [vmem:[#allocation5 + $0x388] sm:$0xff]
          %v5097 = vld [vmem:[#allocation5 + $0x390] sm:$0xff]
          %v5098 = vld [vmem:[#allocation5 + $0x398] sm:$0xff]
          %v5099 = vld [vmem:[#allocation5 + $0x3a0] sm:$0xff]
          %v5100 = vld [vmem:[#allocation5 + $0x3a8] sm:$0xff]
          %v5101 = vld [vmem:[#allocation5 + $0x3b0] sm:$0xff]
          %v5102 = vld [vmem:[#allocation5 + $0x3b8] sm:$0xff]
          %v5103 = vld [vmem:[#allocation5 + $0x3c0] sm:$0xff]
          %v5104 = vld [vmem:[#allocation5 + $0x3c8] sm:$0xff]
          %v5105 = vld [vmem:[#allocation5 + $0x3d0] sm:$0xff]
          %v5106 = vld [vmem:[#allocation5 + $0x3d8] sm:$0xff]
          %v5107 = vld [vmem:[#allocation5 + $0x3e0] sm:$0xff]
          %v5108 = vld [vmem:[#allocation5 + $0x3e8] sm:$0xff]
          %v5109 = vld [vmem:[#allocation5 + $0x3f0] sm:$0xff]
          %v5110 = vld [vmem:[#allocation5 + $0x3f8] sm:$0xff]
          %v5111 = vld [vmem:[#allocation5 + $0x400] sm:$0xff]
          %v5112 = vld [vmem:[#allocation5 + $0x408] sm:$0xff]
          %v5113 = vld [vmem:[#allocation5 + $0x410] sm:$0xff]
          %v5114 = vld [vmem:[#allocation5 + $0x418] sm:$0xff]
          %v5115 = vld [vmem:[#allocation5 + $0x420] sm:$0xff]
          %v5116 = vld [vmem:[#allocation5 + $0x428] sm:$0xff]
          %v5117 = vld [vmem:[#allocation5 + $0x430] sm:$0xff]
          %v5118 = vld [vmem:[#allocation5 + $0x438] sm:$0xff]
          %v5119 = vld [vmem:[#allocation5 + $0x440] sm:$0xff]
          %v5120 = vld [vmem:[#allocation5 + $0x448] sm:$0xff]
          %v5121 = vld [vmem:[#allocation5 + $0x450] sm:$0xff]
          %v5122 = vld [vmem:[#allocation5 + $0x458] sm:$0xff]
          %v5123 = vld [vmem:[#allocation5 + $0x460] sm:$0xff]
          %v5124 = vld [vmem:[#allocation5 + $0x468] sm:$0xff]
          %v5125 = vld [vmem:[#allocation5 + $0x470] sm:$0xff]
          %v5126 = vld [vmem:[#allocation5 + $0x478] sm:$0xff]
          %v5127 = vld [vmem:[#allocation5 + $0x480] sm:$0xff]
          %v5128 = vld [vmem:[#allocation5 + $0x488] sm:$0xff]
          %v5129 = vld [vmem:[#allocation5 + $0x490] sm:$0xff]
          %v5130 = vld [vmem:[#allocation5 + $0x498] sm:$0xff]
          %v5131 = vld [vmem:[#allocation5 + $0x4a0] sm:$0xff]
          %v5132 = vld [vmem:[#allocation5 + $0x4a8] sm:$0xff]
          %v5133 = vld [vmem:[#allocation5 + $0x4b0] sm:$0xff]
          %v5134 = vld [vmem:[#allocation5 + $0x4b8] sm:$0xff]
          %v5135 = vld [vmem:[#allocation5 + $0x4c0] sm:$0xff]
          %v5136 = vld [vmem:[#allocation5 + $0x4c8] sm:$0xff]
          %v5137 = vld [vmem:[#allocation5 + $0x4d0] sm:$0xff]
          %v5138 = vld [vmem:[#allocation5 + $0x4d8] sm:$0xff]
          %v5139 = vld [vmem:[#allocation5 + $0x4e0] sm:$0xff]
          %v5140 = vld [vmem:[#allocation5 + $0x4e8] sm:$0xff]
          %v5141 = vld [vmem:[#allocation5 + $0x4f0] sm:$0xff]
          %v5142 = vld [vmem:[#allocation5 + $0x4f8] sm:$0xff]
          %v5143 = vld [vmem:[#allocation5 + $0x500] sm:$0xff]
          %v5144 = vld [vmem:[#allocation5 + $0x508] sm:$0xff]
          %v5145 = vld [vmem:[#allocation5 + $0x510] sm:$0xff]
          %v5146 = vld [vmem:[#allocation5 + $0x518] sm:$0xff]
          %v5147 = vld [vmem:[#allocation5 + $0x520] sm:$0xff]
          %v5148 = vld [vmem:[#allocation5 + $0x528] sm:$0xff]
          %v5149 = vld [vmem:[#allocation5 + $0x530] sm:$0xff]
          %v5150 = vld [vmem:[#allocation5 + $0x538] sm:$0xff]
          %v5151 = vld [vmem:[#allocation5 + $0x540] sm:$0xff]
          %v5152 = vld [vmem:[#allocation5 + $0x548] sm:$0xff]
          %v5153 = vld [vmem:[#allocation5 + $0x550] sm:$0xff]
          %v5154 = vld [vmem:[#allocation5 + $0x558] sm:$0xff]
          %v5155 = vld [vmem:[#allocation5 + $0x560] sm:$0xff]
          %v5156 = vld [vmem:[#allocation5 + $0x568] sm:$0xff]
          %v5157 = vld [vmem:[#allocation5 + $0x570] sm:$0xff]
          %v5158 = vld [vmem:[#allocation5 + $0x578] sm:$0xff]
          %v5159 = vld [vmem:[#allocation5 + $0x580] sm:$0xff]
          %v5160 = vld [vmem:[#allocation5 + $0x588] sm:$0xff]
          %v5161 = vld [vmem:[#allocation5 + $0x590] sm:$0xff]
          %v5162 = vld [vmem:[#allocation5 + $0x598] sm:$0xff]
          %v5163 = vld [vmem:[#allocation5 + $0x5a0] sm:$0xff]
          %v5164 = vld [vmem:[#allocation5 + $0x5a8] sm:$0xff]
          %v5165 = vld [vmem:[#allocation5 + $0x5b0] sm:$0xff]
          %v5166 = vld [vmem:[#allocation5 + $0x5b8] sm:$0xff]
          %v5167 = vld [vmem:[#allocation5 + $0x5c0] sm:$0xff]
          %v5168 = vld [vmem:[#allocation5 + $0x5c8] sm:$0xff]
          %v5169 = vld [vmem:[#allocation5 + $0x5d0] sm:$0xff]
          %v5170 = vld [vmem:[#allocation5 + $0x5d8] sm:$0xff]
          %v5171 = vld [vmem:[#allocation5 + $0x5e0] sm:$0xff]
          %v5172 = vld [vmem:[#allocation5 + $0x5e8] sm:$0xff]
          %v5173 = vld [vmem:[#allocation5 + $0x5f0] sm:$0xff]
          %v5174 = vld [vmem:[#allocation5 + $0x5f8] sm:$0xff]
          %v5175 = vld [vmem:[#allocation5 + $0x600] sm:$0xff]
          %v5176 = vld [vmem:[#allocation5 + $0x608] sm:$0xff]
          %v5177 = vld [vmem:[#allocation5 + $0x610] sm:$0xff]
          %v5178 = vld [vmem:[#allocation5 + $0x618] sm:$0xff]
          %v5179 = vld [vmem:[#allocation5 + $0x620] sm:$0xff]
          %v5180 = vld [vmem:[#allocation5 + $0x628] sm:$0xff]
          %v5181 = vld [vmem:[#allocation5 + $0x630] sm:$0xff]
          %v5182 = vld [vmem:[#allocation5 + $0x638] sm:$0xff]
          %v5183 = vld [vmem:[#allocation5 + $0x640] sm:$0xff]
          %v5184 = vld [vmem:[#allocation5 + $0x648] sm:$0xff]
          %v5185 = vld [vmem:[#allocation5 + $0x650] sm:$0xff]
          %v5186 = vld [vmem:[#allocation5 + $0x658] sm:$0xff]
          %v5187 = vld [vmem:[#allocation5 + $0x660] sm:$0xff]
          %v5188 = vld [vmem:[#allocation5 + $0x668] sm:$0xff]
          %v5189 = vld [vmem:[#allocation5 + $0x670] sm:$0xff]
          %v5190 = vld [vmem:[#allocation5 + $0x678] sm:$0xff]
          %v5191 = vld [vmem:[#allocation5 + $0x680] sm:$0xff]
          %v5192 = vld [vmem:[#allocation5 + $0x688] sm:$0xff]
          %v5193 = vld [vmem:[#allocation5 + $0x690] sm:$0xff]
          %v5194 = vld [vmem:[#allocation5 + $0x698] sm:$0xff]
          %v5195 = vld [vmem:[#allocation5 + $0x6a0] sm:$0xff]
          %v5196 = vld [vmem:[#allocation5 + $0x6a8] sm:$0xff]
          %v5197 = vld [vmem:[#allocation5 + $0x6b0] sm:$0xff]
          %v5198 = vld [vmem:[#allocation5 + $0x6b8] sm:$0xff]
          %v5199 = vld [vmem:[#allocation5 + $0x6c0] sm:$0xff]
          %v5200 = vld [vmem:[#allocation5 + $0x6c8] sm:$0xff]
          %v5201 = vld [vmem:[#allocation5 + $0x6d0] sm:$0xff]
          %v5202 = vld [vmem:[#allocation5 + $0x6d8] sm:$0xff]
          %v5203 = vld [vmem:[#allocation5 + $0x6e0] sm:$0xff]
          %v5204 = vld [vmem:[#allocation5 + $0x6e8] sm:$0xff]
          %v5205 = vld [vmem:[#allocation5 + $0x6f0] sm:$0xff]
          %v5206 = vld [vmem:[#allocation5 + $0x6f8] sm:$0xff]
          %v5207 = vld [vmem:[#allocation5 + $0x700] sm:$0xff]
          %v5208 = vld [vmem:[#allocation5 + $0x708] sm:$0xff]
          %v5209 = vld [vmem:[#allocation5 + $0x710] sm:$0xff]
          %v5210 = vld [vmem:[#allocation5 + $0x718] sm:$0xff]
          %v5211 = vld [vmem:[#allocation5 + $0x720] sm:$0xff]
          %v5212 = vld [vmem:[#allocation5 + $0x728] sm:$0xff]
          %v5213 = vld [vmem:[#allocation5 + $0x730] sm:$0xff]
          %v5214 = vld [vmem:[#allocation5 + $0x738] sm:$0xff]
          %v5215 = vld [vmem:[#allocation5 + $0x740] sm:$0xff]
          %v5216 = vld [vmem:[#allocation5 + $0x748] sm:$0xff]
          %v5217 = vld [vmem:[#allocation5 + $0x750] sm:$0xff]
          %v5218 = vld [vmem:[#allocation5 + $0x758] sm:$0xff]
          %v5219 = vld [vmem:[#allocation5 + $0x760] sm:$0xff]
          %v5220 = vld [vmem:[#allocation5 + $0x768] sm:$0xff]
          %v5221 = vld [vmem:[#allocation5 + $0x770] sm:$0xff]
          %v5222 = vld [vmem:[#allocation5 + $0x778] sm:$0xff]
          %v5223 = vld [vmem:[#allocation5 + $0x780] sm:$0xff]
          %v5224 = vld [vmem:[#allocation5 + $0x788] sm:$0xff]
          %v5225 = vld [vmem:[#allocation5 + $0x790] sm:$0xff]
          %v5226 = vld [vmem:[#allocation5 + $0x798] sm:$0xff]
          %v5227 = vld [vmem:[#allocation5 + $0x7a0] sm:$0xff]
          %v5228 = vld [vmem:[#allocation5 + $0x7a8] sm:$0xff]
          %v5229 = vld [vmem:[#allocation5 + $0x7b0] sm:$0xff]
          %v5230 = vld [vmem:[#allocation5 + $0x7b8] sm:$0xff]
          %v5231 = vld [vmem:[#allocation5 + $0x7c0] sm:$0xff]
          %v5232 = vld [vmem:[#allocation5 + $0x7c8] sm:$0xff]
          %v5233 = vld [vmem:[#allocation5 + $0x7d0] sm:$0xff]
          %v5234 = vld [vmem:[#allocation5 + $0x7d8] sm:$0xff]
          %v5235 = vld [vmem:[#allocation5 + $0x7e0] sm:$0xff]
          %v5236 = vld [vmem:[#allocation5 + $0x7e8] sm:$0xff]
          %v5237 = vld [vmem:[#allocation5 + $0x7f0] sm:$0xff]
          %v5238 = vld [vmem:[#allocation5 + $0x7f8] sm:$0xff]
          %v5239 = vld [vmem:[%s8] sm:$0xf]
          %v5496 = vunpack.c.l.b16 %v4983
          %v5497 = vunpack.c.h.b16 %v4983
          %v5498 = vunpack.c.l.b16 %v4984
          %v5499 = vunpack.c.h.b16 %v4984
          %v5500 = vunpack.c.l.b16 %v4985
          %v5501 = vunpack.c.h.b16 %v4985
          %v5502 = vunpack.c.l.b16 %v4986
          %v5503 = vunpack.c.h.b16 %v4986
          %v5504 = vunpack.c.l.b16 %v4987
          %v5505 = vunpack.c.h.b16 %v4987
          %v5506 = vunpack.c.l.b16 %v4988
          %v5507 = vunpack.c.h.b16 %v4988
          %v5508 = vunpack.c.l.b16 %v4989
          %v5509 = vunpack.c.h.b16 %v4989
          %v5510 = vunpack.c.l.b16 %v4990
          %v5511 = vunpack.c.h.b16 %v4990
          %v5512 = vunpack.c.l.b16 %v4991
          %v5513 = vunpack.c.h.b16 %v4991
          %v5514 = vunpack.c.l.b16 %v4992
          %v5515 = vunpack.c.h.b16 %v4992
          %v5516 = vunpack.c.l.b16 %v4993
          %v5517 = vunpack.c.h.b16 %v4993
          %v5518 = vunpack.c.l.b16 %v4994
          %v5519 = vunpack.c.h.b16 %v4994
          %v5520 = vunpack.c.l.b16 %v4995
          %v5521 = vunpack.c.h.b16 %v4995
          %v5522 = vunpack.c.l.b16 %v4996
          %v5523 = vunpack.c.h.b16 %v4996
          %v5524 = vunpack.c.l.b16 %v4997
          %v5525 = vunpack.c.h.b16 %v4997
          %v5526 = vunpack.c.l.b16 %v4998
          %v5527 = vunpack.c.h.b16 %v4998
          %v5528 = vunpack.c.l.b16 %v4999
          %v5529 = vunpack.c.h.b16 %v4999
          %v5530 = vunpack.c.l.b16 %v5000
          %v5531 = vunpack.c.h.b16 %v5000
          %v5532 = vunpack.c.l.b16 %v5001
          %v5533 = vunpack.c.h.b16 %v5001
          %v5534 = vunpack.c.l.b16 %v5002
          %v5535 = vunpack.c.h.b16 %v5002
          %v5536 = vunpack.c.l.b16 %v5003
          %v5537 = vunpack.c.h.b16 %v5003
          %v5538 = vunpack.c.l.b16 %v5004
          %v5539 = vunpack.c.h.b16 %v5004
          %v5540 = vunpack.c.l.b16 %v5005
          %v5541 = vunpack.c.h.b16 %v5005
          %v5542 = vunpack.c.l.b16 %v5006
          %v5543 = vunpack.c.h.b16 %v5006
          %v5544 = vunpack.c.l.b16 %v5007
          %v5545 = vunpack.c.h.b16 %v5007
          %v5546 = vunpack.c.l.b16 %v5008
          %v5547 = vunpack.c.h.b16 %v5008
          %v5548 = vunpack.c.l.b16 %v5009
          %v5549 = vunpack.c.h.b16 %v5009
          %v5550 = vunpack.c.l.b16 %v5010
          %v5551 = vunpack.c.h.b16 %v5010
          %v5552 = vunpack.c.l.b16 %v5011
          %v5553 = vunpack.c.h.b16 %v5011
          %v5554 = vunpack.c.l.b16 %v5012
          %v5555 = vunpack.c.h.b16 %v5012
          %v5556 = vunpack.c.l.b16 %v5013
          %v5557 = vunpack.c.h.b16 %v5013
          %v5558 = vunpack.c.l.b16 %v5014
          %v5559 = vunpack.c.h.b16 %v5014
          %v5560 = vunpack.c.l.b16 %v5015
          %v5561 = vunpack.c.h.b16 %v5015
          %v5562 = vunpack.c.l.b16 %v5016
          %v5563 = vunpack.c.h.b16 %v5016
          %v5564 = vunpack.c.l.b16 %v5017
          %v5565 = vunpack.c.h.b16 %v5017
          %v5566 = vunpack.c.l.b16 %v5018
          %v5567 = vunpack.c.h.b16 %v5018
          %v5568 = vunpack.c.l.b16 %v5019
          %v5569 = vunpack.c.h.b16 %v5019
          %v5570 = vunpack.c.l.b16 %v5020
          %v5571 = vunpack.c.h.b16 %v5020
          %v5572 = vunpack.c.l.b16 %v5021
          %v5573 = vunpack.c.h.b16 %v5021
          %v5574 = vunpack.c.l.b16 %v5022
          %v5575 = vunpack.c.h.b16 %v5022
          %v5576 = vunpack.c.l.b16 %v5023
          %v5577 = vunpack.c.h.b16 %v5023
          %v5578 = vunpack.c.l.b16 %v5024
          %v5579 = vunpack.c.h.b16 %v5024
          %v5580 = vunpack.c.l.b16 %v5025
          %v5581 = vunpack.c.h.b16 %v5025
          %v5582 = vunpack.c.l.b16 %v5026
          %v5583 = vunpack.c.h.b16 %v5026
          %v5584 = vunpack.c.l.b16 %v5027
          %v5585 = vunpack.c.h.b16 %v5027
          %v5586 = vunpack.c.l.b16 %v5028
          %v5587 = vunpack.c.h.b16 %v5028
          %v5588 = vunpack.c.l.b16 %v5029
          %v5589 = vunpack.c.h.b16 %v5029
          %v5590 = vunpack.c.l.b16 %v5030
          %v5591 = vunpack.c.h.b16 %v5030
          %v5592 = vunpack.c.l.b16 %v5031
          %v5593 = vunpack.c.h.b16 %v5031
          %v5594 = vunpack.c.l.b16 %v5032
          %v5595 = vunpack.c.h.b16 %v5032
          %v5596 = vunpack.c.l.b16 %v5033
          %v5597 = vunpack.c.h.b16 %v5033
          %v5598 = vunpack.c.l.b16 %v5034
          %v5599 = vunpack.c.h.b16 %v5034
          %v5600 = vunpack.c.l.b16 %v5035
          %v5601 = vunpack.c.h.b16 %v5035
          %v5602 = vunpack.c.l.b16 %v5036
          %v5603 = vunpack.c.h.b16 %v5036
          %v5604 = vunpack.c.l.b16 %v5037
          %v5605 = vunpack.c.h.b16 %v5037
          %v5606 = vunpack.c.l.b16 %v5038
          %v5607 = vunpack.c.h.b16 %v5038
          %v5608 = vunpack.c.l.b16 %v5039
          %v5609 = vunpack.c.h.b16 %v5039
          %v5610 = vunpack.c.l.b16 %v5040
          %v5611 = vunpack.c.h.b16 %v5040
          %v5612 = vunpack.c.l.b16 %v5041
          %v5613 = vunpack.c.h.b16 %v5041
          %v5614 = vunpack.c.l.b16 %v5042
          %v5615 = vunpack.c.h.b16 %v5042
          %v5616 = vunpack.c.l.b16 %v5043
          %v5617 = vunpack.c.h.b16 %v5043
          %v5618 = vunpack.c.l.b16 %v5044
          %v5619 = vunpack.c.h.b16 %v5044
          %v5620 = vunpack.c.l.b16 %v5045
          %v5621 = vunpack.c.h.b16 %v5045
          %v5622 = vunpack.c.l.b16 %v5046
          %v5623 = vunpack.c.h.b16 %v5046
          %v5624 = vunpack.c.l.b16 %v5047
          %v5625 = vunpack.c.h.b16 %v5047
          %v5626 = vunpack.c.l.b16 %v5048
          %v5627 = vunpack.c.h.b16 %v5048
          %v5628 = vunpack.c.l.b16 %v5049
          %v5629 = vunpack.c.h.b16 %v5049
          %v5630 = vunpack.c.l.b16 %v5050
          %v5631 = vunpack.c.h.b16 %v5050
          %v5632 = vunpack.c.l.b16 %v5051
          %v5633 = vunpack.c.h.b16 %v5051
          %v5634 = vunpack.c.l.b16 %v5052
          %v5635 = vunpack.c.h.b16 %v5052
          %v5636 = vunpack.c.l.b16 %v5053
          %v5637 = vunpack.c.h.b16 %v5053
          %v5638 = vunpack.c.l.b16 %v5054
          %v5639 = vunpack.c.h.b16 %v5054
          %v5640 = vunpack.c.l.b16 %v5055
          %v5641 = vunpack.c.h.b16 %v5055
          %v5642 = vunpack.c.l.b16 %v5056
          %v5643 = vunpack.c.h.b16 %v5056
          %v5644 = vunpack.c.l.b16 %v5057
          %v5645 = vunpack.c.h.b16 %v5057
          %v5646 = vunpack.c.l.b16 %v5058
          %v5647 = vunpack.c.h.b16 %v5058
          %v5648 = vunpack.c.l.b16 %v5059
          %v5649 = vunpack.c.h.b16 %v5059
          %v5650 = vunpack.c.l.b16 %v5060
          %v5651 = vunpack.c.h.b16 %v5060
          %v5652 = vunpack.c.l.b16 %v5061
          %v5653 = vunpack.c.h.b16 %v5061
          %v5654 = vunpack.c.l.b16 %v5062
          %v5655 = vunpack.c.h.b16 %v5062
          %v5656 = vunpack.c.l.b16 %v5063
          %v5657 = vunpack.c.h.b16 %v5063
          %v5658 = vunpack.c.l.b16 %v5064
          %v5659 = vunpack.c.h.b16 %v5064
          %v5660 = vunpack.c.l.b16 %v5065
          %v5661 = vunpack.c.h.b16 %v5065
          %v5662 = vunpack.c.l.b16 %v5066
          %v5663 = vunpack.c.h.b16 %v5066
          %v5664 = vunpack.c.l.b16 %v5067
          %v5665 = vunpack.c.h.b16 %v5067
          %v5666 = vunpack.c.l.b16 %v5068
          %v5667 = vunpack.c.h.b16 %v5068
          %v5668 = vunpack.c.l.b16 %v5069
          %v5669 = vunpack.c.h.b16 %v5069
          %v5670 = vunpack.c.l.b16 %v5070
          %v5671 = vunpack.c.h.b16 %v5070
          %v5672 = vunpack.c.l.b16 %v5071
          %v5673 = vunpack.c.h.b16 %v5071
          %v5674 = vunpack.c.l.b16 %v5072
          %v5675 = vunpack.c.h.b16 %v5072
          %v5676 = vunpack.c.l.b16 %v5073
          %v5677 = vunpack.c.h.b16 %v5073
          %v5678 = vunpack.c.l.b16 %v5074
          %v5679 = vunpack.c.h.b16 %v5074
          %v5680 = vunpack.c.l.b16 %v5075
          %v5681 = vunpack.c.h.b16 %v5075
          %v5682 = vunpack.c.l.b16 %v5076
          %v5683 = vunpack.c.h.b16 %v5076
          %v5684 = vunpack.c.l.b16 %v5077
          %v5685 = vunpack.c.h.b16 %v5077
          %v5686 = vunpack.c.l.b16 %v5078
          %v5687 = vunpack.c.h.b16 %v5078
          %v5688 = vunpack.c.l.b16 %v5079
          %v5689 = vunpack.c.h.b16 %v5079
          %v5690 = vunpack.c.l.b16 %v5080
          %v5691 = vunpack.c.h.b16 %v5080
          %v5692 = vunpack.c.l.b16 %v5081
          %v5693 = vunpack.c.h.b16 %v5081
          %v5694 = vunpack.c.l.b16 %v5082
          %v5695 = vunpack.c.h.b16 %v5082
          %v5696 = vunpack.c.l.b16 %v5083
          %v5697 = vunpack.c.h.b16 %v5083
          %v5698 = vunpack.c.l.b16 %v5084
          %v5699 = vunpack.c.h.b16 %v5084
          %v5700 = vunpack.c.l.b16 %v5085
          %v5701 = vunpack.c.h.b16 %v5085
          %v5702 = vunpack.c.l.b16 %v5086
          %v5703 = vunpack.c.h.b16 %v5086
          %v5704 = vunpack.c.l.b16 %v5087
          %v5705 = vunpack.c.h.b16 %v5087
          %v5706 = vunpack.c.l.b16 %v5088
          %v5707 = vunpack.c.h.b16 %v5088
          %v5708 = vunpack.c.l.b16 %v5089
          %v5709 = vunpack.c.h.b16 %v5089
          %v5710 = vunpack.c.l.b16 %v5090
          %v5711 = vunpack.c.h.b16 %v5090
          %v5712 = vunpack.c.l.b16 %v5091
          %v5713 = vunpack.c.h.b16 %v5091
          %v5714 = vunpack.c.l.b16 %v5092
          %v5715 = vunpack.c.h.b16 %v5092
          %v5716 = vunpack.c.l.b16 %v5093
          %v5717 = vunpack.c.h.b16 %v5093
          %v5718 = vunpack.c.l.b16 %v5094
          %v5719 = vunpack.c.h.b16 %v5094
          %v5720 = vunpack.c.l.b16 %v5095
          %v5721 = vunpack.c.h.b16 %v5095
          %v5722 = vunpack.c.l.b16 %v5096
          %v5723 = vunpack.c.h.b16 %v5096
          %v5724 = vunpack.c.l.b16 %v5097
          %v5725 = vunpack.c.h.b16 %v5097
          %v5726 = vunpack.c.l.b16 %v5098
          %v5727 = vunpack.c.h.b16 %v5098
          %v5728 = vunpack.c.l.b16 %v5099
          %v5729 = vunpack.c.h.b16 %v5099
          %v5730 = vunpack.c.l.b16 %v5100
          %v5731 = vunpack.c.h.b16 %v5100
          %v5732 = vunpack.c.l.b16 %v5101
          %v5733 = vunpack.c.h.b16 %v5101
          %v5734 = vunpack.c.l.b16 %v5102
          %v5735 = vunpack.c.h.b16 %v5102
          %v5736 = vunpack.c.l.b16 %v5103
          %v5737 = vunpack.c.h.b16 %v5103
          %v5738 = vunpack.c.l.b16 %v5104
          %v5739 = vunpack.c.h.b16 %v5104
          %v5740 = vunpack.c.l.b16 %v5105
          %v5741 = vunpack.c.h.b16 %v5105
          %v5742 = vunpack.c.l.b16 %v5106
          %v5743 = vunpack.c.h.b16 %v5106
          %v5744 = vunpack.c.l.b16 %v5107
          %v5745 = vunpack.c.h.b16 %v5107
          %v5746 = vunpack.c.l.b16 %v5108
          %v5747 = vunpack.c.h.b16 %v5108
          %v5748 = vunpack.c.l.b16 %v5109
          %v5749 = vunpack.c.h.b16 %v5109
          %v5750 = vunpack.c.l.b16 %v5110
          %v5751 = vunpack.c.h.b16 %v5110
          %v5752 = vunpack.c.l.b16 %v5111
          %v5753 = vunpack.c.h.b16 %v5111
          %v5754 = vunpack.c.l.b16 %v5112
          %v5755 = vunpack.c.h.b16 %v5112
          %v5756 = vunpack.c.l.b16 %v5113
          %v5757 = vunpack.c.h.b16 %v5113
          %v5758 = vunpack.c.l.b16 %v5114
          %v5759 = vunpack.c.h.b16 %v5114
          %v5760 = vunpack.c.l.b16 %v5115
          %v5761 = vunpack.c.h.b16 %v5115
          %v5762 = vunpack.c.l.b16 %v5116
          %v5763 = vunpack.c.h.b16 %v5116
          %v5764 = vunpack.c.l.b16 %v5117
          %v5765 = vunpack.c.h.b16 %v5117
          %v5766 = vunpack.c.l.b16 %v5118
          %v5767 = vunpack.c.h.b16 %v5118
          %v5768 = vunpack.c.l.b16 %v5119
          %v5769 = vunpack.c.h.b16 %v5119
          %v5770 = vunpack.c.l.b16 %v5120
          %v5771 = vunpack.c.h.b16 %v5120
          %v5772 = vunpack.c.l.b16 %v5121
          %v5773 = vunpack.c.h.b16 %v5121
          %v5774 = vunpack.c.l.b16 %v5122
          %v5775 = vunpack.c.h.b16 %v5122
          %v5776 = vunpack.c.l.b16 %v5123
          %v5777 = vunpack.c.h.b16 %v5123
          %v5778 = vunpack.c.l.b16 %v5124
          %v5779 = vunpack.c.h.b16 %v5124
          %v5780 = vunpack.c.l.b16 %v5125
          %v5781 = vunpack.c.h.b16 %v5125
          %v5782 = vunpack.c.l.b16 %v5126
          %v5783 = vunpack.c.h.b16 %v5126
          %v5784 = vunpack.c.l.b16 %v5127
          %v5785 = vunpack.c.h.b16 %v5127
          %v5786 = vunpack.c.l.b16 %v5128
          %v5787 = vunpack.c.h.b16 %v5128
          %v5788 = vunpack.c.l.b16 %v5129
          %v5789 = vunpack.c.h.b16 %v5129
          %v5790 = vunpack.c.l.b16 %v5130
          %v5791 = vunpack.c.h.b16 %v5130
          %v5792 = vunpack.c.l.b16 %v5131
          %v5793 = vunpack.c.h.b16 %v5131
          %v5794 = vunpack.c.l.b16 %v5132
          %v5795 = vunpack.c.h.b16 %v5132
          %v5796 = vunpack.c.l.b16 %v5133
          %v5797 = vunpack.c.h.b16 %v5133
          %v5798 = vunpack.c.l.b16 %v5134
          %v5799 = vunpack.c.h.b16 %v5134
          %v5800 = vunpack.c.l.b16 %v5135
          %v5801 = vunpack.c.h.b16 %v5135
          %v5802 = vunpack.c.l.b16 %v5136
          %v5803 = vunpack.c.h.b16 %v5136
          %v5804 = vunpack.c.l.b16 %v5137
          %v5805 = vunpack.c.h.b16 %v5137
          %v5806 = vunpack.c.l.b16 %v5138
          %v5807 = vunpack.c.h.b16 %v5138
          %v5808 = vunpack.c.l.b16 %v5139
          %v5809 = vunpack.c.h.b16 %v5139
          %v5810 = vunpack.c.l.b16 %v5140
          %v5811 = vunpack.c.h.b16 %v5140
          %v5812 = vunpack.c.l.b16 %v5141
          %v5813 = vunpack.c.h.b16 %v5141
          %v5814 = vunpack.c.l.b16 %v5142
          %v5815 = vunpack.c.h.b16 %v5142
          %v5816 = vunpack.c.l.b16 %v5143
          %v5817 = vunpack.c.h.b16 %v5143
          %v5818 = vunpack.c.l.b16 %v5144
          %v5819 = vunpack.c.h.b16 %v5144
          %v5820 = vunpack.c.l.b16 %v5145
          %v5821 = vunpack.c.h.b16 %v5145
          %v5822 = vunpack.c.l.b16 %v5146
          %v5823 = vunpack.c.h.b16 %v5146
          %v5824 = vunpack.c.l.b16 %v5147
          %v5825 = vunpack.c.h.b16 %v5147
          %v5826 = vunpack.c.l.b16 %v5148
          %v5827 = vunpack.c.h.b16 %v5148
          %v5828 = vunpack.c.l.b16 %v5149
          %v5829 = vunpack.c.h.b16 %v5149
          %v5830 = vunpack.c.l.b16 %v5150
          %v5831 = vunpack.c.h.b16 %v5150
          %v5832 = vunpack.c.l.b16 %v5151
          %v5833 = vunpack.c.h.b16 %v5151
          %v5834 = vunpack.c.l.b16 %v5152
          %v5835 = vunpack.c.h.b16 %v5152
          %v5836 = vunpack.c.l.b16 %v5153
          %v5837 = vunpack.c.h.b16 %v5153
          %v5838 = vunpack.c.l.b16 %v5154
          %v5839 = vunpack.c.h.b16 %v5154
          %v5840 = vunpack.c.l.b16 %v5155
          %v5841 = vunpack.c.h.b16 %v5155
          %v5842 = vunpack.c.l.b16 %v5156
          %v5843 = vunpack.c.h.b16 %v5156
          %v5844 = vunpack.c.l.b16 %v5157
          %v5845 = vunpack.c.h.b16 %v5157
          %v5846 = vunpack.c.l.b16 %v5158
          %v5847 = vunpack.c.h.b16 %v5158
          %v5848 = vunpack.c.l.b16 %v5159
          %v5849 = vunpack.c.h.b16 %v5159
          %v5850 = vunpack.c.l.b16 %v5160
          %v5851 = vunpack.c.h.b16 %v5160
          %v5852 = vunpack.c.l.b16 %v5161
          %v5853 = vunpack.c.h.b16 %v5161
          %v5854 = vunpack.c.l.b16 %v5162
          %v5855 = vunpack.c.h.b16 %v5162
          %v5856 = vunpack.c.l.b16 %v5163
          %v5857 = vunpack.c.h.b16 %v5163
          %v5858 = vunpack.c.l.b16 %v5164
          %v5859 = vunpack.c.h.b16 %v5164
          %v5860 = vunpack.c.l.b16 %v5165
          %v5861 = vunpack.c.h.b16 %v5165
          %v5862 = vunpack.c.l.b16 %v5166
          %v5863 = vunpack.c.h.b16 %v5166
          %v5864 = vunpack.c.l.b16 %v5167
          %v5865 = vunpack.c.h.b16 %v5167
          %v5866 = vunpack.c.l.b16 %v5168
          %v5867 = vunpack.c.h.b16 %v5168
          %v5868 = vunpack.c.l.b16 %v5169
          %v5869 = vunpack.c.h.b16 %v5169
          %v5870 = vunpack.c.l.b16 %v5170
          %v5871 = vunpack.c.h.b16 %v5170
          %v5872 = vunpack.c.l.b16 %v5171
          %v5873 = vunpack.c.h.b16 %v5171
          %v5874 = vunpack.c.l.b16 %v5172
          %v5875 = vunpack.c.h.b16 %v5172
          %v5876 = vunpack.c.l.b16 %v5173
          %v5877 = vunpack.c.h.b16 %v5173
          %v5878 = vunpack.c.l.b16 %v5174
          %v5879 = vunpack.c.h.b16 %v5174
          %v5880 = vunpack.c.l.b16 %v5175
          %v5881 = vunpack.c.h.b16 %v5175
          %v5882 = vunpack.c.l.b16 %v5176
          %v5883 = vunpack.c.h.b16 %v5176
          %v5884 = vunpack.c.l.b16 %v5177
          %v5885 = vunpack.c.h.b16 %v5177
          %v5886 = vunpack.c.l.b16 %v5178
          %v5887 = vunpack.c.h.b16 %v5178
          %v5888 = vunpack.c.l.b16 %v5179
          %v5889 = vunpack.c.h.b16 %v5179
          %v5890 = vunpack.c.l.b16 %v5180
          %v5891 = vunpack.c.h.b16 %v5180
          %v5892 = vunpack.c.l.b16 %v5181
          %v5893 = vunpack.c.h.b16 %v5181
          %v5894 = vunpack.c.l.b16 %v5182
          %v5895 = vunpack.c.h.b16 %v5182
          %v5896 = vunpack.c.l.b16 %v5183
          %v5897 = vunpack.c.h.b16 %v5183
          %v5898 = vunpack.c.l.b16 %v5184
          %v5899 = vunpack.c.h.b16 %v5184
          %v5900 = vunpack.c.l.b16 %v5185
          %v5901 = vunpack.c.h.b16 %v5185
          %v5902 = vunpack.c.l.b16 %v5186
          %v5903 = vunpack.c.h.b16 %v5186
          %v5904 = vunpack.c.l.b16 %v5187
          %v5905 = vunpack.c.h.b16 %v5187
          %v5906 = vunpack.c.l.b16 %v5188
          %v5907 = vunpack.c.h.b16 %v5188
          %v5908 = vunpack.c.l.b16 %v5189
          %v5909 = vunpack.c.h.b16 %v5189
          %v5910 = vunpack.c.l.b16 %v5190
          %v5911 = vunpack.c.h.b16 %v5190
          %v5912 = vunpack.c.l.b16 %v5191
          %v5913 = vunpack.c.h.b16 %v5191
          %v5914 = vunpack.c.l.b16 %v5192
          %v5915 = vunpack.c.h.b16 %v5192
          %v5916 = vunpack.c.l.b16 %v5193
          %v5917 = vunpack.c.h.b16 %v5193
          %v5918 = vunpack.c.l.b16 %v5194
          %v5919 = vunpack.c.h.b16 %v5194
          %v5920 = vunpack.c.l.b16 %v5195
          %v5921 = vunpack.c.h.b16 %v5195
          %v5922 = vunpack.c.l.b16 %v5196
          %v5923 = vunpack.c.h.b16 %v5196
          %v5924 = vunpack.c.l.b16 %v5197
          %v5925 = vunpack.c.h.b16 %v5197
          %v5926 = vunpack.c.l.b16 %v5198
          %v5927 = vunpack.c.h.b16 %v5198
          %v5928 = vunpack.c.l.b16 %v5199
          %v5929 = vunpack.c.h.b16 %v5199
          %v5930 = vunpack.c.l.b16 %v5200
          %v5931 = vunpack.c.h.b16 %v5200
          %v5932 = vunpack.c.l.b16 %v5201
          %v5933 = vunpack.c.h.b16 %v5201
          %v5934 = vunpack.c.l.b16 %v5202
          %v5935 = vunpack.c.h.b16 %v5202
          %v5936 = vunpack.c.l.b16 %v5203
          %v5937 = vunpack.c.h.b16 %v5203
          %v5938 = vunpack.c.l.b16 %v5204
          %v5939 = vunpack.c.h.b16 %v5204
          %v5940 = vunpack.c.l.b16 %v5205
          %v5941 = vunpack.c.h.b16 %v5205
          %v5942 = vunpack.c.l.b16 %v5206
          %v5943 = vunpack.c.h.b16 %v5206
          %v5944 = vunpack.c.l.b16 %v5207
          %v5945 = vunpack.c.h.b16 %v5207
          %v5946 = vunpack.c.l.b16 %v5208
          %v5947 = vunpack.c.h.b16 %v5208
          %v5948 = vunpack.c.l.b16 %v5209
          %v5949 = vunpack.c.h.b16 %v5209
          %v5950 = vunpack.c.l.b16 %v5210
          %v5951 = vunpack.c.h.b16 %v5210
          %v5952 = vunpack.c.l.b16 %v5211
          %v5953 = vunpack.c.h.b16 %v5211
          %v5954 = vunpack.c.l.b16 %v5212
          %v5955 = vunpack.c.h.b16 %v5212
          %v5956 = vunpack.c.l.b16 %v5213
          %v5957 = vunpack.c.h.b16 %v5213
          %v5958 = vunpack.c.l.b16 %v5214
          %v5959 = vunpack.c.h.b16 %v5214
          %v5960 = vunpack.c.l.b16 %v5215
          %v5961 = vunpack.c.h.b16 %v5215
          %v5962 = vunpack.c.l.b16 %v5216
          %v5963 = vunpack.c.h.b16 %v5216
          %v5964 = vunpack.c.l.b16 %v5217
          %v5965 = vunpack.c.h.b16 %v5217
          %v5966 = vunpack.c.l.b16 %v5218
          %v5967 = vunpack.c.h.b16 %v5218
          %v5968 = vunpack.c.l.b16 %v5219
          %v5969 = vunpack.c.h.b16 %v5219
          %v5970 = vunpack.c.l.b16 %v5220
          %v5971 = vunpack.c.h.b16 %v5220
          %v5972 = vunpack.c.l.b16 %v5221
          %v5973 = vunpack.c.h.b16 %v5221
          %v5974 = vunpack.c.l.b16 %v5222
          %v5975 = vunpack.c.h.b16 %v5222
          %v5976 = vunpack.c.l.b16 %v5223
          %v5977 = vunpack.c.h.b16 %v5223
          %v5978 = vunpack.c.l.b16 %v5224
          %v5979 = vunpack.c.h.b16 %v5224
          %v5980 = vunpack.c.l.b16 %v5225
          %v5981 = vunpack.c.h.b16 %v5225
          %v5982 = vunpack.c.l.b16 %v5226
          %v5983 = vunpack.c.h.b16 %v5226
          %v5984 = vunpack.c.l.b16 %v5227
          %v5985 = vunpack.c.h.b16 %v5227
          %v5986 = vunpack.c.l.b16 %v5228
          %v5987 = vunpack.c.h.b16 %v5228
          %v5988 = vunpack.c.l.b16 %v5229
          %v5989 = vunpack.c.h.b16 %v5229
          %v5990 = vunpack.c.l.b16 %v5230
          %v5991 = vunpack.c.h.b16 %v5230
          %v5992 = vunpack.c.l.b16 %v5231
          %v5993 = vunpack.c.h.b16 %v5231
          %v5994 = vunpack.c.l.b16 %v5232
          %v5995 = vunpack.c.h.b16 %v5232
          %v5996 = vunpack.c.l.b16 %v5233
          %v5997 = vunpack.c.h.b16 %v5233
          %v5998 = vunpack.c.l.b16 %v5234
          %v5999 = vunpack.c.h.b16 %v5234
          %v6000 = vunpack.c.l.b16 %v5235
          %v6001 = vunpack.c.h.b16 %v5235
          %v6002 = vunpack.c.l.b16 %v5236
          %v6003 = vunpack.c.h.b16 %v5236
          %v6004 = vunpack.c.l.b16 %v5237
          %v6005 = vunpack.c.h.b16 %v5237
          %v6006 = vunpack.c.l.b16 %v5238
          %v6007 = vunpack.c.h.b16 %v5238
          %v6008 = vpack.c.b16 %v5500, %v5496
          %v6009 = vpack.c.b16 %v5501, %v5497
          %v6010 = vpack.c.b16 %v5502, %v5498
          %v6011 = vpack.c.b16 %v5503, %v5499
          %v6012 = vpack.c.b16 %v5508, %v5504
          %v6013 = vpack.c.b16 %v5509, %v5505
          %v6014 = vpack.c.b16 %v5510, %v5506
          %v6015 = vpack.c.b16 %v5511, %v5507
          %v6016 = vpack.c.b16 %v5516, %v5512
          %v6017 = vpack.c.b16 %v5517, %v5513
          %v6018 = vpack.c.b16 %v5518, %v5514
          %v6019 = vpack.c.b16 %v5519, %v5515
          %v6020 = vpack.c.b16 %v5524, %v5520
          %v6021 = vpack.c.b16 %v5525, %v5521
          %v6022 = vpack.c.b16 %v5526, %v5522
          %v6023 = vpack.c.b16 %v5527, %v5523
          %v6024 = vpack.c.b16 %v5532, %v5528
          %v6025 = vpack.c.b16 %v5533, %v5529
          %v6026 = vpack.c.b16 %v5534, %v5530
          %v6027 = vpack.c.b16 %v5535, %v5531
          %v6028 = vpack.c.b16 %v5540, %v5536
          %v6029 = vpack.c.b16 %v5541, %v5537
          %v6030 = vpack.c.b16 %v5542, %v5538
          %v6031 = vpack.c.b16 %v5543, %v5539
          %v6032 = vpack.c.b16 %v5548, %v5544
          %v6033 = vpack.c.b16 %v5549, %v5545
          %v6034 = vpack.c.b16 %v5550, %v5546
          %v6035 = vpack.c.b16 %v5551, %v5547
          %v6036 = vpack.c.b16 %v5556, %v5552
          %v6037 = vpack.c.b16 %v5557, %v5553
          %v6038 = vpack.c.b16 %v5558, %v5554
          %v6039 = vpack.c.b16 %v5559, %v5555
          %v6040 = vpack.c.b16 %v5564, %v5560
          %v6041 = vpack.c.b16 %v5565, %v5561
          %v6042 = vpack.c.b16 %v5566, %v5562
          %v6043 = vpack.c.b16 %v5567, %v5563
          %v6044 = vpack.c.b16 %v5572, %v5568
          %v6045 = vpack.c.b16 %v5573, %v5569
          %v6046 = vpack.c.b16 %v5574, %v5570
          %v6047 = vpack.c.b16 %v5575, %v5571
          %v6048 = vpack.c.b16 %v5580, %v5576
          %v6049 = vpack.c.b16 %v5581, %v5577
          %v6050 = vpack.c.b16 %v5582, %v5578
          %v6051 = vpack.c.b16 %v5583, %v5579
          %v6052 = vpack.c.b16 %v5588, %v5584
          %v6053 = vpack.c.b16 %v5589, %v5585
          %v6054 = vpack.c.b16 %v5590, %v5586
          %v6055 = vpack.c.b16 %v5591, %v5587
          %v6056 = vpack.c.b16 %v5596, %v5592
          %v6057 = vpack.c.b16 %v5597, %v5593
          %v6058 = vpack.c.b16 %v5598, %v5594
          %v6059 = vpack.c.b16 %v5599, %v5595
          %v6060 = vpack.c.b16 %v5604, %v5600
          %v6061 = vpack.c.b16 %v5605, %v5601
          %v6062 = vpack.c.b16 %v5606, %v5602
          %v6063 = vpack.c.b16 %v5607, %v5603
          %v6064 = vpack.c.b16 %v5612, %v5608
          %v6065 = vpack.c.b16 %v5613, %v5609
          %v6066 = vpack.c.b16 %v5614, %v5610
          %v6067 = vpack.c.b16 %v5615, %v5611
          %v6068 = vpack.c.b16 %v5620, %v5616
          %v6069 = vpack.c.b16 %v5621, %v5617
          %v6070 = vpack.c.b16 %v5622, %v5618
          %v6071 = vpack.c.b16 %v5623, %v5619
          %v6072 = vpack.c.b16 %v5628, %v5624
          %v6073 = vpack.c.b16 %v5629, %v5625
          %v6074 = vpack.c.b16 %v5630, %v5626
          %v6075 = vpack.c.b16 %v5631, %v5627
          %v6076 = vpack.c.b16 %v5636, %v5632
          %v6077 = vpack.c.b16 %v5637, %v5633
          %v6078 = vpack.c.b16 %v5638, %v5634
          %v6079 = vpack.c.b16 %v5639, %v5635
          %v6080 = vpack.c.b16 %v5644, %v5640
          %v6081 = vpack.c.b16 %v5645, %v5641
          %v6082 = vpack.c.b16 %v5646, %v5642
          %v6083 = vpack.c.b16 %v5647, %v5643
          %v6084 = vpack.c.b16 %v5652, %v5648
          %v6085 = vpack.c.b16 %v5653, %v5649
          %v6086 = vpack.c.b16 %v5654, %v5650
          %v6087 = vpack.c.b16 %v5655, %v5651
          %v6088 = vpack.c.b16 %v5660, %v5656
          %v6089 = vpack.c.b16 %v5661, %v5657
          %v6090 = vpack.c.b16 %v5662, %v5658
          %v6091 = vpack.c.b16 %v5663, %v5659
          %v6092 = vpack.c.b16 %v5668, %v5664
          %v6093 = vpack.c.b16 %v5669, %v5665
          %v6094 = vpack.c.b16 %v5670, %v5666
          %v6095 = vpack.c.b16 %v5671, %v5667
          %v6096 = vpack.c.b16 %v5676, %v5672
          %v6097 = vpack.c.b16 %v5677, %v5673
          %v6098 = vpack.c.b16 %v5678, %v5674
          %v6099 = vpack.c.b16 %v5679, %v5675
          %v6100 = vpack.c.b16 %v5684, %v5680
          %v6101 = vpack.c.b16 %v5685, %v5681
          %v6102 = vpack.c.b16 %v5686, %v5682
          %v6103 = vpack.c.b16 %v5687, %v5683
          %v6104 = vpack.c.b16 %v5692, %v5688
          %v6105 = vpack.c.b16 %v5693, %v5689
          %v6106 = vpack.c.b16 %v5694, %v5690
          %v6107 = vpack.c.b16 %v5695, %v5691
          %v6108 = vpack.c.b16 %v5700, %v5696
          %v6109 = vpack.c.b16 %v5701, %v5697
          %v6110 = vpack.c.b16 %v5702, %v5698
          %v6111 = vpack.c.b16 %v5703, %v5699
          %v6112 = vpack.c.b16 %v5708, %v5704
          %v6113 = vpack.c.b16 %v5709, %v5705
          %v6114 = vpack.c.b16 %v5710, %v5706
          %v6115 = vpack.c.b16 %v5711, %v5707
          %v6116 = vpack.c.b16 %v5716, %v5712
          %v6117 = vpack.c.b16 %v5717, %v5713
          %v6118 = vpack.c.b16 %v5718, %v5714
          %v6119 = vpack.c.b16 %v5719, %v5715
          %v6120 = vpack.c.b16 %v5724, %v5720
          %v6121 = vpack.c.b16 %v5725, %v5721
          %v6122 = vpack.c.b16 %v5726, %v5722
          %v6123 = vpack.c.b16 %v5727, %v5723
          %v6124 = vpack.c.b16 %v5732, %v5728
          %v6125 = vpack.c.b16 %v5733, %v5729
          %v6126 = vpack.c.b16 %v5734, %v5730
          %v6127 = vpack.c.b16 %v5735, %v5731
          %v6128 = vpack.c.b16 %v5740, %v5736
          %v6129 = vpack.c.b16 %v5741, %v5737
          %v6130 = vpack.c.b16 %v5742, %v5738
          %v6131 = vpack.c.b16 %v5743, %v5739
          %v6132 = vpack.c.b16 %v5748, %v5744
          %v6133 = vpack.c.b16 %v5749, %v5745
          %v6134 = vpack.c.b16 %v5750, %v5746
          %v6135 = vpack.c.b16 %v5751, %v5747
          %v6136 = vpack.c.b16 %v5756, %v5752
          %v6137 = vpack.c.b16 %v5757, %v5753
          %v6138 = vpack.c.b16 %v5758, %v5754
          %v6139 = vpack.c.b16 %v5759, %v5755
          %v6140 = vpack.c.b16 %v5764, %v5760
          %v6141 = vpack.c.b16 %v5765, %v5761
          %v6142 = vpack.c.b16 %v5766, %v5762
          %v6143 = vpack.c.b16 %v5767, %v5763
          %v6144 = vpack.c.b16 %v5772, %v5768
          %v6145 = vpack.c.b16 %v5773, %v5769
          %v6146 = vpack.c.b16 %v5774, %v5770
          %v6147 = vpack.c.b16 %v5775, %v5771
          %v6148 = vpack.c.b16 %v5780, %v5776
          %v6149 = vpack.c.b16 %v5781, %v5777
          %v6150 = vpack.c.b16 %v5782, %v5778
          %v6151 = vpack.c.b16 %v5783, %v5779
          %v6152 = vpack.c.b16 %v5788, %v5784
          %v6153 = vpack.c.b16 %v5789, %v5785
          %v6154 = vpack.c.b16 %v5790, %v5786
          %v6155 = vpack.c.b16 %v5791, %v5787
          %v6156 = vpack.c.b16 %v5796, %v5792
          %v6157 = vpack.c.b16 %v5797, %v5793
          %v6158 = vpack.c.b16 %v5798, %v5794
          %v6159 = vpack.c.b16 %v5799, %v5795
          %v6160 = vpack.c.b16 %v5804, %v5800
          %v6161 = vpack.c.b16 %v5805, %v5801
          %v6162 = vpack.c.b16 %v5806, %v5802
          %v6163 = vpack.c.b16 %v5807, %v5803
          %v6164 = vpack.c.b16 %v5812, %v5808
          %v6165 = vpack.c.b16 %v5813, %v5809
          %v6166 = vpack.c.b16 %v5814, %v5810
          %v6167 = vpack.c.b16 %v5815, %v5811
          %v6168 = vpack.c.b16 %v5820, %v5816
          %v6169 = vpack.c.b16 %v5821, %v5817
          %v6170 = vpack.c.b16 %v5822, %v5818
          %v6171 = vpack.c.b16 %v5823, %v5819
          %v6172 = vpack.c.b16 %v5828, %v5824
          %v6173 = vpack.c.b16 %v5829, %v5825
          %v6174 = vpack.c.b16 %v5830, %v5826
          %v6175 = vpack.c.b16 %v5831, %v5827
          %v6176 = vpack.c.b16 %v5836, %v5832
          %v6177 = vpack.c.b16 %v5837, %v5833
          %v6178 = vpack.c.b16 %v5838, %v5834
          %v6179 = vpack.c.b16 %v5839, %v5835
          %v6180 = vpack.c.b16 %v5844, %v5840
          %v6181 = vpack.c.b16 %v5845, %v5841
          %v6182 = vpack.c.b16 %v5846, %v5842
          %v6183 = vpack.c.b16 %v5847, %v5843
          %v6184 = vpack.c.b16 %v5852, %v5848
          %v6185 = vpack.c.b16 %v5853, %v5849
          %v6186 = vpack.c.b16 %v5854, %v5850
          %v6187 = vpack.c.b16 %v5855, %v5851
          %v6188 = vpack.c.b16 %v5860, %v5856
          %v6189 = vpack.c.b16 %v5861, %v5857
          %v6190 = vpack.c.b16 %v5862, %v5858
          %v6191 = vpack.c.b16 %v5863, %v5859
          %v6192 = vpack.c.b16 %v5868, %v5864
          %v6193 = vpack.c.b16 %v5869, %v5865
          %v6194 = vpack.c.b16 %v5870, %v5866
          %v6195 = vpack.c.b16 %v5871, %v5867
          %v6196 = vpack.c.b16 %v5876, %v5872
          %v6197 = vpack.c.b16 %v5877, %v5873
          %v6198 = vpack.c.b16 %v5878, %v5874
          %v6199 = vpack.c.b16 %v5879, %v5875
          %v6200 = vpack.c.b16 %v5884, %v5880
          %v6201 = vpack.c.b16 %v5885, %v5881
          %v6202 = vpack.c.b16 %v5886, %v5882
          %v6203 = vpack.c.b16 %v5887, %v5883
          %v6204 = vpack.c.b16 %v5892, %v5888
          %v6205 = vpack.c.b16 %v5893, %v5889
          %v6206 = vpack.c.b16 %v5894, %v5890
          %v6207 = vpack.c.b16 %v5895, %v5891
          %v6208 = vpack.c.b16 %v5900, %v5896
          %v6209 = vpack.c.b16 %v5901, %v5897
          %v6210 = vpack.c.b16 %v5902, %v5898
          %v6211 = vpack.c.b16 %v5903, %v5899
          %v6212 = vpack.c.b16 %v5908, %v5904
          %v6213 = vpack.c.b16 %v5909, %v5905
          %v6214 = vpack.c.b16 %v5910, %v5906
          %v6215 = vpack.c.b16 %v5911, %v5907
          %v6216 = vpack.c.b16 %v5916, %v5912
          %v6217 = vpack.c.b16 %v5917, %v5913
          %v6218 = vpack.c.b16 %v5918, %v5914
          %v6219 = vpack.c.b16 %v5919, %v5915
          %v6220 = vpack.c.b16 %v5924, %v5920
          %v6221 = vpack.c.b16 %v5925, %v5921
          %v6222 = vpack.c.b16 %v5926, %v5922
          %v6223 = vpack.c.b16 %v5927, %v5923
          %v6224 = vpack.c.b16 %v5932, %v5928
          %v6225 = vpack.c.b16 %v5933, %v5929
          %v6226 = vpack.c.b16 %v5934, %v5930
          %v6227 = vpack.c.b16 %v5935, %v5931
          %v6228 = vpack.c.b16 %v5940, %v5936
          %v6229 = vpack.c.b16 %v5941, %v5937
          %v6230 = vpack.c.b16 %v5942, %v5938
          %v6231 = vpack.c.b16 %v5943, %v5939
          %v6232 = vpack.c.b16 %v5948, %v5944
          %v6233 = vpack.c.b16 %v5949, %v5945
          %v6234 = vpack.c.b16 %v5950, %v5946
          %v6235 = vpack.c.b16 %v5951, %v5947
          %v6236 = vpack.c.b16 %v5956, %v5952
          %v6237 = vpack.c.b16 %v5957, %v5953
          %v6238 = vpack.c.b16 %v5958, %v5954
          %v6239 = vpack.c.b16 %v5959, %v5955
          %v6240 = vpack.c.b16 %v5964, %v5960
          %v6241 = vpack.c.b16 %v5965, %v5961
          %v6242 = vpack.c.b16 %v5966, %v5962
          %v6243 = vpack.c.b16 %v5967, %v5963
          %v6244 = vpack.c.b16 %v5972, %v5968
          %v6245 = vpack.c.b16 %v5973, %v5969
          %v6246 = vpack.c.b16 %v5974, %v5970
          %v6247 = vpack.c.b16 %v5975, %v5971
          %v6248 = vpack.c.b16 %v5980, %v5976
          %v6249 = vpack.c.b16 %v5981, %v5977
          %v6250 = vpack.c.b16 %v5982, %v5978
          %v6251 = vpack.c.b16 %v5983, %v5979
          %v6252 = vpack.c.b16 %v5988, %v5984
          %v6253 = vpack.c.b16 %v5989, %v5985
          %v6254 = vpack.c.b16 %v5990, %v5986
          %v6255 = vpack.c.b16 %v5991, %v5987
          %v6256 = vpack.c.b16 %v5996, %v5992
          %v6257 = vpack.c.b16 %v5997, %v5993
          %v6258 = vpack.c.b16 %v5998, %v5994
          %v6259 = vpack.c.b16 %v5999, %v5995
          %v6260 = vpack.c.b16 %v6004, %v6000
          %v6261 = vpack.c.b16 %v6005, %v6001
          %v6262 = vpack.c.b16 %v6006, %v6002
          %v6263 = vpack.c.b16 %v6007, %v6003
          %v6521 = vlaneseq
          %v6522 = vshrl.u32 %v6521, 7
          %v6523 = vsub.s32 0, %v6522
          %v6524 = vrot.slane %v5239, %v6523
          %v6525 = vlaneseq
          %v6526 = vshrl.u32 %v6525, 7
          %v6527 = vsub.s32 1, %v6526
          %v6528 = vrot.slane %v5239, %v6527
          %v6529 = vlaneseq
          %v6530 = vshrl.u32 %v6529, 7
          %v6531 = vsub.s32 2, %v6530
          %v6532 = vrot.slane %v5239, %v6531
          %v6533 = vlaneseq
          %v6534 = vshrl.u32 %v6533, 7
          %v6535 = vsub.s32 3, %v6534
          %v6536 = vrot.slane %v5239, %v6535
          %6541 = vmatprep.subr.bf16.mxu0 %v6009
          %6542 = vmatpush1.bf16.msra.mxu0 %v6008
          %6543 = vmatprep.subr.bf16.mxu0 %v6013
          %6544 = vmatpush1.bf16.msra.mxu0 %v6012
          %6545 = vmatprep.subr.bf16.mxu0 %v6017
          %6546 = vmatpush1.bf16.msra.mxu0 %v6016
          %6547 = vmatprep.subr.bf16.mxu0 %v6021
          %6548 = vmatpush1.bf16.msra.mxu0 %v6020
          %6549 = vmatprep.subr.bf16.mxu0 %v6025
          %6550 = vmatpush1.bf16.msra.mxu0 %v6024
          %6551 = vmatprep.subr.bf16.mxu0 %v6029
          %6552 = vmatpush1.bf16.msra.mxu0 %v6028
          %6553 = vmatprep.subr.bf16.mxu0 %v6033
          %6554 = vmatpush1.bf16.msra.mxu0 %v6032
          %6555 = vmatprep.subr.bf16.mxu0 %v6037
          %6556 = vmatpush1.bf16.msra.mxu0 %v6036
          %6557 = vmatprep.subr.bf16.mxu0 %v6041
          %6558 = vmatpush1.bf16.msra.mxu0 %v6040
          %6559 = vmatprep.subr.bf16.mxu0 %v6045
          %6560 = vmatpush1.bf16.msra.mxu0 %v6044
          %6561 = vmatprep.subr.bf16.mxu0 %v6049
          %6562 = vmatpush1.bf16.msra.mxu0 %v6048
          %6563 = vmatprep.subr.bf16.mxu0 %v6053
          %6564 = vmatpush1.bf16.msra.mxu0 %v6052
          %6565 = vmatprep.subr.bf16.mxu0 %v6057
          %6566 = vmatpush1.bf16.msra.mxu0 %v6056
          %6567 = vmatprep.subr.bf16.mxu0 %v6061
          %6568 = vmatpush1.bf16.msra.mxu0 %v6060
          %6569 = vmatprep.subr.bf16.mxu0 %v6065
          %6570 = vmatpush1.bf16.msra.mxu0 %v6064
          %6571 = vmatprep.subr.bf16.mxu0 %v6069
          %6572 = vmatpush1.bf16.msra.mxu0 %v6068
          %6573 = vmatprep.mubr.bf16.mxu0 %v4976
          %6574 = vmatmul.mubr.bf16.gmra.mrb[0].mxu0 %v4975
          %v6575 = vpop.f32.mrb[0].mxu0
          %v6576 = vadd.f32 %v6524, %v6575
          %v6577 = vpop.f32.mrb[0].mxu0
          %v6578 = vadd.f32 %v6528, %v6577
          %v6579 = vpop.f32.mrb[0].mxu0
          %v6580 = vpop.f32.mrb[0].mxu0
          %6581 = vdwg.mxu0
          %6582 = vmatprep.subr.bf16.mxu0 %v6073
          %6583 = vmatpush1.bf16.msra.mxu0 %v6072
          %6584 = vmatprep.subr.bf16.mxu0 %v6077
          %6585 = vmatpush1.bf16.msra.mxu0 %v6076
          %6586 = vmatprep.subr.bf16.mxu0 %v6081
          %6587 = vmatpush1.bf16.msra.mxu0 %v6080
          %6588 = vmatprep.subr.bf16.mxu0 %v6085
          %6589 = vmatpush1.bf16.msra.mxu0 %v6084
          %6590 = vmatprep.subr.bf16.mxu0 %v6089
          %6591 = vmatpush1.bf16.msra.mxu0 %v6088
          %6592 = vmatprep.subr.bf16.mxu0 %v6093
          %6593 = vmatpush1.bf16.msra.mxu0 %v6092
          %6594 = vmatprep.subr.bf16.mxu0 %v6097
          %6595 = vmatpush1.bf16.msra.mxu0 %v6096
          %6596 = vmatprep.subr.bf16.mxu0 %v6101
          %6597 = vmatpush1.bf16.msra.mxu0 %v6100
          %6598 = vmatprep.subr.bf16.mxu0 %v6105
          %6599 = vmatpush1.bf16.msra.mxu0 %v6104
          %6600 = vmatprep.subr.bf16.mxu0 %v6109
          %6601 = vmatpush1.bf16.msra.mxu0 %v6108
          %6602 = vmatprep.subr.bf16.mxu0 %v6113
          %6603 = vmatpush1.bf16.msra.mxu0 %v6112
          %6604 = vmatprep.subr.bf16.mxu0 %v6117
          %6605 = vmatpush1.bf16.msra.mxu0 %v6116
          %6606 = vmatprep.subr.bf16.mxu0 %v6121
          %6607 = vmatpush1.bf16.msra.mxu0 %v6120
          %6608 = vmatprep.subr.bf16.mxu0 %v6125
          %6609 = vmatpush1.bf16.msra.mxu0 %v6124
          %6610 = vmatprep.subr.bf16.mxu0 %v6129
          %6611 = vmatpush1.bf16.msra.mxu0 %v6128
          %6612 = vmatprep.subr.bf16.mxu0 %v6133
          %6613 = vmatpush1.bf16.msra.mxu0 %v6132
          %6614 = vmatprep.mubr.bf16.mxu0 %v4978
          %6615 = vmatmul.mubr.bf16.gmra.mrb[0].mxu0 %v4977
          %v6616 = vpop.f32.mrb[0].mxu0
          %v6617 = vadd.f32 %v6576, %v6616
          %v6618 = vpop.f32.mrb[0].mxu0
          %v6619 = vadd.f32 %v6578, %v6618
          %v6620 = vpop.f32.mrb[0].mxu0
          %v6621 = vpop.f32.mrb[0].mxu0
          %6622 = vdwg.mxu0
          %6623 = vmatprep.subr.bf16.mxu0 %v6137
          %6624 = vmatpush1.bf16.msra.mxu0 %v6136
          %6625 = vmatprep.subr.bf16.mxu0 %v6141
          %6626 = vmatpush1.bf16.msra.mxu0 %v6140
          %6627 = vmatprep.subr.bf16.mxu0 %v6145
          %6628 = vmatpush1.bf16.msra.mxu0 %v6144
          %6629 = vmatprep.subr.bf16.mxu0 %v6149
          %6630 = vmatpush1.bf16.msra.mxu0 %v6148
          %6631 = vmatprep.subr.bf16.mxu0 %v6153
          %6632 = vmatpush1.bf16.msra.mxu0 %v6152
          %6633 = vmatprep.subr.bf16.mxu0 %v6157
          %6634 = vmatpush1.bf16.msra.mxu0 %v6156
          %6635 = vmatprep.subr.bf16.mxu0 %v6161
          %6636 = vmatpush1.bf16.msra.mxu0 %v6160
          %6637 = vmatprep.subr.bf16.mxu0 %v6165
          %6638 = vmatpush1.bf16.msra.mxu0 %v6164
          %6639 = vmatprep.subr.bf16.mxu0 %v6169
          %6640 = vmatpush1.bf16.msra.mxu0 %v6168
          %6641 = vmatprep.subr.bf16.mxu0 %v6173
          %6642 = vmatpush1.bf16.msra.mxu0 %v6172
          %6643 = vmatprep.subr.bf16.mxu0 %v6177
          %6644 = vmatpush1.bf16.msra.mxu0 %v6176
          %6645 = vmatprep.subr.bf16.mxu0 %v6181
          %6646 = vmatpush1.bf16.msra.mxu0 %v6180
          %6647 = vmatprep.subr.bf16.mxu0 %v6185
          %6648 = vmatpush1.bf16.msra.mxu0 %v6184
          %6649 = vmatprep.subr.bf16.mxu0 %v6189
          %6650 = vmatpush1.bf16.msra.mxu0 %v6188
          %6651 = vmatprep.subr.bf16.mxu0 %v6193
          %6652 = vmatpush1.bf16.msra.mxu0 %v6192
          %6653 = vmatprep.subr.bf16.mxu0 %v6197
          %6654 = vmatpush1.bf16.msra.mxu0 %v6196
          %6655 = vmatprep.mubr.bf16.mxu0 %v4980
          %6656 = vmatmul.mubr.bf16.gmra.mrb[0].mxu0 %v4979
          %v6657 = vpop.f32.mrb[0].mxu0
          %v6658 = vadd.f32 %v6617, %v6657
          %v6659 = vpop.f32.mrb[0].mxu0
          %v6660 = vadd.f32 %v6619, %v6659
          %v6661 = vpop.f32.mrb[0].mxu0
          %v6662 = vpop.f32.mrb[0].mxu0
          %6663 = vdwg.mxu0
          %6664 = vmatprep.subr.bf16.mxu0 %v6201
          %6665 = vmatpush1.bf16.msra.mxu0 %v6200
          %6666 = vmatprep.subr.bf16.mxu0 %v6205
          %6667 = vmatpush1.bf16.msra.mxu0 %v6204
          %6668 = vmatprep.subr.bf16.mxu0 %v6209
          %6669 = vmatpush1.bf16.msra.mxu0 %v6208
          %6670 = vmatprep.subr.bf16.mxu0 %v6213
          %6671 = vmatpush1.bf16.msra.mxu0 %v6212
          %6672 = vmatprep.subr.bf16.mxu0 %v6217
          %6673 = vmatpush1.bf16.msra.mxu0 %v6216
          %6674 = vmatprep.subr.bf16.mxu0 %v6221
          %6675 = vmatpush1.bf16.msra.mxu0 %v6220
          %6676 = vmatprep.subr.bf16.mxu0 %v6225
          %6677 = vmatpush1.bf16.msra.mxu0 %v6224
          %6678 = vmatprep.subr.bf16.mxu0 %v6229
          %6679 = vmatpush1.bf16.msra.mxu0 %v6228
          %6680 = vmatprep.subr.bf16.mxu0 %v6233
          %6681 = vmatpush1.bf16.msra.mxu0 %v6232
          %6682 = vmatprep.subr.bf16.mxu0 %v6237
          %6683 = vmatpush1.bf16.msra.mxu0 %v6236
          %6684 = vmatprep.subr.bf16.mxu0 %v6241
          %6685 = vmatpush1.bf16.msra.mxu0 %v6240
          %6686 = vmatprep.subr.bf16.mxu0 %v6245
          %6687 = vmatpush1.bf16.msra.mxu0 %v6244
          %6688 = vmatprep.subr.bf16.mxu0 %v6249
          %6689 = vmatpush1.bf16.msra.mxu0 %v6248
          %6690 = vmatprep.subr.bf16.mxu0 %v6253
          %6691 = vmatpush1.bf16.msra.mxu0 %v6252
          %6692 = vmatprep.subr.bf16.mxu0 %v6257
          %6693 = vmatpush1.bf16.msra.mxu0 %v6256
          %6694 = vmatprep.subr.bf16.mxu0 %v6261
          %6695 = vmatpush1.bf16.msra.mxu0 %v6260
          %6696 = vmatprep.mubr.bf16.mxu0 %v4982
          %6697 = vmatmul.mubr.bf16.gmra.mrb[0].mxu0 %v4981
          %v6698 = vpop.f32.mrb[0].mxu0
          %v6699 = vadd.f32 %v6658, %v6698
          %v6700 = vpop.f32.mrb[0].mxu0
          %v6701 = vadd.f32 %v6660, %v6700
          %v6702 = vpop.f32.mrb[0].mxu0
          %v6703 = vpop.f32.mrb[0].mxu0
          %6704 = vdwg.mxu0
          %6705 = vmatprep.subr.bf16.mxu0 %v6011
          %6706 = vmatpush1.bf16.msra.mxu0 %v6010
          %6707 = vmatprep.subr.bf16.mxu0 %v6015
          %6708 = vmatpush1.bf16.msra.mxu0 %v6014
          %6709 = vmatprep.subr.bf16.mxu0 %v6019
          %6710 = vmatpush1.bf16.msra.mxu0 %v6018
          %6711 = vmatprep.subr.bf16.mxu0 %v6023
          %6712 = vmatpush1.bf16.msra.mxu0 %v6022
          %6713 = vmatprep.subr.bf16.mxu0 %v6027
          %6714 = vmatpush1.bf16.msra.mxu0 %v6026
          %6715 = vmatprep.subr.bf16.mxu0 %v6031
          %6716 = vmatpush1.bf16.msra.mxu0 %v6030
          %6717 = vmatprep.subr.bf16.mxu0 %v6035
          %6718 = vmatpush1.bf16.msra.mxu0 %v6034
          %6719 = vmatprep.subr.bf16.mxu0 %v6039
          %6720 = vmatpush1.bf16.msra.mxu0 %v6038
          %6721 = vmatprep.subr.bf16.mxu0 %v6043
          %6722 = vmatpush1.bf16.msra.mxu0 %v6042
          %6723 = vmatprep.subr.bf16.mxu0 %v6047
          %6724 = vmatpush1.bf16.msra.mxu0 %v6046
          %6725 = vmatprep.subr.bf16.mxu0 %v6051
          %6726 = vmatpush1.bf16.msra.mxu0 %v6050
          %6727 = vmatprep.subr.bf16.mxu0 %v6055
          %6728 = vmatpush1.bf16.msra.mxu0 %v6054
          %6729 = vmatprep.subr.bf16.mxu0 %v6059
          %6730 = vmatpush1.bf16.msra.mxu0 %v6058
          %6731 = vmatprep.subr.bf16.mxu0 %v6063
          %6732 = vmatpush1.bf16.msra.mxu0 %v6062
          %6733 = vmatprep.subr.bf16.mxu0 %v6067
          %6734 = vmatpush1.bf16.msra.mxu0 %v6066
          %6735 = vmatprep.subr.bf16.mxu0 %v6071
          %6736 = vmatpush1.bf16.msra.mxu0 %v6070
          %6737 = vmatprep.mubr.bf16.mxu0 %v4976
          %6738 = vmatmul.mubr.bf16.gmra.mrb[0].mxu0 %v4975
          %v6739 = vpop.f32.mrb[0].mxu0
          %v6740 = vadd.f32 %v6532, %v6739
          %v6741 = vpop.f32.mrb[0].mxu0
          %v6742 = vadd.f32 %v6536, %v6741
          %v6743 = vpop.f32.mrb[0].mxu0
          %v6744 = vpop.f32.mrb[0].mxu0
          %6745 = vdwg.mxu0
          %6746 = vmatprep.subr.bf16.mxu0 %v6075
          %6747 = vmatpush1.bf16.msra.mxu0 %v6074
          %6748 = vmatprep.subr.bf16.mxu0 %v6079
          %6749 = vmatpush1.bf16.msra.mxu0 %v6078
          %6750 = vmatprep.subr.bf16.mxu0 %v6083
          %6751 = vmatpush1.bf16.msra.mxu0 %v6082
          %6752 = vmatprep.subr.bf16.mxu0 %v6087
          %6753 = vmatpush1.bf16.msra.mxu0 %v6086
          %6754 = vmatprep.subr.bf16.mxu0 %v6091
          %6755 = vmatpush1.bf16.msra.mxu0 %v6090
          %6756 = vmatprep.subr.bf16.mxu0 %v6095
          %6757 = vmatpush1.bf16.msra.mxu0 %v6094
          %6758 = vmatprep.subr.bf16.mxu0 %v6099
          %6759 = vmatpush1.bf16.msra.mxu0 %v6098
          %6760 = vmatprep.subr.bf16.mxu0 %v6103
          %6761 = vmatpush1.bf16.msra.mxu0 %v6102
          %6762 = vmatprep.subr.bf16.mxu0 %v6107
          %6763 = vmatpush1.bf16.msra.mxu0 %v6106
          %6764 = vmatprep.subr.bf16.mxu0 %v6111
          %6765 = vmatpush1.bf16.msra.mxu0 %v6110
          %6766 = vmatprep.subr.bf16.mxu0 %v6115
          %6767 = vmatpush1.bf16.msra.mxu0 %v6114
          %6768 = vmatprep.subr.bf16.mxu0 %v6119
          %6769 = vmatpush1.bf16.msra.mxu0 %v6118
          %6770 = vmatprep.subr.bf16.mxu0 %v6123
          %6771 = vmatpush1.bf16.msra.mxu0 %v6122
          %6772 = vmatprep.subr.bf16.mxu0 %v6127
          %6773 = vmatpush1.bf16.msra.mxu0 %v6126
          %6774 = vmatprep.subr.bf16.mxu0 %v6131
          %6775 = vmatpush1.bf16.msra.mxu0 %v6130
          %6776 = vmatprep.subr.bf16.mxu0 %v6135
          %6777 = vmatpush1.bf16.msra.mxu0 %v6134
          %6778 = vmatprep.mubr.bf16.mxu0 %v4978
          %6779 = vmatmul.mubr.bf16.gmra.mrb[0].mxu0 %v4977
          %v6780 = vpop.f32.mrb[0].mxu0
          %v6781 = vadd.f32 %v6740, %v6780
          %v6782 = vpop.f32.mrb[0].mxu0
          %v6783 = vadd.f32 %v6742, %v6782
          %v6784 = vpop.f32.mrb[0].mxu0
          %v6785 = vpop.f32.mrb[0].mxu0
          %6786 = vdwg.mxu0
          %6787 = vmatprep.subr.bf16.mxu0 %v6139
          %6788 = vmatpush1.bf16.msra.mxu0 %v6138
          %6789 = vmatprep.subr.bf16.mxu0 %v6143
          %6790 = vmatpush1.bf16.msra.mxu0 %v6142
          %6791 = vmatprep.subr.bf16.mxu0 %v6147
          %6792 = vmatpush1.bf16.msra.mxu0 %v6146
          %6793 = vmatprep.subr.bf16.mxu0 %v6151
          %6794 = vmatpush1.bf16.msra.mxu0 %v6150
          %6795 = vmatprep.subr.bf16.mxu0 %v6155
          %6796 = vmatpush1.bf16.msra.mxu0 %v6154
          %6797 = vmatprep.subr.bf16.mxu0 %v6159
          %6798 = vmatpush1.bf16.msra.mxu0 %v6158
          %6799 = vmatprep.subr.bf16.mxu0 %v6163
          %6800 = vmatpush1.bf16.msra.mxu0 %v6162
          %6801 = vmatprep.subr.bf16.mxu0 %v6167
          %6802 = vmatpush1.bf16.msra.mxu0 %v6166
          %6803 = vmatprep.subr.bf16.mxu0 %v6171
          %6804 = vmatpush1.bf16.msra.mxu0 %v6170
          %6805 = vmatprep.subr.bf16.mxu0 %v6175
          %6806 = vmatpush1.bf16.msra.mxu0 %v6174
          %6807 = vmatprep.subr.bf16.mxu0 %v6179
          %6808 = vmatpush1.bf16.msra.mxu0 %v6178
          %6809 = vmatprep.subr.bf16.mxu0 %v6183
          %6810 = vmatpush1.bf16.msra.mxu0 %v6182
          %6811 = vmatprep.subr.bf16.mxu0 %v6187
          %6812 = vmatpush1.bf16.msra.mxu0 %v6186
          %6813 = vmatprep.subr.bf16.mxu0 %v6191
          %6814 = vmatpush1.bf16.msra.mxu0 %v6190
          %6815 = vmatprep.subr.bf16.mxu0 %v6195
          %6816 = vmatpush1.bf16.msra.mxu0 %v6194
          %6817 = vmatprep.subr.bf16.mxu0 %v6199
          %6818 = vmatpush1.bf16.msra.mxu0 %v6198
          %6819 = vmatprep.mubr.bf16.mxu0 %v4980
          %6820 = vmatmul.mubr.bf16.gmra.mrb[0].mxu0 %v4979
          %v6821 = vpop.f32.mrb[0].mxu0
          %v6822 = vadd.f32 %v6781, %v6821
          %v6823 = vpop.f32.mrb[0].mxu0
          %v6824 = vadd.f32 %v6783, %v6823
          %v6825 = vpop.f32.mrb[0].mxu0
          %v6826 = vpop.f32.mrb[0].mxu0
          %6827 = vdwg.mxu0
          %6828 = vmatprep.subr.bf16.mxu0 %v6203
          %6829 = vmatpush1.bf16.msra.mxu0 %v6202
          %6830 = vmatprep.subr.bf16.mxu0 %v6207
          %6831 = vmatpush1.bf16.msra.mxu0 %v6206
          %6832 = vmatprep.subr.bf16.mxu0 %v6211
          %6833 = vmatpush1.bf16.msra.mxu0 %v6210
          %6834 = vmatprep.subr.bf16.mxu0 %v6215
          %6835 = vmatpush1.bf16.msra.mxu0 %v6214
          %6836 = vmatprep.subr.bf16.mxu0 %v6219
          %6837 = vmatpush1.bf16.msra.mxu0 %v6218
          %6838 = vmatprep.subr.bf16.mxu0 %v6223
          %6839 = vmatpush1.bf16.msra.mxu0 %v6222
          %6840 = vmatprep.subr.bf16.mxu0 %v6227
          %6841 = vmatpush1.bf16.msra.mxu0 %v6226
          %6842 = vmatprep.subr.bf16.mxu0 %v6231
          %6843 = vmatpush1.bf16.msra.mxu0 %v6230
          %6844 = vmatprep.subr.bf16.mxu0 %v6235
          %6845 = vmatpush1.bf16.msra.mxu0 %v6234
          %6846 = vmatprep.subr.bf16.mxu0 %v6239
          %6847 = vmatpush1.bf16.msra.mxu0 %v6238
          %6848 = vmatprep.subr.bf16.mxu0 %v6243
          %6849 = vmatpush1.bf16.msra.mxu0 %v6242
          %6850 = vmatprep.subr.bf16.mxu0 %v6247
          %6851 = vmatpush1.bf16.msra.mxu0 %v6246
          %6852 = vmatprep.subr.bf16.mxu0 %v6251
          %6853 = vmatpush1.bf16.msra.mxu0 %v6250
          %6854 = vmatprep.subr.bf16.mxu0 %v6255
          %6855 = vmatpush1.bf16.msra.mxu0 %v6254
          %6856 = vmatprep.subr.bf16.mxu0 %v6259
          %6857 = vmatpush1.bf16.msra.mxu0 %v6258
          %6858 = vmatprep.subr.bf16.mxu0 %v6263
          %6859 = vmatpush1.bf16.msra.mxu0 %v6262
          %6860 = vmatprep.mubr.bf16.mxu0 %v4982
          %6861 = vmatmul.mubr.bf16.gmra.mrb[0].mxu0 %v4981
          %v6862 = vpop.f32.mrb[0].mxu0
          %v6863 = vadd.f32 %v6822, %v6862
          %v6864 = vpop.f32.mrb[0].mxu0
          %v6865 = vadd.f32 %v6824, %v6864
          %v6866 = vpop.f32.mrb[0].mxu0
          %v6867 = vpop.f32.mrb[0].mxu0
          %6868 = vdwg.mxu0
          %v6869 = vmax.f32 %v6699, 0.0
          %v6870 = vmax.f32 %v6701, 0.0
          %v6871 = vmax.f32 %v6863, 0.0
          %v6872 = vmax.f32 %v6865, 0.0
          %v6873 = vpack.c.bf16 %v6869, %v6869
          %v6874 = vpack.c.bf16 %v6870, %v6870
          %v6875 = vpack.c.bf16 %v6871, %v6871
          %v6876 = vpack.c.bf16 %v6872, %v6872
          %v6877 = vld [vmem:[#allocation7] sm:$0xff]
          %v6878 = vld [vmem:[#allocation7 + $0x8] sm:$0xff]
          %v6879 = vld [vmem:[#allocation7 + $0x10] sm:$0xff]
          %v6880 = vld [vmem:[#allocation7 + $0x18] sm:$0xff]
          %v6881 = vld [vmem:[#allocation7 + $0x20] sm:$0xff]
          %v6882 = vld [vmem:[#allocation7 + $0x28] sm:$0xff]
          %v6883 = vld [vmem:[#allocation7 + $0x30] sm:$0xff]
          %v6884 = vld [vmem:[#allocation7 + $0x38] sm:$0xff]
          %v6885 = vld [vmem:[#allocation7 + $0x40] sm:$0xff]
          %v6886 = vld [vmem:[#allocation7 + $0x48] sm:$0xff]
          %v6887 = vld [vmem:[#allocation7 + $0x50] sm:$0xff]
          %v6888 = vld [vmem:[#allocation7 + $0x58] sm:$0xff]
          %v6889 = vld [vmem:[#allocation7 + $0x60] sm:$0xff]
          %v6890 = vld [vmem:[#allocation7 + $0x68] sm:$0xff]
          %v6891 = vld [vmem:[#allocation7 + $0x70] sm:$0xff]
          %v6892 = vld [vmem:[#allocation7 + $0x78] sm:$0xff]
          %v6893 = vld [vmem:[#allocation7 + $0x80] sm:$0xff]
          %v6894 = vld [vmem:[#allocation7 + $0x88] sm:$0xff]
          %v6895 = vld [vmem:[#allocation7 + $0x90] sm:$0xff]
          %v6896 = vld [vmem:[#allocation7 + $0x98] sm:$0xff]
          %v6897 = vld [vmem:[#allocation7 + $0xa0] sm:$0xff]
          %v6898 = vld [vmem:[#allocation7 + $0xa8] sm:$0xff]
          %v6899 = vld [vmem:[#allocation7 + $0xb0] sm:$0xff]
          %v6900 = vld [vmem:[#allocation7 + $0xb8] sm:$0xff]
          %v6901 = vld [vmem:[#allocation7 + $0xc0] sm:$0xff]
          %v6902 = vld [vmem:[#allocation7 + $0xc8] sm:$0xff]
          %v6903 = vld [vmem:[#allocation7 + $0xd0] sm:$0xff]
          %v6904 = vld [vmem:[#allocation7 + $0xd8] sm:$0xff]
          %v6905 = vld [vmem:[#allocation7 + $0xe0] sm:$0xff]
          %v6906 = vld [vmem:[#allocation7 + $0xe8] sm:$0xff]
          %v6907 = vld [vmem:[#allocation7 + $0xf0] sm:$0xff]
          %v6908 = vld [vmem:[#allocation7 + $0xf8] sm:$0xff]
          %v6909 = vld [vmem:[#allocation7 + $0x100] sm:$0xff]
          %v6910 = vld [vmem:[#allocation7 + $0x108] sm:$0xff]
          %v6911 = vld [vmem:[#allocation7 + $0x110] sm:$0xff]
          %v6912 = vld [vmem:[#allocation7 + $0x118] sm:$0xff]
          %v6913 = vld [vmem:[#allocation7 + $0x120] sm:$0xff]
          %v6914 = vld [vmem:[#allocation7 + $0x128] sm:$0xff]
          %v6915 = vld [vmem:[#allocation7 + $0x130] sm:$0xff]
          %v6916 = vld [vmem:[#allocation7 + $0x138] sm:$0xff]
          %v6917 = vld [vmem:[#allocation7 + $0x140] sm:$0xff]
          %v6918 = vld [vmem:[#allocation7 + $0x148] sm:$0xff]
          %v6919 = vld [vmem:[#allocation7 + $0x150] sm:$0xff]
          %v6920 = vld [vmem:[#allocation7 + $0x158] sm:$0xff]
          %v6921 = vld [vmem:[#allocation7 + $0x160] sm:$0xff]
          %v6922 = vld [vmem:[#allocation7 + $0x168] sm:$0xff]
          %v6923 = vld [vmem:[#allocation7 + $0x170] sm:$0xff]
          %v6924 = vld [vmem:[#allocation7 + $0x178] sm:$0xff]
          %v6925 = vld [vmem:[#allocation7 + $0x180] sm:$0xff]
          %v6926 = vld [vmem:[#allocation7 + $0x188] sm:$0xff]
          %v6927 = vld [vmem:[#allocation7 + $0x190] sm:$0xff]
          %v6928 = vld [vmem:[#allocation7 + $0x198] sm:$0xff]
          %v6929 = vld [vmem:[#allocation7 + $0x1a0] sm:$0xff]
          %v6930 = vld [vmem:[#allocation7 + $0x1a8] sm:$0xff]
          %v6931 = vld [vmem:[#allocation7 + $0x1b0] sm:$0xff]
          %v6932 = vld [vmem:[#allocation7 + $0x1b8] sm:$0xff]
          %v6933 = vld [vmem:[#allocation7 + $0x1c0] sm:$0xff]
          %v6934 = vld [vmem:[#allocation7 + $0x1c8] sm:$0xff]
          %v6935 = vld [vmem:[#allocation7 + $0x1d0] sm:$0xff]
          %v6936 = vld [vmem:[#allocation7 + $0x1d8] sm:$0xff]
          %v6937 = vld [vmem:[#allocation7 + $0x1e0] sm:$0xff]
          %v6938 = vld [vmem:[#allocation7 + $0x1e8] sm:$0xff]
          %v6939 = vld [vmem:[#allocation7 + $0x1f0] sm:$0xff]
          %v6940 = vld [vmem:[#allocation7 + $0x1f8] sm:$0xff]
          %v6941 = vld [vmem:[%s10] sm:$0x3]
          %v7006 = vunpack.c.l.b16 %v6877
          %v7007 = vunpack.c.h.b16 %v6877
          %v7008 = vunpack.c.l.b16 %v6878
          %v7009 = vunpack.c.h.b16 %v6878
          %v7010 = vunpack.c.l.b16 %v6879
          %v7011 = vunpack.c.h.b16 %v6879
          %v7012 = vunpack.c.l.b16 %v6880
          %v7013 = vunpack.c.h.b16 %v6880
          %v7014 = vunpack.c.l.b16 %v6881
          %v7015 = vunpack.c.h.b16 %v6881
          %v7016 = vunpack.c.l.b16 %v6882
          %v7017 = vunpack.c.h.b16 %v6882
          %v7018 = vunpack.c.l.b16 %v6883
          %v7019 = vunpack.c.h.b16 %v6883
          %v7020 = vunpack.c.l.b16 %v6884
          %v7021 = vunpack.c.h.b16 %v6884
          %v7022 = vunpack.c.l.b16 %v6885
          %v7023 = vunpack.c.h.b16 %v6885
          %v7024 = vunpack.c.l.b16 %v6886
          %v7025 = vunpack.c.h.b16 %v6886
          %v7026 = vunpack.c.l.b16 %v6887
          %v7027 = vunpack.c.h.b16 %v6887
          %v7028 = vunpack.c.l.b16 %v6888
          %v7029 = vunpack.c.h.b16 %v6888
          %v7030 = vunpack.c.l.b16 %v6889
          %v7031 = vunpack.c.h.b16 %v6889
          %v7032 = vunpack.c.l.b16 %v6890
          %v7033 = vunpack.c.h.b16 %v6890
          %v7034 = vunpack.c.l.b16 %v6891
          %v7035 = vunpack.c.h.b16 %v6891
          %v7036 = vunpack.c.l.b16 %v6892
          %v7037 = vunpack.c.h.b16 %v6892
          %v7038 = vunpack.c.l.b16 %v6893
          %v7039 = vunpack.c.h.b16 %v6893
          %v7040 = vunpack.c.l.b16 %v6894
          %v7041 = vunpack.c.h.b16 %v6894
          %v7042 = vunpack.c.l.b16 %v6895
          %v7043 = vunpack.c.h.b16 %v6895
          %v7044 = vunpack.c.l.b16 %v6896
          %v7045 = vunpack.c.h.b16 %v6896
          %v7046 = vunpack.c.l.b16 %v6897
          %v7047 = vunpack.c.h.b16 %v6897
          %v7048 = vunpack.c.l.b16 %v6898
          %v7049 = vunpack.c.h.b16 %v6898
          %v7050 = vunpack.c.l.b16 %v6899
          %v7051 = vunpack.c.h.b16 %v6899
          %v7052 = vunpack.c.l.b16 %v6900
          %v7053 = vunpack.c.h.b16 %v6900
          %v7054 = vunpack.c.l.b16 %v6901
          %v7055 = vunpack.c.h.b16 %v6901
          %v7056 = vunpack.c.l.b16 %v6902
          %v7057 = vunpack.c.h.b16 %v6902
          %v7058 = vunpack.c.l.b16 %v6903
          %v7059 = vunpack.c.h.b16 %v6903
          %v7060 = vunpack.c.l.b16 %v6904
          %v7061 = vunpack.c.h.b16 %v6904
          %v7062 = vunpack.c.l.b16 %v6905
          %v7063 = vunpack.c.h.b16 %v6905
          %v7064 = vunpack.c.l.b16 %v6906
          %v7065 = vunpack.c.h.b16 %v6906
          %v7066 = vunpack.c.l.b16 %v6907
          %v7067 = vunpack.c.h.b16 %v6907
          %v7068 = vunpack.c.l.b16 %v6908
          %v7069 = vunpack.c.h.b16 %v6908
          %v7070 = vunpack.c.l.b16 %v6909
          %v7071 = vunpack.c.h.b16 %v6909
          %v7072 = vunpack.c.l.b16 %v6910
          %v7073 = vunpack.c.h.b16 %v6910
          %v7074 = vunpack.c.l.b16 %v6911
          %v7075 = vunpack.c.h.b16 %v6911
          %v7076 = vunpack.c.l.b16 %v6912
          %v7077 = vunpack.c.h.b16 %v6912
          %v7078 = vunpack.c.l.b16 %v6913
          %v7079 = vunpack.c.h.b16 %v6913
          %v7080 = vunpack.c.l.b16 %v6914
          %v7081 = vunpack.c.h.b16 %v6914
          %v7082 = vunpack.c.l.b16 %v6915
          %v7083 = vunpack.c.h.b16 %v6915
          %v7084 = vunpack.c.l.b16 %v6916
          %v7085 = vunpack.c.h.b16 %v6916
          %v7086 = vunpack.c.l.b16 %v6917
          %v7087 = vunpack.c.h.b16 %v6917
          %v7088 = vunpack.c.l.b16 %v6918
          %v7089 = vunpack.c.h.b16 %v6918
          %v7090 = vunpack.c.l.b16 %v6919
          %v7091 = vunpack.c.h.b16 %v6919
          %v7092 = vunpack.c.l.b16 %v6920
          %v7093 = vunpack.c.h.b16 %v6920
          %v7094 = vunpack.c.l.b16 %v6921
          %v7095 = vunpack.c.h.b16 %v6921
          %v7096 = vunpack.c.l.b16 %v6922
          %v7097 = vunpack.c.h.b16 %v6922
          %v7098 = vunpack.c.l.b16 %v6923
          %v7099 = vunpack.c.h.b16 %v6923
          %v7100 = vunpack.c.l.b16 %v6924
          %v7101 = vunpack.c.h.b16 %v6924
          %v7102 = vunpack.c.l.b16 %v6925
          %v7103 = vunpack.c.h.b16 %v6925
          %v7104 = vunpack.c.l.b16 %v6926
          %v7105 = vunpack.c.h.b16 %v6926
          %v7106 = vunpack.c.l.b16 %v6927
          %v7107 = vunpack.c.h.b16 %v6927
          %v7108 = vunpack.c.l.b16 %v6928
          %v7109 = vunpack.c.h.b16 %v6928
          %v7110 = vunpack.c.l.b16 %v6929
          %v7111 = vunpack.c.h.b16 %v6929
          %v7112 = vunpack.c.l.b16 %v6930
          %v7113 = vunpack.c.h.b16 %v6930
          %v7114 = vunpack.c.l.b16 %v6931
          %v7115 = vunpack.c.h.b16 %v6931
          %v7116 = vunpack.c.l.b16 %v6932
          %v7117 = vunpack.c.h.b16 %v6932
          %v7118 = vunpack.c.l.b16 %v6933
          %v7119 = vunpack.c.h.b16 %v6933
          %v7120 = vunpack.c.l.b16 %v6934
          %v7121 = vunpack.c.h.b16 %v6934
          %v7122 = vunpack.c.l.b16 %v6935
          %v7123 = vunpack.c.h.b16 %v6935
          %v7124 = vunpack.c.l.b16 %v6936
          %v7125 = vunpack.c.h.b16 %v6936
          %v7126 = vunpack.c.l.b16 %v6937
          %v7127 = vunpack.c.h.b16 %v6937
          %v7128 = vunpack.c.l.b16 %v6938
          %v7129 = vunpack.c.h.b16 %v6938
          %v7130 = vunpack.c.l.b16 %v6939
          %v7131 = vunpack.c.h.b16 %v6939
          %v7132 = vunpack.c.l.b16 %v6940
          %v7133 = vunpack.c.h.b16 %v6940
          %v7134 = vpack.c.b16 %v7008, %v7006
          %v7135 = vpack.c.b16 %v7009, %v7007
          %v7136 = vpack.c.b16 %v7012, %v7010
          %v7137 = vpack.c.b16 %v7013, %v7011
          %v7138 = vpack.c.b16 %v7016, %v7014
          %v7139 = vpack.c.b16 %v7017, %v7015
          %v7140 = vpack.c.b16 %v7020, %v7018
          %v7141 = vpack.c.b16 %v7021, %v7019
          %v7142 = vpack.c.b16 %v7024, %v7022
          %v7143 = vpack.c.b16 %v7025, %v7023
          %v7144 = vpack.c.b16 %v7028, %v7026
          %v7145 = vpack.c.b16 %v7029, %v7027
          %v7146 = vpack.c.b16 %v7032, %v7030
          %v7147 = vpack.c.b16 %v7033, %v7031
          %v7148 = vpack.c.b16 %v7036, %v7034
          %v7149 = vpack.c.b16 %v7037, %v7035
          %v7150 = vpack.c.b16 %v7040, %v7038
          %v7151 = vpack.c.b16 %v7041, %v7039
          %v7152 = vpack.c.b16 %v7044, %v7042
          %v7153 = vpack.c.b16 %v7045, %v7043
          %v7154 = vpack.c.b16 %v7048, %v7046
          %v7155 = vpack.c.b16 %v7049, %v7047
          %v7156 = vpack.c.b16 %v7052, %v7050
          %v7157 = vpack.c.b16 %v7053, %v7051
          %v7158 = vpack.c.b16 %v7056, %v7054
          %v7159 = vpack.c.b16 %v7057, %v7055
          %v7160 = vpack.c.b16 %v7060, %v7058
          %v7161 = vpack.c.b16 %v7061, %v7059
          %v7162 = vpack.c.b16 %v7064, %v7062
          %v7163 = vpack.c.b16 %v7065, %v7063
          %v7164 = vpack.c.b16 %v7068, %v7066
          %v7165 = vpack.c.b16 %v7069, %v7067
          %v7166 = vpack.c.b16 %v7072, %v7070
          %v7167 = vpack.c.b16 %v7073, %v7071
          %v7168 = vpack.c.b16 %v7076, %v7074
          %v7169 = vpack.c.b16 %v7077, %v7075
          %v7170 = vpack.c.b16 %v7080, %v7078
          %v7171 = vpack.c.b16 %v7081, %v7079
          %v7172 = vpack.c.b16 %v7084, %v7082
          %v7173 = vpack.c.b16 %v7085, %v7083
          %v7174 = vpack.c.b16 %v7088, %v7086
          %v7175 = vpack.c.b16 %v7089, %v7087
          %v7176 = vpack.c.b16 %v7092, %v7090
          %v7177 = vpack.c.b16 %v7093, %v7091
          %v7178 = vpack.c.b16 %v7096, %v7094
          %v7179 = vpack.c.b16 %v7097, %v7095
          %v7180 = vpack.c.b16 %v7100, %v7098
          %v7181 = vpack.c.b16 %v7101, %v7099
          %v7182 = vpack.c.b16 %v7104, %v7102
          %v7183 = vpack.c.b16 %v7105, %v7103
          %v7184 = vpack.c.b16 %v7108, %v7106
          %v7185 = vpack.c.b16 %v7109, %v7107
          %v7186 = vpack.c.b16 %v7112, %v7110
          %v7187 = vpack.c.b16 %v7113, %v7111
          %v7188 = vpack.c.b16 %v7116, %v7114
          %v7189 = vpack.c.b16 %v7117, %v7115
          %v7190 = vpack.c.b16 %v7120, %v7118
          %v7191 = vpack.c.b16 %v7121, %v7119
          %v7192 = vpack.c.b16 %v7124, %v7122
          %v7193 = vpack.c.b16 %v7125, %v7123
          %v7194 = vpack.c.b16 %v7128, %v7126
          %v7195 = vpack.c.b16 %v7129, %v7127
          %v7196 = vpack.c.b16 %v7132, %v7130
          %v7197 = vpack.c.b16 %v7133, %v7131
          %v7263 = vlaneseq
          %v7264 = vshrl.u32 %v7263, 7
          %v7265 = vsub.s32 0, %v7264
          %v7266 = vrot.slane %v6941, %v7265
          %v7267 = vlaneseq
          %v7268 = vshrl.u32 %v7267, 7
          %v7269 = vsub.s32 1, %v7268
          %v7270 = vrot.slane %v6941, %v7269
          %7273 = vmatprep.subr.bf16.mxu0 %v7135
          %7274 = vmatpush1.bf16.msra.mxu0 %v7134
          %7275 = vmatprep.subr.bf16.mxu0 %v7137
          %7276 = vmatpush1.bf16.msra.mxu0 %v7136
          %7277 = vmatprep.subr.bf16.mxu0 %v7139
          %7278 = vmatpush1.bf16.msra.mxu0 %v7138
          %7279 = vmatprep.subr.bf16.mxu0 %v7141
          %7280 = vmatpush1.bf16.msra.mxu0 %v7140
          %7281 = vmatprep.subr.bf16.mxu0 %v7143
          %7282 = vmatpush1.bf16.msra.mxu0 %v7142
          %7283 = vmatprep.subr.bf16.mxu0 %v7145
          %7284 = vmatpush1.bf16.msra.mxu0 %v7144
          %7285 = vmatprep.subr.bf16.mxu0 %v7147
          %7286 = vmatpush1.bf16.msra.mxu0 %v7146
          %7287 = vmatprep.subr.bf16.mxu0 %v7149
          %7288 = vmatpush1.bf16.msra.mxu0 %v7148
          %7289 = vmatprep.subr.bf16.mxu0 %v7151
          %7290 = vmatpush1.bf16.msra.mxu0 %v7150
          %7291 = vmatprep.subr.bf16.mxu0 %v7153
          %7292 = vmatpush1.bf16.msra.mxu0 %v7152
          %7293 = vmatprep.subr.bf16.mxu0 %v7155
          %7294 = vmatpush1.bf16.msra.mxu0 %v7154
          %7295 = vmatprep.subr.bf16.mxu0 %v7157
          %7296 = vmatpush1.bf16.msra.mxu0 %v7156
          %7297 = vmatprep.subr.bf16.mxu0 %v7159
          %7298 = vmatpush1.bf16.msra.mxu0 %v7158
          %7299 = vmatprep.subr.bf16.mxu0 %v7161
          %7300 = vmatpush1.bf16.msra.mxu0 %v7160
          %7301 = vmatprep.subr.bf16.mxu0 %v7163
          %7302 = vmatpush1.bf16.msra.mxu0 %v7162
          %7303 = vmatprep.subr.bf16.mxu0 %v7165
          %7304 = vmatpush1.bf16.msra.mxu0 %v7164
          %7305 = vmatprep.mubr.bf16.mxu0 %v6874
          %7306 = vmatmul.mubr.bf16.gmra.mrb[0].mxu0 %v6873
          %v7307 = vpop.f32.mrb[0].mxu0
          %v7308 = vadd.f32 %v7266, %v7307
          %v7309 = vpop.f32.mrb[0].mxu0
          %v7310 = vadd.f32 %v7270, %v7309
          %v7311 = vpop.f32.mrb[0].mxu0
          %v7312 = vpop.f32.mrb[0].mxu0
          %7313 = vdwg.mxu0
          %7314 = vmatprep.subr.bf16.mxu0 %v7167
          %7315 = vmatpush1.bf16.msra.mxu0 %v7166
          %7316 = vmatprep.subr.bf16.mxu0 %v7169
          %7317 = vmatpush1.bf16.msra.mxu0 %v7168
          %7318 = vmatprep.subr.bf16.mxu0 %v7171
          %7319 = vmatpush1.bf16.msra.mxu0 %v7170
          %7320 = vmatprep.subr.bf16.mxu0 %v7173
          %7321 = vmatpush1.bf16.msra.mxu0 %v7172
          %7322 = vmatprep.subr.bf16.mxu0 %v7175
          %7323 = vmatpush1.bf16.msra.mxu0 %v7174
          %7324 = vmatprep.subr.bf16.mxu0 %v7177
          %7325 = vmatpush1.bf16.msra.mxu0 %v7176
          %7326 = vmatprep.subr.bf16.mxu0 %v7179
          %7327 = vmatpush1.bf16.msra.mxu0 %v7178
          %7328 = vmatprep.subr.bf16.mxu0 %v7181
          %7329 = vmatpush1.bf16.msra.mxu0 %v7180
          %7330 = vmatprep.subr.bf16.mxu0 %v7183
          %7331 = vmatpush1.bf16.msra.mxu0 %v7182
          %7332 = vmatprep.subr.bf16.mxu0 %v7185
          %7333 = vmatpush1.bf16.msra.mxu0 %v7184
          %7334 = vmatprep.subr.bf16.mxu0 %v7187
          %7335 = vmatpush1.bf16.msra.mxu0 %v7186
          %7336 = vmatprep.subr.bf16.mxu0 %v7189
          %7337 = vmatpush1.bf16.msra.mxu0 %v7188
          %7338 = vmatprep.subr.bf16.mxu0 %v7191
          %7339 = vmatpush1.bf16.msra.mxu0 %v7190
          %7340 = vmatprep.subr.bf16.mxu0 %v7193
          %7341 = vmatpush1.bf16.msra.mxu0 %v7192
          %7342 = vmatprep.subr.bf16.mxu0 %v7195
          %7343 = vmatpush1.bf16.msra.mxu0 %v7194
          %7344 = vmatprep.subr.bf16.mxu0 %v7197
          %7345 = vmatpush1.bf16.msra.mxu0 %v7196
          %7346 = vmatprep.mubr.bf16.mxu0 %v6876
          %7347 = vmatmul.mubr.bf16.gmra.mrb[0].mxu0 %v6875
          %v7348 = vpop.f32.mrb[0].mxu0
          %v7349 = vadd.f32 %v7308, %v7348
          %v7350 = vpop.f32.mrb[0].mxu0
          %v7351 = vadd.f32 %v7310, %v7350
          %v7352 = vpop.f32.mrb[0].mxu0
          %v7353 = vpop.f32.mrb[0].mxu0
          %7354 = vdwg.mxu0
          %v7355 = vmax.f32 %v7349, 0.0
          %v7356 = vmax.f32 %v7351, 0.0
          %v7357 = vpack.c.bf16 %v7355, %v7355
          %v7358 = vpack.c.bf16 %v7356, %v7356
          %v7359 = vld [vmem:[%s11] sm:$0xf]
          %v7360 = vld [vmem:[%s11 + $0x4] sm:$0xf]
          %v7361 = vld [vmem:[%s11 + $0x8] sm:$0xf]
          %v7362 = vld [vmem:[%s11 + $0xc] sm:$0xf]
          %v7363 = vld [vmem:[%s11 + $0x10] sm:$0xf]
          %v7364 = vld [vmem:[%s11 + $0x14] sm:$0xf]
          %v7365 = vld [vmem:[%s11 + $0x18] sm:$0xf]
          %v7366 = vld [vmem:[%s11 + $0x1c] sm:$0xf]
          %v7367 = vld [vmem:[%s11 + $0x20] sm:$0xf]
          %v7368 = vld [vmem:[%s11 + $0x24] sm:$0xf]
          %v7369 = vld [vmem:[%s11 + $0x28] sm:$0xf]
          %v7370 = vld [vmem:[%s11 + $0x2c] sm:$0xf]
          %v7371 = vld [vmem:[%s11 + $0x30] sm:$0xf]
          %v7372 = vld [vmem:[%s11 + $0x34] sm:$0xf]
          %v7373 = vld [vmem:[%s11 + $0x38] sm:$0xf]
          %v7374 = vld [vmem:[%s11 + $0x3c] sm:$0xf]
          %v7375 = vld [vmem:[%s11 + $0x40] sm:$0xf]
          %v7376 = vld [vmem:[%s11 + $0x44] sm:$0xf]
          %v7377 = vld [vmem:[%s11 + $0x48] sm:$0xf]
          %v7378 = vld [vmem:[%s11 + $0x4c] sm:$0xf]
          %v7379 = vld [vmem:[%s11 + $0x50] sm:$0xf]
          %v7380 = vld [vmem:[%s11 + $0x54] sm:$0xf]
          %v7381 = vld [vmem:[%s11 + $0x58] sm:$0xf]
          %v7382 = vld [vmem:[%s11 + $0x5c] sm:$0xf]
          %v7383 = vld [vmem:[%s11 + $0x60] sm:$0xf]
          %v7384 = vld [vmem:[%s11 + $0x64] sm:$0xf]
          %v7385 = vld [vmem:[%s11 + $0x68] sm:$0xf]
          %v7386 = vld [vmem:[%s11 + $0x6c] sm:$0xf]
          %v7387 = vld [vmem:[%s11 + $0x70] sm:$0xf]
          %v7388 = vld [vmem:[%s11 + $0x74] sm:$0xf]
          %v7389 = vld [vmem:[%s11 + $0x78] sm:$0xf]
          %v7390 = vld [vmem:[%s11 + $0x7c] sm:$0xf]
          %v7391 = vld [vmem:[%s12] sm:$0x1]
          %v7424 = vunpack.c.l.b16 %v7359
          %v7425 = vunpack.c.l.b16 %v7360
          %v7426 = vunpack.c.l.b16 %v7361
          %v7427 = vunpack.c.l.b16 %v7362
          %v7428 = vunpack.c.l.b16 %v7363
          %v7429 = vunpack.c.l.b16 %v7364
          %v7430 = vunpack.c.l.b16 %v7365
          %v7431 = vunpack.c.l.b16 %v7366
          %v7432 = vunpack.c.l.b16 %v7367
          %v7433 = vunpack.c.l.b16 %v7368
          %v7434 = vunpack.c.l.b16 %v7369
          %v7435 = vunpack.c.l.b16 %v7370
          %v7436 = vunpack.c.l.b16 %v7371
          %v7437 = vunpack.c.l.b16 %v7372
          %v7438 = vunpack.c.l.b16 %v7373
          %v7439 = vunpack.c.l.b16 %v7374
          %v7440 = vunpack.c.l.b16 %v7375
          %v7441 = vunpack.c.l.b16 %v7376
          %v7442 = vunpack.c.l.b16 %v7377
          %v7443 = vunpack.c.l.b16 %v7378
          %v7444 = vunpack.c.l.b16 %v7379
          %v7445 = vunpack.c.l.b16 %v7380
          %v7446 = vunpack.c.l.b16 %v7381
          %v7447 = vunpack.c.l.b16 %v7382
          %v7448 = vunpack.c.l.b16 %v7383
          %v7449 = vunpack.c.l.b16 %v7384
          %v7450 = vunpack.c.l.b16 %v7385
          %v7451 = vunpack.c.l.b16 %v7386
          %v7452 = vunpack.c.l.b16 %v7387
          %v7453 = vunpack.c.l.b16 %v7388
          %v7454 = vunpack.c.l.b16 %v7389
          %v7455 = vunpack.c.l.b16 %v7390
          %v7456 = vpack.c.b16 %v7425, %v7424
          %v7457 = vpack.c.b16 %v7427, %v7426
          %v7458 = vpack.c.b16 %v7429, %v7428
          %v7459 = vpack.c.b16 %v7431, %v7430
          %v7460 = vpack.c.b16 %v7433, %v7432
          %v7461 = vpack.c.b16 %v7435, %v7434
          %v7462 = vpack.c.b16 %v7437, %v7436
          %v7463 = vpack.c.b16 %v7439, %v7438
          %v7464 = vpack.c.b16 %v7441, %v7440
          %v7465 = vpack.c.b16 %v7443, %v7442
          %v7466 = vpack.c.b16 %v7445, %v7444
          %v7467 = vpack.c.b16 %v7447, %v7446
          %v7468 = vpack.c.b16 %v7449, %v7448
          %v7469 = vpack.c.b16 %v7451, %v7450
          %v7470 = vpack.c.b16 %v7453, %v7452
          %v7471 = vpack.c.b16 %v7455, %v7454
          %7488 = vmatprep.subr.bf16.mxu0 0
          %7489 = vmatpush1.bf16.msra.mxu0 %v7456
          %7490 = vmatprep.subr.bf16.mxu0 0
          %7491 = vmatpush1.bf16.msra.mxu0 %v7457
          %7492 = vmatprep.subr.bf16.mxu0 0
          %7493 = vmatpush1.bf16.msra.mxu0 %v7458
          %7494 = vmatprep.subr.bf16.mxu0 0
          %7495 = vmatpush1.bf16.msra.mxu0 %v7459
          %7496 = vmatprep.subr.bf16.mxu0 0
          %7497 = vmatpush1.bf16.msra.mxu0 %v7460
          %7498 = vmatprep.subr.bf16.mxu0 0
          %7499 = vmatpush1.bf16.msra.mxu0 %v7461
          %7500 = vmatprep.subr.bf16.mxu0 0
          %7501 = vmatpush1.bf16.msra.mxu0 %v7462
          %7502 = vmatprep.subr.bf16.mxu0 0
          %7503 = vmatpush1.bf16.msra.mxu0 %v7463
          %7504 = vmatprep.subr.bf16.mxu0 0
          %7505 = vmatpush1.bf16.msra.mxu0 %v7464
          %7506 = vmatprep.subr.bf16.mxu0 0
          %7507 = vmatpush1.bf16.msra.mxu0 %v7465
          %7508 = vmatprep.subr.bf16.mxu0 0
          %7509 = vmatpush1.bf16.msra.mxu0 %v7466
          %7510 = vmatprep.subr.bf16.mxu0 0
          %7511 = vmatpush1.bf16.msra.mxu0 %v7467
          %7512 = vmatprep.subr.bf16.mxu0 0
          %7513 = vmatpush1.bf16.msra.mxu0 %v7468
          %7514 = vmatprep.subr.bf16.mxu0 0
          %7515 = vmatpush1.bf16.msra.mxu0 %v7469
          %7516 = vmatprep.subr.bf16.mxu0 0
          %7517 = vmatpush1.bf16.msra.mxu0 %v7470
          %7518 = vmatprep.subr.bf16.mxu0 0
          %7519 = vmatpush1.bf16.msra.mxu0 %v7471
          %7520 = vmatprep.mubr.bf16.mxu0 %v7358
          %7521 = vmatmul.mubr.bf16.gmra.mrb[0].mxu0 %v7357
          %v7522 = vpop.f32.mrb[0].mxu0
          %v7523 = vadd.f32 %v7391, %v7522
          %v7524 = vpop.f32.mrb[0].mxu0
          %v7525 = vpop.f32.mrb[0].mxu0
          %v7526 = vpop.f32.mrb[0].mxu0
          %7527 = vdwg.mxu0
          %7528 = vst [vmem:[%s528] sm:$0x1] %v7523
        $region92: #{stn3d_forward.1} parent=71 // pred_fallthru
          _
        %p7529 = scmp.lt.s32.totalorder %s30, 1
        %s7530 = scalar_select %p7529, %s30, 1
        %s7531 = scalar_lea.vmem %s13, %s7530
        // Predicated region
        $region93: #{stn3d_forward.1} parent=71 // pred_check
          %p7532 = pneg %p336
        $region94: #{stn3d_forward.1} parent=71 // pred_check_branch
          %7534 = sbr.rel (%p7532) target = $region96
        $region95: #{stn3d_forward.1} parent=71 // pred_region
          _
        $region96: #{stn3d_forward.1} parent=71 // pred_fallthru
          _
      $region72: #{stn3d_forward.1} parent=5 // pred_fallthru
        _
      %p7535 = scmp.le.s32.totalorder 2, %s21
      // Predicated region
      $region97: #{stn3d_forward.1} parent=5 // pred_check
        %p7536 = pneg %p7535
      $region98: #{stn3d_forward.1} parent=5 // pred_check_branch
        %7538 = sbr.rel (%p7536) target = $region100
      $region99: #{stn3d_forward.1} parent=5 // pred_region
        %s7539 = ssub.s32 %s21, 2
        // Predicated region
        $region101: #{stn3d_forward.1} parent=99 // pred_check
          %p7540 = pneg %p342
        $region102: #{stn3d_forward.1} parent=99 // pred_check_branch
          %7542 = sbr.rel (%p7540) target = $region104
        $region103: #{stn3d_forward.1} parent=99 // pred_region
          %p7543 = scmp.lt.s32.totalorder %s32, 1
          %s7544 = scalar_select %p7543, %s32, 1
          %s7545 = scalar_lea.vmem %s13, %s7544
        $region104: #{stn3d_forward.1} parent=99 // pred_fallthru
          _
      $region100: #{stn3d_forward.1} parent=5 // pred_fallthru
        _
    $region6: #{stn3d_forward.1} parent=1 // loop_footer
      %s25 = sadd.s32 1, %s21
    $region7: #{stn3d_forward.1} parent=1 // loop_footer_branch
      %20 = sbr.rel target = $region3
    $region8: #{stn3d_forward.1} parent=1 // loop_exit
      _
    %7546 = vsyncpa [#allocation4], 1
    %s7547 = scalar_lea.sflag [#allocation4], 1
    %7548 = vsyncpa %s7547, 1
    %7549 = vsyncpa [#allocation6], 1

</llo_original>
